<compile_context>
chip_gen: v7x
topology: tpu7x:2x2x1
jax: 0.10.0
libtpu: 0.0.40
codegen_flags: <defaults>
</compile_context>

<pallas_src>
import math
import jax
import jax.numpy as jnp
from jax.experimental import pallas as pl
from jax.experimental.pallas import tpu as pltpu

# ----------------------------- config ---------------------------------------
B, NUM_EV, NUM_SEQ_EG, SEQ = 2, 2, 2, 8
N = B * NUM_EV * NUM_SEQ_EG          # 8 flattened sequences
NTOK = N * SEQ                       # 64 tokens total
HID = 32
NUM_HEADS = 2
HEAD_DIM = HID // NUM_HEADS
FFN = 64
LAYERS = 2
VOCAB = 100
POS_VOCAB = SEQ + 2                  # RoBERTa positions start at PAD_ID+1
EMB_ROWS = VOCAB + POS_VOCAB         # fused word+pos embedding table rows
NUM_LABELS = 5
PADC = 128                           # lane-dense padded class dim for logits
PAD_ID = 1                           # RoBERTa padding_idx
LN_EPS = 1e-5

ROWS_PER_LAYER = 8                   # packed small-param rows per layer
GROW = LAYERS * ROWS_PER_LAYER       # first global row in the small-param slab
SMALL_ROWS = GROW + 4                # + emb_ln_g, emb_ln_b, cls_bd, cls_bp


def _layer_norm(x, g, b):
    mu = jnp.mean(x, axis=-1, keepdims=True)
    var = jnp.mean(jnp.square(x - mu), axis=-1, keepdims=True)
    return (x - mu) * jax.lax.rsqrt(var + LN_EPS) * g + b


def _gelu(x):
    # TODO(synk): HF RoBERTa uses exact erf-GELU; tanh approximation (~1e-3)
    # used to stay on ops with guaranteed Mosaic lowering.
    return jax.nn.gelu(x, approximate=True)


# ----------------- fused Pallas kernel: embed + encoder + head ---------------
def fused_kernel(idspos_ref, bias_ref, small_ref,
                 emb_ref, wqkv_ref, wo_ref, wi_ref, wf_ref,
                 wd_ref, wp_ref, logits_ref):
    def srow(r, width):
        # static (1, width) slice of the packed small-params slab
        return small_ref[r:r + 1, :width]

    # ---- fused token+position embedding: ONE two-hot MXU gather ----
    ip = idspos_ref[...]                                           # (NTOK, 2) i32
    tok = ip[:, 0:1]                                               # token id
    pos = ip[:, 1:2]                                               # pos id + VOCAB
    iota = jax.lax.broadcasted_iota(jnp.int32, (NTOK, EMB_ROWS), 1)
    two_hot = jnp.logical_or(iota == tok, iota == pos).astype(jnp.float32)
    emb = jnp.dot(two_hot, emb_ref[...], preferred_element_type=jnp.float32)
    x = _layer_norm(emb, srow(GROW + 0, HID), srow(GROW + 1, HID))  # (NTOK, HID)

    bias_hb = bias_ref[...]                                        # (NH*N, 1, S), pre-tiled
    HB = NUM_HEADS * N

    # ---- transformer layers, statically unrolled inside the kernel ----
    for l in range(LAYERS):
        base = l * ROWS_PER_LAYER
        # fused QKV: one (NTOK,H)@(H,3H) matmul (Wq/bq pre-scaled by 1/sqrt(HD))
        qkv = jnp.dot(x, wqkv_ref[l], preferred_element_type=jnp.float32) \
            + srow(base + 0, 3 * HID)                              # (NTOK, 3H)

        # single consolidated head split: 6 lane slices -> one axis-0 concat ->
        # one leading-dim reshape to head-major batched layout
        qkv_all = jnp.concatenate(
            [qkv[:, c:c + HEAD_DIM] for c in range(0, 3 * HID, HEAD_DIM)], axis=0)
        qkv_all = qkv_all.reshape(3 * HB, SEQ, HEAD_DIM)           # (3*NH*N, S, HD)
        qh = qkv_all[:HB]
        kh = qkv_all[HB:2 * HB]
        vh = qkv_all[2 * HB:]

        s = jnp.einsum('bqd,bkd->bqk', qh, kh,
                       preferred_element_type=jnp.float32) + bias_hb
        p = jax.nn.softmax(s, axis=-1)
        ctx = jnp.einsum('bqk,bkd->bqd', p, vh,
                         preferred_element_type=jnp.float32)       # (NH*N, S, HD)

        # output projection: one head-batched matmul + cheap leading-dim sum
        ctx_h = ctx.reshape(NUM_HEADS, NTOK, HEAD_DIM)
        attn = jnp.sum(jnp.einsum('hnd,hdo->hno', ctx_h, wo_ref[l],
                                  preferred_element_type=jnp.float32), axis=0) \
            + srow(base + 1, HID)
        h1 = _layer_norm(attn + x, srow(base + 2, HID), srow(base + 3, HID))

        ff = _gelu(jnp.dot(h1, wi_ref[l], preferred_element_type=jnp.float32)
                   + srow(base + 4, FFN))
        ffo = jnp.dot(ff, wf_ref[l], preferred_element_type=jnp.float32) \
            + srow(base + 5, HID)
        x = _layer_norm(ffo + h1, srow(base + 6, HID), srow(base + 7, HID))

    # ---- classification head on <s> tokens (row n*SEQ), one-hot MXU select ----
    cols = jax.lax.broadcasted_iota(jnp.int32, (N, NTOK), 1)
    rows = jax.lax.broadcasted_iota(jnp.int32, (N, NTOK), 0)
    sel = (cols == rows * SEQ).astype(jnp.float32)                 # (N, NTOK)
    h0 = jnp.dot(sel, x, preferred_element_type=jnp.float32)       # (N, HID)

    hd = jnp.tanh(jnp.dot(h0, wd_ref[...], preferred_element_type=jnp.float32)
                  + srow(GROW + 2, HID))
    logits_ref[...] = jnp.dot(hd, wp_ref[...], preferred_element_type=jnp.float32) \
        + srow(GROW + 3, PADC)                                     # lane-dense (N,128)


# ------------------------------ wrapper --------------------------------------
def _full_spec(shape):
    nd = len(shape)
    return pl.BlockSpec(tuple(shape), lambda i, _nd=nd: (0,) * _nd)


def _pad_row(v, width=PADC):
    v = jnp.asarray(v, jnp.float32).reshape(-1)
    return jnp.zeros((width,), jnp.float32).at[:v.shape[0]].set(v)


def simple_evrel_roberta_forward(params, inp):
    src_toks1 = inp['evrel_seq_out']           # (B, num_ev, num_seq_eg, S) int32
    src_attn1 = inp['evrel_seq_out_lens']      # (B, num_ev, num_seq_eg, S) int32 mask
    b, ne, ns, s = src_toks1.shape
    n = b * ne * ns
    ids = src_toks1.reshape(n, s)
    mask_f = src_attn1.reshape(n, s).astype(jnp.float32)
    labels = inp['evrel_labs'].reshape(-1).astype(jnp.int32)

    # ---- plain-JAX glue: position ids, mask, packed / padded weights ----
    not_pad = (ids != PAD_ID).astype(jnp.int32)
    pos_ids = jnp.cumsum(not_pad, axis=1) * not_pad + PAD_ID
    idspos = jnp.stack([ids.reshape(-1),
                        pos_ids.reshape(-1) + VOCAB], axis=-1).astype(jnp.int32)  # (NTOK,2)

    bias2d = (1.0 - mask_f) * (-1e9)                                       # (N, S)
    bias_hb = jnp.tile(bias2d, (NUM_HEADS, 1)).reshape(NUM_HEADS * n, 1, s)  # (NH*N,1,S)

    scale = 1.0 / math.sqrt(HEAD_DIM)
    # fused word(+type) / position embedding table
    emb_table = jnp.concatenate([params['word_emb'] + params['type_emb'],
                                 params['pos_emb']], axis=0)               # (EMB_ROWS, HID)
    # fused QKV weight, q pre-scaled so the kernel needs no score multiply
    wqkv = jnp.concatenate([params['wq'] * scale, params['wk'], params['wv']],
                           axis=-1)                                        # (L, H, 3H)
    wo_heads = params['wo'].reshape(LAYERS, NUM_HEADS, HEAD_DIM, HID)
    wp_pad = jnp.zeros((HID, PADC), jnp.float32).at[:, :NUM_LABELS].set(params['cls_wp'])

    # ---- packed small-params slab: (SMALL_ROWS, 128), one DMA ----
    rows = []
    for l in range(LAYERS):
        bqkv_row = jnp.concatenate([params['bq'][l].reshape(-1) * scale,
                                    params['bk'][l].reshape(-1),
                                    params['bv'][l].reshape(-1)])
        rows += [_pad_row(bqkv_row),
                 _pad_row(params['bo'][l]),
                 _pad_row(params['ln1g'][l]), _pad_row(params['ln1b'][l]),
                 _pad_row(params['bi'][l]), _pad_row(params['bf'][l]),
                 _pad_row(params['ln2g'][l]), _pad_row(params['ln2b'][l])]
    rows += [_pad_row(params['emb_ln_g']), _pad_row(params['emb_ln_b']),
             _pad_row(params['cls_bd']), _pad_row(params['cls_bp'])]
    small = jnp.stack(rows, axis=0)                                        # (20, 128)

    args = [idspos, bias_hb, small,
            emb_table, wqkv, wo_heads, params['wi'], params['wf'],
            params['cls_wd'], wp_pad]

    # NOTE: with grid=(1,) the default double-buffering of inputs is harmless at
    # this size; when scaling up, set pipeline_mode=pl.Buffered(1) on weights.
    logits_pad = pl.pallas_call(
        fused_kernel,
        out_shape=jax.ShapeDtypeStruct((n, PADC), jnp.float32),
        grid=(1,),
        in_specs=[_full_spec(a.shape) for a in args],
        out_specs=_full_spec((n, PADC)),
        compiler_params=pltpu.CompilerParams(dimension_semantics=("arbitrary",)),
    )(*args)

    logits = logits_pad[:, :NUM_LABELS]
    # mean cross-entropy (== F.cross_entropy) on the tiny (N,5) logits in plain JAX
    logp = jax.nn.log_softmax(logits, axis=-1)
    loss = -jnp.mean(jnp.take_along_axis(logp, labels[:, None], axis=-1))
    return {'logits': logits,
            'loss': loss,
            'mdl_out': logits.reshape(b, ne, ns, NUM_LABELS)}


# ------------------------- pure-JAX reference --------------------------------
def embed(params, ids):
    not_pad = (ids != PAD_ID).astype(jnp.int32)
    pos_ids = jnp.cumsum(not_pad, axis=1) * not_pad + PAD_ID
    emb = (params['word_emb'][ids] + params['pos_emb'][pos_ids]
           + params['type_emb'][0])
    return _layer_norm(emb, params['emb_ln_g'], params['emb_ln_b']).astype(jnp.float32)


def reference_forward(params, inp):
    src_toks1 = inp['evrel_seq_out']
    b, ne, ns, s = src_toks1.shape
    ids = src_toks1.reshape(b * ne * ns, s)
    mask = inp['evrel_seq_out_lens'].reshape(b * ne * ns, s).astype(jnp.float32)
    labels = inp['evrel_labs'].reshape(-1)

    h = embed(params, ids)
    bias = (1.0 - mask)[:, None, :] * (-1e9)
    scale = 1.0 / math.sqrt(HEAD_DIM)
    for l in range(LAYERS):
        q = jnp.einsum('nsh,hd->nsd', h, params['wq'][l]) + params['bq'][l]
        k = jnp.einsum('nsh,hd->nsd', h, params['wk'][l]) + params['bk'][l]
        v = jnp.einsum('nsh,hd->nsd', h, params['wv'][l]) + params['bv'][l]
        parts = []
        for hh in range(NUM_HEADS):
            sl = slice(hh * HEAD_DIM, (hh + 1) * HEAD_DIM)
            sc = jnp.einsum('nsd,ntd->nst', q[:, :, sl], k[:, :, sl]) * scale + bias
            parts.append(jnp.einsum('nst,ntd->nsd', jax.nn.softmax(sc, -1), v[:, :, sl]))
        ctx = jnp.concatenate(parts, axis=-1)
        attn = jnp.einsum('nsh,hd->nsd', ctx, params['wo'][l]) + params['bo'][l]
        h1 = _layer_norm(attn + h, params['ln1g'][l], params['ln1b'][l])
        ff = _gelu(jnp.einsum('nsh,hi->nsi', h1, params['wi'][l]) + params['bi'][l])
        ff = jnp.einsum('nsi,ih->nsh', ff, params['wf'][l]) + params['bf'][l]
        h = _layer_norm(ff + h1, params['ln2g'][l], params['ln2b'][l])

    x = jnp.tanh(h[:, 0, :] @ params['cls_wd'] + params['cls_bd'])
    logits = x @ params['cls_wp'] + params['cls_bp']
    logp = jax.nn.log_softmax(logits, axis=-1)
    loss = -jnp.mean(jnp.take_along_axis(logp, labels[:, None], axis=-1))
    return logits, loss


# ------------------------------ params ---------------------------------------
def init_params(key):
    keys = iter(jax.random.split(key, 64))

    def nrm(shape):
        return jax.random.normal(next(keys), shape, jnp.float32) * 0.02

    p = {}
    p['word_emb'] = nrm((VOCAB, HID)).at[PAD_ID].set(0.0)
    p['pos_emb'] = nrm((POS_VOCAB, HID)).at[PAD_ID].set(0.0)
    p['type_emb'] = nrm((1, HID))
    p['emb_ln_g'] = jnp.ones((HID,), jnp.float32)
    p['emb_ln_b'] = jnp.zeros((HID,), jnp.float32)

    L = LAYERS
    for nm, shp in [('wq', (L, HID, HID)), ('wk', (L, HID, HID)),
                    ('wv', (L, HID, HID)), ('wo', (L, HID, HID)),
                    ('wi', (L, HID, FFN)), ('wf', (L, FFN, HID))]:
        p[nm] = nrm(shp)
    for nm, d in [('bq', HID), ('bk', HID), ('bv', HID), ('bo', HID),
                  ('bi', FFN), ('bf', HID), ('ln1b', HID), ('ln2b', HID)]:
        p[nm] = jnp.zeros((L, 1, d), jnp.float32)
    p['ln1g'] = jnp.ones((L, 1, HID), jnp.float32)
    p['ln2g'] = jnp.ones((L, 1, HID), jnp.float32)

    p['cls_wd'] = nrm((HID, HID))
    p['cls_bd'] = jnp.zeros((1, HID), jnp.float32)
    p['cls_wp'] = nrm((HID, NUM_LABELS))
    p['cls_bp'] = jnp.zeros((1, NUM_LABELS), jnp.float32)
    return p


# -------------------------------- main ----------------------------------------
if __name__ == "__main__":
    key = jax.random.PRNGKey(0)
    k_ids, k_len, k_lab, k_par = jax.random.split(key, 4)

    ids = jax.random.randint(k_ids, (B, NUM_EV, NUM_SEQ_EG, SEQ), 3, VOCAB, jnp.int32)
    lens = jax.random.randint(k_len, (B, NUM_EV, NUM_SEQ_EG), 2, SEQ + 1, jnp.int32)
    attn_mask = (jnp.arange(SEQ)[None, None, None, :] < lens[..., None]).astype(jnp.int32)
    ids = ids.at[..., 0].set(0)                        # <s> token (cls position)
    ids = jnp.where(attn_mask == 1, ids, PAD_ID)       # pad token on masked positions
    labels = jax.random.randint(k_lab, (B, NUM_EV, NUM_SEQ_EG), 0, NUM_LABELS, jnp.int32)

    inp = {'evrel_seq_out': ids,
           'evrel_seq_out_lens': attn_mask,
           'evrel_labs': labels}

    params = init_params(k_par)

    out = simple_evrel_roberta_forward(params, inp)
    jax.block_until_ready(out['mdl_out'])
    jax.block_until_ready(out['loss'])

    # sanity check against a pure-JAX reference of the same math
    ref_logits, ref_loss = reference_forward(params, inp)
    assert out['mdl_out'].shape == (B, NUM_EV, NUM_SEQ_EG, NUM_LABELS)
    assert jnp.allclose(out['logits'], ref_logits, atol=1e-4, rtol=1e-4), "logits mismatch"
    assert jnp.allclose(out['loss'], ref_loss, atol=1e-5, rtol=1e-4), "loss mismatch"

    print("KERNEL_OK")
</pallas_src>

<mosaic_0001>
module attributes {stable_mosaic.version = 11 : i64} {
  func.func @fused_kernel(%arg0: i32, %arg1: memref<64x2xi32, #tpu.memory_space<vmem>>, %arg2: memref<16x1x8xf32, #tpu.memory_space<vmem>>, %arg3: memref<20x128xf32, #tpu.memory_space<vmem>>, %arg4: memref<110x32xf32, #tpu.memory_space<vmem>>, %arg5: memref<2x32x96xf32, #tpu.memory_space<vmem>>, %arg6: memref<2x2x16x32xf32, #tpu.memory_space<vmem>>, %arg7: memref<2x32x64xf32, #tpu.memory_space<vmem>>, %arg8: memref<2x64x32xf32, #tpu.memory_space<vmem>>, %arg9: memref<32x32xf32, #tpu.memory_space<vmem>>, %arg10: memref<32x128xf32, #tpu.memory_space<vmem>>, %arg11: memref<8x128xf32, #tpu.memory_space<vmem>>) attributes {dimension_semantics = [#tpu.dimension_semantics<arbitrary>], iteration_bounds = array<i64: 1>, scalar_prefetch = 0 : i64, scratch_operands = 0 : i64, tpu.core_type = #tpu.core_type<tc>, window_params = [{pipeline_mode = #tpu.pipeline_mode<synchronous>, transform_indices = @transform_0, window_bounds = array<i64: 64, 2>}, {pipeline_mode = #tpu.pipeline_mode<synchronous>, transform_indices = @transform_1, window_bounds = array<i64: 16, 1, 8>}, {pipeline_mode = #tpu.pipeline_mode<synchronous>, transform_indices = @transform_2, window_bounds = array<i64: 20, 128>}, {pipeline_mode = #tpu.pipeline_mode<synchronous>, transform_indices = @transform_3, window_bounds = array<i64: 110, 32>}, {pipeline_mode = #tpu.pipeline_mode<synchronous>, transform_indices = @transform_4, window_bounds = array<i64: 2, 32, 96>}, {pipeline_mode = #tpu.pipeline_mode<synchronous>, transform_indices = @transform_5, window_bounds = array<i64: 2, 2, 16, 32>}, {pipeline_mode = #tpu.pipeline_mode<synchronous>, transform_indices = @transform_6, window_bounds = array<i64: 2, 32, 64>}, {pipeline_mode = #tpu.pipeline_mode<synchronous>, transform_indices = @transform_7, window_bounds = array<i64: 2, 64, 32>}, {pipeline_mode = #tpu.pipeline_mode<synchronous>, transform_indices = @transform_8, window_bounds = array<i64: 32, 32>}, {pipeline_mode = #tpu.pipeline_mode<synchronous>, transform_indices = @transform_9, window_bounds = array<i64: 32, 128>}, {pipeline_mode = #tpu.pipeline_mode<synchronous>, transform_indices = @transform_10, window_bounds = array<i64: 8, 128>}]} {
    %c0 = arith.constant 0 : index
    %c0_0 = arith.constant 0 : index
    %0 = vector.load %arg1[%c0, %c0_0] : memref<64x2xi32, #tpu.memory_space<vmem>>, vector<64x2xi32>
    %1 = vector.extract_strided_slice %0 {offsets = [0, 0], sizes = [64, 1], strides = [1, 1]} : vector<64x2xi32> to vector<64x1xi32>
    %2 = vector.extract_strided_slice %0 {offsets = [0, 1], sizes = [64, 1], strides = [1, 1]} : vector<64x2xi32> to vector<64x1xi32>
    %3 = tpu.iota {dimensions = array<i32: 1>} : vector<64x110xi32>
    %4 = vector.broadcast %1 : vector<64x1xi32> to vector<64x110xi32>
    %5 = arith.cmpi eq, %3, %4 : vector<64x110xi32>
    %6 = vector.broadcast %2 : vector<64x1xi32> to vector<64x110xi32>
    %7 = arith.cmpi eq, %3, %6 : vector<64x110xi32>
    %8 = arith.ori %5, %7 : vector<64x110xi1>
    %9 = arith.extui %8 : vector<64x110xi1> to vector<64x110xi32>
    %10 = arith.sitofp %9 : vector<64x110xi32> to vector<64x110xf32>
    %c0_1 = arith.constant 0 : index
    %c0_2 = arith.constant 0 : index
    %11 = vector.load %arg4[%c0_1, %c0_2] : memref<110x32xf32, #tpu.memory_space<vmem>>, vector<110x32xf32>
    %cst = arith.constant dense<0.000000e+00> : vector<64x32xf32>
    %12 = tpu.matmul %10, %11, %cst {dimension_numbers = #tpu.dot_dimension_numbers<[1], [0], [0], [1], [0, 0, 1, 1], [], []>} : vector<64x110xf32>, vector<110x32xf32>, vector<64x32xf32> -> vector<64x32xf32>
    %c16 = arith.constant 16 : index
    %c0_3 = arith.constant 0 : index
    %13 = vector.load %arg3[%c16, %c0_3] : memref<20x128xf32, #tpu.memory_space<vmem>>, vector<1x32xf32>
    %c17 = arith.constant 17 : index
    %c0_4 = arith.constant 0 : index
    %14 = vector.load %arg3[%c17, %c0_4] : memref<20x128xf32, #tpu.memory_space<vmem>>, vector<1x32xf32>
    %cst_5 = arith.constant dense<0.000000e+00> : vector<64xf32>
    %15 = vector.multi_reduction <add>, %12, %cst_5 [1] : vector<64x32xf32> to vector<64xf32>
    %16 = vector.shape_cast %15 : vector<64xf32> to vector<64x1xf32>
    %cst_6 = arith.constant 3.200000e+01 : f32
    %17 = vector.broadcast %cst_6 : f32 to vector<64x1xf32>
    %18 = arith.divf %16, %17 : vector<64x1xf32>
    %19 = vector.broadcast %18 : vector<64x1xf32> to vector<64x32xf32>
    %20 = arith.subf %12, %19 : vector<64x32xf32>
    %21 = arith.mulf %20, %20 : vector<64x32xf32>
    %cst_7 = arith.constant dense<0.000000e+00> : vector<64xf32>
    %22 = vector.multi_reduction <add>, %21, %cst_7 [1] : vector<64x32xf32> to vector<64xf32>
    %23 = vector.shape_cast %22 : vector<64xf32> to vector<64x1xf32>
    %cst_8 = arith.constant 3.200000e+01 : f32
    %24 = vector.broadcast %cst_8 : f32 to vector<64x1xf32>
    %25 = arith.divf %23, %24 : vector<64x1xf32>
    %26 = vector.broadcast %18 : vector<64x1xf32> to vector<64x32xf32>
    %27 = arith.subf %12, %26 : vector<64x32xf32>
    %cst_9 = arith.constant 9.99999974E-6 : f32
    %28 = vector.broadcast %cst_9 : f32 to vector<64x1xf32>
    %29 = arith.addf %25, %28 : vector<64x1xf32>
    %30 = math.rsqrt %29 : vector<64x1xf32>
    %31 = vector.broadcast %30 : vector<64x1xf32> to vector<64x32xf32>
    %32 = arith.mulf %27, %31 : vector<64x32xf32>
    %33 = vector.broadcast %13 : vector<1x32xf32> to vector<64x32xf32>
    %34 = arith.mulf %32, %33 : vector<64x32xf32>
    %35 = vector.broadcast %14 : vector<1x32xf32> to vector<64x32xf32>
    %36 = arith.addf %34, %35 : vector<64x32xf32>
    %c0_10 = arith.constant 0 : index
    %c0_11 = arith.constant 0 : index
    %c0_12 = arith.constant 0 : index
    %37 = vector.load %arg2[%c0_10, %c0_11, %c0_12] : memref<16x1x8xf32, #tpu.memory_space<vmem>>, vector<16x1x8xf32>
    %c0_13 = arith.constant 0 : index
    %c0_14 = arith.constant 0 : index
    %c0_15 = arith.constant 0 : index
    %38 = vector.load %arg5[%c0_13, %c0_14, %c0_15] : memref<2x32x96xf32, #tpu.memory_space<vmem>>, vector<1x32x96xf32>
    %39 = vector.shape_cast %38 : vector<1x32x96xf32> to vector<32x96xf32>
    %cst_16 = arith.constant dense<0.000000e+00> : vector<64x96xf32>
    %40 = tpu.matmul %36, %39, %cst_16 {dimension_numbers = #tpu.dot_dimension_numbers<[1], [0], [0], [1], [0, 0, 1, 1], [], []>} : vector<64x32xf32>, vector<32x96xf32>, vector<64x96xf32> -> vector<64x96xf32>
    %c0_17 = arith.constant 0 : index
    %c0_18 = arith.constant 0 : index
    %41 = vector.load %arg3[%c0_17, %c0_18] : memref<20x128xf32, #tpu.memory_space<vmem>>, vector<1x96xf32>
    %42 = vector.broadcast %41 : vector<1x96xf32> to vector<64x96xf32>
    %43 = arith.addf %40, %42 : vector<64x96xf32>
    %44 = vector.extract_strided_slice %43 {offsets = [0, 0], sizes = [64, 16], strides = [1, 1]} : vector<64x96xf32> to vector<64x16xf32>
    %45 = vector.extract_strided_slice %43 {offsets = [0, 16], sizes = [64, 16], strides = [1, 1]} : vector<64x96xf32> to vector<64x16xf32>
    %46 = vector.extract_strided_slice %43 {offsets = [0, 32], sizes = [64, 16], strides = [1, 1]} : vector<64x96xf32> to vector<64x16xf32>
    %47 = vector.extract_strided_slice %43 {offsets = [0, 48], sizes = [64, 16], strides = [1, 1]} : vector<64x96xf32> to vector<64x16xf32>
    %48 = vector.extract_strided_slice %43 {offsets = [0, 64], sizes = [64, 16], strides = [1, 1]} : vector<64x96xf32> to vector<64x16xf32>
    %49 = vector.extract_strided_slice %43 {offsets = [0, 80], sizes = [64, 16], strides = [1, 1]} : vector<64x96xf32> to vector<64x16xf32>
    %50 = tpu.concatenate %44, %45, %46, %47, %48, %49 in 0 : vector<64x16xf32>, vector<64x16xf32>, vector<64x16xf32>, vector<64x16xf32>, vector<64x16xf32>, vector<64x16xf32> -> vector<384x16xf32>
    %51 = vector.shape_cast %50 : vector<384x16xf32> to vector<48x8x16xf32>
    %52 = vector.extract_strided_slice %51 {offsets = [0, 0, 0], sizes = [16, 8, 16], strides = [1, 1, 1]} : vector<48x8x16xf32> to vector<16x8x16xf32>
    %53 = vector.extract_strided_slice %51 {offsets = [16, 0, 0], sizes = [16, 8, 16], strides = [1, 1, 1]} : vector<48x8x16xf32> to vector<16x8x16xf32>
    %54 = vector.extract_strided_slice %51 {offsets = [32, 0, 0], sizes = [16, 8, 16], strides = [1, 1, 1]} : vector<48x8x16xf32> to vector<16x8x16xf32>
    "tpu.trace_start"() <{level = 10 : i32, message = "bqd,bkd->bqk"}> : () -> ()
    %cst_19 = arith.constant dense<0.000000e+00> : vector<16x8x8xf32>
    %55 = tpu.matmul %52, %53, %cst_19 {dimension_numbers = #tpu.dot_dimension_numbers<[2], [2], [1], [1], [0, 0, 0, 1, 1, 1], [0], [0]>} : vector<16x8x16xf32>, vector<16x8x16xf32>, vector<16x8x8xf32> -> vector<16x8x8xf32>
    "tpu.trace_stop"() : () -> ()
    %56 = vector.broadcast %37 : vector<16x1x8xf32> to vector<16x8x8xf32>
    %57 = arith.addf %55, %56 : vector<16x8x8xf32>
    %cst_20 = arith.constant dense<0xFF800000> : vector<16x8xf32>
    %58 = vector.multi_reduction <maximumf>, %57, %cst_20 [2] : vector<16x8x8xf32> to vector<16x8xf32>
    %cst_21 = arith.constant 0xFF800000 : f32
    %59 = vector.broadcast %cst_21 : f32 to vector<16x8xf32>
    %60 = arith.maximumf %59, %58 : vector<16x8xf32>
    %61 = vector.shape_cast %60 : vector<16x8xf32> to vector<16x8x1xf32>
    %62 = vector.broadcast %61 : vector<16x8x1xf32> to vector<16x8x8xf32>
    %63 = arith.subf %57, %62 : vector<16x8x8xf32>
    %64 = math.exp %63 : vector<16x8x8xf32>
    %cst_22 = arith.constant dense<0.000000e+00> : vector<16x8xf32>
    %65 = vector.multi_reduction <add>, %64, %cst_22 [2] : vector<16x8x8xf32> to vector<16x8xf32>
    %66 = vector.shape_cast %65 : vector<16x8xf32> to vector<16x8x1xf32>
    %67 = vector.broadcast %66 : vector<16x8x1xf32> to vector<16x8x8xf32>
    %68 = arith.divf %64, %67 : vector<16x8x8xf32>
    "tpu.trace_start"() <{level = 10 : i32, message = "bqk,bkd->bqd"}> : () -> ()
    %cst_23 = arith.constant dense<0.000000e+00> : vector<16x8x16xf32>
    %69 = tpu.matmul %68, %54, %cst_23 {dimension_numbers = #tpu.dot_dimension_numbers<[2], [1], [1], [2], [0, 0, 0, 1, 1, 2], [0], [0]>} : vector<16x8x8xf32>, vector<16x8x16xf32>, vector<16x8x16xf32> -> vector<16x8x16xf32>
    "tpu.trace_stop"() : () -> ()
    %70 = vector.shape_cast %69 : vector<16x8x16xf32> to vector<2x64x16xf32>
    %c0_24 = arith.constant 0 : index
    %c0_25 = arith.constant 0 : index
    %c0_26 = arith.constant 0 : index
    %c0_27 = arith.constant 0 : index
    %71 = vector.load %arg6[%c0_24, %c0_25, %c0_26, %c0_27] : memref<2x2x16x32xf32, #tpu.memory_space<vmem>>, vector<1x2x16x32xf32>
    %72 = vector.shape_cast %71 : vector<1x2x16x32xf32> to vector<2x16x32xf32>
    "tpu.trace_start"() <{level = 10 : i32, message = "hnd,hdo->hno"}> : () -> ()
    %cst_28 = arith.constant dense<0.000000e+00> : vector<2x64x32xf32>
    %73 = tpu.matmul %70, %72, %cst_28 {dimension_numbers = #tpu.dot_dimension_numbers<[2], [1], [1], [2], [0, 0, 0, 1, 1, 2], [0], [0]>} : vector<2x64x16xf32>, vector<2x16x32xf32>, vector<2x64x32xf32> -> vector<2x64x32xf32>
    "tpu.trace_stop"() : () -> ()
    %cst_29 = arith.constant dense<0.000000e+00> : vector<64x32xf32>
    %74 = vector.multi_reduction <add>, %73, %cst_29 [0] : vector<2x64x32xf32> to vector<64x32xf32>
    %c1 = arith.constant 1 : index
    %c0_30 = arith.constant 0 : index
    %75 = vector.load %arg3[%c1, %c0_30] : memref<20x128xf32, #tpu.memory_space<vmem>>, vector<1x32xf32>
    %76 = vector.broadcast %75 : vector<1x32xf32> to vector<64x32xf32>
    %77 = arith.addf %74, %76 : vector<64x32xf32>
    %78 = arith.addf %77, %36 : vector<64x32xf32>
    %c2 = arith.constant 2 : index
    %c0_31 = arith.constant 0 : index
    %79 = vector.load %arg3[%c2, %c0_31] : memref<20x128xf32, #tpu.memory_space<vmem>>, vector<1x32xf32>
    %c3 = arith.constant 3 : index
    %c0_32 = arith.constant 0 : index
    %80 = vector.load %arg3[%c3, %c0_32] : memref<20x128xf32, #tpu.memory_space<vmem>>, vector<1x32xf32>
    %cst_33 = arith.constant dense<0.000000e+00> : vector<64xf32>
    %81 = vector.multi_reduction <add>, %78, %cst_33 [1] : vector<64x32xf32> to vector<64xf32>
    %82 = vector.shape_cast %81 : vector<64xf32> to vector<64x1xf32>
    %cst_34 = arith.constant 3.200000e+01 : f32
    %83 = vector.broadcast %cst_34 : f32 to vector<64x1xf32>
    %84 = arith.divf %82, %83 : vector<64x1xf32>
    %85 = vector.broadcast %84 : vector<64x1xf32> to vector<64x32xf32>
    %86 = arith.subf %78, %85 : vector<64x32xf32>
    %87 = arith.mulf %86, %86 : vector<64x32xf32>
    %cst_35 = arith.constant dense<0.000000e+00> : vector<64xf32>
    %88 = vector.multi_reduction <add>, %87, %cst_35 [1] : vector<64x32xf32> to vector<64xf32>
    %89 = vector.shape_cast %88 : vector<64xf32> to vector<64x1xf32>
    %cst_36 = arith.constant 3.200000e+01 : f32
    %90 = vector.broadcast %cst_36 : f32 to vector<64x1xf32>
    %91 = arith.divf %89, %90 : vector<64x1xf32>
    %92 = vector.broadcast %84 : vector<64x1xf32> to vector<64x32xf32>
    %93 = arith.subf %78, %92 : vector<64x32xf32>
    %cst_37 = arith.constant 9.99999974E-6 : f32
    %94 = vector.broadcast %cst_37 : f32 to vector<64x1xf32>
    %95 = arith.addf %91, %94 : vector<64x1xf32>
    %96 = math.rsqrt %95 : vector<64x1xf32>
    %97 = vector.broadcast %96 : vector<64x1xf32> to vector<64x32xf32>
    %98 = arith.mulf %93, %97 : vector<64x32xf32>
    %99 = vector.broadcast %79 : vector<1x32xf32> to vector<64x32xf32>
    %100 = arith.mulf %98, %99 : vector<64x32xf32>
    %101 = vector.broadcast %80 : vector<1x32xf32> to vector<64x32xf32>
    %102 = arith.addf %100, %101 : vector<64x32xf32>
    %c0_38 = arith.constant 0 : index
    %c0_39 = arith.constant 0 : index
    %c0_40 = arith.constant 0 : index
    %103 = vector.load %arg7[%c0_38, %c0_39, %c0_40] : memref<2x32x64xf32, #tpu.memory_space<vmem>>, vector<1x32x64xf32>
    %104 = vector.shape_cast %103 : vector<1x32x64xf32> to vector<32x64xf32>
    %cst_41 = arith.constant dense<0.000000e+00> : vector<64x64xf32>
    %105 = tpu.matmul %102, %104, %cst_41 {dimension_numbers = #tpu.dot_dimension_numbers<[1], [0], [0], [1], [0, 0, 1, 1], [], []>} : vector<64x32xf32>, vector<32x64xf32>, vector<64x64xf32> -> vector<64x64xf32>
    %c4 = arith.constant 4 : index
    %c0_42 = arith.constant 0 : index
    %106 = vector.load %arg3[%c4, %c0_42] : memref<20x128xf32, #tpu.memory_space<vmem>>, vector<1x64xf32>
    %107 = vector.broadcast %106 : vector<1x64xf32> to vector<64x64xf32>
    %108 = arith.addf %105, %107 : vector<64x64xf32>
    %109 = arith.mulf %108, %108 : vector<64x64xf32>
    %110 = arith.mulf %108, %109 : vector<64x64xf32>
    %cst_43 = arith.constant 4.471500e-02 : f32
    %111 = vector.broadcast %cst_43 : f32 to vector<64x64xf32>
    %112 = arith.mulf %111, %110 : vector<64x64xf32>
    %113 = arith.addf %108, %112 : vector<64x64xf32>
    %cst_44 = arith.constant 0.797884583 : f32
    %114 = vector.broadcast %cst_44 : f32 to vector<64x64xf32>
    %115 = arith.mulf %114, %113 : vector<64x64xf32>
    %116 = math.tanh %115 : vector<64x64xf32>
    %cst_45 = arith.constant 1.000000e+00 : f32
    %117 = vector.broadcast %cst_45 : f32 to vector<64x64xf32>
    %118 = arith.addf %117, %116 : vector<64x64xf32>
    %cst_46 = arith.constant 5.000000e-01 : f32
    %119 = vector.broadcast %cst_46 : f32 to vector<64x64xf32>
    %120 = arith.mulf %119, %118 : vector<64x64xf32>
    %121 = arith.mulf %108, %120 : vector<64x64xf32>
    %c0_47 = arith.constant 0 : index
    %c0_48 = arith.constant 0 : index
    %c0_49 = arith.constant 0 : index
    %122 = vector.load %arg8[%c0_47, %c0_48, %c0_49] : memref<2x64x32xf32, #tpu.memory_space<vmem>>, vector<1x64x32xf32>
    %123 = vector.shape_cast %122 : vector<1x64x32xf32> to vector<64x32xf32>
    %cst_50 = arith.constant dense<0.000000e+00> : vector<64x32xf32>
    %124 = tpu.matmul %121, %123, %cst_50 {dimension_numbers = #tpu.dot_dimension_numbers<[1], [0], [0], [1], [0, 0, 1, 1], [], []>} : vector<64x64xf32>, vector<64x32xf32>, vector<64x32xf32> -> vector<64x32xf32>
    %c5 = arith.constant 5 : index
    %c0_51 = arith.constant 0 : index
    %125 = vector.load %arg3[%c5, %c0_51] : memref<20x128xf32, #tpu.memory_space<vmem>>, vector<1x32xf32>
    %126 = vector.broadcast %125 : vector<1x32xf32> to vector<64x32xf32>
    %127 = arith.addf %124, %126 : vector<64x32xf32>
    %128 = arith.addf %127, %102 : vector<64x32xf32>
    %c6 = arith.constant 6 : index
    %c0_52 = arith.constant 0 : index
    %129 = vector.load %arg3[%c6, %c0_52] : memref<20x128xf32, #tpu.memory_space<vmem>>, vector<1x32xf32>
    %c7 = arith.constant 7 : index
    %c0_53 = arith.constant 0 : index
    %130 = vector.load %arg3[%c7, %c0_53] : memref<20x128xf32, #tpu.memory_space<vmem>>, vector<1x32xf32>
    %cst_54 = arith.constant dense<0.000000e+00> : vector<64xf32>
    %131 = vector.multi_reduction <add>, %128, %cst_54 [1] : vector<64x32xf32> to vector<64xf32>
    %132 = vector.shape_cast %131 : vector<64xf32> to vector<64x1xf32>
    %cst_55 = arith.constant 3.200000e+01 : f32
    %133 = vector.broadcast %cst_55 : f32 to vector<64x1xf32>
    %134 = arith.divf %132, %133 : vector<64x1xf32>
    %135 = vector.broadcast %134 : vector<64x1xf32> to vector<64x32xf32>
    %136 = arith.subf %128, %135 : vector<64x32xf32>
    %137 = arith.mulf %136, %136 : vector<64x32xf32>
    %cst_56 = arith.constant dense<0.000000e+00> : vector<64xf32>
    %138 = vector.multi_reduction <add>, %137, %cst_56 [1] : vector<64x32xf32> to vector<64xf32>
    %139 = vector.shape_cast %138 : vector<64xf32> to vector<64x1xf32>
    %cst_57 = arith.constant 3.200000e+01 : f32
    %140 = vector.broadcast %cst_57 : f32 to vector<64x1xf32>
    %141 = arith.divf %139, %140 : vector<64x1xf32>
    %142 = vector.broadcast %134 : vector<64x1xf32> to vector<64x32xf32>
    %143 = arith.subf %128, %142 : vector<64x32xf32>
    %cst_58 = arith.constant 9.99999974E-6 : f32
    %144 = vector.broadcast %cst_58 : f32 to vector<64x1xf32>
    %145 = arith.addf %141, %144 : vector<64x1xf32>
    %146 = math.rsqrt %145 : vector<64x1xf32>
    %147 = vector.broadcast %146 : vector<64x1xf32> to vector<64x32xf32>
    %148 = arith.mulf %143, %147 : vector<64x32xf32>
    %149 = vector.broadcast %129 : vector<1x32xf32> to vector<64x32xf32>
    %150 = arith.mulf %148, %149 : vector<64x32xf32>
    %151 = vector.broadcast %130 : vector<1x32xf32> to vector<64x32xf32>
    %152 = arith.addf %150, %151 : vector<64x32xf32>
    %c1_59 = arith.constant 1 : index
    %c0_60 = arith.constant 0 : index
    %c0_61 = arith.constant 0 : index
    %153 = vector.load %arg5[%c1_59, %c0_60, %c0_61] : memref<2x32x96xf32, #tpu.memory_space<vmem>>, vector<1x32x96xf32>
    %154 = vector.shape_cast %153 : vector<1x32x96xf32> to vector<32x96xf32>
    %cst_62 = arith.constant dense<0.000000e+00> : vector<64x96xf32>
    %155 = tpu.matmul %152, %154, %cst_62 {dimension_numbers = #tpu.dot_dimension_numbers<[1], [0], [0], [1], [0, 0, 1, 1], [], []>} : vector<64x32xf32>, vector<32x96xf32>, vector<64x96xf32> -> vector<64x96xf32>
    %c8 = arith.constant 8 : index
    %c0_63 = arith.constant 0 : index
    %156 = vector.load %arg3[%c8, %c0_63] : memref<20x128xf32, #tpu.memory_space<vmem>>, vector<1x96xf32>
    %157 = vector.broadcast %156 : vector<1x96xf32> to vector<64x96xf32>
    %158 = arith.addf %155, %157 : vector<64x96xf32>
    %159 = vector.extract_strided_slice %158 {offsets = [0, 0], sizes = [64, 16], strides = [1, 1]} : vector<64x96xf32> to vector<64x16xf32>
    %160 = vector.extract_strided_slice %158 {offsets = [0, 16], sizes = [64, 16], strides = [1, 1]} : vector<64x96xf32> to vector<64x16xf32>
    %161 = vector.extract_strided_slice %158 {offsets = [0, 32], sizes = [64, 16], strides = [1, 1]} : vector<64x96xf32> to vector<64x16xf32>
    %162 = vector.extract_strided_slice %158 {offsets = [0, 48], sizes = [64, 16], strides = [1, 1]} : vector<64x96xf32> to vector<64x16xf32>
    %163 = vector.extract_strided_slice %158 {offsets = [0, 64], sizes = [64, 16], strides = [1, 1]} : vector<64x96xf32> to vector<64x16xf32>
    %164 = vector.extract_strided_slice %158 {offsets = [0, 80], sizes = [64, 16], strides = [1, 1]} : vector<64x96xf32> to vector<64x16xf32>
    %165 = tpu.concatenate %159, %160, %161, %162, %163, %164 in 0 : vector<64x16xf32>, vector<64x16xf32>, vector<64x16xf32>, vector<64x16xf32>, vector<64x16xf32>, vector<64x16xf32> -> vector<384x16xf32>
    %166 = vector.shape_cast %165 : vector<384x16xf32> to vector<48x8x16xf32>
    %167 = vector.extract_strided_slice %166 {offsets = [0, 0, 0], sizes = [16, 8, 16], strides = [1, 1, 1]} : vector<48x8x16xf32> to vector<16x8x16xf32>
    %168 = vector.extract_strided_slice %166 {offsets = [16, 0, 0], sizes = [16, 8, 16], strides = [1, 1, 1]} : vector<48x8x16xf32> to vector<16x8x16xf32>
    %169 = vector.extract_strided_slice %166 {offsets = [32, 0, 0], sizes = [16, 8, 16], strides = [1, 1, 1]} : vector<48x8x16xf32> to vector<16x8x16xf32>
    "tpu.trace_start"() <{level = 10 : i32, message = "bqd,bkd->bqk"}> : () -> ()
    %cst_64 = arith.constant dense<0.000000e+00> : vector<16x8x8xf32>
    %170 = tpu.matmul %167, %168, %cst_64 {dimension_numbers = #tpu.dot_dimension_numbers<[2], [2], [1], [1], [0, 0, 0, 1, 1, 1], [0], [0]>} : vector<16x8x16xf32>, vector<16x8x16xf32>, vector<16x8x8xf32> -> vector<16x8x8xf32>
    "tpu.trace_stop"() : () -> ()
    %171 = vector.broadcast %37 : vector<16x1x8xf32> to vector<16x8x8xf32>
    %172 = arith.addf %170, %171 : vector<16x8x8xf32>
    %cst_65 = arith.constant dense<0xFF800000> : vector<16x8xf32>
    %173 = vector.multi_reduction <maximumf>, %172, %cst_65 [2] : vector<16x8x8xf32> to vector<16x8xf32>
    %cst_66 = arith.constant 0xFF800000 : f32
    %174 = vector.broadcast %cst_66 : f32 to vector<16x8xf32>
    %175 = arith.maximumf %174, %173 : vector<16x8xf32>
    %176 = vector.shape_cast %175 : vector<16x8xf32> to vector<16x8x1xf32>
    %177 = vector.broadcast %176 : vector<16x8x1xf32> to vector<16x8x8xf32>
    %178 = arith.subf %172, %177 : vector<16x8x8xf32>
    %179 = math.exp %178 : vector<16x8x8xf32>
    %cst_67 = arith.constant dense<0.000000e+00> : vector<16x8xf32>
    %180 = vector.multi_reduction <add>, %179, %cst_67 [2] : vector<16x8x8xf32> to vector<16x8xf32>
    %181 = vector.shape_cast %180 : vector<16x8xf32> to vector<16x8x1xf32>
    %182 = vector.broadcast %181 : vector<16x8x1xf32> to vector<16x8x8xf32>
    %183 = arith.divf %179, %182 : vector<16x8x8xf32>
    "tpu.trace_start"() <{level = 10 : i32, message = "bqk,bkd->bqd"}> : () -> ()
    %cst_68 = arith.constant dense<0.000000e+00> : vector<16x8x16xf32>
    %184 = tpu.matmul %183, %169, %cst_68 {dimension_numbers = #tpu.dot_dimension_numbers<[2], [1], [1], [2], [0, 0, 0, 1, 1, 2], [0], [0]>} : vector<16x8x8xf32>, vector<16x8x16xf32>, vector<16x8x16xf32> -> vector<16x8x16xf32>
    "tpu.trace_stop"() : () -> ()
    %185 = vector.shape_cast %184 : vector<16x8x16xf32> to vector<2x64x16xf32>
    %c1_69 = arith.constant 1 : index
    %c0_70 = arith.constant 0 : index
    %c0_71 = arith.constant 0 : index
    %c0_72 = arith.constant 0 : index
    %186 = vector.load %arg6[%c1_69, %c0_70, %c0_71, %c0_72] : memref<2x2x16x32xf32, #tpu.memory_space<vmem>>, vector<1x2x16x32xf32>
    %187 = vector.shape_cast %186 : vector<1x2x16x32xf32> to vector<2x16x32xf32>
    "tpu.trace_start"() <{level = 10 : i32, message = "hnd,hdo->hno"}> : () -> ()
    %cst_73 = arith.constant dense<0.000000e+00> : vector<2x64x32xf32>
    %188 = tpu.matmul %185, %187, %cst_73 {dimension_numbers = #tpu.dot_dimension_numbers<[2], [1], [1], [2], [0, 0, 0, 1, 1, 2], [0], [0]>} : vector<2x64x16xf32>, vector<2x16x32xf32>, vector<2x64x32xf32> -> vector<2x64x32xf32>
    "tpu.trace_stop"() : () -> ()
    %cst_74 = arith.constant dense<0.000000e+00> : vector<64x32xf32>
    %189 = vector.multi_reduction <add>, %188, %cst_74 [0] : vector<2x64x32xf32> to vector<64x32xf32>
    %c9 = arith.constant 9 : index
    %c0_75 = arith.constant 0 : index
    %190 = vector.load %arg3[%c9, %c0_75] : memref<20x128xf32, #tpu.memory_space<vmem>>, vector<1x32xf32>
    %191 = vector.broadcast %190 : vector<1x32xf32> to vector<64x32xf32>
    %192 = arith.addf %189, %191 : vector<64x32xf32>
    %193 = arith.addf %192, %152 : vector<64x32xf32>
    %c10 = arith.constant 10 : index
    %c0_76 = arith.constant 0 : index
    %194 = vector.load %arg3[%c10, %c0_76] : memref<20x128xf32, #tpu.memory_space<vmem>>, vector<1x32xf32>
    %c11 = arith.constant 11 : index
    %c0_77 = arith.constant 0 : index
    %195 = vector.load %arg3[%c11, %c0_77] : memref<20x128xf32, #tpu.memory_space<vmem>>, vector<1x32xf32>
    %cst_78 = arith.constant dense<0.000000e+00> : vector<64xf32>
    %196 = vector.multi_reduction <add>, %193, %cst_78 [1] : vector<64x32xf32> to vector<64xf32>
    %197 = vector.shape_cast %196 : vector<64xf32> to vector<64x1xf32>
    %cst_79 = arith.constant 3.200000e+01 : f32
    %198 = vector.broadcast %cst_79 : f32 to vector<64x1xf32>
    %199 = arith.divf %197, %198 : vector<64x1xf32>
    %200 = vector.broadcast %199 : vector<64x1xf32> to vector<64x32xf32>
    %201 = arith.subf %193, %200 : vector<64x32xf32>
    %202 = arith.mulf %201, %201 : vector<64x32xf32>
    %cst_80 = arith.constant dense<0.000000e+00> : vector<64xf32>
    %203 = vector.multi_reduction <add>, %202, %cst_80 [1] : vector<64x32xf32> to vector<64xf32>
    %204 = vector.shape_cast %203 : vector<64xf32> to vector<64x1xf32>
    %cst_81 = arith.constant 3.200000e+01 : f32
    %205 = vector.broadcast %cst_81 : f32 to vector<64x1xf32>
    %206 = arith.divf %204, %205 : vector<64x1xf32>
    %207 = vector.broadcast %199 : vector<64x1xf32> to vector<64x32xf32>
    %208 = arith.subf %193, %207 : vector<64x32xf32>
    %cst_82 = arith.constant 9.99999974E-6 : f32
    %209 = vector.broadcast %cst_82 : f32 to vector<64x1xf32>
    %210 = arith.addf %206, %209 : vector<64x1xf32>
    %211 = math.rsqrt %210 : vector<64x1xf32>
    %212 = vector.broadcast %211 : vector<64x1xf32> to vector<64x32xf32>
    %213 = arith.mulf %208, %212 : vector<64x32xf32>
    %214 = vector.broadcast %194 : vector<1x32xf32> to vector<64x32xf32>
    %215 = arith.mulf %213, %214 : vector<64x32xf32>
    %216 = vector.broadcast %195 : vector<1x32xf32> to vector<64x32xf32>
    %217 = arith.addf %215, %216 : vector<64x32xf32>
    %c1_83 = arith.constant 1 : index
    %c0_84 = arith.constant 0 : index
    %c0_85 = arith.constant 0 : index
    %218 = vector.load %arg7[%c1_83, %c0_84, %c0_85] : memref<2x32x64xf32, #tpu.memory_space<vmem>>, vector<1x32x64xf32>
    %219 = vector.shape_cast %218 : vector<1x32x64xf32> to vector<32x64xf32>
    %cst_86 = arith.constant dense<0.000000e+00> : vector<64x64xf32>
    %220 = tpu.matmul %217, %219, %cst_86 {dimension_numbers = #tpu.dot_dimension_numbers<[1], [0], [0], [1], [0, 0, 1, 1], [], []>} : vector<64x32xf32>, vector<32x64xf32>, vector<64x64xf32> -> vector<64x64xf32>
    %c12 = arith.constant 12 : index
    %c0_87 = arith.constant 0 : index
    %221 = vector.load %arg3[%c12, %c0_87] : memref<20x128xf32, #tpu.memory_space<vmem>>, vector<1x64xf32>
    %222 = vector.broadcast %221 : vector<1x64xf32> to vector<64x64xf32>
    %223 = arith.addf %220, %222 : vector<64x64xf32>
    %224 = arith.mulf %223, %223 : vector<64x64xf32>
    %225 = arith.mulf %223, %224 : vector<64x64xf32>
    %cst_88 = arith.constant 4.471500e-02 : f32
    %226 = vector.broadcast %cst_88 : f32 to vector<64x64xf32>
    %227 = arith.mulf %226, %225 : vector<64x64xf32>
    %228 = arith.addf %223, %227 : vector<64x64xf32>
    %cst_89 = arith.constant 0.797884583 : f32
    %229 = vector.broadcast %cst_89 : f32 to vector<64x64xf32>
    %230 = arith.mulf %229, %228 : vector<64x64xf32>
    %231 = math.tanh %230 : vector<64x64xf32>
    %cst_90 = arith.constant 1.000000e+00 : f32
    %232 = vector.broadcast %cst_90 : f32 to vector<64x64xf32>
    %233 = arith.addf %232, %231 : vector<64x64xf32>
    %cst_91 = arith.constant 5.000000e-01 : f32
    %234 = vector.broadcast %cst_91 : f32 to vector<64x64xf32>
    %235 = arith.mulf %234, %233 : vector<64x64xf32>
    %236 = arith.mulf %223, %235 : vector<64x64xf32>
    %c1_92 = arith.constant 1 : index
    %c0_93 = arith.constant 0 : index
    %c0_94 = arith.constant 0 : index
    %237 = vector.load %arg8[%c1_92, %c0_93, %c0_94] : memref<2x64x32xf32, #tpu.memory_space<vmem>>, vector<1x64x32xf32>
    %238 = vector.shape_cast %237 : vector<1x64x32xf32> to vector<64x32xf32>
    %cst_95 = arith.constant dense<0.000000e+00> : vector<64x32xf32>
    %239 = tpu.matmul %236, %238, %cst_95 {dimension_numbers = #tpu.dot_dimension_numbers<[1], [0], [0], [1], [0, 0, 1, 1], [], []>} : vector<64x64xf32>, vector<64x32xf32>, vector<64x32xf32> -> vector<64x32xf32>
    %c13 = arith.constant 13 : index
    %c0_96 = arith.constant 0 : index
    %240 = vector.load %arg3[%c13, %c0_96] : memref<20x128xf32, #tpu.memory_space<vmem>>, vector<1x32xf32>
    %241 = vector.broadcast %240 : vector<1x32xf32> to vector<64x32xf32>
    %242 = arith.addf %239, %241 : vector<64x32xf32>
    %243 = arith.addf %242, %217 : vector<64x32xf32>
    %c14 = arith.constant 14 : index
    %c0_97 = arith.constant 0 : index
    %244 = vector.load %arg3[%c14, %c0_97] : memref<20x128xf32, #tpu.memory_space<vmem>>, vector<1x32xf32>
    %c15 = arith.constant 15 : index
    %c0_98 = arith.constant 0 : index
    %245 = vector.load %arg3[%c15, %c0_98] : memref<20x128xf32, #tpu.memory_space<vmem>>, vector<1x32xf32>
    %cst_99 = arith.constant dense<0.000000e+00> : vector<64xf32>
    %246 = vector.multi_reduction <add>, %243, %cst_99 [1] : vector<64x32xf32> to vector<64xf32>
    %247 = vector.shape_cast %246 : vector<64xf32> to vector<64x1xf32>
    %cst_100 = arith.constant 3.200000e+01 : f32
    %248 = vector.broadcast %cst_100 : f32 to vector<64x1xf32>
    %249 = arith.divf %247, %248 : vector<64x1xf32>
    %250 = vector.broadcast %249 : vector<64x1xf32> to vector<64x32xf32>
    %251 = arith.subf %243, %250 : vector<64x32xf32>
    %252 = arith.mulf %251, %251 : vector<64x32xf32>
    %cst_101 = arith.constant dense<0.000000e+00> : vector<64xf32>
    %253 = vector.multi_reduction <add>, %252, %cst_101 [1] : vector<64x32xf32> to vector<64xf32>
    %254 = vector.shape_cast %253 : vector<64xf32> to vector<64x1xf32>
    %cst_102 = arith.constant 3.200000e+01 : f32
    %255 = vector.broadcast %cst_102 : f32 to vector<64x1xf32>
    %256 = arith.divf %254, %255 : vector<64x1xf32>
    %257 = vector.broadcast %249 : vector<64x1xf32> to vector<64x32xf32>
    %258 = arith.subf %243, %257 : vector<64x32xf32>
    %cst_103 = arith.constant 9.99999974E-6 : f32
    %259 = vector.broadcast %cst_103 : f32 to vector<64x1xf32>
    %260 = arith.addf %256, %259 : vector<64x1xf32>
    %261 = math.rsqrt %260 : vector<64x1xf32>
    %262 = vector.broadcast %261 : vector<64x1xf32> to vector<64x32xf32>
    %263 = arith.mulf %258, %262 : vector<64x32xf32>
    %264 = vector.broadcast %244 : vector<1x32xf32> to vector<64x32xf32>
    %265 = arith.mulf %263, %264 : vector<64x32xf32>
    %266 = vector.broadcast %245 : vector<1x32xf32> to vector<64x32xf32>
    %267 = arith.addf %265, %266 : vector<64x32xf32>
    %268 = tpu.iota {dimensions = array<i32: 1>} : vector<8x64xi32>
    %269 = tpu.iota {dimensions = array<i32: 0>} : vector<8x64xi32>
    %c8_i32 = arith.constant 8 : i32
    %270 = vector.broadcast %c8_i32 : i32 to vector<8x64xi32>
    %271 = arith.muli %269, %270 : vector<8x64xi32>
    %272 = arith.cmpi eq, %268, %271 : vector<8x64xi32>
    %273 = arith.extui %272 : vector<8x64xi1> to vector<8x64xi32>
    %274 = arith.sitofp %273 : vector<8x64xi32> to vector<8x64xf32>
    %cst_104 = arith.constant dense<0.000000e+00> : vector<8x32xf32>
    %275 = tpu.matmul %274, %267, %cst_104 {dimension_numbers = #tpu.dot_dimension_numbers<[1], [0], [0], [1], [0, 0, 1, 1], [], []>} : vector<8x64xf32>, vector<64x32xf32>, vector<8x32xf32> -> vector<8x32xf32>
    %c0_105 = arith.constant 0 : index
    %c0_106 = arith.constant 0 : index
    %276 = vector.load %arg9[%c0_105, %c0_106] : memref<32x32xf32, #tpu.memory_space<vmem>>, vector<32x32xf32>
    %cst_107 = arith.constant dense<0.000000e+00> : vector<8x32xf32>
    %277 = tpu.matmul %275, %276, %cst_107 {dimension_numbers = #tpu.dot_dimension_numbers<[1], [0], [0], [1], [0, 0, 1, 1], [], []>} : vector<8x32xf32>, vector<32x32xf32>, vector<8x32xf32> -> vector<8x32xf32>
    %c18 = arith.constant 18 : index
    %c0_108 = arith.constant 0 : index
    %278 = vector.load %arg3[%c18, %c0_108] : memref<20x128xf32, #tpu.memory_space<vmem>>, vector<1x32xf32>
    %279 = vector.broadcast %278 : vector<1x32xf32> to vector<8x32xf32>
    %280 = arith.addf %277, %279 : vector<8x32xf32>
    %281 = math.tanh %280 : vector<8x32xf32>
    %c0_109 = arith.constant 0 : index
    %c0_110 = arith.constant 0 : index
    %282 = vector.load %arg10[%c0_109, %c0_110] : memref<32x128xf32, #tpu.memory_space<vmem>>, vector<32x128xf32>
    %cst_111 = arith.constant dense<0.000000e+00> : vector<8x128xf32>
    %283 = tpu.matmul %281, %282, %cst_111 {dimension_numbers = #tpu.dot_dimension_numbers<[1], [0], [0], [1], [0, 0, 1, 1], [], []>} : vector<8x32xf32>, vector<32x128xf32>, vector<8x128xf32> -> vector<8x128xf32>
    %c19 = arith.constant 19 : index
    %c0_112 = arith.constant 0 : index
    %284 = vector.load %arg3[%c19, %c0_112] : memref<20x128xf32, #tpu.memory_space<vmem>>, vector<1x128xf32>
    %285 = vector.broadcast %284 : vector<1x128xf32> to vector<8x128xf32>
    %286 = arith.addf %283, %285 : vector<8x128xf32>
    %c0_113 = arith.constant 0 : index
    %c0_114 = arith.constant 0 : index
    %287 = vector.load %arg11[%c0_113, %c0_114] : memref<8x128xf32, #tpu.memory_space<vmem>>, vector<8x128xf32>
    tpu.vector_store %arg11[%c0_113, %c0_114], %286 {strides = array<i32>} : memref<8x128xf32, #tpu.memory_space<vmem>>, vector<8x128xf32>,
    return
  }
  func.func @transform_0(%arg0: i32) -> (i32, i32) {
    %c0_i32 = arith.constant 0 : i32
    %c0_i32_0 = arith.constant 0 : i32
    %c0_i32_1 = arith.constant 0 : i32
    return %c0_i32, %c0_i32_0 : i32, i32
  }
  func.func @transform_1(%arg0: i32) -> (i32, i32, i32) {
    %c0_i32 = arith.constant 0 : i32
    %c0_i32_0 = arith.constant 0 : i32
    %c0_i32_1 = arith.constant 0 : i32
    %c0_i32_2 = arith.constant 0 : i32
    return %c0_i32, %c0_i32_0, %c0_i32_1 : i32, i32, i32
  }
  func.func @transform_2(%arg0: i32) -> (i32, i32) {
    %c0_i32 = arith.constant 0 : i32
    %c0_i32_0 = arith.constant 0 : i32
    %c0_i32_1 = arith.constant 0 : i32
    return %c0_i32, %c0_i32_0 : i32, i32
  }
  func.func @transform_3(%arg0: i32) -> (i32, i32) {
    %c0_i32 = arith.constant 0 : i32
    %c0_i32_0 = arith.constant 0 : i32
    %c0_i32_1 = arith.constant 0 : i32
    return %c0_i32, %c0_i32_0 : i32, i32
  }
  func.func @transform_4(%arg0: i32) -> (i32, i32, i32) {
    %c0_i32 = arith.constant 0 : i32
    %c0_i32_0 = arith.constant 0 : i32
    %c0_i32_1 = arith.constant 0 : i32
    %c0_i32_2 = arith.constant 0 : i32
    return %c0_i32, %c0_i32_0, %c0_i32_1 : i32, i32, i32
  }
  func.func @transform_5(%arg0: i32) -> (i32, i32, i32, i32) {
    %c0_i32 = arith.constant 0 : i32
    %c0_i32_0 = arith.constant 0 : i32
    %c0_i32_1 = arith.constant 0 : i32
    %c0_i32_2 = arith.constant 0 : i32
    %c0_i32_3 = arith.constant 0 : i32
    return %c0_i32, %c0_i32_0, %c0_i32_1, %c0_i32_2 : i32, i32, i32, i32
  }
  func.func @transform_6(%arg0: i32) -> (i32, i32, i32) {
    %c0_i32 = arith.constant 0 : i32
    %c0_i32_0 = arith.constant 0 : i32
    %c0_i32_1 = arith.constant 0 : i32
    %c0_i32_2 = arith.constant 0 : i32
    return %c0_i32, %c0_i32_0, %c0_i32_1 : i32, i32, i32
  }
  func.func @transform_7(%arg0: i32) -> (i32, i32, i32) {
    %c0_i32 = arith.constant 0 : i32
    %c0_i32_0 = arith.constant 0 : i32
    %c0_i32_1 = arith.constant 0 : i32
    %c0_i32_2 = arith.constant 0 : i32
    return %c0_i32, %c0_i32_0, %c0_i32_1 : i32, i32, i32
  }
  func.func @transform_8(%arg0: i32) -> (i32, i32) {
    %c0_i32 = arith.constant 0 : i32
    %c0_i32_0 = arith.constant 0 : i32
    %c0_i32_1 = arith.constant 0 : i32
    return %c0_i32, %c0_i32_0 : i32, i32
  }
  func.func @transform_9(%arg0: i32) -> (i32, i32) {
    %c0_i32 = arith.constant 0 : i32
    %c0_i32_0 = arith.constant 0 : i32
    %c0_i32_1 = arith.constant 0 : i32
    return %c0_i32, %c0_i32_0 : i32, i32
  }
  func.func @transform_10(%arg0: i32) -> (i32, i32) {
    %c0_i32 = arith.constant 0 : i32
    %c0_i32_0 = arith.constant 0 : i32
    %c0_i32_1 = arith.constant 0 : i32
    return %c0_i32, %c0_i32_0 : i32, i32
  }
}

</mosaic_0001>

<llo_original>
// kernel: tpu_custom_call.1
$region0: #{tpu_custom_call.1}
  #allocation0 [shape = 'u32[]', space=smem, size = 0x4, offset = 0x4, fixed_abs, tag = 'smem constant byte address 0x4 - core index']
  #allocation1 [shape = 'u32[144,128]{1,0:T(1,128)}', space=vmem, size = 0x12000, scoped, tag = 'internal scratch']
  %s0 = inlined_call_operand.vmem [shape: s32[64,2], index: 0, kind: input, shape index: {}]
  %s1 = inlined_call_operand.vmem [shape: f32[16,1,8], index: 1, kind: input, shape index: {}]
  %s2 = inlined_call_operand.vmem [shape: f32[20,128], index: 2, kind: input, shape index: {}]
  %s3 = inlined_call_operand.vmem [shape: f32[110,32], index: 3, kind: input, shape index: {}]
  %s4 = inlined_call_operand.vmem [shape: f32[2,32,96], index: 4, kind: input, shape index: {}]
  %s5 = inlined_call_operand.vmem [shape: f32[2,2,16,32], index: 5, kind: input, shape index: {}]
  %s6 = inlined_call_operand.vmem [shape: f32[2,32,64], index: 6, kind: input, shape index: {}]
  %s7 = inlined_call_operand.vmem [shape: f32[2,64,32], index: 7, kind: input, shape index: {}]
  %s8 = inlined_call_operand.vmem [shape: f32[32,32], index: 8, kind: input, shape index: {}]
  %s9 = inlined_call_operand.vmem [shape: f32[32,128], index: 9, kind: input, shape index: {}]
  %s10 = inlined_call_operand.hbm [shape: f32[8,128], index: 10, kind: output, shape index: {}]
  %s11 = sld [smem:[#allocation0]]
  $region50: #{tpu_custom_call.1} parent=0
    _
  %s13 = ssub.s32 1, %s11
  %s14 = scalar_select 0, %s13, %s11
  $region1: #{tpu_custom_call.1} parent=0
    #allocation2 [shape = 'u8[4096]{0}', space=vmem, size = 0x1000, scoped, tag = 'output window, operand 0, single buffered']
    #allocation3 [shape = 's32[1]{0}', space=sflag, size = 0x4, scoped, tag = 'scoped memory for tpu_custom_call.1']
    %15 = vsyncpa [#allocation3], 0
    // Predicated region
    $region2: #{tpu_custom_call.1} parent=1 // pred_check
      _
    $region3: #{tpu_custom_call.1} parent=1 // pred_check_branch
      %17 = sbr.rel (0) target = $region5
    $region4: #{tpu_custom_call.1} parent=1 // pred_region
      _
    $region5: #{tpu_custom_call.1} parent=1 // pred_fallthru
      _
    // Predicated region
    $region6: #{tpu_custom_call.1} parent=1 // pred_check
      _
    $region7: #{tpu_custom_call.1} parent=1 // pred_check_branch
      %19 = sbr.rel (0) target = $region9
    $region8: #{tpu_custom_call.1} parent=1 // pred_region
      _
    $region9: #{tpu_custom_call.1} parent=1 // pred_fallthru
      _
    // Predicated region
    $region10: #{tpu_custom_call.1} parent=1 // pred_check
      _
    $region11: #{tpu_custom_call.1} parent=1 // pred_check_branch
      %21 = sbr.rel (0) target = $region13
    $region12: #{tpu_custom_call.1} parent=1 // pred_region
      _
    $region13: #{tpu_custom_call.1} parent=1 // pred_fallthru
      _
    // Predicated region
    $region14: #{tpu_custom_call.1} parent=1 // pred_check
      _
    $region15: #{tpu_custom_call.1} parent=1 // pred_check_branch
      %23 = sbr.rel (0) target = $region17
    $region16: #{tpu_custom_call.1} parent=1 // pred_region
      _
    $region17: #{tpu_custom_call.1} parent=1 // pred_fallthru
      _
    // Predicated region
    $region18: #{tpu_custom_call.1} parent=1 // pred_check
      _
    $region19: #{tpu_custom_call.1} parent=1 // pred_check_branch
      %25 = sbr.rel (0) target = $region21
    $region20: #{tpu_custom_call.1} parent=1 // pred_region
      _
    $region21: #{tpu_custom_call.1} parent=1 // pred_fallthru
      _
    // Predicated region
    $region22: #{tpu_custom_call.1} parent=1 // pred_check
      _
    $region23: #{tpu_custom_call.1} parent=1 // pred_check_branch
      %27 = sbr.rel (0) target = $region25
    $region24: #{tpu_custom_call.1} parent=1 // pred_region
      _
    $region25: #{tpu_custom_call.1} parent=1 // pred_fallthru
      _
    // Predicated region
    $region26: #{tpu_custom_call.1} parent=1 // pred_check
      _
    $region27: #{tpu_custom_call.1} parent=1 // pred_check_branch
      %29 = sbr.rel (0) target = $region29
    $region28: #{tpu_custom_call.1} parent=1 // pred_region
      _
    $region29: #{tpu_custom_call.1} parent=1 // pred_fallthru
      _
    // Predicated region
    $region30: #{tpu_custom_call.1} parent=1 // pred_check
      _
    $region31: #{tpu_custom_call.1} parent=1 // pred_check_branch
      %31 = sbr.rel (0) target = $region33
    $region32: #{tpu_custom_call.1} parent=1 // pred_region
      _
    $region33: #{tpu_custom_call.1} parent=1 // pred_fallthru
      _
    // Predicated region
    $region34: #{tpu_custom_call.1} parent=1 // pred_check
      _
    $region35: #{tpu_custom_call.1} parent=1 // pred_check_branch
      %33 = sbr.rel (0) target = $region37
    $region36: #{tpu_custom_call.1} parent=1 // pred_region
      _
    $region37: #{tpu_custom_call.1} parent=1 // pred_fallthru
      _
    // Predicated region
    $region38: #{tpu_custom_call.1} parent=1 // pred_check
      _
    $region39: #{tpu_custom_call.1} parent=1 // pred_check_branch
      %35 = sbr.rel (0) target = $region41
    $region40: #{tpu_custom_call.1} parent=1 // pred_region
      _
    $region41: #{tpu_custom_call.1} parent=1 // pred_fallthru
      _
    %v36 = vld [vmem:[%s0] sm:$0xff]
    %v37 = vld [vmem:[%s0 + $0x8] sm:$0xff]
    %v38 = vld [vmem:[%s0 + $0x10] sm:$0xff]
    %v39 = vld [vmem:[%s0 + $0x18] sm:$0xff]
    %v40 = vld [vmem:[%s0 + $0x20] sm:$0xff]
    %v41 = vld [vmem:[%s0 + $0x28] sm:$0xff]
    %v42 = vld [vmem:[%s0 + $0x30] sm:$0xff]
    %v43 = vld [vmem:[%s0 + $0x38] sm:$0xff]
    %v44 = vlaneseq
    %v45 = vand.u32 %v44, 127
    %46 = vset.pattern.permute.xlu0 0
    %47 = vperm.xlu0 %46, %v36
    %v48 = vpop.permute.xlu0 %47
    %49 = vset.pattern.permute.xlu0 0
    %50 = vperm.xlu0 %49, %v37
    %v51 = vpop.permute.xlu0 %50
    %52 = vset.pattern.permute.xlu0 0
    %53 = vperm.xlu0 %52, %v38
    %v54 = vpop.permute.xlu0 %53
    %55 = vset.pattern.permute.xlu0 0
    %56 = vperm.xlu0 %55, %v39
    %v57 = vpop.permute.xlu0 %56
    %58 = vset.pattern.permute.xlu0 0
    %59 = vperm.xlu0 %58, %v40
    %v60 = vpop.permute.xlu0 %59
    %61 = vset.pattern.permute.xlu0 0
    %62 = vperm.xlu0 %61, %v41
    %v63 = vpop.permute.xlu0 %62
    %64 = vset.pattern.permute.xlu0 0
    %65 = vperm.xlu0 %64, %v42
    %v66 = vpop.permute.xlu0 %65
    %67 = vset.pattern.permute.xlu0 0
    %68 = vperm.xlu0 %67, %v43
    %v69 = vpop.permute.xlu0 %68
    %vm70 = vcmp.eq.s32.totalorder %v45, %v48
    %vm71 = vcmp.eq.s32.totalorder %v45, %v51
    %vm72 = vcmp.eq.s32.totalorder %v45, %v54
    %vm73 = vcmp.eq.s32.totalorder %v45, %v57
    %vm74 = vcmp.eq.s32.totalorder %v45, %v60
    %vm75 = vcmp.eq.s32.totalorder %v45, %v63
    %vm76 = vcmp.eq.s32.totalorder %v45, %v66
    %vm77 = vcmp.eq.s32.totalorder %v45, %v69
    %78 = vset.pattern.permute.xlu0 1
    %79 = vperm.xlu0 %78, %v36
    %v80 = vpop.permute.xlu0 %79
    %81 = vset.pattern.permute.xlu0 1
    %82 = vperm.xlu0 %81, %v37
    %v83 = vpop.permute.xlu0 %82
    %84 = vset.pattern.permute.xlu0 1
    %85 = vperm.xlu0 %84, %v38
    %v86 = vpop.permute.xlu0 %85
    %87 = vset.pattern.permute.xlu0 1
    %88 = vperm.xlu0 %87, %v39
    %v89 = vpop.permute.xlu0 %88
    %90 = vset.pattern.permute.xlu0 1
    %91 = vperm.xlu0 %90, %v40
    %v92 = vpop.permute.xlu0 %91
    %93 = vset.pattern.permute.xlu0 1
    %94 = vperm.xlu0 %93, %v41
    %v95 = vpop.permute.xlu0 %94
    %96 = vset.pattern.permute.xlu0 1
    %97 = vperm.xlu0 %96, %v42
    %v98 = vpop.permute.xlu0 %97
    %99 = vset.pattern.permute.xlu0 1
    %100 = vperm.xlu0 %99, %v43
    %v101 = vpop.permute.xlu0 %100
    %vm102 = vcmp.eq.s32.totalorder %v45, %v80
    %vm103 = vcmp.eq.s32.totalorder %v45, %v83
    %vm104 = vcmp.eq.s32.totalorder %v45, %v86
    %vm105 = vcmp.eq.s32.totalorder %v45, %v89
    %vm106 = vcmp.eq.s32.totalorder %v45, %v92
    %vm107 = vcmp.eq.s32.totalorder %v45, %v95
    %vm108 = vcmp.eq.s32.totalorder %v45, %v98
    %vm109 = vcmp.eq.s32.totalorder %v45, %v101
    %vm110 = vmor %vm70, %vm102
    %vm111 = vmor %vm71, %vm103
    %vm112 = vmor %vm72, %vm104
    %vm113 = vmor %vm73, %vm105
    %vm114 = vmor %vm74, %vm106
    %vm115 = vmor %vm75, %vm107
    %vm116 = vmor %vm76, %vm108
    %vm117 = vmor %vm77, %vm109
    %v118 = vsel %vm110, 1, 0
    %v119 = vsel %vm111, 1, 0
    %v120 = vsel %vm112, 1, 0
    %v121 = vsel %vm113, 1, 0
    %v122 = vsel %vm114, 1, 0
    %v123 = vsel %vm115, 1, 0
    %v124 = vsel %vm116, 1, 0
    %v125 = vsel %vm117, 1, 0
    %v126 = vcvt.s32.f32 %v118
    %v127 = vcvt.s32.f32 %v119
    %v128 = vcvt.s32.f32 %v120
    %v129 = vcvt.s32.f32 %v121
    %v130 = vcvt.s32.f32 %v122
    %v131 = vcvt.s32.f32 %v123
    %v132 = vcvt.s32.f32 %v124
    %v133 = vcvt.s32.f32 %v125
    %v134 = vld [vmem:[%s3] sm:$0xff]
    %v135 = vld [vmem:[%s3 + $0x8] sm:$0xff]
    %v136 = vld [vmem:[%s3 + $0x10] sm:$0xff]
    %v137 = vld [vmem:[%s3 + $0x18] sm:$0xff]
    %v138 = vld [vmem:[%s3 + $0x20] sm:$0xff]
    %v139 = vld [vmem:[%s3 + $0x28] sm:$0xff]
    %v140 = vld [vmem:[%s3 + $0x30] sm:$0xff]
    %v141 = vld [vmem:[%s3 + $0x38] sm:$0xff]
    %v142 = vld [vmem:[%s3 + $0x40] sm:$0xff]
    %v143 = vld [vmem:[%s3 + $0x48] sm:$0xff]
    %v144 = vld [vmem:[%s3 + $0x50] sm:$0xff]
    %v145 = vld [vmem:[%s3 + $0x58] sm:$0xff]
    %v146 = vld [vmem:[%s3 + $0x60] sm:$0xff]
    %v147 = vld [vmem:[%s3 + $0x68] sm:$0x3f]
    %vm148 = vcmask 900096
    %v150 = vsel %vm148, %v126, 0
    %v153 = vsel %vm148, %v127, 0
    %v156 = vsel %vm148, %v128, 0
    %v159 = vsel %vm148, %v129, 0
    %v162 = vsel %vm148, %v130, 0
    %v165 = vsel %vm148, %v131, 0
    %v168 = vsel %vm148, %v132, 0
    %v171 = vsel %vm148, %v133, 0
    %vm173 = vcmask 1045504
    %v175 = vsel %vm173, %v147, 0
    %177 = vmatprep.subr.mxu0 0.0
    %178 = vmatpush1.msra.mxu0 %v134
    %179 = vmatprep.subr.mxu0 0.0
    %180 = vmatpush1.msra.mxu0 %v135
    %181 = vmatprep.subr.mxu0 0.0
    %182 = vmatpush1.msra.mxu0 %v136
    %183 = vmatprep.subr.mxu0 0.0
    %184 = vmatpush1.msra.mxu0 %v137
    %185 = vmatprep.subr.mxu0 0.0
    %186 = vmatpush1.msra.mxu0 %v138
    %187 = vmatprep.subr.mxu0 0.0
    %188 = vmatpush1.msra.mxu0 %v139
    %189 = vmatprep.subr.mxu0 0.0
    %190 = vmatpush1.msra.mxu0 %v140
    %191 = vmatprep.subr.mxu0 0.0
    %192 = vmatpush1.msra.mxu0 %v141
    %193 = vmatprep.subr.mxu0 0.0
    %194 = vmatpush1.msra.mxu0 %v142
    %195 = vmatprep.subr.mxu0 0.0
    %196 = vmatpush1.msra.mxu0 %v143
    %197 = vmatprep.subr.mxu0 0.0
    %198 = vmatpush1.msra.mxu0 %v144
    %199 = vmatprep.subr.mxu0 0.0
    %200 = vmatpush1.msra.mxu0 %v145
    %201 = vmatprep.subr.mxu0 0.0
    %202 = vmatpush1.msra.mxu0 %v146
    %203 = vmatprep.subr.mxu0 0.0
    %204 = vmatpush1.msra.mxu0 %v175
    %205 = vmatprep.subr.mxu0 0.0
    %206 = vmatpush1.msra.mxu0 0.0
    %207 = vmatprep.subr.mxu0 0.0
    %208 = vmatpush1.msra.mxu0 0.0
    %209 = vmatprep.subr.mxu0 0.0
    %210 = vmatpush1.msra.mxu0 0.0
    %211 = vmatprep.subr.mxu0 0.0
    %212 = vmatpush1.msra.mxu0 0.0
    %213 = vmatprep.subr.mxu0 0.0
    %214 = vmatpush1.msra.mxu0 0.0
    %215 = vmatprep.subr.mxu0 0.0
    %216 = vmatpush1.msra.mxu0 0.0
    %217 = vmatprep.subr.mxu0 0.0
    %218 = vmatpush1.msra.mxu0 0.0
    %219 = vmatprep.subr.mxu0 0.0
    %220 = vmatpush1.msra.mxu0 0.0
    %221 = vmatprep.subr.mxu0 0.0
    %222 = vmatpush1.msra.mxu0 0.0
    %223 = vmatprep.subr.mxu0 0.0
    %224 = vmatpush1.msra.mxu0 0.0
    %225 = vmatprep.subr.mxu0 0.0
    %226 = vmatpush1.msra.mxu0 0.0
    %227 = vmatprep.subr.mxu0 0.0
    %228 = vmatpush1.msra.mxu0 0.0
    %229 = vmatprep.subr.mxu0 0.0
    %230 = vmatpush1.msra.mxu0 0.0
    %231 = vmatprep.subr.mxu0 0.0
    %232 = vmatpush1.msra.mxu0 0.0
    %233 = vmatprep.subr.mxu0 0.0
    %234 = vmatpush1.msra.mxu0 0.0
    %235 = vmatprep.subr.mxu0 0.0
    %236 = vmatpush1.msra.mxu0 0.0
    %237 = vmatprep.subr.mxu0 0.0
    %238 = vmatpush1.msra.mxu0 0.0
    %239 = vmatprep.subr.mxu0 0.0
    %240 = vmatpush1.msra.mxu0 0.0
    %241 = vmatprep.mubr.f32.mxu0 0.0
    %242 = vmatmul.mubr.f32.gmra.mrb[0].mxu0 %v150
    %v243 = vpop.f32.mrb[0].mxu0
    %v244 = vadd.f32 0.0, %v243
    %v245 = vpop.f32.mrb[0].mxu0
    %246 = vmatprep.mubr.f32.mxu0 0.0
    %247 = vmatmul.mubr.f32.gmra.mrb[0].mxu0 %v153
    %v248 = vpop.f32.mrb[0].mxu0
    %v249 = vadd.f32 0.0, %v248
    %v250 = vpop.f32.mrb[0].mxu0
    %251 = vmatprep.mubr.f32.mxu0 0.0
    %252 = vmatmul.mubr.f32.gmra.mrb[0].mxu0 %v156
    %v253 = vpop.f32.mrb[0].mxu0
    %v254 = vadd.f32 0.0, %v253
    %v255 = vpop.f32.mrb[0].mxu0
    %256 = vmatprep.mubr.f32.mxu0 0.0
    %257 = vmatmul.mubr.f32.gmra.mrb[0].mxu0 %v159
    %v258 = vpop.f32.mrb[0].mxu0
    %v259 = vadd.f32 0.0, %v258
    %v260 = vpop.f32.mrb[0].mxu0
    %261 = vmatprep.mubr.f32.mxu0 0.0
    %262 = vmatmul.mubr.f32.gmra.mrb[0].mxu0 %v162
    %v263 = vpop.f32.mrb[0].mxu0
    %v264 = vadd.f32 0.0, %v263
    %v265 = vpop.f32.mrb[0].mxu0
    %266 = vmatprep.mubr.f32.mxu0 0.0
    %267 = vmatmul.mubr.f32.gmra.mrb[0].mxu0 %v165
    %v268 = vpop.f32.mrb[0].mxu0
    %v269 = vadd.f32 0.0, %v268
    %v270 = vpop.f32.mrb[0].mxu0
    %271 = vmatprep.mubr.f32.mxu0 0.0
    %272 = vmatmul.mubr.f32.gmra.mrb[0].mxu0 %v168
    %v273 = vpop.f32.mrb[0].mxu0
    %v274 = vadd.f32 0.0, %v273
    %v275 = vpop.f32.mrb[0].mxu0
    %276 = vmatprep.mubr.f32.mxu0 0.0
    %277 = vmatmul.mubr.f32.gmra.mrb[0].mxu0 %v171
    %v278 = vpop.f32.mrb[0].mxu0
    %v279 = vadd.f32 0.0, %v278
    %v280 = vpop.f32.mrb[0].mxu0
    %281 = vdwg.mxu0
    %v282 = vld [vmem:[%s2 + $0x10] sm:$0x1]
    %v283 = vld [vmem:[%s2 + $0x11] sm:$0x1]
    %vm284 = vcmask 261120
    %v285 = vsel %vm284, %v244, 0.0
    %286 = vadd.xlane.f32.xlu0 %v285
    %v287 = vpop.xlane.xlu0 %286
    %v288 = vsel %vm284, %v249, 0.0
    %289 = vadd.xlane.f32.xlu0 %v288
    %v290 = vpop.xlane.xlu0 %289
    %v291 = vsel %vm284, %v254, 0.0
    %292 = vadd.xlane.f32.xlu0 %v291
    %v293 = vpop.xlane.xlu0 %292
    %v294 = vsel %vm284, %v259, 0.0
    %295 = vadd.xlane.f32.xlu0 %v294
    %v296 = vpop.xlane.xlu0 %295
    %v297 = vsel %vm284, %v264, 0.0
    %298 = vadd.xlane.f32.xlu0 %v297
    %v299 = vpop.xlane.xlu0 %298
    %v300 = vsel %vm284, %v269, 0.0
    %301 = vadd.xlane.f32.xlu0 %v300
    %v302 = vpop.xlane.xlu0 %301
    %v303 = vsel %vm284, %v274, 0.0
    %304 = vadd.xlane.f32.xlu0 %v303
    %v305 = vpop.xlane.xlu0 %304
    %v306 = vsel %vm284, %v279, 0.0
    %307 = vadd.xlane.f32.xlu0 %v306
    %v308 = vpop.xlane.xlu0 %307
    %v309 = vrcp.pop 32.0
    %v310 = vmul.f32 %v287, %v309
    %v311 = vmul.f32 %v290, %v309
    %v312 = vmul.f32 %v293, %v309
    %v313 = vmul.f32 %v296, %v309
    %v314 = vmul.f32 %v299, %v309
    %v315 = vmul.f32 %v302, %v309
    %v316 = vmul.f32 %v305, %v309
    %v317 = vmul.f32 %v308, %v309
    %v318 = vsub.f32 %v244, %v310
    %v319 = vsub.f32 %v249, %v311
    %v320 = vsub.f32 %v254, %v312
    %v321 = vsub.f32 %v259, %v313
    %v322 = vsub.f32 %v264, %v314
    %v323 = vsub.f32 %v269, %v315
    %v324 = vsub.f32 %v274, %v316
    %v325 = vsub.f32 %v279, %v317
    %v326 = vmul.f32 %v318, %v318
    %v327 = vmul.f32 %v319, %v319
    %v328 = vmul.f32 %v320, %v320
    %v329 = vmul.f32 %v321, %v321
    %v330 = vmul.f32 %v322, %v322
    %v331 = vmul.f32 %v323, %v323
    %v332 = vmul.f32 %v324, %v324
    %v333 = vmul.f32 %v325, %v325
    %v334 = vsel %vm284, %v326, 0.0
    %335 = vadd.xlane.f32.xlu0 %v334
    %v336 = vpop.xlane.xlu0 %335
    %v337 = vsel %vm284, %v327, 0.0
    %338 = vadd.xlane.f32.xlu0 %v337
    %v339 = vpop.xlane.xlu0 %338
    %v340 = vsel %vm284, %v328, 0.0
    %341 = vadd.xlane.f32.xlu0 %v340
    %v342 = vpop.xlane.xlu0 %341
    %v343 = vsel %vm284, %v329, 0.0
    %344 = vadd.xlane.f32.xlu0 %v343
    %v345 = vpop.xlane.xlu0 %344
    %v346 = vsel %vm284, %v330, 0.0
    %347 = vadd.xlane.f32.xlu0 %v346
    %v348 = vpop.xlane.xlu0 %347
    %v349 = vsel %vm284, %v331, 0.0
    %350 = vadd.xlane.f32.xlu0 %v349
    %v351 = vpop.xlane.xlu0 %350
    %v352 = vsel %vm284, %v332, 0.0
    %353 = vadd.xlane.f32.xlu0 %v352
    %v354 = vpop.xlane.xlu0 %353
    %v355 = vsel %vm284, %v333, 0.0
    %356 = vadd.xlane.f32.xlu0 %v355
    %v357 = vpop.xlane.xlu0 %356
    %v358 = vmul.f32 %v336, %v309
    %v359 = vmul.f32 %v339, %v309
    %v360 = vmul.f32 %v342, %v309
    %v361 = vmul.f32 %v345, %v309
    %v362 = vmul.f32 %v348, %v309
    %v363 = vmul.f32 %v351, %v309
    %v364 = vmul.f32 %v354, %v309
    %v365 = vmul.f32 %v357, %v309
    %v366 = vadd.f32 %v358, 1e-05
    %v367 = vadd.f32 %v359, 1e-05
    %v368 = vadd.f32 %v360, 1e-05
    %v369 = vadd.f32 %v361, 1e-05
    %v370 = vadd.f32 %v362, 1e-05
    %v371 = vadd.f32 %v363, 1e-05
    %v372 = vadd.f32 %v364, 1e-05
    %v373 = vadd.f32 %v365, 1e-05
    %v374 = vrsqrt.pop %v366
    %v375 = vrsqrt.pop %v367
    %v376 = vrsqrt.pop %v368
    %v377 = vrsqrt.pop %v369
    %v378 = vrsqrt.pop %v370
    %v379 = vrsqrt.pop %v371
    %v380 = vrsqrt.pop %v372
    %v381 = vrsqrt.pop %v373
    %v382 = vmul.f32 %v318, %v374
    %v383 = vmul.f32 %v319, %v375
    %v384 = vmul.f32 %v320, %v376
    %v385 = vmul.f32 %v321, %v377
    %v386 = vmul.f32 %v322, %v378
    %v387 = vmul.f32 %v323, %v379
    %v388 = vmul.f32 %v324, %v380
    %v389 = vmul.f32 %v325, %v381
    %v390 = vlaneseq
    %v391 = vshrl.u32 %v390, 7
    %v392 = vsub.s32 0, %v391
    %v393 = vrot.slane %v282, %v392
    %v394 = vmul.f32 %v382, %v393
    %v395 = vmul.f32 %v383, %v393
    %v396 = vmul.f32 %v384, %v393
    %v397 = vmul.f32 %v385, %v393
    %v398 = vmul.f32 %v386, %v393
    %v399 = vmul.f32 %v387, %v393
    %v400 = vmul.f32 %v388, %v393
    %v401 = vmul.f32 %v389, %v393
    %v402 = vlaneseq
    %v403 = vshrl.u32 %v402, 7
    %v404 = vsub.s32 0, %v403
    %v405 = vrot.slane %v283, %v404
    %v406 = vadd.f32 %v394, %v405
    %v407 = vadd.f32 %v395, %v405
    %v408 = vadd.f32 %v396, %v405
    %v409 = vadd.f32 %v397, %v405
    %v410 = vadd.f32 %v398, %v405
    %v411 = vadd.f32 %v399, %v405
    %v412 = vadd.f32 %v400, %v405
    %v413 = vadd.f32 %v401, %v405
    %v414 = vld [vmem:[%s1] sm:$0x1]
    %v415 = vld [vmem:[%s1 + $0x1] sm:$0x1]
    %v416 = vld [vmem:[%s1 + $0x2] sm:$0x1]
    %v417 = vld [vmem:[%s1 + $0x3] sm:$0x1]
    %v418 = vld [vmem:[%s1 + $0x4] sm:$0x1]
    %v419 = vld [vmem:[%s1 + $0x5] sm:$0x1]
    %v420 = vld [vmem:[%s1 + $0x6] sm:$0x1]
    %v421 = vld [vmem:[%s1 + $0x7] sm:$0x1]
    %v422 = vld [vmem:[%s1 + $0x8] sm:$0x1]
    %v423 = vld [vmem:[%s1 + $0x9] sm:$0x1]
    %v424 = vld [vmem:[%s1 + $0xa] sm:$0x1]
    %v425 = vld [vmem:[%s1 + $0xb] sm:$0x1]
    %v426 = vld [vmem:[%s1 + $0xc] sm:$0x1]
    %v427 = vld [vmem:[%s1 + $0xd] sm:$0x1]
    %v428 = vld [vmem:[%s1 + $0xe] sm:$0x1]
    %v429 = vld [vmem:[%s1 + $0xf] sm:$0x1]
    %v430 = vld [vmem:[%s4] sm:$0xff]
    %v431 = vld [vmem:[%s4 + $0x8] sm:$0xff]
    %v432 = vld [vmem:[%s4 + $0x10] sm:$0xff]
    %v433 = vld [vmem:[%s4 + $0x18] sm:$0xff]
    %v434 = vld [vmem:[%s2] sm:$0x1]
    %v435 = vlaneseq
    %v436 = vshrl.u32 %v435, 7
    %v437 = vsub.s32 0, %v436
    %v438 = vrot.slane %v434, %v437
    %v440 = vsel %vm284, %v406, 0
    %v443 = vsel %vm284, %v407, 0
    %v446 = vsel %vm284, %v408, 0
    %v449 = vsel %vm284, %v409, 0
    %v452 = vsel %vm284, %v410, 0
    %v455 = vsel %vm284, %v411, 0
    %v458 = vsel %vm284, %v412, 0
    %v461 = vsel %vm284, %v413, 0
    %463 = vmatprep.subr.mxu0 0.0
    %464 = vmatpush1.msra.mxu0 %v430
    %465 = vmatprep.subr.mxu0 0.0
    %466 = vmatpush1.msra.mxu0 %v431
    %467 = vmatprep.subr.mxu0 0.0
    %468 = vmatpush1.msra.mxu0 %v432
    %469 = vmatprep.subr.mxu0 0.0
    %470 = vmatpush1.msra.mxu0 %v433
    %471 = vmatprep.subr.mxu0 0.0
    %472 = vmatpush1.msra.mxu0 0.0
    %473 = vmatprep.subr.mxu0 0.0
    %474 = vmatpush1.msra.mxu0 0.0
    %475 = vmatprep.subr.mxu0 0.0
    %476 = vmatpush1.msra.mxu0 0.0
    %477 = vmatprep.subr.mxu0 0.0
    %478 = vmatpush1.msra.mxu0 0.0
    %479 = vmatprep.subr.mxu0 0.0
    %480 = vmatpush1.msra.mxu0 0.0
    %481 = vmatprep.subr.mxu0 0.0
    %482 = vmatpush1.msra.mxu0 0.0
    %483 = vmatprep.subr.mxu0 0.0
    %484 = vmatpush1.msra.mxu0 0.0
    %485 = vmatprep.subr.mxu0 0.0
    %486 = vmatpush1.msra.mxu0 0.0
    %487 = vmatprep.subr.mxu0 0.0
    %488 = vmatpush1.msra.mxu0 0.0
    %489 = vmatprep.subr.mxu0 0.0
    %490 = vmatpush1.msra.mxu0 0.0
    %491 = vmatprep.subr.mxu0 0.0
    %492 = vmatpush1.msra.mxu0 0.0
    %493 = vmatprep.subr.mxu0 0.0
    %494 = vmatpush1.msra.mxu0 0.0
    %495 = vmatprep.subr.mxu0 0.0
    %496 = vmatpush1.msra.mxu0 0.0
    %497 = vmatprep.subr.mxu0 0.0
    %498 = vmatpush1.msra.mxu0 0.0
    %499 = vmatprep.subr.mxu0 0.0
    %500 = vmatpush1.msra.mxu0 0.0
    %501 = vmatprep.subr.mxu0 0.0
    %502 = vmatpush1.msra.mxu0 0.0
    %503 = vmatprep.subr.mxu0 0.0
    %504 = vmatpush1.msra.mxu0 0.0
    %505 = vmatprep.subr.mxu0 0.0
    %506 = vmatpush1.msra.mxu0 0.0
    %507 = vmatprep.subr.mxu0 0.0
    %508 = vmatpush1.msra.mxu0 0.0
    %509 = vmatprep.subr.mxu0 0.0
    %510 = vmatpush1.msra.mxu0 0.0
    %511 = vmatprep.subr.mxu0 0.0
    %512 = vmatpush1.msra.mxu0 0.0
    %513 = vmatprep.subr.mxu0 0.0
    %514 = vmatpush1.msra.mxu0 0.0
    %515 = vmatprep.subr.mxu0 0.0
    %516 = vmatpush1.msra.mxu0 0.0
    %517 = vmatprep.subr.mxu0 0.0
    %518 = vmatpush1.msra.mxu0 0.0
    %519 = vmatprep.subr.mxu0 0.0
    %520 = vmatpush1.msra.mxu0 0.0
    %521 = vmatprep.subr.mxu0 0.0
    %522 = vmatpush1.msra.mxu0 0.0
    %523 = vmatprep.subr.mxu0 0.0
    %524 = vmatpush1.msra.mxu0 0.0
    %525 = vmatprep.subr.mxu0 0.0
    %526 = vmatpush1.msra.mxu0 0.0
    %527 = vmatprep.mubr.f32.mxu0 0.0
    %528 = vmatmul.mubr.f32.gmra.mrb[0].mxu0 %v440
    %v529 = vpop.f32.mrb[0].mxu0
    %v530 = vadd.f32 %v438, %v529
    %v531 = vpop.f32.mrb[0].mxu0
    %532 = vmatprep.mubr.f32.mxu0 0.0
    %533 = vmatmul.mubr.f32.gmra.mrb[0].mxu0 %v443
    %v534 = vpop.f32.mrb[0].mxu0
    %v535 = vadd.f32 %v438, %v534
    %v536 = vpop.f32.mrb[0].mxu0
    %537 = vmatprep.mubr.f32.mxu0 0.0
    %538 = vmatmul.mubr.f32.gmra.mrb[0].mxu0 %v446
    %v539 = vpop.f32.mrb[0].mxu0
    %v540 = vadd.f32 %v438, %v539
    %v541 = vpop.f32.mrb[0].mxu0
    %542 = vmatprep.mubr.f32.mxu0 0.0
    %543 = vmatmul.mubr.f32.gmra.mrb[0].mxu0 %v449
    %v544 = vpop.f32.mrb[0].mxu0
    %v545 = vadd.f32 %v438, %v544
    %v546 = vpop.f32.mrb[0].mxu0
    %547 = vmatprep.mubr.f32.mxu0 0.0
    %548 = vmatmul.mubr.f32.gmra.mrb[0].mxu0 %v452
    %v549 = vpop.f32.mrb[0].mxu0
    %v550 = vadd.f32 %v438, %v549
    %v551 = vpop.f32.mrb[0].mxu0
    %552 = vmatprep.mubr.f32.mxu0 0.0
    %553 = vmatmul.mubr.f32.gmra.mrb[0].mxu0 %v455
    %v554 = vpop.f32.mrb[0].mxu0
    %v555 = vadd.f32 %v438, %v554
    %v556 = vpop.f32.mrb[0].mxu0
    %557 = vmatprep.mubr.f32.mxu0 0.0
    %558 = vmatmul.mubr.f32.gmra.mrb[0].mxu0 %v458
    %v559 = vpop.f32.mrb[0].mxu0
    %v560 = vadd.f32 %v438, %v559
    %v561 = vpop.f32.mrb[0].mxu0
    %562 = vmatprep.mubr.f32.mxu0 0.0
    %563 = vmatmul.mubr.f32.gmra.mrb[0].mxu0 %v461
    %v564 = vpop.f32.mrb[0].mxu0
    %v565 = vadd.f32 %v438, %v564
    %v566 = vpop.f32.mrb[0].mxu0
    %567 = vdwg.mxu0
    %576 = vrot.lane.b32.xlu0 %v530, 112
    %v577 = vpop.permute.xlu0 %576
    %578 = vrot.lane.b32.xlu0 %v535, 112
    %v579 = vpop.permute.xlu0 %578
    %580 = vrot.lane.b32.xlu0 %v540, 112
    %v581 = vpop.permute.xlu0 %580
    %582 = vrot.lane.b32.xlu0 %v545, 112
    %v583 = vpop.permute.xlu0 %582
    %584 = vrot.lane.b32.xlu0 %v550, 112
    %v585 = vpop.permute.xlu0 %584
    %586 = vrot.lane.b32.xlu0 %v555, 112
    %v587 = vpop.permute.xlu0 %586
    %588 = vrot.lane.b32.xlu0 %v560, 112
    %v589 = vpop.permute.xlu0 %588
    %590 = vrot.lane.b32.xlu0 %v565, 112
    %v591 = vpop.permute.xlu0 %590
    %592 = vrot.lane.b32.xlu0 %v530, 96
    %v593 = vpop.permute.xlu0 %592
    %594 = vrot.lane.b32.xlu0 %v535, 96
    %v595 = vpop.permute.xlu0 %594
    %596 = vrot.lane.b32.xlu0 %v540, 96
    %v597 = vpop.permute.xlu0 %596
    %598 = vrot.lane.b32.xlu0 %v545, 96
    %v599 = vpop.permute.xlu0 %598
    %600 = vrot.lane.b32.xlu0 %v550, 96
    %v601 = vpop.permute.xlu0 %600
    %602 = vrot.lane.b32.xlu0 %v555, 96
    %v603 = vpop.permute.xlu0 %602
    %604 = vrot.lane.b32.xlu0 %v560, 96
    %v605 = vpop.permute.xlu0 %604
    %606 = vrot.lane.b32.xlu0 %v565, 96
    %v607 = vpop.permute.xlu0 %606
    %608 = vrot.lane.b32.xlu0 %v530, 80
    %v609 = vpop.permute.xlu0 %608
    %610 = vrot.lane.b32.xlu0 %v535, 80
    %v611 = vpop.permute.xlu0 %610
    %612 = vrot.lane.b32.xlu0 %v540, 80
    %v613 = vpop.permute.xlu0 %612
    %614 = vrot.lane.b32.xlu0 %v545, 80
    %v615 = vpop.permute.xlu0 %614
    %616 = vrot.lane.b32.xlu0 %v550, 80
    %v617 = vpop.permute.xlu0 %616
    %618 = vrot.lane.b32.xlu0 %v555, 80
    %v619 = vpop.permute.xlu0 %618
    %620 = vrot.lane.b32.xlu0 %v560, 80
    %v621 = vpop.permute.xlu0 %620
    %622 = vrot.lane.b32.xlu0 %v565, 80
    %v623 = vpop.permute.xlu0 %622
    %624 = vrot.lane.b32.xlu0 %v530, 64
    %v625 = vpop.permute.xlu0 %624
    %626 = vrot.lane.b32.xlu0 %v535, 64
    %v627 = vpop.permute.xlu0 %626
    %628 = vrot.lane.b32.xlu0 %v540, 64
    %v629 = vpop.permute.xlu0 %628
    %630 = vrot.lane.b32.xlu0 %v545, 64
    %v631 = vpop.permute.xlu0 %630
    %632 = vrot.lane.b32.xlu0 %v550, 64
    %v633 = vpop.permute.xlu0 %632
    %634 = vrot.lane.b32.xlu0 %v555, 64
    %v635 = vpop.permute.xlu0 %634
    %636 = vrot.lane.b32.xlu0 %v560, 64
    %v637 = vpop.permute.xlu0 %636
    %638 = vrot.lane.b32.xlu0 %v565, 64
    %v639 = vpop.permute.xlu0 %638
    %648 = vrot.lane.b32.xlu0 %v530, 48
    %v649 = vpop.permute.xlu0 %648
    %650 = vrot.lane.b32.xlu0 %v535, 48
    %v651 = vpop.permute.xlu0 %650
    %652 = vrot.lane.b32.xlu0 %v540, 48
    %v653 = vpop.permute.xlu0 %652
    %654 = vrot.lane.b32.xlu0 %v545, 48
    %v655 = vpop.permute.xlu0 %654
    %656 = vrot.lane.b32.xlu0 %v550, 48
    %v657 = vpop.permute.xlu0 %656
    %658 = vrot.lane.b32.xlu0 %v555, 48
    %v659 = vpop.permute.xlu0 %658
    %660 = vrot.lane.b32.xlu0 %v560, 48
    %v661 = vpop.permute.xlu0 %660
    %662 = vrot.lane.b32.xlu0 %v565, 48
    %v663 = vpop.permute.xlu0 %662
    %v688 = vlaneseq
    %v689 = vshrl.u32 %v688, 7
    %v690 = vsub.s32 0, %v689
    %v691 = vrot.slane %v414, %v690
    %v692 = vlaneseq
    %v693 = vshrl.u32 %v692, 7
    %v694 = vsub.s32 0, %v693
    %v695 = vrot.slane %v415, %v694
    %v696 = vlaneseq
    %v697 = vshrl.u32 %v696, 7
    %v698 = vsub.s32 0, %v697
    %v699 = vrot.slane %v416, %v698
    %v700 = vlaneseq
    %v701 = vshrl.u32 %v700, 7
    %v702 = vsub.s32 0, %v701
    %v703 = vrot.slane %v417, %v702
    %v704 = vlaneseq
    %v705 = vshrl.u32 %v704, 7
    %v706 = vsub.s32 0, %v705
    %v707 = vrot.slane %v418, %v706
    %v708 = vlaneseq
    %v709 = vshrl.u32 %v708, 7
    %v710 = vsub.s32 0, %v709
    %v711 = vrot.slane %v419, %v710
    %v712 = vlaneseq
    %v713 = vshrl.u32 %v712, 7
    %v714 = vsub.s32 0, %v713
    %v715 = vrot.slane %v420, %v714
    %v716 = vlaneseq
    %v717 = vshrl.u32 %v716, 7
    %v718 = vsub.s32 0, %v717
    %v719 = vrot.slane %v421, %v718
    %v720 = vlaneseq
    %v721 = vshrl.u32 %v720, 7
    %v722 = vsub.s32 0, %v721
    %v723 = vrot.slane %v422, %v722
    %v724 = vlaneseq
    %v725 = vshrl.u32 %v724, 7
    %v726 = vsub.s32 0, %v725
    %v727 = vrot.slane %v423, %v726
    %v728 = vlaneseq
    %v729 = vshrl.u32 %v728, 7
    %v730 = vsub.s32 0, %v729
    %v731 = vrot.slane %v424, %v730
    %v732 = vlaneseq
    %v733 = vshrl.u32 %v732, 7
    %v734 = vsub.s32 0, %v733
    %v735 = vrot.slane %v425, %v734
    %v736 = vlaneseq
    %v737 = vshrl.u32 %v736, 7
    %v738 = vsub.s32 0, %v737
    %v739 = vrot.slane %v426, %v738
    %v740 = vlaneseq
    %v741 = vshrl.u32 %v740, 7
    %v742 = vsub.s32 0, %v741
    %v743 = vrot.slane %v427, %v742
    %v744 = vlaneseq
    %v745 = vshrl.u32 %v744, 7
    %v746 = vsub.s32 0, %v745
    %v747 = vrot.slane %v428, %v746
    %v748 = vlaneseq
    %v749 = vshrl.u32 %v748, 7
    %v750 = vsub.s32 0, %v749
    %v751 = vrot.slane %v429, %v750
    %vm768 = vcmask 130048
    %v769 = vsel %vm768, %v530, 0
    %v771 = vsel %vm768, %v593, 0
    %773 = vmatprep.subr.mxu0 0.0
    %774 = vmatpush1.xpose.msra.mxu0 %v771
    %775 = vmatprep.subr.mxu0 0.0
    %776 = vmatpush1.xpose.msra.mxu0 0.0
    %777 = vmatprep.subr.mxu0 0.0
    %778 = vmatpush1.xpose.msra.mxu0 0.0
    %779 = vmatprep.subr.mxu0 0.0
    %780 = vmatpush1.xpose.msra.mxu0 0.0
    %781 = vmatprep.subr.mxu0 0.0
    %782 = vmatpush1.xpose.msra.mxu0 0.0
    %783 = vmatprep.subr.mxu0 0.0
    %784 = vmatpush1.xpose.msra.mxu0 0.0
    %785 = vmatprep.subr.mxu0 0.0
    %786 = vmatpush1.xpose.msra.mxu0 0.0
    %787 = vmatprep.subr.mxu0 0.0
    %788 = vmatpush1.xpose.msra.mxu0 0.0
    %789 = vmatprep.subr.mxu0 0.0
    %790 = vmatpush1.xpose.msra.mxu0 0.0
    %791 = vmatprep.subr.mxu0 0.0
    %792 = vmatpush1.xpose.msra.mxu0 0.0
    %793 = vmatprep.subr.mxu0 0.0
    %794 = vmatpush1.xpose.msra.mxu0 0.0
    %795 = vmatprep.subr.mxu0 0.0
    %796 = vmatpush1.xpose.msra.mxu0 0.0
    %797 = vmatprep.subr.mxu0 0.0
    %798 = vmatpush1.xpose.msra.mxu0 0.0
    %799 = vmatprep.subr.mxu0 0.0
    %800 = vmatpush1.xpose.msra.mxu0 0.0
    %801 = vmatprep.subr.mxu0 0.0
    %802 = vmatpush1.xpose.msra.mxu0 0.0
    %803 = vmatprep.subr.mxu0 0.0
    %804 = vmatpush1.xpose.msra.mxu0 0.0
    %805 = vmatprep.subr.mxu0 0.0
    %806 = vmatpush1.xpose.msra.mxu0 0.0
    %807 = vmatprep.subr.mxu0 0.0
    %808 = vmatpush1.xpose.msra.mxu0 0.0
    %809 = vmatprep.subr.mxu0 0.0
    %810 = vmatpush1.xpose.msra.mxu0 0.0
    %811 = vmatprep.subr.mxu0 0.0
    %812 = vmatpush1.xpose.msra.mxu0 0.0
    %813 = vmatprep.subr.mxu0 0.0
    %814 = vmatpush1.xpose.msra.mxu0 0.0
    %815 = vmatprep.subr.mxu0 0.0
    %816 = vmatpush1.xpose.msra.mxu0 0.0
    %817 = vmatprep.subr.mxu0 0.0
    %818 = vmatpush1.xpose.msra.mxu0 0.0
    %819 = vmatprep.subr.mxu0 0.0
    %820 = vmatpush1.xpose.msra.mxu0 0.0
    %821 = vmatprep.subr.mxu0 0.0
    %822 = vmatpush1.xpose.msra.mxu0 0.0
    %823 = vmatprep.subr.mxu0 0.0
    %824 = vmatpush1.xpose.msra.mxu0 0.0
    %825 = vmatprep.subr.mxu0 0.0
    %826 = vmatpush1.xpose.msra.mxu0 0.0
    %827 = vmatprep.subr.mxu0 0.0
    %828 = vmatpush1.xpose.msra.mxu0 0.0
    %829 = vmatprep.subr.mxu0 0.0
    %830 = vmatpush1.xpose.msra.mxu0 0.0
    %831 = vmatprep.subr.mxu0 0.0
    %832 = vmatpush1.xpose.msra.mxu0 0.0
    %833 = vmatprep.subr.mxu0 0.0
    %834 = vmatpush1.xpose.msra.mxu0 0.0
    %835 = vmatprep.subr.mxu0 0.0
    %836 = vmatpush1.xpose.msra.mxu0 0.0
    %837 = vmatprep.mubr.f32.mxu0 0.0
    %838 = vmatmul.mubr.f32.gmra.mrb[0].mxu0 %v769
    %v839 = vpop.f32.mrb[0].mxu0
    %v840 = vadd.f32 %v691, %v839
    %v841 = vpop.f32.mrb[0].mxu0
    %842 = vdwg.mxu0
    %v843 = vsel %vm768, %v535, 0
    %v845 = vsel %vm768, %v595, 0
    %847 = vmatprep.subr.mxu0 0.0
    %848 = vmatpush1.xpose.msra.mxu0 %v845
    %849 = vmatprep.subr.mxu0 0.0
    %850 = vmatpush1.xpose.msra.mxu0 0.0
    %851 = vmatprep.subr.mxu0 0.0
    %852 = vmatpush1.xpose.msra.mxu0 0.0
    %853 = vmatprep.subr.mxu0 0.0
    %854 = vmatpush1.xpose.msra.mxu0 0.0
    %855 = vmatprep.subr.mxu0 0.0
    %856 = vmatpush1.xpose.msra.mxu0 0.0
    %857 = vmatprep.subr.mxu0 0.0
    %858 = vmatpush1.xpose.msra.mxu0 0.0
    %859 = vmatprep.subr.mxu0 0.0
    %860 = vmatpush1.xpose.msra.mxu0 0.0
    %861 = vmatprep.subr.mxu0 0.0
    %862 = vmatpush1.xpose.msra.mxu0 0.0
    %863 = vmatprep.subr.mxu0 0.0
    %864 = vmatpush1.xpose.msra.mxu0 0.0
    %865 = vmatprep.subr.mxu0 0.0
    %866 = vmatpush1.xpose.msra.mxu0 0.0
    %867 = vmatprep.subr.mxu0 0.0
    %868 = vmatpush1.xpose.msra.mxu0 0.0
    %869 = vmatprep.subr.mxu0 0.0
    %870 = vmatpush1.xpose.msra.mxu0 0.0
    %871 = vmatprep.subr.mxu0 0.0
    %872 = vmatpush1.xpose.msra.mxu0 0.0
    %873 = vmatprep.subr.mxu0 0.0
    %874 = vmatpush1.xpose.msra.mxu0 0.0
    %875 = vmatprep.subr.mxu0 0.0
    %876 = vmatpush1.xpose.msra.mxu0 0.0
    %877 = vmatprep.subr.mxu0 0.0
    %878 = vmatpush1.xpose.msra.mxu0 0.0
    %879 = vmatprep.subr.mxu0 0.0
    %880 = vmatpush1.xpose.msra.mxu0 0.0
    %881 = vmatprep.subr.mxu0 0.0
    %882 = vmatpush1.xpose.msra.mxu0 0.0
    %883 = vmatprep.subr.mxu0 0.0
    %884 = vmatpush1.xpose.msra.mxu0 0.0
    %885 = vmatprep.subr.mxu0 0.0
    %886 = vmatpush1.xpose.msra.mxu0 0.0
    %887 = vmatprep.subr.mxu0 0.0
    %888 = vmatpush1.xpose.msra.mxu0 0.0
    %889 = vmatprep.subr.mxu0 0.0
    %890 = vmatpush1.xpose.msra.mxu0 0.0
    %891 = vmatprep.subr.mxu0 0.0
    %892 = vmatpush1.xpose.msra.mxu0 0.0
    %893 = vmatprep.subr.mxu0 0.0
    %894 = vmatpush1.xpose.msra.mxu0 0.0
    %895 = vmatprep.subr.mxu0 0.0
    %896 = vmatpush1.xpose.msra.mxu0 0.0
    %897 = vmatprep.subr.mxu0 0.0
    %898 = vmatpush1.xpose.msra.mxu0 0.0
    %899 = vmatprep.subr.mxu0 0.0
    %900 = vmatpush1.xpose.msra.mxu0 0.0
    %901 = vmatprep.subr.mxu0 0.0
    %902 = vmatpush1.xpose.msra.mxu0 0.0
    %903 = vmatprep.subr.mxu0 0.0
    %904 = vmatpush1.xpose.msra.mxu0 0.0
    %905 = vmatprep.subr.mxu0 0.0
    %906 = vmatpush1.xpose.msra.mxu0 0.0
    %907 = vmatprep.subr.mxu0 0.0
    %908 = vmatpush1.xpose.msra.mxu0 0.0
    %909 = vmatprep.subr.mxu0 0.0
    %910 = vmatpush1.xpose.msra.mxu0 0.0
    %911 = vmatprep.mubr.f32.mxu0 0.0
    %912 = vmatmul.mubr.f32.gmra.mrb[0].mxu0 %v843
    %v913 = vpop.f32.mrb[0].mxu0
    %v914 = vadd.f32 %v695, %v913
    %v915 = vpop.f32.mrb[0].mxu0
    %916 = vdwg.mxu0
    %v917 = vsel %vm768, %v540, 0
    %v919 = vsel %vm768, %v597, 0
    %921 = vmatprep.subr.mxu0 0.0
    %922 = vmatpush1.xpose.msra.mxu0 %v919
    %923 = vmatprep.subr.mxu0 0.0
    %924 = vmatpush1.xpose.msra.mxu0 0.0
    %925 = vmatprep.subr.mxu0 0.0
    %926 = vmatpush1.xpose.msra.mxu0 0.0
    %927 = vmatprep.subr.mxu0 0.0
    %928 = vmatpush1.xpose.msra.mxu0 0.0
    %929 = vmatprep.subr.mxu0 0.0
    %930 = vmatpush1.xpose.msra.mxu0 0.0
    %931 = vmatprep.subr.mxu0 0.0
    %932 = vmatpush1.xpose.msra.mxu0 0.0
    %933 = vmatprep.subr.mxu0 0.0
    %934 = vmatpush1.xpose.msra.mxu0 0.0
    %935 = vmatprep.subr.mxu0 0.0
    %936 = vmatpush1.xpose.msra.mxu0 0.0
    %937 = vmatprep.subr.mxu0 0.0
    %938 = vmatpush1.xpose.msra.mxu0 0.0
    %939 = vmatprep.subr.mxu0 0.0
    %940 = vmatpush1.xpose.msra.mxu0 0.0
    %941 = vmatprep.subr.mxu0 0.0
    %942 = vmatpush1.xpose.msra.mxu0 0.0
    %943 = vmatprep.subr.mxu0 0.0
    %944 = vmatpush1.xpose.msra.mxu0 0.0
    %945 = vmatprep.subr.mxu0 0.0
    %946 = vmatpush1.xpose.msra.mxu0 0.0
    %947 = vmatprep.subr.mxu0 0.0
    %948 = vmatpush1.xpose.msra.mxu0 0.0
    %949 = vmatprep.subr.mxu0 0.0
    %950 = vmatpush1.xpose.msra.mxu0 0.0
    %951 = vmatprep.subr.mxu0 0.0
    %952 = vmatpush1.xpose.msra.mxu0 0.0
    %953 = vmatprep.subr.mxu0 0.0
    %954 = vmatpush1.xpose.msra.mxu0 0.0
    %955 = vmatprep.subr.mxu0 0.0
    %956 = vmatpush1.xpose.msra.mxu0 0.0
    %957 = vmatprep.subr.mxu0 0.0
    %958 = vmatpush1.xpose.msra.mxu0 0.0
    %959 = vmatprep.subr.mxu0 0.0
    %960 = vmatpush1.xpose.msra.mxu0 0.0
    %961 = vmatprep.subr.mxu0 0.0
    %962 = vmatpush1.xpose.msra.mxu0 0.0
    %963 = vmatprep.subr.mxu0 0.0
    %964 = vmatpush1.xpose.msra.mxu0 0.0
    %965 = vmatprep.subr.mxu0 0.0
    %966 = vmatpush1.xpose.msra.mxu0 0.0
    %967 = vmatprep.subr.mxu0 0.0
    %968 = vmatpush1.xpose.msra.mxu0 0.0
    %969 = vmatprep.subr.mxu0 0.0
    %970 = vmatpush1.xpose.msra.mxu0 0.0
    %971 = vmatprep.subr.mxu0 0.0
    %972 = vmatpush1.xpose.msra.mxu0 0.0
    %973 = vmatprep.subr.mxu0 0.0
    %974 = vmatpush1.xpose.msra.mxu0 0.0
    %975 = vmatprep.subr.mxu0 0.0
    %976 = vmatpush1.xpose.msra.mxu0 0.0
    %977 = vmatprep.subr.mxu0 0.0
    %978 = vmatpush1.xpose.msra.mxu0 0.0
    %979 = vmatprep.subr.mxu0 0.0
    %980 = vmatpush1.xpose.msra.mxu0 0.0
    %981 = vmatprep.subr.mxu0 0.0
    %982 = vmatpush1.xpose.msra.mxu0 0.0
    %983 = vmatprep.subr.mxu0 0.0
    %984 = vmatpush1.xpose.msra.mxu0 0.0
    %985 = vmatprep.mubr.f32.mxu0 0.0
    %986 = vmatmul.mubr.f32.gmra.mrb[0].mxu0 %v917
    %v987 = vpop.f32.mrb[0].mxu0
    %v988 = vadd.f32 %v699, %v987
    %v989 = vpop.f32.mrb[0].mxu0
    %990 = vdwg.mxu0
    %v991 = vsel %vm768, %v545, 0
    %v993 = vsel %vm768, %v599, 0
    %995 = vmatprep.subr.mxu0 0.0
    %996 = vmatpush1.xpose.msra.mxu0 %v993
    %997 = vmatprep.subr.mxu0 0.0
    %998 = vmatpush1.xpose.msra.mxu0 0.0
    %999 = vmatprep.subr.mxu0 0.0
    %1000 = vmatpush1.xpose.msra.mxu0 0.0
    %1001 = vmatprep.subr.mxu0 0.0
    %1002 = vmatpush1.xpose.msra.mxu0 0.0
    %1003 = vmatprep.subr.mxu0 0.0
    %1004 = vmatpush1.xpose.msra.mxu0 0.0
    %1005 = vmatprep.subr.mxu0 0.0
    %1006 = vmatpush1.xpose.msra.mxu0 0.0
    %1007 = vmatprep.subr.mxu0 0.0
    %1008 = vmatpush1.xpose.msra.mxu0 0.0
    %1009 = vmatprep.subr.mxu0 0.0
    %1010 = vmatpush1.xpose.msra.mxu0 0.0
    %1011 = vmatprep.subr.mxu0 0.0
    %1012 = vmatpush1.xpose.msra.mxu0 0.0
    %1013 = vmatprep.subr.mxu0 0.0
    %1014 = vmatpush1.xpose.msra.mxu0 0.0
    %1015 = vmatprep.subr.mxu0 0.0
    %1016 = vmatpush1.xpose.msra.mxu0 0.0
    %1017 = vmatprep.subr.mxu0 0.0
    %1018 = vmatpush1.xpose.msra.mxu0 0.0
    %1019 = vmatprep.subr.mxu0 0.0
    %1020 = vmatpush1.xpose.msra.mxu0 0.0
    %1021 = vmatprep.subr.mxu0 0.0
    %1022 = vmatpush1.xpose.msra.mxu0 0.0
    %1023 = vmatprep.subr.mxu0 0.0
    %1024 = vmatpush1.xpose.msra.mxu0 0.0
    %1025 = vmatprep.subr.mxu0 0.0
    %1026 = vmatpush1.xpose.msra.mxu0 0.0
    %1027 = vmatprep.subr.mxu0 0.0
    %1028 = vmatpush1.xpose.msra.mxu0 0.0
    %1029 = vmatprep.subr.mxu0 0.0
    %1030 = vmatpush1.xpose.msra.mxu0 0.0
    %1031 = vmatprep.subr.mxu0 0.0
    %1032 = vmatpush1.xpose.msra.mxu0 0.0
    %1033 = vmatprep.subr.mxu0 0.0
    %1034 = vmatpush1.xpose.msra.mxu0 0.0
    %1035 = vmatprep.subr.mxu0 0.0
    %1036 = vmatpush1.xpose.msra.mxu0 0.0
    %1037 = vmatprep.subr.mxu0 0.0
    %1038 = vmatpush1.xpose.msra.mxu0 0.0
    %1039 = vmatprep.subr.mxu0 0.0
    %1040 = vmatpush1.xpose.msra.mxu0 0.0
    %1041 = vmatprep.subr.mxu0 0.0
    %1042 = vmatpush1.xpose.msra.mxu0 0.0
    %1043 = vmatprep.subr.mxu0 0.0
    %1044 = vmatpush1.xpose.msra.mxu0 0.0
    %1045 = vmatprep.subr.mxu0 0.0
    %1046 = vmatpush1.xpose.msra.mxu0 0.0
    %1047 = vmatprep.subr.mxu0 0.0
    %1048 = vmatpush1.xpose.msra.mxu0 0.0
    %1049 = vmatprep.subr.mxu0 0.0
    %1050 = vmatpush1.xpose.msra.mxu0 0.0
    %1051 = vmatprep.subr.mxu0 0.0
    %1052 = vmatpush1.xpose.msra.mxu0 0.0
    %1053 = vmatprep.subr.mxu0 0.0
    %1054 = vmatpush1.xpose.msra.mxu0 0.0
    %1055 = vmatprep.subr.mxu0 0.0
    %1056 = vmatpush1.xpose.msra.mxu0 0.0
    %1057 = vmatprep.subr.mxu0 0.0
    %1058 = vmatpush1.xpose.msra.mxu0 0.0
    %1059 = vmatprep.mubr.f32.mxu0 0.0
    %1060 = vmatmul.mubr.f32.gmra.mrb[0].mxu0 %v991
    %v1061 = vpop.f32.mrb[0].mxu0
    %v1062 = vadd.f32 %v703, %v1061
    %v1063 = vpop.f32.mrb[0].mxu0
    %1064 = vdwg.mxu0
    %v1065 = vsel %vm768, %v550, 0
    %v1067 = vsel %vm768, %v601, 0
    %1069 = vmatprep.subr.mxu0 0.0
    %1070 = vmatpush1.xpose.msra.mxu0 %v1067
    %1071 = vmatprep.subr.mxu0 0.0
    %1072 = vmatpush1.xpose.msra.mxu0 0.0
    %1073 = vmatprep.subr.mxu0 0.0
    %1074 = vmatpush1.xpose.msra.mxu0 0.0
    %1075 = vmatprep.subr.mxu0 0.0
    %1076 = vmatpush1.xpose.msra.mxu0 0.0
    %1077 = vmatprep.subr.mxu0 0.0
    %1078 = vmatpush1.xpose.msra.mxu0 0.0
    %1079 = vmatprep.subr.mxu0 0.0
    %1080 = vmatpush1.xpose.msra.mxu0 0.0
    %1081 = vmatprep.subr.mxu0 0.0
    %1082 = vmatpush1.xpose.msra.mxu0 0.0
    %1083 = vmatprep.subr.mxu0 0.0
    %1084 = vmatpush1.xpose.msra.mxu0 0.0
    %1085 = vmatprep.subr.mxu0 0.0
    %1086 = vmatpush1.xpose.msra.mxu0 0.0
    %1087 = vmatprep.subr.mxu0 0.0
    %1088 = vmatpush1.xpose.msra.mxu0 0.0
    %1089 = vmatprep.subr.mxu0 0.0
    %1090 = vmatpush1.xpose.msra.mxu0 0.0
    %1091 = vmatprep.subr.mxu0 0.0
    %1092 = vmatpush1.xpose.msra.mxu0 0.0
    %1093 = vmatprep.subr.mxu0 0.0
    %1094 = vmatpush1.xpose.msra.mxu0 0.0
    %1095 = vmatprep.subr.mxu0 0.0
    %1096 = vmatpush1.xpose.msra.mxu0 0.0
    %1097 = vmatprep.subr.mxu0 0.0
    %1098 = vmatpush1.xpose.msra.mxu0 0.0
    %1099 = vmatprep.subr.mxu0 0.0
    %1100 = vmatpush1.xpose.msra.mxu0 0.0
    %1101 = vmatprep.subr.mxu0 0.0
    %1102 = vmatpush1.xpose.msra.mxu0 0.0
    %1103 = vmatprep.subr.mxu0 0.0
    %1104 = vmatpush1.xpose.msra.mxu0 0.0
    %1105 = vmatprep.subr.mxu0 0.0
    %1106 = vmatpush1.xpose.msra.mxu0 0.0
    %1107 = vmatprep.subr.mxu0 0.0
    %1108 = vmatpush1.xpose.msra.mxu0 0.0
    %1109 = vmatprep.subr.mxu0 0.0
    %1110 = vmatpush1.xpose.msra.mxu0 0.0
    %1111 = vmatprep.subr.mxu0 0.0
    %1112 = vmatpush1.xpose.msra.mxu0 0.0
    %1113 = vmatprep.subr.mxu0 0.0
    %1114 = vmatpush1.xpose.msra.mxu0 0.0
    %1115 = vmatprep.subr.mxu0 0.0
    %1116 = vmatpush1.xpose.msra.mxu0 0.0
    %1117 = vmatprep.subr.mxu0 0.0
    %1118 = vmatpush1.xpose.msra.mxu0 0.0
    %1119 = vmatprep.subr.mxu0 0.0
    %1120 = vmatpush1.xpose.msra.mxu0 0.0
    %1121 = vmatprep.subr.mxu0 0.0
    %1122 = vmatpush1.xpose.msra.mxu0 0.0
    %1123 = vmatprep.subr.mxu0 0.0
    %1124 = vmatpush1.xpose.msra.mxu0 0.0
    %1125 = vmatprep.subr.mxu0 0.0
    %1126 = vmatpush1.xpose.msra.mxu0 0.0
    %1127 = vmatprep.subr.mxu0 0.0
    %1128 = vmatpush1.xpose.msra.mxu0 0.0
    %1129 = vmatprep.subr.mxu0 0.0
    %1130 = vmatpush1.xpose.msra.mxu0 0.0
    %1131 = vmatprep.subr.mxu0 0.0
    %1132 = vmatpush1.xpose.msra.mxu0 0.0
    %1133 = vmatprep.mubr.f32.mxu0 0.0
    %1134 = vmatmul.mubr.f32.gmra.mrb[0].mxu0 %v1065
    %v1135 = vpop.f32.mrb[0].mxu0
    %v1136 = vadd.f32 %v707, %v1135
    %v1137 = vpop.f32.mrb[0].mxu0
    %1138 = vdwg.mxu0
    %v1139 = vsel %vm768, %v555, 0
    %v1141 = vsel %vm768, %v603, 0
    %1143 = vmatprep.subr.mxu0 0.0
    %1144 = vmatpush1.xpose.msra.mxu0 %v1141
    %1145 = vmatprep.subr.mxu0 0.0
    %1146 = vmatpush1.xpose.msra.mxu0 0.0
    %1147 = vmatprep.subr.mxu0 0.0
    %1148 = vmatpush1.xpose.msra.mxu0 0.0
    %1149 = vmatprep.subr.mxu0 0.0
    %1150 = vmatpush1.xpose.msra.mxu0 0.0
    %1151 = vmatprep.subr.mxu0 0.0
    %1152 = vmatpush1.xpose.msra.mxu0 0.0
    %1153 = vmatprep.subr.mxu0 0.0
    %1154 = vmatpush1.xpose.msra.mxu0 0.0
    %1155 = vmatprep.subr.mxu0 0.0
    %1156 = vmatpush1.xpose.msra.mxu0 0.0
    %1157 = vmatprep.subr.mxu0 0.0
    %1158 = vmatpush1.xpose.msra.mxu0 0.0
    %1159 = vmatprep.subr.mxu0 0.0
    %1160 = vmatpush1.xpose.msra.mxu0 0.0
    %1161 = vmatprep.subr.mxu0 0.0
    %1162 = vmatpush1.xpose.msra.mxu0 0.0
    %1163 = vmatprep.subr.mxu0 0.0
    %1164 = vmatpush1.xpose.msra.mxu0 0.0
    %1165 = vmatprep.subr.mxu0 0.0
    %1166 = vmatpush1.xpose.msra.mxu0 0.0
    %1167 = vmatprep.subr.mxu0 0.0
    %1168 = vmatpush1.xpose.msra.mxu0 0.0
    %1169 = vmatprep.subr.mxu0 0.0
    %1170 = vmatpush1.xpose.msra.mxu0 0.0
    %1171 = vmatprep.subr.mxu0 0.0
    %1172 = vmatpush1.xpose.msra.mxu0 0.0
    %1173 = vmatprep.subr.mxu0 0.0
    %1174 = vmatpush1.xpose.msra.mxu0 0.0
    %1175 = vmatprep.subr.mxu0 0.0
    %1176 = vmatpush1.xpose.msra.mxu0 0.0
    %1177 = vmatprep.subr.mxu0 0.0
    %1178 = vmatpush1.xpose.msra.mxu0 0.0
    %1179 = vmatprep.subr.mxu0 0.0
    %1180 = vmatpush1.xpose.msra.mxu0 0.0
    %1181 = vmatprep.subr.mxu0 0.0
    %1182 = vmatpush1.xpose.msra.mxu0 0.0
    %1183 = vmatprep.subr.mxu0 0.0
    %1184 = vmatpush1.xpose.msra.mxu0 0.0
    %1185 = vmatprep.subr.mxu0 0.0
    %1186 = vmatpush1.xpose.msra.mxu0 0.0
    %1187 = vmatprep.subr.mxu0 0.0
    %1188 = vmatpush1.xpose.msra.mxu0 0.0
    %1189 = vmatprep.subr.mxu0 0.0
    %1190 = vmatpush1.xpose.msra.mxu0 0.0
    %1191 = vmatprep.subr.mxu0 0.0
    %1192 = vmatpush1.xpose.msra.mxu0 0.0
    %1193 = vmatprep.subr.mxu0 0.0
    %1194 = vmatpush1.xpose.msra.mxu0 0.0
    %1195 = vmatprep.subr.mxu0 0.0
    %1196 = vmatpush1.xpose.msra.mxu0 0.0
    %1197 = vmatprep.subr.mxu0 0.0
    %1198 = vmatpush1.xpose.msra.mxu0 0.0
    %1199 = vmatprep.subr.mxu0 0.0
    %1200 = vmatpush1.xpose.msra.mxu0 0.0
    %1201 = vmatprep.subr.mxu0 0.0
    %1202 = vmatpush1.xpose.msra.mxu0 0.0
    %1203 = vmatprep.subr.mxu0 0.0
    %1204 = vmatpush1.xpose.msra.mxu0 0.0
    %1205 = vmatprep.subr.mxu0 0.0
    %1206 = vmatpush1.xpose.msra.mxu0 0.0
    %1207 = vmatprep.mubr.f32.mxu0 0.0
    %1208 = vmatmul.mubr.f32.gmra.mrb[0].mxu0 %v1139
    %v1209 = vpop.f32.mrb[0].mxu0
    %v1210 = vadd.f32 %v711, %v1209
    %v1211 = vpop.f32.mrb[0].mxu0
    %1212 = vdwg.mxu0
    %v1213 = vsel %vm768, %v560, 0
    %v1215 = vsel %vm768, %v605, 0
    %1217 = vmatprep.subr.mxu0 0.0
    %1218 = vmatpush1.xpose.msra.mxu0 %v1215
    %1219 = vmatprep.subr.mxu0 0.0
    %1220 = vmatpush1.xpose.msra.mxu0 0.0
    %1221 = vmatprep.subr.mxu0 0.0
    %1222 = vmatpush1.xpose.msra.mxu0 0.0
    %1223 = vmatprep.subr.mxu0 0.0
    %1224 = vmatpush1.xpose.msra.mxu0 0.0
    %1225 = vmatprep.subr.mxu0 0.0
    %1226 = vmatpush1.xpose.msra.mxu0 0.0
    %1227 = vmatprep.subr.mxu0 0.0
    %1228 = vmatpush1.xpose.msra.mxu0 0.0
    %1229 = vmatprep.subr.mxu0 0.0
    %1230 = vmatpush1.xpose.msra.mxu0 0.0
    %1231 = vmatprep.subr.mxu0 0.0
    %1232 = vmatpush1.xpose.msra.mxu0 0.0
    %1233 = vmatprep.subr.mxu0 0.0
    %1234 = vmatpush1.xpose.msra.mxu0 0.0
    %1235 = vmatprep.subr.mxu0 0.0
    %1236 = vmatpush1.xpose.msra.mxu0 0.0
    %1237 = vmatprep.subr.mxu0 0.0
    %1238 = vmatpush1.xpose.msra.mxu0 0.0
    %1239 = vmatprep.subr.mxu0 0.0
    %1240 = vmatpush1.xpose.msra.mxu0 0.0
    %1241 = vmatprep.subr.mxu0 0.0
    %1242 = vmatpush1.xpose.msra.mxu0 0.0
    %1243 = vmatprep.subr.mxu0 0.0
    %1244 = vmatpush1.xpose.msra.mxu0 0.0
    %1245 = vmatprep.subr.mxu0 0.0
    %1246 = vmatpush1.xpose.msra.mxu0 0.0
    %1247 = vmatprep.subr.mxu0 0.0
    %1248 = vmatpush1.xpose.msra.mxu0 0.0
    %1249 = vmatprep.subr.mxu0 0.0
    %1250 = vmatpush1.xpose.msra.mxu0 0.0
    %1251 = vmatprep.subr.mxu0 0.0
    %1252 = vmatpush1.xpose.msra.mxu0 0.0
    %1253 = vmatprep.subr.mxu0 0.0
    %1254 = vmatpush1.xpose.msra.mxu0 0.0
    %1255 = vmatprep.subr.mxu0 0.0
    %1256 = vmatpush1.xpose.msra.mxu0 0.0
    %1257 = vmatprep.subr.mxu0 0.0
    %1258 = vmatpush1.xpose.msra.mxu0 0.0
    %1259 = vmatprep.subr.mxu0 0.0
    %1260 = vmatpush1.xpose.msra.mxu0 0.0
    %1261 = vmatprep.subr.mxu0 0.0
    %1262 = vmatpush1.xpose.msra.mxu0 0.0
    %1263 = vmatprep.subr.mxu0 0.0
    %1264 = vmatpush1.xpose.msra.mxu0 0.0
    %1265 = vmatprep.subr.mxu0 0.0
    %1266 = vmatpush1.xpose.msra.mxu0 0.0
    %1267 = vmatprep.subr.mxu0 0.0
    %1268 = vmatpush1.xpose.msra.mxu0 0.0
    %1269 = vmatprep.subr.mxu0 0.0
    %1270 = vmatpush1.xpose.msra.mxu0 0.0
    %1271 = vmatprep.subr.mxu0 0.0
    %1272 = vmatpush1.xpose.msra.mxu0 0.0
    %1273 = vmatprep.subr.mxu0 0.0
    %1274 = vmatpush1.xpose.msra.mxu0 0.0
    %1275 = vmatprep.subr.mxu0 0.0
    %1276 = vmatpush1.xpose.msra.mxu0 0.0
    %1277 = vmatprep.subr.mxu0 0.0
    %1278 = vmatpush1.xpose.msra.mxu0 0.0
    %1279 = vmatprep.subr.mxu0 0.0
    %1280 = vmatpush1.xpose.msra.mxu0 0.0
    %1281 = vmatprep.mubr.f32.mxu0 0.0
    %1282 = vmatmul.mubr.f32.gmra.mrb[0].mxu0 %v1213
    %v1283 = vpop.f32.mrb[0].mxu0
    %v1284 = vadd.f32 %v715, %v1283
    %v1285 = vpop.f32.mrb[0].mxu0
    %1286 = vdwg.mxu0
    %v1287 = vsel %vm768, %v565, 0
    %v1289 = vsel %vm768, %v607, 0
    %1291 = vmatprep.subr.mxu0 0.0
    %1292 = vmatpush1.xpose.msra.mxu0 %v1289
    %1293 = vmatprep.subr.mxu0 0.0
    %1294 = vmatpush1.xpose.msra.mxu0 0.0
    %1295 = vmatprep.subr.mxu0 0.0
    %1296 = vmatpush1.xpose.msra.mxu0 0.0
    %1297 = vmatprep.subr.mxu0 0.0
    %1298 = vmatpush1.xpose.msra.mxu0 0.0
    %1299 = vmatprep.subr.mxu0 0.0
    %1300 = vmatpush1.xpose.msra.mxu0 0.0
    %1301 = vmatprep.subr.mxu0 0.0
    %1302 = vmatpush1.xpose.msra.mxu0 0.0
    %1303 = vmatprep.subr.mxu0 0.0
    %1304 = vmatpush1.xpose.msra.mxu0 0.0
    %1305 = vmatprep.subr.mxu0 0.0
    %1306 = vmatpush1.xpose.msra.mxu0 0.0
    %1307 = vmatprep.subr.mxu0 0.0
    %1308 = vmatpush1.xpose.msra.mxu0 0.0
    %1309 = vmatprep.subr.mxu0 0.0
    %1310 = vmatpush1.xpose.msra.mxu0 0.0
    %1311 = vmatprep.subr.mxu0 0.0
    %1312 = vmatpush1.xpose.msra.mxu0 0.0
    %1313 = vmatprep.subr.mxu0 0.0
    %1314 = vmatpush1.xpose.msra.mxu0 0.0
    %1315 = vmatprep.subr.mxu0 0.0
    %1316 = vmatpush1.xpose.msra.mxu0 0.0
    %1317 = vmatprep.subr.mxu0 0.0
    %1318 = vmatpush1.xpose.msra.mxu0 0.0
    %1319 = vmatprep.subr.mxu0 0.0
    %1320 = vmatpush1.xpose.msra.mxu0 0.0
    %1321 = vmatprep.subr.mxu0 0.0
    %1322 = vmatpush1.xpose.msra.mxu0 0.0
    %1323 = vmatprep.subr.mxu0 0.0
    %1324 = vmatpush1.xpose.msra.mxu0 0.0
    %1325 = vmatprep.subr.mxu0 0.0
    %1326 = vmatpush1.xpose.msra.mxu0 0.0
    %1327 = vmatprep.subr.mxu0 0.0
    %1328 = vmatpush1.xpose.msra.mxu0 0.0
    %1329 = vmatprep.subr.mxu0 0.0
    %1330 = vmatpush1.xpose.msra.mxu0 0.0
    %1331 = vmatprep.subr.mxu0 0.0
    %1332 = vmatpush1.xpose.msra.mxu0 0.0
    %1333 = vmatprep.subr.mxu0 0.0
    %1334 = vmatpush1.xpose.msra.mxu0 0.0
    %1335 = vmatprep.subr.mxu0 0.0
    %1336 = vmatpush1.xpose.msra.mxu0 0.0
    %1337 = vmatprep.subr.mxu0 0.0
    %1338 = vmatpush1.xpose.msra.mxu0 0.0
    %1339 = vmatprep.subr.mxu0 0.0
    %1340 = vmatpush1.xpose.msra.mxu0 0.0
    %1341 = vmatprep.subr.mxu0 0.0
    %1342 = vmatpush1.xpose.msra.mxu0 0.0
    %1343 = vmatprep.subr.mxu0 0.0
    %1344 = vmatpush1.xpose.msra.mxu0 0.0
    %1345 = vmatprep.subr.mxu0 0.0
    %1346 = vmatpush1.xpose.msra.mxu0 0.0
    %1347 = vmatprep.subr.mxu0 0.0
    %1348 = vmatpush1.xpose.msra.mxu0 0.0
    %1349 = vmatprep.subr.mxu0 0.0
    %1350 = vmatpush1.xpose.msra.mxu0 0.0
    %1351 = vmatprep.subr.mxu0 0.0
    %1352 = vmatpush1.xpose.msra.mxu0 0.0
    %1353 = vmatprep.subr.mxu0 0.0
    %1354 = vmatpush1.xpose.msra.mxu0 0.0
    %1355 = vmatprep.mubr.f32.mxu0 0.0
    %1356 = vmatmul.mubr.f32.gmra.mrb[0].mxu0 %v1287
    %v1357 = vpop.f32.mrb[0].mxu0
    %v1358 = vadd.f32 %v719, %v1357
    %v1359 = vpop.f32.mrb[0].mxu0
    %1360 = vdwg.mxu0
    %v1361 = vsel %vm768, %v577, 0
    %v1363 = vsel %vm768, %v609, 0
    %1365 = vmatprep.subr.mxu0 0.0
    %1366 = vmatpush1.xpose.msra.mxu0 %v1363
    %1367 = vmatprep.subr.mxu0 0.0
    %1368 = vmatpush1.xpose.msra.mxu0 0.0
    %1369 = vmatprep.subr.mxu0 0.0
    %1370 = vmatpush1.xpose.msra.mxu0 0.0
    %1371 = vmatprep.subr.mxu0 0.0
    %1372 = vmatpush1.xpose.msra.mxu0 0.0
    %1373 = vmatprep.subr.mxu0 0.0
    %1374 = vmatpush1.xpose.msra.mxu0 0.0
    %1375 = vmatprep.subr.mxu0 0.0
    %1376 = vmatpush1.xpose.msra.mxu0 0.0
    %1377 = vmatprep.subr.mxu0 0.0
    %1378 = vmatpush1.xpose.msra.mxu0 0.0
    %1379 = vmatprep.subr.mxu0 0.0
    %1380 = vmatpush1.xpose.msra.mxu0 0.0
    %1381 = vmatprep.subr.mxu0 0.0
    %1382 = vmatpush1.xpose.msra.mxu0 0.0
    %1383 = vmatprep.subr.mxu0 0.0
    %1384 = vmatpush1.xpose.msra.mxu0 0.0
    %1385 = vmatprep.subr.mxu0 0.0
    %1386 = vmatpush1.xpose.msra.mxu0 0.0
    %1387 = vmatprep.subr.mxu0 0.0
    %1388 = vmatpush1.xpose.msra.mxu0 0.0
    %1389 = vmatprep.subr.mxu0 0.0
    %1390 = vmatpush1.xpose.msra.mxu0 0.0
    %1391 = vmatprep.subr.mxu0 0.0
    %1392 = vmatpush1.xpose.msra.mxu0 0.0
    %1393 = vmatprep.subr.mxu0 0.0
    %1394 = vmatpush1.xpose.msra.mxu0 0.0
    %1395 = vmatprep.subr.mxu0 0.0
    %1396 = vmatpush1.xpose.msra.mxu0 0.0
    %1397 = vmatprep.subr.mxu0 0.0
    %1398 = vmatpush1.xpose.msra.mxu0 0.0
    %1399 = vmatprep.subr.mxu0 0.0
    %1400 = vmatpush1.xpose.msra.mxu0 0.0
    %1401 = vmatprep.subr.mxu0 0.0
    %1402 = vmatpush1.xpose.msra.mxu0 0.0
    %1403 = vmatprep.subr.mxu0 0.0
    %1404 = vmatpush1.xpose.msra.mxu0 0.0
    %1405 = vmatprep.subr.mxu0 0.0
    %1406 = vmatpush1.xpose.msra.mxu0 0.0
    %1407 = vmatprep.subr.mxu0 0.0
    %1408 = vmatpush1.xpose.msra.mxu0 0.0
    %1409 = vmatprep.subr.mxu0 0.0
    %1410 = vmatpush1.xpose.msra.mxu0 0.0
    %1411 = vmatprep.subr.mxu0 0.0
    %1412 = vmatpush1.xpose.msra.mxu0 0.0
    %1413 = vmatprep.subr.mxu0 0.0
    %1414 = vmatpush1.xpose.msra.mxu0 0.0
    %1415 = vmatprep.subr.mxu0 0.0
    %1416 = vmatpush1.xpose.msra.mxu0 0.0
    %1417 = vmatprep.subr.mxu0 0.0
    %1418 = vmatpush1.xpose.msra.mxu0 0.0
    %1419 = vmatprep.subr.mxu0 0.0
    %1420 = vmatpush1.xpose.msra.mxu0 0.0
    %1421 = vmatprep.subr.mxu0 0.0
    %1422 = vmatpush1.xpose.msra.mxu0 0.0
    %1423 = vmatprep.subr.mxu0 0.0
    %1424 = vmatpush1.xpose.msra.mxu0 0.0
    %1425 = vmatprep.subr.mxu0 0.0
    %1426 = vmatpush1.xpose.msra.mxu0 0.0
    %1427 = vmatprep.subr.mxu0 0.0
    %1428 = vmatpush1.xpose.msra.mxu0 0.0
    %1429 = vmatprep.mubr.f32.mxu0 0.0
    %1430 = vmatmul.mubr.f32.gmra.mrb[0].mxu0 %v1361
    %v1431 = vpop.f32.mrb[0].mxu0
    %v1432 = vadd.f32 %v723, %v1431
    %v1433 = vpop.f32.mrb[0].mxu0
    %1434 = vdwg.mxu0
    %v1435 = vsel %vm768, %v579, 0
    %v1437 = vsel %vm768, %v611, 0
    %1439 = vmatprep.subr.mxu0 0.0
    %1440 = vmatpush1.xpose.msra.mxu0 %v1437
    %1441 = vmatprep.subr.mxu0 0.0
    %1442 = vmatpush1.xpose.msra.mxu0 0.0
    %1443 = vmatprep.subr.mxu0 0.0
    %1444 = vmatpush1.xpose.msra.mxu0 0.0
    %1445 = vmatprep.subr.mxu0 0.0
    %1446 = vmatpush1.xpose.msra.mxu0 0.0
    %1447 = vmatprep.subr.mxu0 0.0
    %1448 = vmatpush1.xpose.msra.mxu0 0.0
    %1449 = vmatprep.subr.mxu0 0.0
    %1450 = vmatpush1.xpose.msra.mxu0 0.0
    %1451 = vmatprep.subr.mxu0 0.0
    %1452 = vmatpush1.xpose.msra.mxu0 0.0
    %1453 = vmatprep.subr.mxu0 0.0
    %1454 = vmatpush1.xpose.msra.mxu0 0.0
    %1455 = vmatprep.subr.mxu0 0.0
    %1456 = vmatpush1.xpose.msra.mxu0 0.0
    %1457 = vmatprep.subr.mxu0 0.0
    %1458 = vmatpush1.xpose.msra.mxu0 0.0
    %1459 = vmatprep.subr.mxu0 0.0
    %1460 = vmatpush1.xpose.msra.mxu0 0.0
    %1461 = vmatprep.subr.mxu0 0.0
    %1462 = vmatpush1.xpose.msra.mxu0 0.0
    %1463 = vmatprep.subr.mxu0 0.0
    %1464 = vmatpush1.xpose.msra.mxu0 0.0
    %1465 = vmatprep.subr.mxu0 0.0
    %1466 = vmatpush1.xpose.msra.mxu0 0.0
    %1467 = vmatprep.subr.mxu0 0.0
    %1468 = vmatpush1.xpose.msra.mxu0 0.0
    %1469 = vmatprep.subr.mxu0 0.0
    %1470 = vmatpush1.xpose.msra.mxu0 0.0
    %1471 = vmatprep.subr.mxu0 0.0
    %1472 = vmatpush1.xpose.msra.mxu0 0.0
    %1473 = vmatprep.subr.mxu0 0.0
    %1474 = vmatpush1.xpose.msra.mxu0 0.0
    %1475 = vmatprep.subr.mxu0 0.0
    %1476 = vmatpush1.xpose.msra.mxu0 0.0
    %1477 = vmatprep.subr.mxu0 0.0
    %1478 = vmatpush1.xpose.msra.mxu0 0.0
    %1479 = vmatprep.subr.mxu0 0.0
    %1480 = vmatpush1.xpose.msra.mxu0 0.0
    %1481 = vmatprep.subr.mxu0 0.0
    %1482 = vmatpush1.xpose.msra.mxu0 0.0
    %1483 = vmatprep.subr.mxu0 0.0
    %1484 = vmatpush1.xpose.msra.mxu0 0.0
    %1485 = vmatprep.subr.mxu0 0.0
    %1486 = vmatpush1.xpose.msra.mxu0 0.0
    %1487 = vmatprep.subr.mxu0 0.0
    %1488 = vmatpush1.xpose.msra.mxu0 0.0
    %1489 = vmatprep.subr.mxu0 0.0
    %1490 = vmatpush1.xpose.msra.mxu0 0.0
    %1491 = vmatprep.subr.mxu0 0.0
    %1492 = vmatpush1.xpose.msra.mxu0 0.0
    %1493 = vmatprep.subr.mxu0 0.0
    %1494 = vmatpush1.xpose.msra.mxu0 0.0
    %1495 = vmatprep.subr.mxu0 0.0
    %1496 = vmatpush1.xpose.msra.mxu0 0.0
    %1497 = vmatprep.subr.mxu0 0.0
    %1498 = vmatpush1.xpose.msra.mxu0 0.0
    %1499 = vmatprep.subr.mxu0 0.0
    %1500 = vmatpush1.xpose.msra.mxu0 0.0
    %1501 = vmatprep.subr.mxu0 0.0
    %1502 = vmatpush1.xpose.msra.mxu0 0.0
    %1503 = vmatprep.mubr.f32.mxu0 0.0
    %1504 = vmatmul.mubr.f32.gmra.mrb[0].mxu0 %v1435
    %v1505 = vpop.f32.mrb[0].mxu0
    %v1506 = vadd.f32 %v727, %v1505
    %v1507 = vpop.f32.mrb[0].mxu0
    %1508 = vdwg.mxu0
    %v1509 = vsel %vm768, %v581, 0
    %v1511 = vsel %vm768, %v613, 0
    %1513 = vmatprep.subr.mxu0 0.0
    %1514 = vmatpush1.xpose.msra.mxu0 %v1511
    %1515 = vmatprep.subr.mxu0 0.0
    %1516 = vmatpush1.xpose.msra.mxu0 0.0
    %1517 = vmatprep.subr.mxu0 0.0
    %1518 = vmatpush1.xpose.msra.mxu0 0.0
    %1519 = vmatprep.subr.mxu0 0.0
    %1520 = vmatpush1.xpose.msra.mxu0 0.0
    %1521 = vmatprep.subr.mxu0 0.0
    %1522 = vmatpush1.xpose.msra.mxu0 0.0
    %1523 = vmatprep.subr.mxu0 0.0
    %1524 = vmatpush1.xpose.msra.mxu0 0.0
    %1525 = vmatprep.subr.mxu0 0.0
    %1526 = vmatpush1.xpose.msra.mxu0 0.0
    %1527 = vmatprep.subr.mxu0 0.0
    %1528 = vmatpush1.xpose.msra.mxu0 0.0
    %1529 = vmatprep.subr.mxu0 0.0
    %1530 = vmatpush1.xpose.msra.mxu0 0.0
    %1531 = vmatprep.subr.mxu0 0.0
    %1532 = vmatpush1.xpose.msra.mxu0 0.0
    %1533 = vmatprep.subr.mxu0 0.0
    %1534 = vmatpush1.xpose.msra.mxu0 0.0
    %1535 = vmatprep.subr.mxu0 0.0
    %1536 = vmatpush1.xpose.msra.mxu0 0.0
    %1537 = vmatprep.subr.mxu0 0.0
    %1538 = vmatpush1.xpose.msra.mxu0 0.0
    %1539 = vmatprep.subr.mxu0 0.0
    %1540 = vmatpush1.xpose.msra.mxu0 0.0
    %1541 = vmatprep.subr.mxu0 0.0
    %1542 = vmatpush1.xpose.msra.mxu0 0.0
    %1543 = vmatprep.subr.mxu0 0.0
    %1544 = vmatpush1.xpose.msra.mxu0 0.0
    %1545 = vmatprep.subr.mxu0 0.0
    %1546 = vmatpush1.xpose.msra.mxu0 0.0
    %1547 = vmatprep.subr.mxu0 0.0
    %1548 = vmatpush1.xpose.msra.mxu0 0.0
    %1549 = vmatprep.subr.mxu0 0.0
    %1550 = vmatpush1.xpose.msra.mxu0 0.0
    %1551 = vmatprep.subr.mxu0 0.0
    %1552 = vmatpush1.xpose.msra.mxu0 0.0
    %1553 = vmatprep.subr.mxu0 0.0
    %1554 = vmatpush1.xpose.msra.mxu0 0.0
    %1555 = vmatprep.subr.mxu0 0.0
    %1556 = vmatpush1.xpose.msra.mxu0 0.0
    %1557 = vmatprep.subr.mxu0 0.0
    %1558 = vmatpush1.xpose.msra.mxu0 0.0
    %1559 = vmatprep.subr.mxu0 0.0
    %1560 = vmatpush1.xpose.msra.mxu0 0.0
    %1561 = vmatprep.subr.mxu0 0.0
    %1562 = vmatpush1.xpose.msra.mxu0 0.0
    %1563 = vmatprep.subr.mxu0 0.0
    %1564 = vmatpush1.xpose.msra.mxu0 0.0
    %1565 = vmatprep.subr.mxu0 0.0
    %1566 = vmatpush1.xpose.msra.mxu0 0.0
    %1567 = vmatprep.subr.mxu0 0.0
    %1568 = vmatpush1.xpose.msra.mxu0 0.0
    %1569 = vmatprep.subr.mxu0 0.0
    %1570 = vmatpush1.xpose.msra.mxu0 0.0
    %1571 = vmatprep.subr.mxu0 0.0
    %1572 = vmatpush1.xpose.msra.mxu0 0.0
    %1573 = vmatprep.subr.mxu0 0.0
    %1574 = vmatpush1.xpose.msra.mxu0 0.0
    %1575 = vmatprep.subr.mxu0 0.0
    %1576 = vmatpush1.xpose.msra.mxu0 0.0
    %1577 = vmatprep.mubr.f32.mxu0 0.0
    %1578 = vmatmul.mubr.f32.gmra.mrb[0].mxu0 %v1509
    %v1579 = vpop.f32.mrb[0].mxu0
    %v1580 = vadd.f32 %v731, %v1579
    %v1581 = vpop.f32.mrb[0].mxu0
    %1582 = vdwg.mxu0
    %v1583 = vsel %vm768, %v583, 0
    %v1585 = vsel %vm768, %v615, 0
    %1587 = vmatprep.subr.mxu0 0.0
    %1588 = vmatpush1.xpose.msra.mxu0 %v1585
    %1589 = vmatprep.subr.mxu0 0.0
    %1590 = vmatpush1.xpose.msra.mxu0 0.0
    %1591 = vmatprep.subr.mxu0 0.0
    %1592 = vmatpush1.xpose.msra.mxu0 0.0
    %1593 = vmatprep.subr.mxu0 0.0
    %1594 = vmatpush1.xpose.msra.mxu0 0.0
    %1595 = vmatprep.subr.mxu0 0.0
    %1596 = vmatpush1.xpose.msra.mxu0 0.0
    %1597 = vmatprep.subr.mxu0 0.0
    %1598 = vmatpush1.xpose.msra.mxu0 0.0
    %1599 = vmatprep.subr.mxu0 0.0
    %1600 = vmatpush1.xpose.msra.mxu0 0.0
    %1601 = vmatprep.subr.mxu0 0.0
    %1602 = vmatpush1.xpose.msra.mxu0 0.0
    %1603 = vmatprep.subr.mxu0 0.0
    %1604 = vmatpush1.xpose.msra.mxu0 0.0
    %1605 = vmatprep.subr.mxu0 0.0
    %1606 = vmatpush1.xpose.msra.mxu0 0.0
    %1607 = vmatprep.subr.mxu0 0.0
    %1608 = vmatpush1.xpose.msra.mxu0 0.0
    %1609 = vmatprep.subr.mxu0 0.0
    %1610 = vmatpush1.xpose.msra.mxu0 0.0
    %1611 = vmatprep.subr.mxu0 0.0
    %1612 = vmatpush1.xpose.msra.mxu0 0.0
    %1613 = vmatprep.subr.mxu0 0.0
    %1614 = vmatpush1.xpose.msra.mxu0 0.0
    %1615 = vmatprep.subr.mxu0 0.0
    %1616 = vmatpush1.xpose.msra.mxu0 0.0
    %1617 = vmatprep.subr.mxu0 0.0
    %1618 = vmatpush1.xpose.msra.mxu0 0.0
    %1619 = vmatprep.subr.mxu0 0.0
    %1620 = vmatpush1.xpose.msra.mxu0 0.0
    %1621 = vmatprep.subr.mxu0 0.0
    %1622 = vmatpush1.xpose.msra.mxu0 0.0
    %1623 = vmatprep.subr.mxu0 0.0
    %1624 = vmatpush1.xpose.msra.mxu0 0.0
    %1625 = vmatprep.subr.mxu0 0.0
    %1626 = vmatpush1.xpose.msra.mxu0 0.0
    %1627 = vmatprep.subr.mxu0 0.0
    %1628 = vmatpush1.xpose.msra.mxu0 0.0
    %1629 = vmatprep.subr.mxu0 0.0
    %1630 = vmatpush1.xpose.msra.mxu0 0.0
    %1631 = vmatprep.subr.mxu0 0.0
    %1632 = vmatpush1.xpose.msra.mxu0 0.0
    %1633 = vmatprep.subr.mxu0 0.0
    %1634 = vmatpush1.xpose.msra.mxu0 0.0
    %1635 = vmatprep.subr.mxu0 0.0
    %1636 = vmatpush1.xpose.msra.mxu0 0.0
    %1637 = vmatprep.subr.mxu0 0.0
    %1638 = vmatpush1.xpose.msra.mxu0 0.0
    %1639 = vmatprep.subr.mxu0 0.0
    %1640 = vmatpush1.xpose.msra.mxu0 0.0
    %1641 = vmatprep.subr.mxu0 0.0
    %1642 = vmatpush1.xpose.msra.mxu0 0.0
    %1643 = vmatprep.subr.mxu0 0.0
    %1644 = vmatpush1.xpose.msra.mxu0 0.0
    %1645 = vmatprep.subr.mxu0 0.0
    %1646 = vmatpush1.xpose.msra.mxu0 0.0
    %1647 = vmatprep.subr.mxu0 0.0
    %1648 = vmatpush1.xpose.msra.mxu0 0.0
    %1649 = vmatprep.subr.mxu0 0.0
    %1650 = vmatpush1.xpose.msra.mxu0 0.0
    %1651 = vmatprep.mubr.f32.mxu0 0.0
    %1652 = vmatmul.mubr.f32.gmra.mrb[0].mxu0 %v1583
    %v1653 = vpop.f32.mrb[0].mxu0
    %v1654 = vadd.f32 %v735, %v1653
    %v1655 = vpop.f32.mrb[0].mxu0
    %1656 = vdwg.mxu0
    %v1657 = vsel %vm768, %v585, 0
    %v1659 = vsel %vm768, %v617, 0
    %1661 = vmatprep.subr.mxu0 0.0
    %1662 = vmatpush1.xpose.msra.mxu0 %v1659
    %1663 = vmatprep.subr.mxu0 0.0
    %1664 = vmatpush1.xpose.msra.mxu0 0.0
    %1665 = vmatprep.subr.mxu0 0.0
    %1666 = vmatpush1.xpose.msra.mxu0 0.0
    %1667 = vmatprep.subr.mxu0 0.0
    %1668 = vmatpush1.xpose.msra.mxu0 0.0
    %1669 = vmatprep.subr.mxu0 0.0
    %1670 = vmatpush1.xpose.msra.mxu0 0.0
    %1671 = vmatprep.subr.mxu0 0.0
    %1672 = vmatpush1.xpose.msra.mxu0 0.0
    %1673 = vmatprep.subr.mxu0 0.0
    %1674 = vmatpush1.xpose.msra.mxu0 0.0
    %1675 = vmatprep.subr.mxu0 0.0
    %1676 = vmatpush1.xpose.msra.mxu0 0.0
    %1677 = vmatprep.subr.mxu0 0.0
    %1678 = vmatpush1.xpose.msra.mxu0 0.0
    %1679 = vmatprep.subr.mxu0 0.0
    %1680 = vmatpush1.xpose.msra.mxu0 0.0
    %1681 = vmatprep.subr.mxu0 0.0
    %1682 = vmatpush1.xpose.msra.mxu0 0.0
    %1683 = vmatprep.subr.mxu0 0.0
    %1684 = vmatpush1.xpose.msra.mxu0 0.0
    %1685 = vmatprep.subr.mxu0 0.0
    %1686 = vmatpush1.xpose.msra.mxu0 0.0
    %1687 = vmatprep.subr.mxu0 0.0
    %1688 = vmatpush1.xpose.msra.mxu0 0.0
    %1689 = vmatprep.subr.mxu0 0.0
    %1690 = vmatpush1.xpose.msra.mxu0 0.0
    %1691 = vmatprep.subr.mxu0 0.0
    %1692 = vmatpush1.xpose.msra.mxu0 0.0
    %1693 = vmatprep.subr.mxu0 0.0
    %1694 = vmatpush1.xpose.msra.mxu0 0.0
    %1695 = vmatprep.subr.mxu0 0.0
    %1696 = vmatpush1.xpose.msra.mxu0 0.0
    %1697 = vmatprep.subr.mxu0 0.0
    %1698 = vmatpush1.xpose.msra.mxu0 0.0
    %1699 = vmatprep.subr.mxu0 0.0
    %1700 = vmatpush1.xpose.msra.mxu0 0.0
    %1701 = vmatprep.subr.mxu0 0.0
    %1702 = vmatpush1.xpose.msra.mxu0 0.0
    %1703 = vmatprep.subr.mxu0 0.0
    %1704 = vmatpush1.xpose.msra.mxu0 0.0
    %1705 = vmatprep.subr.mxu0 0.0
    %1706 = vmatpush1.xpose.msra.mxu0 0.0
    %1707 = vmatprep.subr.mxu0 0.0
    %1708 = vmatpush1.xpose.msra.mxu0 0.0
    %1709 = vmatprep.subr.mxu0 0.0
    %1710 = vmatpush1.xpose.msra.mxu0 0.0
    %1711 = vmatprep.subr.mxu0 0.0
    %1712 = vmatpush1.xpose.msra.mxu0 0.0
    %1713 = vmatprep.subr.mxu0 0.0
    %1714 = vmatpush1.xpose.msra.mxu0 0.0
    %1715 = vmatprep.subr.mxu0 0.0
    %1716 = vmatpush1.xpose.msra.mxu0 0.0
    %1717 = vmatprep.subr.mxu0 0.0
    %1718 = vmatpush1.xpose.msra.mxu0 0.0
    %1719 = vmatprep.subr.mxu0 0.0
    %1720 = vmatpush1.xpose.msra.mxu0 0.0
    %1721 = vmatprep.subr.mxu0 0.0
    %1722 = vmatpush1.xpose.msra.mxu0 0.0
    %1723 = vmatprep.subr.mxu0 0.0
    %1724 = vmatpush1.xpose.msra.mxu0 0.0
    %1725 = vmatprep.mubr.f32.mxu0 0.0
    %1726 = vmatmul.mubr.f32.gmra.mrb[0].mxu0 %v1657
    %v1727 = vpop.f32.mrb[0].mxu0
    %v1728 = vadd.f32 %v739, %v1727
    %v1729 = vpop.f32.mrb[0].mxu0
    %1730 = vdwg.mxu0
    %v1731 = vsel %vm768, %v587, 0
    %v1733 = vsel %vm768, %v619, 0
    %1735 = vmatprep.subr.mxu0 0.0
    %1736 = vmatpush1.xpose.msra.mxu0 %v1733
    %1737 = vmatprep.subr.mxu0 0.0
    %1738 = vmatpush1.xpose.msra.mxu0 0.0
    %1739 = vmatprep.subr.mxu0 0.0
    %1740 = vmatpush1.xpose.msra.mxu0 0.0
    %1741 = vmatprep.subr.mxu0 0.0
    %1742 = vmatpush1.xpose.msra.mxu0 0.0
    %1743 = vmatprep.subr.mxu0 0.0
    %1744 = vmatpush1.xpose.msra.mxu0 0.0
    %1745 = vmatprep.subr.mxu0 0.0
    %1746 = vmatpush1.xpose.msra.mxu0 0.0
    %1747 = vmatprep.subr.mxu0 0.0
    %1748 = vmatpush1.xpose.msra.mxu0 0.0
    %1749 = vmatprep.subr.mxu0 0.0
    %1750 = vmatpush1.xpose.msra.mxu0 0.0
    %1751 = vmatprep.subr.mxu0 0.0
    %1752 = vmatpush1.xpose.msra.mxu0 0.0
    %1753 = vmatprep.subr.mxu0 0.0
    %1754 = vmatpush1.xpose.msra.mxu0 0.0
    %1755 = vmatprep.subr.mxu0 0.0
    %1756 = vmatpush1.xpose.msra.mxu0 0.0
    %1757 = vmatprep.subr.mxu0 0.0
    %1758 = vmatpush1.xpose.msra.mxu0 0.0
    %1759 = vmatprep.subr.mxu0 0.0
    %1760 = vmatpush1.xpose.msra.mxu0 0.0
    %1761 = vmatprep.subr.mxu0 0.0
    %1762 = vmatpush1.xpose.msra.mxu0 0.0
    %1763 = vmatprep.subr.mxu0 0.0
    %1764 = vmatpush1.xpose.msra.mxu0 0.0
    %1765 = vmatprep.subr.mxu0 0.0
    %1766 = vmatpush1.xpose.msra.mxu0 0.0
    %1767 = vmatprep.subr.mxu0 0.0
    %1768 = vmatpush1.xpose.msra.mxu0 0.0
    %1769 = vmatprep.subr.mxu0 0.0
    %1770 = vmatpush1.xpose.msra.mxu0 0.0
    %1771 = vmatprep.subr.mxu0 0.0
    %1772 = vmatpush1.xpose.msra.mxu0 0.0
    %1773 = vmatprep.subr.mxu0 0.0
    %1774 = vmatpush1.xpose.msra.mxu0 0.0
    %1775 = vmatprep.subr.mxu0 0.0
    %1776 = vmatpush1.xpose.msra.mxu0 0.0
    %1777 = vmatprep.subr.mxu0 0.0
    %1778 = vmatpush1.xpose.msra.mxu0 0.0
    %1779 = vmatprep.subr.mxu0 0.0
    %1780 = vmatpush1.xpose.msra.mxu0 0.0
    %1781 = vmatprep.subr.mxu0 0.0
    %1782 = vmatpush1.xpose.msra.mxu0 0.0
    %1783 = vmatprep.subr.mxu0 0.0
    %1784 = vmatpush1.xpose.msra.mxu0 0.0
    %1785 = vmatprep.subr.mxu0 0.0
    %1786 = vmatpush1.xpose.msra.mxu0 0.0
    %1787 = vmatprep.subr.mxu0 0.0
    %1788 = vmatpush1.xpose.msra.mxu0 0.0
    %1789 = vmatprep.subr.mxu0 0.0
    %1790 = vmatpush1.xpose.msra.mxu0 0.0
    %1791 = vmatprep.subr.mxu0 0.0
    %1792 = vmatpush1.xpose.msra.mxu0 0.0
    %1793 = vmatprep.subr.mxu0 0.0
    %1794 = vmatpush1.xpose.msra.mxu0 0.0
    %1795 = vmatprep.subr.mxu0 0.0
    %1796 = vmatpush1.xpose.msra.mxu0 0.0
    %1797 = vmatprep.subr.mxu0 0.0
    %1798 = vmatpush1.xpose.msra.mxu0 0.0
    %1799 = vmatprep.mubr.f32.mxu0 0.0
    %1800 = vmatmul.mubr.f32.gmra.mrb[0].mxu0 %v1731
    %v1801 = vpop.f32.mrb[0].mxu0
    %v1802 = vadd.f32 %v743, %v1801
    %v1803 = vpop.f32.mrb[0].mxu0
    %1804 = vdwg.mxu0
    %v1805 = vsel %vm768, %v589, 0
    %v1807 = vsel %vm768, %v621, 0
    %1809 = vmatprep.subr.mxu0 0.0
    %1810 = vmatpush1.xpose.msra.mxu0 %v1807
    %1811 = vmatprep.subr.mxu0 0.0
    %1812 = vmatpush1.xpose.msra.mxu0 0.0
    %1813 = vmatprep.subr.mxu0 0.0
    %1814 = vmatpush1.xpose.msra.mxu0 0.0
    %1815 = vmatprep.subr.mxu0 0.0
    %1816 = vmatpush1.xpose.msra.mxu0 0.0
    %1817 = vmatprep.subr.mxu0 0.0
    %1818 = vmatpush1.xpose.msra.mxu0 0.0
    %1819 = vmatprep.subr.mxu0 0.0
    %1820 = vmatpush1.xpose.msra.mxu0 0.0
    %1821 = vmatprep.subr.mxu0 0.0
    %1822 = vmatpush1.xpose.msra.mxu0 0.0
    %1823 = vmatprep.subr.mxu0 0.0
    %1824 = vmatpush1.xpose.msra.mxu0 0.0
    %1825 = vmatprep.subr.mxu0 0.0
    %1826 = vmatpush1.xpose.msra.mxu0 0.0
    %1827 = vmatprep.subr.mxu0 0.0
    %1828 = vmatpush1.xpose.msra.mxu0 0.0
    %1829 = vmatprep.subr.mxu0 0.0
    %1830 = vmatpush1.xpose.msra.mxu0 0.0
    %1831 = vmatprep.subr.mxu0 0.0
    %1832 = vmatpush1.xpose.msra.mxu0 0.0
    %1833 = vmatprep.subr.mxu0 0.0
    %1834 = vmatpush1.xpose.msra.mxu0 0.0
    %1835 = vmatprep.subr.mxu0 0.0
    %1836 = vmatpush1.xpose.msra.mxu0 0.0
    %1837 = vmatprep.subr.mxu0 0.0
    %1838 = vmatpush1.xpose.msra.mxu0 0.0
    %1839 = vmatprep.subr.mxu0 0.0
    %1840 = vmatpush1.xpose.msra.mxu0 0.0
    %1841 = vmatprep.subr.mxu0 0.0
    %1842 = vmatpush1.xpose.msra.mxu0 0.0
    %1843 = vmatprep.subr.mxu0 0.0
    %1844 = vmatpush1.xpose.msra.mxu0 0.0
    %1845 = vmatprep.subr.mxu0 0.0
    %1846 = vmatpush1.xpose.msra.mxu0 0.0
    %1847 = vmatprep.subr.mxu0 0.0
    %1848 = vmatpush1.xpose.msra.mxu0 0.0
    %1849 = vmatprep.subr.mxu0 0.0
    %1850 = vmatpush1.xpose.msra.mxu0 0.0
    %1851 = vmatprep.subr.mxu0 0.0
    %1852 = vmatpush1.xpose.msra.mxu0 0.0
    %1853 = vmatprep.subr.mxu0 0.0
    %1854 = vmatpush1.xpose.msra.mxu0 0.0
    %1855 = vmatprep.subr.mxu0 0.0
    %1856 = vmatpush1.xpose.msra.mxu0 0.0
    %1857 = vmatprep.subr.mxu0 0.0
    %1858 = vmatpush1.xpose.msra.mxu0 0.0
    %1859 = vmatprep.subr.mxu0 0.0
    %1860 = vmatpush1.xpose.msra.mxu0 0.0
    %1861 = vmatprep.subr.mxu0 0.0
    %1862 = vmatpush1.xpose.msra.mxu0 0.0
    %1863 = vmatprep.subr.mxu0 0.0
    %1864 = vmatpush1.xpose.msra.mxu0 0.0
    %1865 = vmatprep.subr.mxu0 0.0
    %1866 = vmatpush1.xpose.msra.mxu0 0.0
    %1867 = vmatprep.subr.mxu0 0.0
    %1868 = vmatpush1.xpose.msra.mxu0 0.0
    %1869 = vmatprep.subr.mxu0 0.0
    %1870 = vmatpush1.xpose.msra.mxu0 0.0
    %1871 = vmatprep.subr.mxu0 0.0
    %1872 = vmatpush1.xpose.msra.mxu0 0.0
    %1873 = vmatprep.mubr.f32.mxu0 0.0
    %1874 = vmatmul.mubr.f32.gmra.mrb[0].mxu0 %v1805
    %v1875 = vpop.f32.mrb[0].mxu0
    %v1876 = vadd.f32 %v747, %v1875
    %v1877 = vpop.f32.mrb[0].mxu0
    %1878 = vdwg.mxu0
    %v1879 = vsel %vm768, %v591, 0
    %v1881 = vsel %vm768, %v623, 0
    %1883 = vmatprep.subr.mxu0 0.0
    %1884 = vmatpush1.xpose.msra.mxu0 %v1881
    %1885 = vmatprep.subr.mxu0 0.0
    %1886 = vmatpush1.xpose.msra.mxu0 0.0
    %1887 = vmatprep.subr.mxu0 0.0
    %1888 = vmatpush1.xpose.msra.mxu0 0.0
    %1889 = vmatprep.subr.mxu0 0.0
    %1890 = vmatpush1.xpose.msra.mxu0 0.0
    %1891 = vmatprep.subr.mxu0 0.0
    %1892 = vmatpush1.xpose.msra.mxu0 0.0
    %1893 = vmatprep.subr.mxu0 0.0
    %1894 = vmatpush1.xpose.msra.mxu0 0.0
    %1895 = vmatprep.subr.mxu0 0.0
    %1896 = vmatpush1.xpose.msra.mxu0 0.0
    %1897 = vmatprep.subr.mxu0 0.0
    %1898 = vmatpush1.xpose.msra.mxu0 0.0
    %1899 = vmatprep.subr.mxu0 0.0
    %1900 = vmatpush1.xpose.msra.mxu0 0.0
    %1901 = vmatprep.subr.mxu0 0.0
    %1902 = vmatpush1.xpose.msra.mxu0 0.0
    %1903 = vmatprep.subr.mxu0 0.0
    %1904 = vmatpush1.xpose.msra.mxu0 0.0
    %1905 = vmatprep.subr.mxu0 0.0
    %1906 = vmatpush1.xpose.msra.mxu0 0.0
    %1907 = vmatprep.subr.mxu0 0.0
    %1908 = vmatpush1.xpose.msra.mxu0 0.0
    %1909 = vmatprep.subr.mxu0 0.0
    %1910 = vmatpush1.xpose.msra.mxu0 0.0
    %1911 = vmatprep.subr.mxu0 0.0
    %1912 = vmatpush1.xpose.msra.mxu0 0.0
    %1913 = vmatprep.subr.mxu0 0.0
    %1914 = vmatpush1.xpose.msra.mxu0 0.0
    %1915 = vmatprep.subr.mxu0 0.0
    %1916 = vmatpush1.xpose.msra.mxu0 0.0
    %1917 = vmatprep.subr.mxu0 0.0
    %1918 = vmatpush1.xpose.msra.mxu0 0.0
    %1919 = vmatprep.subr.mxu0 0.0
    %1920 = vmatpush1.xpose.msra.mxu0 0.0
    %1921 = vmatprep.subr.mxu0 0.0
    %1922 = vmatpush1.xpose.msra.mxu0 0.0
    %1923 = vmatprep.subr.mxu0 0.0
    %1924 = vmatpush1.xpose.msra.mxu0 0.0
    %1925 = vmatprep.subr.mxu0 0.0
    %1926 = vmatpush1.xpose.msra.mxu0 0.0
    %1927 = vmatprep.subr.mxu0 0.0
    %1928 = vmatpush1.xpose.msra.mxu0 0.0
    %1929 = vmatprep.subr.mxu0 0.0
    %1930 = vmatpush1.xpose.msra.mxu0 0.0
    %1931 = vmatprep.subr.mxu0 0.0
    %1932 = vmatpush1.xpose.msra.mxu0 0.0
    %1933 = vmatprep.subr.mxu0 0.0
    %1934 = vmatpush1.xpose.msra.mxu0 0.0
    %1935 = vmatprep.subr.mxu0 0.0
    %1936 = vmatpush1.xpose.msra.mxu0 0.0
    %1937 = vmatprep.subr.mxu0 0.0
    %1938 = vmatpush1.xpose.msra.mxu0 0.0
    %1939 = vmatprep.subr.mxu0 0.0
    %1940 = vmatpush1.xpose.msra.mxu0 0.0
    %1941 = vmatprep.subr.mxu0 0.0
    %1942 = vmatpush1.xpose.msra.mxu0 0.0
    %1943 = vmatprep.subr.mxu0 0.0
    %1944 = vmatpush1.xpose.msra.mxu0 0.0
    %1945 = vmatprep.subr.mxu0 0.0
    %1946 = vmatpush1.xpose.msra.mxu0 0.0
    %1947 = vmatprep.mubr.f32.mxu0 0.0
    %1948 = vmatmul.mubr.f32.gmra.mrb[0].mxu0 %v1879
    %v1949 = vpop.f32.mrb[0].mxu0
    %v1950 = vadd.f32 %v751, %v1949
    %v1951 = vpop.f32.mrb[0].mxu0
    %1952 = vdwg.mxu0
    %vm1953 = vcmask 64512
    %v1954 = vsel %vm1953, %v840, -inf
    %1955 = vmax.xlane.f32.xlu0 %v1954
    %v1956 = vpop.xlane.xlu0 %1955
    %v1957 = vsel %vm1953, %v914, -inf
    %1958 = vmax.xlane.f32.xlu0 %v1957
    %v1959 = vpop.xlane.xlu0 %1958
    %v1960 = vsel %vm1953, %v988, -inf
    %1961 = vmax.xlane.f32.xlu0 %v1960
    %v1962 = vpop.xlane.xlu0 %1961
    %v1963 = vsel %vm1953, %v1062, -inf
    %1964 = vmax.xlane.f32.xlu0 %v1963
    %v1965 = vpop.xlane.xlu0 %1964
    %v1966 = vsel %vm1953, %v1136, -inf
    %1967 = vmax.xlane.f32.xlu0 %v1966
    %v1968 = vpop.xlane.xlu0 %1967
    %v1969 = vsel %vm1953, %v1210, -inf
    %1970 = vmax.xlane.f32.xlu0 %v1969
    %v1971 = vpop.xlane.xlu0 %1970
    %v1972 = vsel %vm1953, %v1284, -inf
    %1973 = vmax.xlane.f32.xlu0 %v1972
    %v1974 = vpop.xlane.xlu0 %1973
    %v1975 = vsel %vm1953, %v1358, -inf
    %1976 = vmax.xlane.f32.xlu0 %v1975
    %v1977 = vpop.xlane.xlu0 %1976
    %v1978 = vsel %vm1953, %v1432, -inf
    %1979 = vmax.xlane.f32.xlu0 %v1978
    %v1980 = vpop.xlane.xlu0 %1979
    %v1981 = vsel %vm1953, %v1506, -inf
    %1982 = vmax.xlane.f32.xlu0 %v1981
    %v1983 = vpop.xlane.xlu0 %1982
    %v1984 = vsel %vm1953, %v1580, -inf
    %1985 = vmax.xlane.f32.xlu0 %v1984
    %v1986 = vpop.xlane.xlu0 %1985
    %v1987 = vsel %vm1953, %v1654, -inf
    %1988 = vmax.xlane.f32.xlu0 %v1987
    %v1989 = vpop.xlane.xlu0 %1988
    %v1990 = vsel %vm1953, %v1728, -inf
    %1991 = vmax.xlane.f32.xlu0 %v1990
    %v1992 = vpop.xlane.xlu0 %1991
    %v1993 = vsel %vm1953, %v1802, -inf
    %1994 = vmax.xlane.f32.xlu0 %v1993
    %v1995 = vpop.xlane.xlu0 %1994
    %v1996 = vsel %vm1953, %v1876, -inf
    %1997 = vmax.xlane.f32.xlu0 %v1996
    %v1998 = vpop.xlane.xlu0 %1997
    %v1999 = vsel %vm1953, %v1950, -inf
    %2000 = vmax.xlane.f32.xlu0 %v1999
    %v2001 = vpop.xlane.xlu0 %2000
    %v2002 = vsub.f32 %v840, %v1956
    %v2003 = vsub.f32 %v914, %v1959
    %v2004 = vsub.f32 %v988, %v1962
    %v2005 = vsub.f32 %v1062, %v1965
    %v2006 = vsub.f32 %v1136, %v1968
    %v2007 = vsub.f32 %v1210, %v1971
    %v2008 = vsub.f32 %v1284, %v1974
    %v2009 = vsub.f32 %v1358, %v1977
    %v2010 = vsub.f32 %v1432, %v1980
    %v2011 = vsub.f32 %v1506, %v1983
    %v2012 = vsub.f32 %v1580, %v1986
    %v2013 = vsub.f32 %v1654, %v1989
    %v2014 = vsub.f32 %v1728, %v1992
    %v2015 = vsub.f32 %v1802, %v1995
    %v2016 = vsub.f32 %v1876, %v1998
    %v2017 = vsub.f32 %v1950, %v2001
    %v2018 = vmul.f32 %v2002, 1.442695
    %v2019 = vpow.pop %v2018
    %v2020 = vmul.f32 %v2003, 1.442695
    %v2021 = vpow.pop %v2020
    %v2022 = vmul.f32 %v2004, 1.442695
    %v2023 = vpow.pop %v2022
    %v2024 = vmul.f32 %v2005, 1.442695
    %v2025 = vpow.pop %v2024
    %v2026 = vmul.f32 %v2006, 1.442695
    %v2027 = vpow.pop %v2026
    %v2028 = vmul.f32 %v2007, 1.442695
    %v2029 = vpow.pop %v2028
    %v2030 = vmul.f32 %v2008, 1.442695
    %v2031 = vpow.pop %v2030
    %v2032 = vmul.f32 %v2009, 1.442695
    %v2033 = vpow.pop %v2032
    %v2034 = vmul.f32 %v2010, 1.442695
    %v2035 = vpow.pop %v2034
    %v2036 = vmul.f32 %v2011, 1.442695
    %v2037 = vpow.pop %v2036
    %v2038 = vmul.f32 %v2012, 1.442695
    %v2039 = vpow.pop %v2038
    %v2040 = vmul.f32 %v2013, 1.442695
    %v2041 = vpow.pop %v2040
    %v2042 = vmul.f32 %v2014, 1.442695
    %v2043 = vpow.pop %v2042
    %v2044 = vmul.f32 %v2015, 1.442695
    %v2045 = vpow.pop %v2044
    %v2046 = vmul.f32 %v2016, 1.442695
    %v2047 = vpow.pop %v2046
    %v2048 = vmul.f32 %v2017, 1.442695
    %v2049 = vpow.pop %v2048
    %v2050 = vsel %vm1953, %v2019, 0.0
    %2051 = vadd.xlane.f32.xlu0 %v2050
    %v2052 = vpop.xlane.xlu0 %2051
    %v2053 = vsel %vm1953, %v2021, 0.0
    %2054 = vadd.xlane.f32.xlu0 %v2053
    %v2055 = vpop.xlane.xlu0 %2054
    %v2056 = vsel %vm1953, %v2023, 0.0
    %2057 = vadd.xlane.f32.xlu0 %v2056
    %v2058 = vpop.xlane.xlu0 %2057
    %v2059 = vsel %vm1953, %v2025, 0.0
    %2060 = vadd.xlane.f32.xlu0 %v2059
    %v2061 = vpop.xlane.xlu0 %2060
    %v2062 = vsel %vm1953, %v2027, 0.0
    %2063 = vadd.xlane.f32.xlu0 %v2062
    %v2064 = vpop.xlane.xlu0 %2063
    %v2065 = vsel %vm1953, %v2029, 0.0
    %2066 = vadd.xlane.f32.xlu0 %v2065
    %v2067 = vpop.xlane.xlu0 %2066
    %v2068 = vsel %vm1953, %v2031, 0.0
    %2069 = vadd.xlane.f32.xlu0 %v2068
    %v2070 = vpop.xlane.xlu0 %2069
    %v2071 = vsel %vm1953, %v2033, 0.0
    %2072 = vadd.xlane.f32.xlu0 %v2071
    %v2073 = vpop.xlane.xlu0 %2072
    %v2074 = vsel %vm1953, %v2035, 0.0
    %2075 = vadd.xlane.f32.xlu0 %v2074
    %v2076 = vpop.xlane.xlu0 %2075
    %v2077 = vsel %vm1953, %v2037, 0.0
    %2078 = vadd.xlane.f32.xlu0 %v2077
    %v2079 = vpop.xlane.xlu0 %2078
    %v2080 = vsel %vm1953, %v2039, 0.0
    %2081 = vadd.xlane.f32.xlu0 %v2080
    %v2082 = vpop.xlane.xlu0 %2081
    %v2083 = vsel %vm1953, %v2041, 0.0
    %2084 = vadd.xlane.f32.xlu0 %v2083
    %v2085 = vpop.xlane.xlu0 %2084
    %v2086 = vsel %vm1953, %v2043, 0.0
    %2087 = vadd.xlane.f32.xlu0 %v2086
    %v2088 = vpop.xlane.xlu0 %2087
    %v2089 = vsel %vm1953, %v2045, 0.0
    %2090 = vadd.xlane.f32.xlu0 %v2089
    %v2091 = vpop.xlane.xlu0 %2090
    %v2092 = vsel %vm1953, %v2047, 0.0
    %2093 = vadd.xlane.f32.xlu0 %v2092
    %v2094 = vpop.xlane.xlu0 %2093
    %v2095 = vsel %vm1953, %v2049, 0.0
    %2096 = vadd.xlane.f32.xlu0 %v2095
    %v2097 = vpop.xlane.xlu0 %2096
    %v2098 = vrcp.pop %v2052
    %v2099 = vmul.f32 %v2019, %v2098
    %v2100 = vrcp.pop %v2055
    %v2101 = vmul.f32 %v2021, %v2100
    %v2102 = vrcp.pop %v2058
    %v2103 = vmul.f32 %v2023, %v2102
    %v2104 = vrcp.pop %v2061
    %v2105 = vmul.f32 %v2025, %v2104
    %v2106 = vrcp.pop %v2064
    %v2107 = vmul.f32 %v2027, %v2106
    %v2108 = vrcp.pop %v2067
    %v2109 = vmul.f32 %v2029, %v2108
    %v2110 = vrcp.pop %v2070
    %v2111 = vmul.f32 %v2031, %v2110
    %v2112 = vrcp.pop %v2073
    %v2113 = vmul.f32 %v2033, %v2112
    %v2114 = vrcp.pop %v2076
    %v2115 = vmul.f32 %v2035, %v2114
    %v2116 = vrcp.pop %v2079
    %v2117 = vmul.f32 %v2037, %v2116
    %v2118 = vrcp.pop %v2082
    %v2119 = vmul.f32 %v2039, %v2118
    %v2120 = vrcp.pop %v2085
    %v2121 = vmul.f32 %v2041, %v2120
    %v2122 = vrcp.pop %v2088
    %v2123 = vmul.f32 %v2043, %v2122
    %v2124 = vrcp.pop %v2091
    %v2125 = vmul.f32 %v2045, %v2124
    %v2126 = vrcp.pop %v2094
    %v2127 = vmul.f32 %v2047, %v2126
    %v2128 = vrcp.pop %v2097
    %v2129 = vmul.f32 %v2049, %v2128
    %v2131 = vsel %vm1953, %v2099, 0
    %2133 = vmatprep.subr.mxu0 0.0
    %2134 = vmatpush1.msra.mxu0 %v625
    %2135 = vmatprep.subr.mxu0 0.0
    %2136 = vmatpush1.msra.mxu0 0.0
    %2137 = vmatprep.subr.mxu0 0.0
    %2138 = vmatpush1.msra.mxu0 0.0
    %2139 = vmatprep.subr.mxu0 0.0
    %2140 = vmatpush1.msra.mxu0 0.0
    %2141 = vmatprep.subr.mxu0 0.0
    %2142 = vmatpush1.msra.mxu0 0.0
    %2143 = vmatprep.subr.mxu0 0.0
    %2144 = vmatpush1.msra.mxu0 0.0
    %2145 = vmatprep.subr.mxu0 0.0
    %2146 = vmatpush1.msra.mxu0 0.0
    %2147 = vmatprep.subr.mxu0 0.0
    %2148 = vmatpush1.msra.mxu0 0.0
    %2149 = vmatprep.subr.mxu0 0.0
    %2150 = vmatpush1.msra.mxu0 0.0
    %2151 = vmatprep.subr.mxu0 0.0
    %2152 = vmatpush1.msra.mxu0 0.0
    %2153 = vmatprep.subr.mxu0 0.0
    %2154 = vmatpush1.msra.mxu0 0.0
    %2155 = vmatprep.subr.mxu0 0.0
    %2156 = vmatpush1.msra.mxu0 0.0
    %2157 = vmatprep.subr.mxu0 0.0
    %2158 = vmatpush1.msra.mxu0 0.0
    %2159 = vmatprep.subr.mxu0 0.0
    %2160 = vmatpush1.msra.mxu0 0.0
    %2161 = vmatprep.subr.mxu0 0.0
    %2162 = vmatpush1.msra.mxu0 0.0
    %2163 = vmatprep.subr.mxu0 0.0
    %2164 = vmatpush1.msra.mxu0 0.0
    %2165 = vmatprep.subr.mxu0 0.0
    %2166 = vmatpush1.msra.mxu0 0.0
    %2167 = vmatprep.subr.mxu0 0.0
    %2168 = vmatpush1.msra.mxu0 0.0
    %2169 = vmatprep.subr.mxu0 0.0
    %2170 = vmatpush1.msra.mxu0 0.0
    %2171 = vmatprep.subr.mxu0 0.0
    %2172 = vmatpush1.msra.mxu0 0.0
    %2173 = vmatprep.subr.mxu0 0.0
    %2174 = vmatpush1.msra.mxu0 0.0
    %2175 = vmatprep.subr.mxu0 0.0
    %2176 = vmatpush1.msra.mxu0 0.0
    %2177 = vmatprep.subr.mxu0 0.0
    %2178 = vmatpush1.msra.mxu0 0.0
    %2179 = vmatprep.subr.mxu0 0.0
    %2180 = vmatpush1.msra.mxu0 0.0
    %2181 = vmatprep.subr.mxu0 0.0
    %2182 = vmatpush1.msra.mxu0 0.0
    %2183 = vmatprep.subr.mxu0 0.0
    %2184 = vmatpush1.msra.mxu0 0.0
    %2185 = vmatprep.subr.mxu0 0.0
    %2186 = vmatpush1.msra.mxu0 0.0
    %2187 = vmatprep.subr.mxu0 0.0
    %2188 = vmatpush1.msra.mxu0 0.0
    %2189 = vmatprep.subr.mxu0 0.0
    %2190 = vmatpush1.msra.mxu0 0.0
    %2191 = vmatprep.subr.mxu0 0.0
    %2192 = vmatpush1.msra.mxu0 0.0
    %2193 = vmatprep.subr.mxu0 0.0
    %2194 = vmatpush1.msra.mxu0 0.0
    %2195 = vmatprep.subr.mxu0 0.0
    %2196 = vmatpush1.msra.mxu0 0.0
    %2197 = vmatprep.mubr.f32.mxu0 0.0
    %2198 = vmatmul.mubr.f32.gmra.mrb[0].mxu0 %v2131
    %v2199 = vpop.f32.mrb[0].mxu0
    %v2200 = vadd.f32 0.0, %v2199
    %v2201 = vpop.f32.mrb[0].mxu0
    %2202 = vdwg.mxu0
    %v2204 = vsel %vm1953, %v2101, 0
    %2206 = vmatprep.subr.mxu0 0.0
    %2207 = vmatpush1.msra.mxu0 %v627
    %2208 = vmatprep.subr.mxu0 0.0
    %2209 = vmatpush1.msra.mxu0 0.0
    %2210 = vmatprep.subr.mxu0 0.0
    %2211 = vmatpush1.msra.mxu0 0.0
    %2212 = vmatprep.subr.mxu0 0.0
    %2213 = vmatpush1.msra.mxu0 0.0
    %2214 = vmatprep.subr.mxu0 0.0
    %2215 = vmatpush1.msra.mxu0 0.0
    %2216 = vmatprep.subr.mxu0 0.0
    %2217 = vmatpush1.msra.mxu0 0.0
    %2218 = vmatprep.subr.mxu0 0.0
    %2219 = vmatpush1.msra.mxu0 0.0
    %2220 = vmatprep.subr.mxu0 0.0
    %2221 = vmatpush1.msra.mxu0 0.0
    %2222 = vmatprep.subr.mxu0 0.0
    %2223 = vmatpush1.msra.mxu0 0.0
    %2224 = vmatprep.subr.mxu0 0.0
    %2225 = vmatpush1.msra.mxu0 0.0
    %2226 = vmatprep.subr.mxu0 0.0
    %2227 = vmatpush1.msra.mxu0 0.0
    %2228 = vmatprep.subr.mxu0 0.0
    %2229 = vmatpush1.msra.mxu0 0.0
    %2230 = vmatprep.subr.mxu0 0.0
    %2231 = vmatpush1.msra.mxu0 0.0
    %2232 = vmatprep.subr.mxu0 0.0
    %2233 = vmatpush1.msra.mxu0 0.0
    %2234 = vmatprep.subr.mxu0 0.0
    %2235 = vmatpush1.msra.mxu0 0.0
    %2236 = vmatprep.subr.mxu0 0.0
    %2237 = vmatpush1.msra.mxu0 0.0
    %2238 = vmatprep.subr.mxu0 0.0
    %2239 = vmatpush1.msra.mxu0 0.0
    %2240 = vmatprep.subr.mxu0 0.0
    %2241 = vmatpush1.msra.mxu0 0.0
    %2242 = vmatprep.subr.mxu0 0.0
    %2243 = vmatpush1.msra.mxu0 0.0
    %2244 = vmatprep.subr.mxu0 0.0
    %2245 = vmatpush1.msra.mxu0 0.0
    %2246 = vmatprep.subr.mxu0 0.0
    %2247 = vmatpush1.msra.mxu0 0.0
    %2248 = vmatprep.subr.mxu0 0.0
    %2249 = vmatpush1.msra.mxu0 0.0
    %2250 = vmatprep.subr.mxu0 0.0
    %2251 = vmatpush1.msra.mxu0 0.0
    %2252 = vmatprep.subr.mxu0 0.0
    %2253 = vmatpush1.msra.mxu0 0.0
    %2254 = vmatprep.subr.mxu0 0.0
    %2255 = vmatpush1.msra.mxu0 0.0
    %2256 = vmatprep.subr.mxu0 0.0
    %2257 = vmatpush1.msra.mxu0 0.0
    %2258 = vmatprep.subr.mxu0 0.0
    %2259 = vmatpush1.msra.mxu0 0.0
    %2260 = vmatprep.subr.mxu0 0.0
    %2261 = vmatpush1.msra.mxu0 0.0
    %2262 = vmatprep.subr.mxu0 0.0
    %2263 = vmatpush1.msra.mxu0 0.0
    %2264 = vmatprep.subr.mxu0 0.0
    %2265 = vmatpush1.msra.mxu0 0.0
    %2266 = vmatprep.subr.mxu0 0.0
    %2267 = vmatpush1.msra.mxu0 0.0
    %2268 = vmatprep.subr.mxu0 0.0
    %2269 = vmatpush1.msra.mxu0 0.0
    %2270 = vmatprep.mubr.f32.mxu0 0.0
    %2271 = vmatmul.mubr.f32.gmra.mrb[0].mxu0 %v2204
    %v2272 = vpop.f32.mrb[0].mxu0
    %v2273 = vadd.f32 0.0, %v2272
    %v2274 = vpop.f32.mrb[0].mxu0
    %2275 = vdwg.mxu0
    %v2277 = vsel %vm1953, %v2103, 0
    %2279 = vmatprep.subr.mxu0 0.0
    %2280 = vmatpush1.msra.mxu0 %v629
    %2281 = vmatprep.subr.mxu0 0.0
    %2282 = vmatpush1.msra.mxu0 0.0
    %2283 = vmatprep.subr.mxu0 0.0
    %2284 = vmatpush1.msra.mxu0 0.0
    %2285 = vmatprep.subr.mxu0 0.0
    %2286 = vmatpush1.msra.mxu0 0.0
    %2287 = vmatprep.subr.mxu0 0.0
    %2288 = vmatpush1.msra.mxu0 0.0
    %2289 = vmatprep.subr.mxu0 0.0
    %2290 = vmatpush1.msra.mxu0 0.0
    %2291 = vmatprep.subr.mxu0 0.0
    %2292 = vmatpush1.msra.mxu0 0.0
    %2293 = vmatprep.subr.mxu0 0.0
    %2294 = vmatpush1.msra.mxu0 0.0
    %2295 = vmatprep.subr.mxu0 0.0
    %2296 = vmatpush1.msra.mxu0 0.0
    %2297 = vmatprep.subr.mxu0 0.0
    %2298 = vmatpush1.msra.mxu0 0.0
    %2299 = vmatprep.subr.mxu0 0.0
    %2300 = vmatpush1.msra.mxu0 0.0
    %2301 = vmatprep.subr.mxu0 0.0
    %2302 = vmatpush1.msra.mxu0 0.0
    %2303 = vmatprep.subr.mxu0 0.0
    %2304 = vmatpush1.msra.mxu0 0.0
    %2305 = vmatprep.subr.mxu0 0.0
    %2306 = vmatpush1.msra.mxu0 0.0
    %2307 = vmatprep.subr.mxu0 0.0
    %2308 = vmatpush1.msra.mxu0 0.0
    %2309 = vmatprep.subr.mxu0 0.0
    %2310 = vmatpush1.msra.mxu0 0.0
    %2311 = vmatprep.subr.mxu0 0.0
    %2312 = vmatpush1.msra.mxu0 0.0
    %2313 = vmatprep.subr.mxu0 0.0
    %2314 = vmatpush1.msra.mxu0 0.0
    %2315 = vmatprep.subr.mxu0 0.0
    %2316 = vmatpush1.msra.mxu0 0.0
    %2317 = vmatprep.subr.mxu0 0.0
    %2318 = vmatpush1.msra.mxu0 0.0
    %2319 = vmatprep.subr.mxu0 0.0
    %2320 = vmatpush1.msra.mxu0 0.0
    %2321 = vmatprep.subr.mxu0 0.0
    %2322 = vmatpush1.msra.mxu0 0.0
    %2323 = vmatprep.subr.mxu0 0.0
    %2324 = vmatpush1.msra.mxu0 0.0
    %2325 = vmatprep.subr.mxu0 0.0
    %2326 = vmatpush1.msra.mxu0 0.0
    %2327 = vmatprep.subr.mxu0 0.0
    %2328 = vmatpush1.msra.mxu0 0.0
    %2329 = vmatprep.subr.mxu0 0.0
    %2330 = vmatpush1.msra.mxu0 0.0
    %2331 = vmatprep.subr.mxu0 0.0
    %2332 = vmatpush1.msra.mxu0 0.0
    %2333 = vmatprep.subr.mxu0 0.0
    %2334 = vmatpush1.msra.mxu0 0.0
    %2335 = vmatprep.subr.mxu0 0.0
    %2336 = vmatpush1.msra.mxu0 0.0
    %2337 = vmatprep.subr.mxu0 0.0
    %2338 = vmatpush1.msra.mxu0 0.0
    %2339 = vmatprep.subr.mxu0 0.0
    %2340 = vmatpush1.msra.mxu0 0.0
    %2341 = vmatprep.subr.mxu0 0.0
    %2342 = vmatpush1.msra.mxu0 0.0
    %2343 = vmatprep.mubr.f32.mxu0 0.0
    %2344 = vmatmul.mubr.f32.gmra.mrb[0].mxu0 %v2277
    %v2345 = vpop.f32.mrb[0].mxu0
    %v2346 = vadd.f32 0.0, %v2345
    %v2347 = vpop.f32.mrb[0].mxu0
    %2348 = vdwg.mxu0
    %v2350 = vsel %vm1953, %v2105, 0
    %2352 = vmatprep.subr.mxu0 0.0
    %2353 = vmatpush1.msra.mxu0 %v631
    %2354 = vmatprep.subr.mxu0 0.0
    %2355 = vmatpush1.msra.mxu0 0.0
    %2356 = vmatprep.subr.mxu0 0.0
    %2357 = vmatpush1.msra.mxu0 0.0
    %2358 = vmatprep.subr.mxu0 0.0
    %2359 = vmatpush1.msra.mxu0 0.0
    %2360 = vmatprep.subr.mxu0 0.0
    %2361 = vmatpush1.msra.mxu0 0.0
    %2362 = vmatprep.subr.mxu0 0.0
    %2363 = vmatpush1.msra.mxu0 0.0
    %2364 = vmatprep.subr.mxu0 0.0
    %2365 = vmatpush1.msra.mxu0 0.0
    %2366 = vmatprep.subr.mxu0 0.0
    %2367 = vmatpush1.msra.mxu0 0.0
    %2368 = vmatprep.subr.mxu0 0.0
    %2369 = vmatpush1.msra.mxu0 0.0
    %2370 = vmatprep.subr.mxu0 0.0
    %2371 = vmatpush1.msra.mxu0 0.0
    %2372 = vmatprep.subr.mxu0 0.0
    %2373 = vmatpush1.msra.mxu0 0.0
    %2374 = vmatprep.subr.mxu0 0.0
    %2375 = vmatpush1.msra.mxu0 0.0
    %2376 = vmatprep.subr.mxu0 0.0
    %2377 = vmatpush1.msra.mxu0 0.0
    %2378 = vmatprep.subr.mxu0 0.0
    %2379 = vmatpush1.msra.mxu0 0.0
    %2380 = vmatprep.subr.mxu0 0.0
    %2381 = vmatpush1.msra.mxu0 0.0
    %2382 = vmatprep.subr.mxu0 0.0
    %2383 = vmatpush1.msra.mxu0 0.0
    %2384 = vmatprep.subr.mxu0 0.0
    %2385 = vmatpush1.msra.mxu0 0.0
    %2386 = vmatprep.subr.mxu0 0.0
    %2387 = vmatpush1.msra.mxu0 0.0
    %2388 = vmatprep.subr.mxu0 0.0
    %2389 = vmatpush1.msra.mxu0 0.0
    %2390 = vmatprep.subr.mxu0 0.0
    %2391 = vmatpush1.msra.mxu0 0.0
    %2392 = vmatprep.subr.mxu0 0.0
    %2393 = vmatpush1.msra.mxu0 0.0
    %2394 = vmatprep.subr.mxu0 0.0
    %2395 = vmatpush1.msra.mxu0 0.0
    %2396 = vmatprep.subr.mxu0 0.0
    %2397 = vmatpush1.msra.mxu0 0.0
    %2398 = vmatprep.subr.mxu0 0.0
    %2399 = vmatpush1.msra.mxu0 0.0
    %2400 = vmatprep.subr.mxu0 0.0
    %2401 = vmatpush1.msra.mxu0 0.0
    %2402 = vmatprep.subr.mxu0 0.0
    %2403 = vmatpush1.msra.mxu0 0.0
    %2404 = vmatprep.subr.mxu0 0.0
    %2405 = vmatpush1.msra.mxu0 0.0
    %2406 = vmatprep.subr.mxu0 0.0
    %2407 = vmatpush1.msra.mxu0 0.0
    %2408 = vmatprep.subr.mxu0 0.0
    %2409 = vmatpush1.msra.mxu0 0.0
    %2410 = vmatprep.subr.mxu0 0.0
    %2411 = vmatpush1.msra.mxu0 0.0
    %2412 = vmatprep.subr.mxu0 0.0
    %2413 = vmatpush1.msra.mxu0 0.0
    %2414 = vmatprep.subr.mxu0 0.0
    %2415 = vmatpush1.msra.mxu0 0.0
    %2416 = vmatprep.mubr.f32.mxu0 0.0
    %2417 = vmatmul.mubr.f32.gmra.mrb[0].mxu0 %v2350
    %v2418 = vpop.f32.mrb[0].mxu0
    %v2419 = vadd.f32 0.0, %v2418
    %v2420 = vpop.f32.mrb[0].mxu0
    %2421 = vdwg.mxu0
    %v2423 = vsel %vm1953, %v2107, 0
    %2425 = vmatprep.subr.mxu0 0.0
    %2426 = vmatpush1.msra.mxu0 %v633
    %2427 = vmatprep.subr.mxu0 0.0
    %2428 = vmatpush1.msra.mxu0 0.0
    %2429 = vmatprep.subr.mxu0 0.0
    %2430 = vmatpush1.msra.mxu0 0.0
    %2431 = vmatprep.subr.mxu0 0.0
    %2432 = vmatpush1.msra.mxu0 0.0
    %2433 = vmatprep.subr.mxu0 0.0
    %2434 = vmatpush1.msra.mxu0 0.0
    %2435 = vmatprep.subr.mxu0 0.0
    %2436 = vmatpush1.msra.mxu0 0.0
    %2437 = vmatprep.subr.mxu0 0.0
    %2438 = vmatpush1.msra.mxu0 0.0
    %2439 = vmatprep.subr.mxu0 0.0
    %2440 = vmatpush1.msra.mxu0 0.0
    %2441 = vmatprep.subr.mxu0 0.0
    %2442 = vmatpush1.msra.mxu0 0.0
    %2443 = vmatprep.subr.mxu0 0.0
    %2444 = vmatpush1.msra.mxu0 0.0
    %2445 = vmatprep.subr.mxu0 0.0
    %2446 = vmatpush1.msra.mxu0 0.0
    %2447 = vmatprep.subr.mxu0 0.0
    %2448 = vmatpush1.msra.mxu0 0.0
    %2449 = vmatprep.subr.mxu0 0.0
    %2450 = vmatpush1.msra.mxu0 0.0
    %2451 = vmatprep.subr.mxu0 0.0
    %2452 = vmatpush1.msra.mxu0 0.0
    %2453 = vmatprep.subr.mxu0 0.0
    %2454 = vmatpush1.msra.mxu0 0.0
    %2455 = vmatprep.subr.mxu0 0.0
    %2456 = vmatpush1.msra.mxu0 0.0
    %2457 = vmatprep.subr.mxu0 0.0
    %2458 = vmatpush1.msra.mxu0 0.0
    %2459 = vmatprep.subr.mxu0 0.0
    %2460 = vmatpush1.msra.mxu0 0.0
    %2461 = vmatprep.subr.mxu0 0.0
    %2462 = vmatpush1.msra.mxu0 0.0
    %2463 = vmatprep.subr.mxu0 0.0
    %2464 = vmatpush1.msra.mxu0 0.0
    %2465 = vmatprep.subr.mxu0 0.0
    %2466 = vmatpush1.msra.mxu0 0.0
    %2467 = vmatprep.subr.mxu0 0.0
    %2468 = vmatpush1.msra.mxu0 0.0
    %2469 = vmatprep.subr.mxu0 0.0
    %2470 = vmatpush1.msra.mxu0 0.0
    %2471 = vmatprep.subr.mxu0 0.0
    %2472 = vmatpush1.msra.mxu0 0.0
    %2473 = vmatprep.subr.mxu0 0.0
    %2474 = vmatpush1.msra.mxu0 0.0
    %2475 = vmatprep.subr.mxu0 0.0
    %2476 = vmatpush1.msra.mxu0 0.0
    %2477 = vmatprep.subr.mxu0 0.0
    %2478 = vmatpush1.msra.mxu0 0.0
    %2479 = vmatprep.subr.mxu0 0.0
    %2480 = vmatpush1.msra.mxu0 0.0
    %2481 = vmatprep.subr.mxu0 0.0
    %2482 = vmatpush1.msra.mxu0 0.0
    %2483 = vmatprep.subr.mxu0 0.0
    %2484 = vmatpush1.msra.mxu0 0.0
    %2485 = vmatprep.subr.mxu0 0.0
    %2486 = vmatpush1.msra.mxu0 0.0
    %2487 = vmatprep.subr.mxu0 0.0
    %2488 = vmatpush1.msra.mxu0 0.0
    %2489 = vmatprep.mubr.f32.mxu0 0.0
    %2490 = vmatmul.mubr.f32.gmra.mrb[0].mxu0 %v2423
    %v2491 = vpop.f32.mrb[0].mxu0
    %v2492 = vadd.f32 0.0, %v2491
    %v2493 = vpop.f32.mrb[0].mxu0
    %2494 = vdwg.mxu0
    %v2496 = vsel %vm1953, %v2109, 0
    %2498 = vmatprep.subr.mxu0 0.0
    %2499 = vmatpush1.msra.mxu0 %v635
    %2500 = vmatprep.subr.mxu0 0.0
    %2501 = vmatpush1.msra.mxu0 0.0
    %2502 = vmatprep.subr.mxu0 0.0
    %2503 = vmatpush1.msra.mxu0 0.0
    %2504 = vmatprep.subr.mxu0 0.0
    %2505 = vmatpush1.msra.mxu0 0.0
    %2506 = vmatprep.subr.mxu0 0.0
    %2507 = vmatpush1.msra.mxu0 0.0
    %2508 = vmatprep.subr.mxu0 0.0
    %2509 = vmatpush1.msra.mxu0 0.0
    %2510 = vmatprep.subr.mxu0 0.0
    %2511 = vmatpush1.msra.mxu0 0.0
    %2512 = vmatprep.subr.mxu0 0.0
    %2513 = vmatpush1.msra.mxu0 0.0
    %2514 = vmatprep.subr.mxu0 0.0
    %2515 = vmatpush1.msra.mxu0 0.0
    %2516 = vmatprep.subr.mxu0 0.0
    %2517 = vmatpush1.msra.mxu0 0.0
    %2518 = vmatprep.subr.mxu0 0.0
    %2519 = vmatpush1.msra.mxu0 0.0
    %2520 = vmatprep.subr.mxu0 0.0
    %2521 = vmatpush1.msra.mxu0 0.0
    %2522 = vmatprep.subr.mxu0 0.0
    %2523 = vmatpush1.msra.mxu0 0.0
    %2524 = vmatprep.subr.mxu0 0.0
    %2525 = vmatpush1.msra.mxu0 0.0
    %2526 = vmatprep.subr.mxu0 0.0
    %2527 = vmatpush1.msra.mxu0 0.0
    %2528 = vmatprep.subr.mxu0 0.0
    %2529 = vmatpush1.msra.mxu0 0.0
    %2530 = vmatprep.subr.mxu0 0.0
    %2531 = vmatpush1.msra.mxu0 0.0
    %2532 = vmatprep.subr.mxu0 0.0
    %2533 = vmatpush1.msra.mxu0 0.0
    %2534 = vmatprep.subr.mxu0 0.0
    %2535 = vmatpush1.msra.mxu0 0.0
    %2536 = vmatprep.subr.mxu0 0.0
    %2537 = vmatpush1.msra.mxu0 0.0
    %2538 = vmatprep.subr.mxu0 0.0
    %2539 = vmatpush1.msra.mxu0 0.0
    %2540 = vmatprep.subr.mxu0 0.0
    %2541 = vmatpush1.msra.mxu0 0.0
    %2542 = vmatprep.subr.mxu0 0.0
    %2543 = vmatpush1.msra.mxu0 0.0
    %2544 = vmatprep.subr.mxu0 0.0
    %2545 = vmatpush1.msra.mxu0 0.0
    %2546 = vmatprep.subr.mxu0 0.0
    %2547 = vmatpush1.msra.mxu0 0.0
    %2548 = vmatprep.subr.mxu0 0.0
    %2549 = vmatpush1.msra.mxu0 0.0
    %2550 = vmatprep.subr.mxu0 0.0
    %2551 = vmatpush1.msra.mxu0 0.0
    %2552 = vmatprep.subr.mxu0 0.0
    %2553 = vmatpush1.msra.mxu0 0.0
    %2554 = vmatprep.subr.mxu0 0.0
    %2555 = vmatpush1.msra.mxu0 0.0
    %2556 = vmatprep.subr.mxu0 0.0
    %2557 = vmatpush1.msra.mxu0 0.0
    %2558 = vmatprep.subr.mxu0 0.0
    %2559 = vmatpush1.msra.mxu0 0.0
    %2560 = vmatprep.subr.mxu0 0.0
    %2561 = vmatpush1.msra.mxu0 0.0
    %2562 = vmatprep.mubr.f32.mxu0 0.0
    %2563 = vmatmul.mubr.f32.gmra.mrb[0].mxu0 %v2496
    %v2564 = vpop.f32.mrb[0].mxu0
    %v2565 = vadd.f32 0.0, %v2564
    %v2566 = vpop.f32.mrb[0].mxu0
    %2567 = vdwg.mxu0
    %v2569 = vsel %vm1953, %v2111, 0
    %2571 = vmatprep.subr.mxu0 0.0
    %2572 = vmatpush1.msra.mxu0 %v637
    %2573 = vmatprep.subr.mxu0 0.0
    %2574 = vmatpush1.msra.mxu0 0.0
    %2575 = vmatprep.subr.mxu0 0.0
    %2576 = vmatpush1.msra.mxu0 0.0
    %2577 = vmatprep.subr.mxu0 0.0
    %2578 = vmatpush1.msra.mxu0 0.0
    %2579 = vmatprep.subr.mxu0 0.0
    %2580 = vmatpush1.msra.mxu0 0.0
    %2581 = vmatprep.subr.mxu0 0.0
    %2582 = vmatpush1.msra.mxu0 0.0
    %2583 = vmatprep.subr.mxu0 0.0
    %2584 = vmatpush1.msra.mxu0 0.0
    %2585 = vmatprep.subr.mxu0 0.0
    %2586 = vmatpush1.msra.mxu0 0.0
    %2587 = vmatprep.subr.mxu0 0.0
    %2588 = vmatpush1.msra.mxu0 0.0
    %2589 = vmatprep.subr.mxu0 0.0
    %2590 = vmatpush1.msra.mxu0 0.0
    %2591 = vmatprep.subr.mxu0 0.0
    %2592 = vmatpush1.msra.mxu0 0.0
    %2593 = vmatprep.subr.mxu0 0.0
    %2594 = vmatpush1.msra.mxu0 0.0
    %2595 = vmatprep.subr.mxu0 0.0
    %2596 = vmatpush1.msra.mxu0 0.0
    %2597 = vmatprep.subr.mxu0 0.0
    %2598 = vmatpush1.msra.mxu0 0.0
    %2599 = vmatprep.subr.mxu0 0.0
    %2600 = vmatpush1.msra.mxu0 0.0
    %2601 = vmatprep.subr.mxu0 0.0
    %2602 = vmatpush1.msra.mxu0 0.0
    %2603 = vmatprep.subr.mxu0 0.0
    %2604 = vmatpush1.msra.mxu0 0.0
    %2605 = vmatprep.subr.mxu0 0.0
    %2606 = vmatpush1.msra.mxu0 0.0
    %2607 = vmatprep.subr.mxu0 0.0
    %2608 = vmatpush1.msra.mxu0 0.0
    %2609 = vmatprep.subr.mxu0 0.0
    %2610 = vmatpush1.msra.mxu0 0.0
    %2611 = vmatprep.subr.mxu0 0.0
    %2612 = vmatpush1.msra.mxu0 0.0
    %2613 = vmatprep.subr.mxu0 0.0
    %2614 = vmatpush1.msra.mxu0 0.0
    %2615 = vmatprep.subr.mxu0 0.0
    %2616 = vmatpush1.msra.mxu0 0.0
    %2617 = vmatprep.subr.mxu0 0.0
    %2618 = vmatpush1.msra.mxu0 0.0
    %2619 = vmatprep.subr.mxu0 0.0
    %2620 = vmatpush1.msra.mxu0 0.0
    %2621 = vmatprep.subr.mxu0 0.0
    %2622 = vmatpush1.msra.mxu0 0.0
    %2623 = vmatprep.subr.mxu0 0.0
    %2624 = vmatpush1.msra.mxu0 0.0
    %2625 = vmatprep.subr.mxu0 0.0
    %2626 = vmatpush1.msra.mxu0 0.0
    %2627 = vmatprep.subr.mxu0 0.0
    %2628 = vmatpush1.msra.mxu0 0.0
    %2629 = vmatprep.subr.mxu0 0.0
    %2630 = vmatpush1.msra.mxu0 0.0
    %2631 = vmatprep.subr.mxu0 0.0
    %2632 = vmatpush1.msra.mxu0 0.0
    %2633 = vmatprep.subr.mxu0 0.0
    %2634 = vmatpush1.msra.mxu0 0.0
    %2635 = vmatprep.mubr.f32.mxu0 0.0
    %2636 = vmatmul.mubr.f32.gmra.mrb[0].mxu0 %v2569
    %v2637 = vpop.f32.mrb[0].mxu0
    %v2638 = vadd.f32 0.0, %v2637
    %v2639 = vpop.f32.mrb[0].mxu0
    %2640 = vdwg.mxu0
    %v2642 = vsel %vm1953, %v2113, 0
    %2644 = vmatprep.subr.mxu0 0.0
    %2645 = vmatpush1.msra.mxu0 %v639
    %2646 = vmatprep.subr.mxu0 0.0
    %2647 = vmatpush1.msra.mxu0 0.0
    %2648 = vmatprep.subr.mxu0 0.0
    %2649 = vmatpush1.msra.mxu0 0.0
    %2650 = vmatprep.subr.mxu0 0.0
    %2651 = vmatpush1.msra.mxu0 0.0
    %2652 = vmatprep.subr.mxu0 0.0
    %2653 = vmatpush1.msra.mxu0 0.0
    %2654 = vmatprep.subr.mxu0 0.0
    %2655 = vmatpush1.msra.mxu0 0.0
    %2656 = vmatprep.subr.mxu0 0.0
    %2657 = vmatpush1.msra.mxu0 0.0
    %2658 = vmatprep.subr.mxu0 0.0
    %2659 = vmatpush1.msra.mxu0 0.0
    %2660 = vmatprep.subr.mxu0 0.0
    %2661 = vmatpush1.msra.mxu0 0.0
    %2662 = vmatprep.subr.mxu0 0.0
    %2663 = vmatpush1.msra.mxu0 0.0
    %2664 = vmatprep.subr.mxu0 0.0
    %2665 = vmatpush1.msra.mxu0 0.0
    %2666 = vmatprep.subr.mxu0 0.0
    %2667 = vmatpush1.msra.mxu0 0.0
    %2668 = vmatprep.subr.mxu0 0.0
    %2669 = vmatpush1.msra.mxu0 0.0
    %2670 = vmatprep.subr.mxu0 0.0
    %2671 = vmatpush1.msra.mxu0 0.0
    %2672 = vmatprep.subr.mxu0 0.0
    %2673 = vmatpush1.msra.mxu0 0.0
    %2674 = vmatprep.subr.mxu0 0.0
    %2675 = vmatpush1.msra.mxu0 0.0
    %2676 = vmatprep.subr.mxu0 0.0
    %2677 = vmatpush1.msra.mxu0 0.0
    %2678 = vmatprep.subr.mxu0 0.0
    %2679 = vmatpush1.msra.mxu0 0.0
    %2680 = vmatprep.subr.mxu0 0.0
    %2681 = vmatpush1.msra.mxu0 0.0
    %2682 = vmatprep.subr.mxu0 0.0
    %2683 = vmatpush1.msra.mxu0 0.0
    %2684 = vmatprep.subr.mxu0 0.0
    %2685 = vmatpush1.msra.mxu0 0.0
    %2686 = vmatprep.subr.mxu0 0.0
    %2687 = vmatpush1.msra.mxu0 0.0
    %2688 = vmatprep.subr.mxu0 0.0
    %2689 = vmatpush1.msra.mxu0 0.0
    %2690 = vmatprep.subr.mxu0 0.0
    %2691 = vmatpush1.msra.mxu0 0.0
    %2692 = vmatprep.subr.mxu0 0.0
    %2693 = vmatpush1.msra.mxu0 0.0
    %2694 = vmatprep.subr.mxu0 0.0
    %2695 = vmatpush1.msra.mxu0 0.0
    %2696 = vmatprep.subr.mxu0 0.0
    %2697 = vmatpush1.msra.mxu0 0.0
    %2698 = vmatprep.subr.mxu0 0.0
    %2699 = vmatpush1.msra.mxu0 0.0
    %2700 = vmatprep.subr.mxu0 0.0
    %2701 = vmatpush1.msra.mxu0 0.0
    %2702 = vmatprep.subr.mxu0 0.0
    %2703 = vmatpush1.msra.mxu0 0.0
    %2704 = vmatprep.subr.mxu0 0.0
    %2705 = vmatpush1.msra.mxu0 0.0
    %2706 = vmatprep.subr.mxu0 0.0
    %2707 = vmatpush1.msra.mxu0 0.0
    %2708 = vmatprep.mubr.f32.mxu0 0.0
    %2709 = vmatmul.mubr.f32.gmra.mrb[0].mxu0 %v2642
    %v2710 = vpop.f32.mrb[0].mxu0
    %v2711 = vadd.f32 0.0, %v2710
    %v2712 = vpop.f32.mrb[0].mxu0
    %2713 = vdwg.mxu0
    %v2715 = vsel %vm1953, %v2115, 0
    %2717 = vmatprep.subr.mxu0 0.0
    %2718 = vmatpush1.msra.mxu0 %v649
    %2719 = vmatprep.subr.mxu0 0.0
    %2720 = vmatpush1.msra.mxu0 0.0
    %2721 = vmatprep.subr.mxu0 0.0
    %2722 = vmatpush1.msra.mxu0 0.0
    %2723 = vmatprep.subr.mxu0 0.0
    %2724 = vmatpush1.msra.mxu0 0.0
    %2725 = vmatprep.subr.mxu0 0.0
    %2726 = vmatpush1.msra.mxu0 0.0
    %2727 = vmatprep.subr.mxu0 0.0
    %2728 = vmatpush1.msra.mxu0 0.0
    %2729 = vmatprep.subr.mxu0 0.0
    %2730 = vmatpush1.msra.mxu0 0.0
    %2731 = vmatprep.subr.mxu0 0.0
    %2732 = vmatpush1.msra.mxu0 0.0
    %2733 = vmatprep.subr.mxu0 0.0
    %2734 = vmatpush1.msra.mxu0 0.0
    %2735 = vmatprep.subr.mxu0 0.0
    %2736 = vmatpush1.msra.mxu0 0.0
    %2737 = vmatprep.subr.mxu0 0.0
    %2738 = vmatpush1.msra.mxu0 0.0
    %2739 = vmatprep.subr.mxu0 0.0
    %2740 = vmatpush1.msra.mxu0 0.0
    %2741 = vmatprep.subr.mxu0 0.0
    %2742 = vmatpush1.msra.mxu0 0.0
    %2743 = vmatprep.subr.mxu0 0.0
    %2744 = vmatpush1.msra.mxu0 0.0
    %2745 = vmatprep.subr.mxu0 0.0
    %2746 = vmatpush1.msra.mxu0 0.0
    %2747 = vmatprep.subr.mxu0 0.0
    %2748 = vmatpush1.msra.mxu0 0.0
    %2749 = vmatprep.subr.mxu0 0.0
    %2750 = vmatpush1.msra.mxu0 0.0
    %2751 = vmatprep.subr.mxu0 0.0
    %2752 = vmatpush1.msra.mxu0 0.0
    %2753 = vmatprep.subr.mxu0 0.0
    %2754 = vmatpush1.msra.mxu0 0.0
    %2755 = vmatprep.subr.mxu0 0.0
    %2756 = vmatpush1.msra.mxu0 0.0
    %2757 = vmatprep.subr.mxu0 0.0
    %2758 = vmatpush1.msra.mxu0 0.0
    %2759 = vmatprep.subr.mxu0 0.0
    %2760 = vmatpush1.msra.mxu0 0.0
    %2761 = vmatprep.subr.mxu0 0.0
    %2762 = vmatpush1.msra.mxu0 0.0
    %2763 = vmatprep.subr.mxu0 0.0
    %2764 = vmatpush1.msra.mxu0 0.0
    %2765 = vmatprep.subr.mxu0 0.0
    %2766 = vmatpush1.msra.mxu0 0.0
    %2767 = vmatprep.subr.mxu0 0.0
    %2768 = vmatpush1.msra.mxu0 0.0
    %2769 = vmatprep.subr.mxu0 0.0
    %2770 = vmatpush1.msra.mxu0 0.0
    %2771 = vmatprep.subr.mxu0 0.0
    %2772 = vmatpush1.msra.mxu0 0.0
    %2773 = vmatprep.subr.mxu0 0.0
    %2774 = vmatpush1.msra.mxu0 0.0
    %2775 = vmatprep.subr.mxu0 0.0
    %2776 = vmatpush1.msra.mxu0 0.0
    %2777 = vmatprep.subr.mxu0 0.0
    %2778 = vmatpush1.msra.mxu0 0.0
    %2779 = vmatprep.subr.mxu0 0.0
    %2780 = vmatpush1.msra.mxu0 0.0
    %2781 = vmatprep.mubr.f32.mxu0 0.0
    %2782 = vmatmul.mubr.f32.gmra.mrb[0].mxu0 %v2715
    %v2783 = vpop.f32.mrb[0].mxu0
    %v2784 = vadd.f32 0.0, %v2783
    %v2785 = vpop.f32.mrb[0].mxu0
    %2786 = vdwg.mxu0
    %v2788 = vsel %vm1953, %v2117, 0
    %2790 = vmatprep.subr.mxu0 0.0
    %2791 = vmatpush1.msra.mxu0 %v651
    %2792 = vmatprep.subr.mxu0 0.0
    %2793 = vmatpush1.msra.mxu0 0.0
    %2794 = vmatprep.subr.mxu0 0.0
    %2795 = vmatpush1.msra.mxu0 0.0
    %2796 = vmatprep.subr.mxu0 0.0
    %2797 = vmatpush1.msra.mxu0 0.0
    %2798 = vmatprep.subr.mxu0 0.0
    %2799 = vmatpush1.msra.mxu0 0.0
    %2800 = vmatprep.subr.mxu0 0.0
    %2801 = vmatpush1.msra.mxu0 0.0
    %2802 = vmatprep.subr.mxu0 0.0
    %2803 = vmatpush1.msra.mxu0 0.0
    %2804 = vmatprep.subr.mxu0 0.0
    %2805 = vmatpush1.msra.mxu0 0.0
    %2806 = vmatprep.subr.mxu0 0.0
    %2807 = vmatpush1.msra.mxu0 0.0
    %2808 = vmatprep.subr.mxu0 0.0
    %2809 = vmatpush1.msra.mxu0 0.0
    %2810 = vmatprep.subr.mxu0 0.0
    %2811 = vmatpush1.msra.mxu0 0.0
    %2812 = vmatprep.subr.mxu0 0.0
    %2813 = vmatpush1.msra.mxu0 0.0
    %2814 = vmatprep.subr.mxu0 0.0
    %2815 = vmatpush1.msra.mxu0 0.0
    %2816 = vmatprep.subr.mxu0 0.0
    %2817 = vmatpush1.msra.mxu0 0.0
    %2818 = vmatprep.subr.mxu0 0.0
    %2819 = vmatpush1.msra.mxu0 0.0
    %2820 = vmatprep.subr.mxu0 0.0
    %2821 = vmatpush1.msra.mxu0 0.0
    %2822 = vmatprep.subr.mxu0 0.0
    %2823 = vmatpush1.msra.mxu0 0.0
    %2824 = vmatprep.subr.mxu0 0.0
    %2825 = vmatpush1.msra.mxu0 0.0
    %2826 = vmatprep.subr.mxu0 0.0
    %2827 = vmatpush1.msra.mxu0 0.0
    %2828 = vmatprep.subr.mxu0 0.0
    %2829 = vmatpush1.msra.mxu0 0.0
    %2830 = vmatprep.subr.mxu0 0.0
    %2831 = vmatpush1.msra.mxu0 0.0
    %2832 = vmatprep.subr.mxu0 0.0
    %2833 = vmatpush1.msra.mxu0 0.0
    %2834 = vmatprep.subr.mxu0 0.0
    %2835 = vmatpush1.msra.mxu0 0.0
    %2836 = vmatprep.subr.mxu0 0.0
    %2837 = vmatpush1.msra.mxu0 0.0
    %2838 = vmatprep.subr.mxu0 0.0
    %2839 = vmatpush1.msra.mxu0 0.0
    %2840 = vmatprep.subr.mxu0 0.0
    %2841 = vmatpush1.msra.mxu0 0.0
    %2842 = vmatprep.subr.mxu0 0.0
    %2843 = vmatpush1.msra.mxu0 0.0
    %2844 = vmatprep.subr.mxu0 0.0
    %2845 = vmatpush1.msra.mxu0 0.0
    %2846 = vmatprep.subr.mxu0 0.0
    %2847 = vmatpush1.msra.mxu0 0.0
    %2848 = vmatprep.subr.mxu0 0.0
    %2849 = vmatpush1.msra.mxu0 0.0
    %2850 = vmatprep.subr.mxu0 0.0
    %2851 = vmatpush1.msra.mxu0 0.0
    %2852 = vmatprep.subr.mxu0 0.0
    %2853 = vmatpush1.msra.mxu0 0.0
    %2854 = vmatprep.mubr.f32.mxu0 0.0
    %2855 = vmatmul.mubr.f32.gmra.mrb[0].mxu0 %v2788
    %v2856 = vpop.f32.mrb[0].mxu0
    %v2857 = vadd.f32 0.0, %v2856
    %v2858 = vpop.f32.mrb[0].mxu0
    %2859 = vdwg.mxu0
    %v2861 = vsel %vm1953, %v2119, 0
    %2863 = vmatprep.subr.mxu0 0.0
    %2864 = vmatpush1.msra.mxu0 %v653
    %2865 = vmatprep.subr.mxu0 0.0
    %2866 = vmatpush1.msra.mxu0 0.0
    %2867 = vmatprep.subr.mxu0 0.0
    %2868 = vmatpush1.msra.mxu0 0.0
    %2869 = vmatprep.subr.mxu0 0.0
    %2870 = vmatpush1.msra.mxu0 0.0
    %2871 = vmatprep.subr.mxu0 0.0
    %2872 = vmatpush1.msra.mxu0 0.0
    %2873 = vmatprep.subr.mxu0 0.0
    %2874 = vmatpush1.msra.mxu0 0.0
    %2875 = vmatprep.subr.mxu0 0.0
    %2876 = vmatpush1.msra.mxu0 0.0
    %2877 = vmatprep.subr.mxu0 0.0
    %2878 = vmatpush1.msra.mxu0 0.0
    %2879 = vmatprep.subr.mxu0 0.0
    %2880 = vmatpush1.msra.mxu0 0.0
    %2881 = vmatprep.subr.mxu0 0.0
    %2882 = vmatpush1.msra.mxu0 0.0
    %2883 = vmatprep.subr.mxu0 0.0
    %2884 = vmatpush1.msra.mxu0 0.0
    %2885 = vmatprep.subr.mxu0 0.0
    %2886 = vmatpush1.msra.mxu0 0.0
    %2887 = vmatprep.subr.mxu0 0.0
    %2888 = vmatpush1.msra.mxu0 0.0
    %2889 = vmatprep.subr.mxu0 0.0
    %2890 = vmatpush1.msra.mxu0 0.0
    %2891 = vmatprep.subr.mxu0 0.0
    %2892 = vmatpush1.msra.mxu0 0.0
    %2893 = vmatprep.subr.mxu0 0.0
    %2894 = vmatpush1.msra.mxu0 0.0
    %2895 = vmatprep.subr.mxu0 0.0
    %2896 = vmatpush1.msra.mxu0 0.0
    %2897 = vmatprep.subr.mxu0 0.0
    %2898 = vmatpush1.msra.mxu0 0.0
    %2899 = vmatprep.subr.mxu0 0.0
    %2900 = vmatpush1.msra.mxu0 0.0
    %2901 = vmatprep.subr.mxu0 0.0
    %2902 = vmatpush1.msra.mxu0 0.0
    %2903 = vmatprep.subr.mxu0 0.0
    %2904 = vmatpush1.msra.mxu0 0.0
    %2905 = vmatprep.subr.mxu0 0.0
    %2906 = vmatpush1.msra.mxu0 0.0
    %2907 = vmatprep.subr.mxu0 0.0
    %2908 = vmatpush1.msra.mxu0 0.0
    %2909 = vmatprep.subr.mxu0 0.0
    %2910 = vmatpush1.msra.mxu0 0.0
    %2911 = vmatprep.subr.mxu0 0.0
    %2912 = vmatpush1.msra.mxu0 0.0
    %2913 = vmatprep.subr.mxu0 0.0
    %2914 = vmatpush1.msra.mxu0 0.0
    %2915 = vmatprep.subr.mxu0 0.0
    %2916 = vmatpush1.msra.mxu0 0.0
    %2917 = vmatprep.subr.mxu0 0.0
    %2918 = vmatpush1.msra.mxu0 0.0
    %2919 = vmatprep.subr.mxu0 0.0
    %2920 = vmatpush1.msra.mxu0 0.0
    %2921 = vmatprep.subr.mxu0 0.0
    %2922 = vmatpush1.msra.mxu0 0.0
    %2923 = vmatprep.subr.mxu0 0.0
    %2924 = vmatpush1.msra.mxu0 0.0
    %2925 = vmatprep.subr.mxu0 0.0
    %2926 = vmatpush1.msra.mxu0 0.0
    %2927 = vmatprep.mubr.f32.mxu0 0.0
    %2928 = vmatmul.mubr.f32.gmra.mrb[0].mxu0 %v2861
    %v2929 = vpop.f32.mrb[0].mxu0
    %v2930 = vadd.f32 0.0, %v2929
    %v2931 = vpop.f32.mrb[0].mxu0
    %2932 = vdwg.mxu0
    %v2934 = vsel %vm1953, %v2121, 0
    %2936 = vmatprep.subr.mxu0 0.0
    %2937 = vmatpush1.msra.mxu0 %v655
    %2938 = vmatprep.subr.mxu0 0.0
    %2939 = vmatpush1.msra.mxu0 0.0
    %2940 = vmatprep.subr.mxu0 0.0
    %2941 = vmatpush1.msra.mxu0 0.0
    %2942 = vmatprep.subr.mxu0 0.0
    %2943 = vmatpush1.msra.mxu0 0.0
    %2944 = vmatprep.subr.mxu0 0.0
    %2945 = vmatpush1.msra.mxu0 0.0
    %2946 = vmatprep.subr.mxu0 0.0
    %2947 = vmatpush1.msra.mxu0 0.0
    %2948 = vmatprep.subr.mxu0 0.0
    %2949 = vmatpush1.msra.mxu0 0.0
    %2950 = vmatprep.subr.mxu0 0.0
    %2951 = vmatpush1.msra.mxu0 0.0
    %2952 = vmatprep.subr.mxu0 0.0
    %2953 = vmatpush1.msra.mxu0 0.0
    %2954 = vmatprep.subr.mxu0 0.0
    %2955 = vmatpush1.msra.mxu0 0.0
    %2956 = vmatprep.subr.mxu0 0.0
    %2957 = vmatpush1.msra.mxu0 0.0
    %2958 = vmatprep.subr.mxu0 0.0
    %2959 = vmatpush1.msra.mxu0 0.0
    %2960 = vmatprep.subr.mxu0 0.0
    %2961 = vmatpush1.msra.mxu0 0.0
    %2962 = vmatprep.subr.mxu0 0.0
    %2963 = vmatpush1.msra.mxu0 0.0
    %2964 = vmatprep.subr.mxu0 0.0
    %2965 = vmatpush1.msra.mxu0 0.0
    %2966 = vmatprep.subr.mxu0 0.0
    %2967 = vmatpush1.msra.mxu0 0.0
    %2968 = vmatprep.subr.mxu0 0.0
    %2969 = vmatpush1.msra.mxu0 0.0
    %2970 = vmatprep.subr.mxu0 0.0
    %2971 = vmatpush1.msra.mxu0 0.0
    %2972 = vmatprep.subr.mxu0 0.0
    %2973 = vmatpush1.msra.mxu0 0.0
    %2974 = vmatprep.subr.mxu0 0.0
    %2975 = vmatpush1.msra.mxu0 0.0
    %2976 = vmatprep.subr.mxu0 0.0
    %2977 = vmatpush1.msra.mxu0 0.0
    %2978 = vmatprep.subr.mxu0 0.0
    %2979 = vmatpush1.msra.mxu0 0.0
    %2980 = vmatprep.subr.mxu0 0.0
    %2981 = vmatpush1.msra.mxu0 0.0
    %2982 = vmatprep.subr.mxu0 0.0
    %2983 = vmatpush1.msra.mxu0 0.0
    %2984 = vmatprep.subr.mxu0 0.0
    %2985 = vmatpush1.msra.mxu0 0.0
    %2986 = vmatprep.subr.mxu0 0.0
    %2987 = vmatpush1.msra.mxu0 0.0
    %2988 = vmatprep.subr.mxu0 0.0
    %2989 = vmatpush1.msra.mxu0 0.0
    %2990 = vmatprep.subr.mxu0 0.0
    %2991 = vmatpush1.msra.mxu0 0.0
    %2992 = vmatprep.subr.mxu0 0.0
    %2993 = vmatpush1.msra.mxu0 0.0
    %2994 = vmatprep.subr.mxu0 0.0
    %2995 = vmatpush1.msra.mxu0 0.0
    %2996 = vmatprep.subr.mxu0 0.0
    %2997 = vmatpush1.msra.mxu0 0.0
    %2998 = vmatprep.subr.mxu0 0.0
    %2999 = vmatpush1.msra.mxu0 0.0
    %3000 = vmatprep.mubr.f32.mxu0 0.0
    %3001 = vmatmul.mubr.f32.gmra.mrb[0].mxu0 %v2934
    %v3002 = vpop.f32.mrb[0].mxu0
    %v3003 = vadd.f32 0.0, %v3002
    %v3004 = vpop.f32.mrb[0].mxu0
    %3005 = vdwg.mxu0
    %v3007 = vsel %vm1953, %v2123, 0
    %3009 = vmatprep.subr.mxu0 0.0
    %3010 = vmatpush1.msra.mxu0 %v657
    %3011 = vmatprep.subr.mxu0 0.0
    %3012 = vmatpush1.msra.mxu0 0.0
    %3013 = vmatprep.subr.mxu0 0.0
    %3014 = vmatpush1.msra.mxu0 0.0
    %3015 = vmatprep.subr.mxu0 0.0
    %3016 = vmatpush1.msra.mxu0 0.0
    %3017 = vmatprep.subr.mxu0 0.0
    %3018 = vmatpush1.msra.mxu0 0.0
    %3019 = vmatprep.subr.mxu0 0.0
    %3020 = vmatpush1.msra.mxu0 0.0
    %3021 = vmatprep.subr.mxu0 0.0
    %3022 = vmatpush1.msra.mxu0 0.0
    %3023 = vmatprep.subr.mxu0 0.0
    %3024 = vmatpush1.msra.mxu0 0.0
    %3025 = vmatprep.subr.mxu0 0.0
    %3026 = vmatpush1.msra.mxu0 0.0
    %3027 = vmatprep.subr.mxu0 0.0
    %3028 = vmatpush1.msra.mxu0 0.0
    %3029 = vmatprep.subr.mxu0 0.0
    %3030 = vmatpush1.msra.mxu0 0.0
    %3031 = vmatprep.subr.mxu0 0.0
    %3032 = vmatpush1.msra.mxu0 0.0
    %3033 = vmatprep.subr.mxu0 0.0
    %3034 = vmatpush1.msra.mxu0 0.0
    %3035 = vmatprep.subr.mxu0 0.0
    %3036 = vmatpush1.msra.mxu0 0.0
    %3037 = vmatprep.subr.mxu0 0.0
    %3038 = vmatpush1.msra.mxu0 0.0
    %3039 = vmatprep.subr.mxu0 0.0
    %3040 = vmatpush1.msra.mxu0 0.0
    %3041 = vmatprep.subr.mxu0 0.0
    %3042 = vmatpush1.msra.mxu0 0.0
    %3043 = vmatprep.subr.mxu0 0.0
    %3044 = vmatpush1.msra.mxu0 0.0
    %3045 = vmatprep.subr.mxu0 0.0
    %3046 = vmatpush1.msra.mxu0 0.0
    %3047 = vmatprep.subr.mxu0 0.0
    %3048 = vmatpush1.msra.mxu0 0.0
    %3049 = vmatprep.subr.mxu0 0.0
    %3050 = vmatpush1.msra.mxu0 0.0
    %3051 = vmatprep.subr.mxu0 0.0
    %3052 = vmatpush1.msra.mxu0 0.0
    %3053 = vmatprep.subr.mxu0 0.0
    %3054 = vmatpush1.msra.mxu0 0.0
    %3055 = vmatprep.subr.mxu0 0.0
    %3056 = vmatpush1.msra.mxu0 0.0
    %3057 = vmatprep.subr.mxu0 0.0
    %3058 = vmatpush1.msra.mxu0 0.0
    %3059 = vmatprep.subr.mxu0 0.0
    %3060 = vmatpush1.msra.mxu0 0.0
    %3061 = vmatprep.subr.mxu0 0.0
    %3062 = vmatpush1.msra.mxu0 0.0
    %3063 = vmatprep.subr.mxu0 0.0
    %3064 = vmatpush1.msra.mxu0 0.0
    %3065 = vmatprep.subr.mxu0 0.0
    %3066 = vmatpush1.msra.mxu0 0.0
    %3067 = vmatprep.subr.mxu0 0.0
    %3068 = vmatpush1.msra.mxu0 0.0
    %3069 = vmatprep.subr.mxu0 0.0
    %3070 = vmatpush1.msra.mxu0 0.0
    %3071 = vmatprep.subr.mxu0 0.0
    %3072 = vmatpush1.msra.mxu0 0.0
    %3073 = vmatprep.mubr.f32.mxu0 0.0
    %3074 = vmatmul.mubr.f32.gmra.mrb[0].mxu0 %v3007
    %v3075 = vpop.f32.mrb[0].mxu0
    %v3076 = vadd.f32 0.0, %v3075
    %v3077 = vpop.f32.mrb[0].mxu0
    %3078 = vdwg.mxu0
    %v3080 = vsel %vm1953, %v2125, 0
    %3082 = vmatprep.subr.mxu0 0.0
    %3083 = vmatpush1.msra.mxu0 %v659
    %3084 = vmatprep.subr.mxu0 0.0
    %3085 = vmatpush1.msra.mxu0 0.0
    %3086 = vmatprep.subr.mxu0 0.0
    %3087 = vmatpush1.msra.mxu0 0.0
    %3088 = vmatprep.subr.mxu0 0.0
    %3089 = vmatpush1.msra.mxu0 0.0
    %3090 = vmatprep.subr.mxu0 0.0
    %3091 = vmatpush1.msra.mxu0 0.0
    %3092 = vmatprep.subr.mxu0 0.0
    %3093 = vmatpush1.msra.mxu0 0.0
    %3094 = vmatprep.subr.mxu0 0.0
    %3095 = vmatpush1.msra.mxu0 0.0
    %3096 = vmatprep.subr.mxu0 0.0
    %3097 = vmatpush1.msra.mxu0 0.0
    %3098 = vmatprep.subr.mxu0 0.0
    %3099 = vmatpush1.msra.mxu0 0.0
    %3100 = vmatprep.subr.mxu0 0.0
    %3101 = vmatpush1.msra.mxu0 0.0
    %3102 = vmatprep.subr.mxu0 0.0
    %3103 = vmatpush1.msra.mxu0 0.0
    %3104 = vmatprep.subr.mxu0 0.0
    %3105 = vmatpush1.msra.mxu0 0.0
    %3106 = vmatprep.subr.mxu0 0.0
    %3107 = vmatpush1.msra.mxu0 0.0
    %3108 = vmatprep.subr.mxu0 0.0
    %3109 = vmatpush1.msra.mxu0 0.0
    %3110 = vmatprep.subr.mxu0 0.0
    %3111 = vmatpush1.msra.mxu0 0.0
    %3112 = vmatprep.subr.mxu0 0.0
    %3113 = vmatpush1.msra.mxu0 0.0
    %3114 = vmatprep.subr.mxu0 0.0
    %3115 = vmatpush1.msra.mxu0 0.0
    %3116 = vmatprep.subr.mxu0 0.0
    %3117 = vmatpush1.msra.mxu0 0.0
    %3118 = vmatprep.subr.mxu0 0.0
    %3119 = vmatpush1.msra.mxu0 0.0
    %3120 = vmatprep.subr.mxu0 0.0
    %3121 = vmatpush1.msra.mxu0 0.0
    %3122 = vmatprep.subr.mxu0 0.0
    %3123 = vmatpush1.msra.mxu0 0.0
    %3124 = vmatprep.subr.mxu0 0.0
    %3125 = vmatpush1.msra.mxu0 0.0
    %3126 = vmatprep.subr.mxu0 0.0
    %3127 = vmatpush1.msra.mxu0 0.0
    %3128 = vmatprep.subr.mxu0 0.0
    %3129 = vmatpush1.msra.mxu0 0.0
    %3130 = vmatprep.subr.mxu0 0.0
    %3131 = vmatpush1.msra.mxu0 0.0
    %3132 = vmatprep.subr.mxu0 0.0
    %3133 = vmatpush1.msra.mxu0 0.0
    %3134 = vmatprep.subr.mxu0 0.0
    %3135 = vmatpush1.msra.mxu0 0.0
    %3136 = vmatprep.subr.mxu0 0.0
    %3137 = vmatpush1.msra.mxu0 0.0
    %3138 = vmatprep.subr.mxu0 0.0
    %3139 = vmatpush1.msra.mxu0 0.0
    %3140 = vmatprep.subr.mxu0 0.0
    %3141 = vmatpush1.msra.mxu0 0.0
    %3142 = vmatprep.subr.mxu0 0.0
    %3143 = vmatpush1.msra.mxu0 0.0
    %3144 = vmatprep.subr.mxu0 0.0
    %3145 = vmatpush1.msra.mxu0 0.0
    %3146 = vmatprep.mubr.f32.mxu0 0.0
    %3147 = vmatmul.mubr.f32.gmra.mrb[0].mxu0 %v3080
    %v3148 = vpop.f32.mrb[0].mxu0
    %v3149 = vadd.f32 0.0, %v3148
    %v3150 = vpop.f32.mrb[0].mxu0
    %3151 = vdwg.mxu0
    %v3153 = vsel %vm1953, %v2127, 0
    %3155 = vmatprep.subr.mxu0 0.0
    %3156 = vmatpush1.msra.mxu0 %v661
    %3157 = vmatprep.subr.mxu0 0.0
    %3158 = vmatpush1.msra.mxu0 0.0
    %3159 = vmatprep.subr.mxu0 0.0
    %3160 = vmatpush1.msra.mxu0 0.0
    %3161 = vmatprep.subr.mxu0 0.0
    %3162 = vmatpush1.msra.mxu0 0.0
    %3163 = vmatprep.subr.mxu0 0.0
    %3164 = vmatpush1.msra.mxu0 0.0
    %3165 = vmatprep.subr.mxu0 0.0
    %3166 = vmatpush1.msra.mxu0 0.0
    %3167 = vmatprep.subr.mxu0 0.0
    %3168 = vmatpush1.msra.mxu0 0.0
    %3169 = vmatprep.subr.mxu0 0.0
    %3170 = vmatpush1.msra.mxu0 0.0
    %3171 = vmatprep.subr.mxu0 0.0
    %3172 = vmatpush1.msra.mxu0 0.0
    %3173 = vmatprep.subr.mxu0 0.0
    %3174 = vmatpush1.msra.mxu0 0.0
    %3175 = vmatprep.subr.mxu0 0.0
    %3176 = vmatpush1.msra.mxu0 0.0
    %3177 = vmatprep.subr.mxu0 0.0
    %3178 = vmatpush1.msra.mxu0 0.0
    %3179 = vmatprep.subr.mxu0 0.0
    %3180 = vmatpush1.msra.mxu0 0.0
    %3181 = vmatprep.subr.mxu0 0.0
    %3182 = vmatpush1.msra.mxu0 0.0
    %3183 = vmatprep.subr.mxu0 0.0
    %3184 = vmatpush1.msra.mxu0 0.0
    %3185 = vmatprep.subr.mxu0 0.0
    %3186 = vmatpush1.msra.mxu0 0.0
    %3187 = vmatprep.subr.mxu0 0.0
    %3188 = vmatpush1.msra.mxu0 0.0
    %3189 = vmatprep.subr.mxu0 0.0
    %3190 = vmatpush1.msra.mxu0 0.0
    %3191 = vmatprep.subr.mxu0 0.0
    %3192 = vmatpush1.msra.mxu0 0.0
    %3193 = vmatprep.subr.mxu0 0.0
    %3194 = vmatpush1.msra.mxu0 0.0
    %3195 = vmatprep.subr.mxu0 0.0
    %3196 = vmatpush1.msra.mxu0 0.0
    %3197 = vmatprep.subr.mxu0 0.0
    %3198 = vmatpush1.msra.mxu0 0.0
    %3199 = vmatprep.subr.mxu0 0.0
    %3200 = vmatpush1.msra.mxu0 0.0
    %3201 = vmatprep.subr.mxu0 0.0
    %3202 = vmatpush1.msra.mxu0 0.0
    %3203 = vmatprep.subr.mxu0 0.0
    %3204 = vmatpush1.msra.mxu0 0.0
    %3205 = vmatprep.subr.mxu0 0.0
    %3206 = vmatpush1.msra.mxu0 0.0
    %3207 = vmatprep.subr.mxu0 0.0
    %3208 = vmatpush1.msra.mxu0 0.0
    %3209 = vmatprep.subr.mxu0 0.0
    %3210 = vmatpush1.msra.mxu0 0.0
    %3211 = vmatprep.subr.mxu0 0.0
    %3212 = vmatpush1.msra.mxu0 0.0
    %3213 = vmatprep.subr.mxu0 0.0
    %3214 = vmatpush1.msra.mxu0 0.0
    %3215 = vmatprep.subr.mxu0 0.0
    %3216 = vmatpush1.msra.mxu0 0.0
    %3217 = vmatprep.subr.mxu0 0.0
    %3218 = vmatpush1.msra.mxu0 0.0
    %3219 = vmatprep.mubr.f32.mxu0 0.0
    %3220 = vmatmul.mubr.f32.gmra.mrb[0].mxu0 %v3153
    %v3221 = vpop.f32.mrb[0].mxu0
    %v3222 = vadd.f32 0.0, %v3221
    %v3223 = vpop.f32.mrb[0].mxu0
    %3224 = vdwg.mxu0
    %v3226 = vsel %vm1953, %v2129, 0
    %3228 = vmatprep.subr.mxu0 0.0
    %3229 = vmatpush1.msra.mxu0 %v663
    %3230 = vmatprep.subr.mxu0 0.0
    %3231 = vmatpush1.msra.mxu0 0.0
    %3232 = vmatprep.subr.mxu0 0.0
    %3233 = vmatpush1.msra.mxu0 0.0
    %3234 = vmatprep.subr.mxu0 0.0
    %3235 = vmatpush1.msra.mxu0 0.0
    %3236 = vmatprep.subr.mxu0 0.0
    %3237 = vmatpush1.msra.mxu0 0.0
    %3238 = vmatprep.subr.mxu0 0.0
    %3239 = vmatpush1.msra.mxu0 0.0
    %3240 = vmatprep.subr.mxu0 0.0
    %3241 = vmatpush1.msra.mxu0 0.0
    %3242 = vmatprep.subr.mxu0 0.0
    %3243 = vmatpush1.msra.mxu0 0.0
    %3244 = vmatprep.subr.mxu0 0.0
    %3245 = vmatpush1.msra.mxu0 0.0
    %3246 = vmatprep.subr.mxu0 0.0
    %3247 = vmatpush1.msra.mxu0 0.0
    %3248 = vmatprep.subr.mxu0 0.0
    %3249 = vmatpush1.msra.mxu0 0.0
    %3250 = vmatprep.subr.mxu0 0.0
    %3251 = vmatpush1.msra.mxu0 0.0
    %3252 = vmatprep.subr.mxu0 0.0
    %3253 = vmatpush1.msra.mxu0 0.0
    %3254 = vmatprep.subr.mxu0 0.0
    %3255 = vmatpush1.msra.mxu0 0.0
    %3256 = vmatprep.subr.mxu0 0.0
    %3257 = vmatpush1.msra.mxu0 0.0
    %3258 = vmatprep.subr.mxu0 0.0
    %3259 = vmatpush1.msra.mxu0 0.0
    %3260 = vmatprep.subr.mxu0 0.0
    %3261 = vmatpush1.msra.mxu0 0.0
    %3262 = vmatprep.subr.mxu0 0.0
    %3263 = vmatpush1.msra.mxu0 0.0
    %3264 = vmatprep.subr.mxu0 0.0
    %3265 = vmatpush1.msra.mxu0 0.0
    %3266 = vmatprep.subr.mxu0 0.0
    %3267 = vmatpush1.msra.mxu0 0.0
    %3268 = vmatprep.subr.mxu0 0.0
    %3269 = vmatpush1.msra.mxu0 0.0
    %3270 = vmatprep.subr.mxu0 0.0
    %3271 = vmatpush1.msra.mxu0 0.0
    %3272 = vmatprep.subr.mxu0 0.0
    %3273 = vmatpush1.msra.mxu0 0.0
    %3274 = vmatprep.subr.mxu0 0.0
    %3275 = vmatpush1.msra.mxu0 0.0
    %3276 = vmatprep.subr.mxu0 0.0
    %3277 = vmatpush1.msra.mxu0 0.0
    %3278 = vmatprep.subr.mxu0 0.0
    %3279 = vmatpush1.msra.mxu0 0.0
    %3280 = vmatprep.subr.mxu0 0.0
    %3281 = vmatpush1.msra.mxu0 0.0
    %3282 = vmatprep.subr.mxu0 0.0
    %3283 = vmatpush1.msra.mxu0 0.0
    %3284 = vmatprep.subr.mxu0 0.0
    %3285 = vmatpush1.msra.mxu0 0.0
    %3286 = vmatprep.subr.mxu0 0.0
    %3287 = vmatpush1.msra.mxu0 0.0
    %3288 = vmatprep.subr.mxu0 0.0
    %3289 = vmatpush1.msra.mxu0 0.0
    %3290 = vmatprep.subr.mxu0 0.0
    %3291 = vmatpush1.msra.mxu0 0.0
    %3292 = vmatprep.mubr.f32.mxu0 0.0
    %3293 = vmatmul.mubr.f32.gmra.mrb[0].mxu0 %v3226
    %v3294 = vpop.f32.mrb[0].mxu0
    %v3295 = vadd.f32 0.0, %v3294
    %v3296 = vpop.f32.mrb[0].mxu0
    %3297 = vdwg.mxu0
    %v3298 = vld [vmem:[%s5] sm:$0xff]
    %v3299 = vld [vmem:[%s5 + $0x8] sm:$0xff]
    %v3300 = vld [vmem:[%s5 + $0x10] sm:$0xff]
    %v3301 = vld [vmem:[%s5 + $0x18] sm:$0xff]
    %v3303 = vsel %vm768, %v2200, 0
    %v3306 = vsel %vm768, %v2273, 0
    %v3309 = vsel %vm768, %v2346, 0
    %v3312 = vsel %vm768, %v2419, 0
    %v3315 = vsel %vm768, %v2492, 0
    %v3318 = vsel %vm768, %v2565, 0
    %v3321 = vsel %vm768, %v2638, 0
    %v3324 = vsel %vm768, %v2711, 0
    %3326 = vmatprep.subr.mxu0 0.0
    %3327 = vmatpush1.msra.mxu0 %v3298
    %3328 = vmatprep.subr.mxu0 0.0
    %3329 = vmatpush1.msra.mxu0 %v3299
    %3330 = vmatprep.subr.mxu0 0.0
    %3331 = vmatpush1.msra.mxu0 0.0
    %3332 = vmatprep.subr.mxu0 0.0
    %3333 = vmatpush1.msra.mxu0 0.0
    %3334 = vmatprep.subr.mxu0 0.0
    %3335 = vmatpush1.msra.mxu0 0.0
    %3336 = vmatprep.subr.mxu0 0.0
    %3337 = vmatpush1.msra.mxu0 0.0
    %3338 = vmatprep.subr.mxu0 0.0
    %3339 = vmatpush1.msra.mxu0 0.0
    %3340 = vmatprep.subr.mxu0 0.0
    %3341 = vmatpush1.msra.mxu0 0.0
    %3342 = vmatprep.subr.mxu0 0.0
    %3343 = vmatpush1.msra.mxu0 0.0
    %3344 = vmatprep.subr.mxu0 0.0
    %3345 = vmatpush1.msra.mxu0 0.0
    %3346 = vmatprep.subr.mxu0 0.0
    %3347 = vmatpush1.msra.mxu0 0.0
    %3348 = vmatprep.subr.mxu0 0.0
    %3349 = vmatpush1.msra.mxu0 0.0
    %3350 = vmatprep.subr.mxu0 0.0
    %3351 = vmatpush1.msra.mxu0 0.0
    %3352 = vmatprep.subr.mxu0 0.0
    %3353 = vmatpush1.msra.mxu0 0.0
    %3354 = vmatprep.subr.mxu0 0.0
    %3355 = vmatpush1.msra.mxu0 0.0
    %3356 = vmatprep.subr.mxu0 0.0
    %3357 = vmatpush1.msra.mxu0 0.0
    %3358 = vmatprep.subr.mxu0 0.0
    %3359 = vmatpush1.msra.mxu0 0.0
    %3360 = vmatprep.subr.mxu0 0.0
    %3361 = vmatpush1.msra.mxu0 0.0
    %3362 = vmatprep.subr.mxu0 0.0
    %3363 = vmatpush1.msra.mxu0 0.0
    %3364 = vmatprep.subr.mxu0 0.0
    %3365 = vmatpush1.msra.mxu0 0.0
    %3366 = vmatprep.subr.mxu0 0.0
    %3367 = vmatpush1.msra.mxu0 0.0
    %3368 = vmatprep.subr.mxu0 0.0
    %3369 = vmatpush1.msra.mxu0 0.0
    %3370 = vmatprep.subr.mxu0 0.0
    %3371 = vmatpush1.msra.mxu0 0.0
    %3372 = vmatprep.subr.mxu0 0.0
    %3373 = vmatpush1.msra.mxu0 0.0
    %3374 = vmatprep.subr.mxu0 0.0
    %3375 = vmatpush1.msra.mxu0 0.0
    %3376 = vmatprep.subr.mxu0 0.0
    %3377 = vmatpush1.msra.mxu0 0.0
    %3378 = vmatprep.subr.mxu0 0.0
    %3379 = vmatpush1.msra.mxu0 0.0
    %3380 = vmatprep.subr.mxu0 0.0
    %3381 = vmatpush1.msra.mxu0 0.0
    %3382 = vmatprep.subr.mxu0 0.0
    %3383 = vmatpush1.msra.mxu0 0.0
    %3384 = vmatprep.subr.mxu0 0.0
    %3385 = vmatpush1.msra.mxu0 0.0
    %3386 = vmatprep.subr.mxu0 0.0
    %3387 = vmatpush1.msra.mxu0 0.0
    %3388 = vmatprep.subr.mxu0 0.0
    %3389 = vmatpush1.msra.mxu0 0.0
    %3390 = vmatprep.mubr.f32.mxu0 0.0
    %3391 = vmatmul.mubr.f32.gmra.mrb[0].mxu0 %v3303
    %v3392 = vpop.f32.mrb[0].mxu0
    %v3393 = vadd.f32 0.0, %v3392
    %v3394 = vpop.f32.mrb[0].mxu0
    %3395 = vmatprep.mubr.f32.mxu0 0.0
    %3396 = vmatmul.mubr.f32.gmra.mrb[0].mxu0 %v3306
    %v3397 = vpop.f32.mrb[0].mxu0
    %v3398 = vadd.f32 0.0, %v3397
    %v3399 = vpop.f32.mrb[0].mxu0
    %3400 = vmatprep.mubr.f32.mxu0 0.0
    %3401 = vmatmul.mubr.f32.gmra.mrb[0].mxu0 %v3309
    %v3402 = vpop.f32.mrb[0].mxu0
    %v3403 = vadd.f32 0.0, %v3402
    %v3404 = vpop.f32.mrb[0].mxu0
    %3405 = vmatprep.mubr.f32.mxu0 0.0
    %3406 = vmatmul.mubr.f32.gmra.mrb[0].mxu0 %v3312
    %v3407 = vpop.f32.mrb[0].mxu0
    %v3408 = vadd.f32 0.0, %v3407
    %v3409 = vpop.f32.mrb[0].mxu0
    %3410 = vmatprep.mubr.f32.mxu0 0.0
    %3411 = vmatmul.mubr.f32.gmra.mrb[0].mxu0 %v3315
    %v3412 = vpop.f32.mrb[0].mxu0
    %v3413 = vadd.f32 0.0, %v3412
    %v3414 = vpop.f32.mrb[0].mxu0
    %3415 = vmatprep.mubr.f32.mxu0 0.0
    %3416 = vmatmul.mubr.f32.gmra.mrb[0].mxu0 %v3318
    %v3417 = vpop.f32.mrb[0].mxu0
    %v3418 = vadd.f32 0.0, %v3417
    %v3419 = vpop.f32.mrb[0].mxu0
    %3420 = vmatprep.mubr.f32.mxu0 0.0
    %3421 = vmatmul.mubr.f32.gmra.mrb[0].mxu0 %v3321
    %v3422 = vpop.f32.mrb[0].mxu0
    %v3423 = vadd.f32 0.0, %v3422
    %v3424 = vpop.f32.mrb[0].mxu0
    %3425 = vmatprep.mubr.f32.mxu0 0.0
    %3426 = vmatmul.mubr.f32.gmra.mrb[0].mxu0 %v3324
    %v3427 = vpop.f32.mrb[0].mxu0
    %v3428 = vadd.f32 0.0, %v3427
    %v3429 = vpop.f32.mrb[0].mxu0
    %3430 = vdwg.mxu0
    %v3432 = vsel %vm768, %v2784, 0
    %v3435 = vsel %vm768, %v2857, 0
    %v3438 = vsel %vm768, %v2930, 0
    %v3441 = vsel %vm768, %v3003, 0
    %v3444 = vsel %vm768, %v3076, 0
    %v3447 = vsel %vm768, %v3149, 0
    %v3450 = vsel %vm768, %v3222, 0
    %v3453 = vsel %vm768, %v3295, 0
    %3455 = vmatprep.subr.mxu0 0.0
    %3456 = vmatpush1.msra.mxu0 %v3300
    %3457 = vmatprep.subr.mxu0 0.0
    %3458 = vmatpush1.msra.mxu0 %v3301
    %3459 = vmatprep.subr.mxu0 0.0
    %3460 = vmatpush1.msra.mxu0 0.0
    %3461 = vmatprep.subr.mxu0 0.0
    %3462 = vmatpush1.msra.mxu0 0.0
    %3463 = vmatprep.subr.mxu0 0.0
    %3464 = vmatpush1.msra.mxu0 0.0
    %3465 = vmatprep.subr.mxu0 0.0
    %3466 = vmatpush1.msra.mxu0 0.0
    %3467 = vmatprep.subr.mxu0 0.0
    %3468 = vmatpush1.msra.mxu0 0.0
    %3469 = vmatprep.subr.mxu0 0.0
    %3470 = vmatpush1.msra.mxu0 0.0
    %3471 = vmatprep.subr.mxu0 0.0
    %3472 = vmatpush1.msra.mxu0 0.0
    %3473 = vmatprep.subr.mxu0 0.0
    %3474 = vmatpush1.msra.mxu0 0.0
    %3475 = vmatprep.subr.mxu0 0.0
    %3476 = vmatpush1.msra.mxu0 0.0
    %3477 = vmatprep.subr.mxu0 0.0
    %3478 = vmatpush1.msra.mxu0 0.0
    %3479 = vmatprep.subr.mxu0 0.0
    %3480 = vmatpush1.msra.mxu0 0.0
    %3481 = vmatprep.subr.mxu0 0.0
    %3482 = vmatpush1.msra.mxu0 0.0
    %3483 = vmatprep.subr.mxu0 0.0
    %3484 = vmatpush1.msra.mxu0 0.0
    %3485 = vmatprep.subr.mxu0 0.0
    %3486 = vmatpush1.msra.mxu0 0.0
    %3487 = vmatprep.subr.mxu0 0.0
    %3488 = vmatpush1.msra.mxu0 0.0
    %3489 = vmatprep.subr.mxu0 0.0
    %3490 = vmatpush1.msra.mxu0 0.0
    %3491 = vmatprep.subr.mxu0 0.0
    %3492 = vmatpush1.msra.mxu0 0.0
    %3493 = vmatprep.subr.mxu0 0.0
    %3494 = vmatpush1.msra.mxu0 0.0
    %3495 = vmatprep.subr.mxu0 0.0
    %3496 = vmatpush1.msra.mxu0 0.0
    %3497 = vmatprep.subr.mxu0 0.0
    %3498 = vmatpush1.msra.mxu0 0.0
    %3499 = vmatprep.subr.mxu0 0.0
    %3500 = vmatpush1.msra.mxu0 0.0
    %3501 = vmatprep.subr.mxu0 0.0
    %3502 = vmatpush1.msra.mxu0 0.0
    %3503 = vmatprep.subr.mxu0 0.0
    %3504 = vmatpush1.msra.mxu0 0.0
    %3505 = vmatprep.subr.mxu0 0.0
    %3506 = vmatpush1.msra.mxu0 0.0
    %3507 = vmatprep.subr.mxu0 0.0
    %3508 = vmatpush1.msra.mxu0 0.0
    %3509 = vmatprep.subr.mxu0 0.0
    %3510 = vmatpush1.msra.mxu0 0.0
    %3511 = vmatprep.subr.mxu0 0.0
    %3512 = vmatpush1.msra.mxu0 0.0
    %3513 = vmatprep.subr.mxu0 0.0
    %3514 = vmatpush1.msra.mxu0 0.0
    %3515 = vmatprep.subr.mxu0 0.0
    %3516 = vmatpush1.msra.mxu0 0.0
    %3517 = vmatprep.subr.mxu0 0.0
    %3518 = vmatpush1.msra.mxu0 0.0
    %3519 = vmatprep.mubr.f32.mxu0 0.0
    %3520 = vmatmul.mubr.f32.gmra.mrb[0].mxu0 %v3432
    %v3521 = vpop.f32.mrb[0].mxu0
    %v3522 = vadd.f32 0.0, %v3521
    %v3523 = vpop.f32.mrb[0].mxu0
    %3524 = vmatprep.mubr.f32.mxu0 0.0
    %3525 = vmatmul.mubr.f32.gmra.mrb[0].mxu0 %v3435
    %v3526 = vpop.f32.mrb[0].mxu0
    %v3527 = vadd.f32 0.0, %v3526
    %v3528 = vpop.f32.mrb[0].mxu0
    %3529 = vmatprep.mubr.f32.mxu0 0.0
    %3530 = vmatmul.mubr.f32.gmra.mrb[0].mxu0 %v3438
    %v3531 = vpop.f32.mrb[0].mxu0
    %v3532 = vadd.f32 0.0, %v3531
    %v3533 = vpop.f32.mrb[0].mxu0
    %3534 = vmatprep.mubr.f32.mxu0 0.0
    %3535 = vmatmul.mubr.f32.gmra.mrb[0].mxu0 %v3441
    %v3536 = vpop.f32.mrb[0].mxu0
    %v3537 = vadd.f32 0.0, %v3536
    %v3538 = vpop.f32.mrb[0].mxu0
    %3539 = vmatprep.mubr.f32.mxu0 0.0
    %3540 = vmatmul.mubr.f32.gmra.mrb[0].mxu0 %v3444
    %v3541 = vpop.f32.mrb[0].mxu0
    %v3542 = vadd.f32 0.0, %v3541
    %v3543 = vpop.f32.mrb[0].mxu0
    %3544 = vmatprep.mubr.f32.mxu0 0.0
    %3545 = vmatmul.mubr.f32.gmra.mrb[0].mxu0 %v3447
    %v3546 = vpop.f32.mrb[0].mxu0
    %v3547 = vadd.f32 0.0, %v3546
    %v3548 = vpop.f32.mrb[0].mxu0
    %3549 = vmatprep.mubr.f32.mxu0 0.0
    %3550 = vmatmul.mubr.f32.gmra.mrb[0].mxu0 %v3450
    %v3551 = vpop.f32.mrb[0].mxu0
    %v3552 = vadd.f32 0.0, %v3551
    %v3553 = vpop.f32.mrb[0].mxu0
    %3554 = vmatprep.mubr.f32.mxu0 0.0
    %3555 = vmatmul.mubr.f32.gmra.mrb[0].mxu0 %v3453
    %v3556 = vpop.f32.mrb[0].mxu0
    %v3557 = vadd.f32 0.0, %v3556
    %v3558 = vpop.f32.mrb[0].mxu0
    %3559 = vdwg.mxu0
    %v3560 = vsel %vm284, %v3393, 0.0
    %v3561 = vsel %vm284, %v3522, 0.0
    %v3562 = vadd.f32 %v3560, %v3561
    %v3563 = vsel %vm284, %v3398, 0.0
    %v3564 = vsel %vm284, %v3527, 0.0
    %v3565 = vadd.f32 %v3563, %v3564
    %v3566 = vsel %vm284, %v3403, 0.0
    %v3567 = vsel %vm284, %v3532, 0.0
    %v3568 = vadd.f32 %v3566, %v3567
    %v3569 = vsel %vm284, %v3408, 0.0
    %v3570 = vsel %vm284, %v3537, 0.0
    %v3571 = vadd.f32 %v3569, %v3570
    %v3572 = vsel %vm284, %v3413, 0.0
    %v3573 = vsel %vm284, %v3542, 0.0
    %v3574 = vadd.f32 %v3572, %v3573
    %v3575 = vsel %vm284, %v3418, 0.0
    %v3576 = vsel %vm284, %v3547, 0.0
    %v3577 = vadd.f32 %v3575, %v3576
    %v3578 = vsel %vm284, %v3423, 0.0
    %v3579 = vsel %vm284, %v3552, 0.0
    %v3580 = vadd.f32 %v3578, %v3579
    %v3581 = vsel %vm284, %v3428, 0.0
    %v3582 = vsel %vm284, %v3557, 0.0
    %v3583 = vadd.f32 %v3581, %v3582
    %v3584 = vld [vmem:[%s2 + $0x1] sm:$0x1]
    %v3585 = vlaneseq
    %v3586 = vshrl.u32 %v3585, 7
    %v3587 = vsub.s32 0, %v3586
    %v3588 = vrot.slane %v3584, %v3587
    %v3589 = vadd.f32 %v3562, %v3588
    %v3590 = vadd.f32 %v3565, %v3588
    %v3591 = vadd.f32 %v3568, %v3588
    %v3592 = vadd.f32 %v3571, %v3588
    %v3593 = vadd.f32 %v3574, %v3588
    %v3594 = vadd.f32 %v3577, %v3588
    %v3595 = vadd.f32 %v3580, %v3588
    %v3596 = vadd.f32 %v3583, %v3588
    %v3597 = vadd.f32 %v3589, %v406
    %v3598 = vadd.f32 %v3590, %v407
    %v3599 = vadd.f32 %v3591, %v408
    %v3600 = vadd.f32 %v3592, %v409
    %v3601 = vadd.f32 %v3593, %v410
    %v3602 = vadd.f32 %v3594, %v411
    %v3603 = vadd.f32 %v3595, %v412
    %v3604 = vadd.f32 %v3596, %v413
    %v3605 = vld [vmem:[%s2 + $0x2] sm:$0x1]
    %v3606 = vld [vmem:[%s2 + $0x3] sm:$0x1]
    %v3607 = vsel %vm284, %v3597, 0.0
    %3608 = vadd.xlane.f32.xlu0 %v3607
    %v3609 = vpop.xlane.xlu0 %3608
    %v3610 = vsel %vm284, %v3598, 0.0
    %3611 = vadd.xlane.f32.xlu0 %v3610
    %v3612 = vpop.xlane.xlu0 %3611
    %v3613 = vsel %vm284, %v3599, 0.0
    %3614 = vadd.xlane.f32.xlu0 %v3613
    %v3615 = vpop.xlane.xlu0 %3614
    %v3616 = vsel %vm284, %v3600, 0.0
    %3617 = vadd.xlane.f32.xlu0 %v3616
    %v3618 = vpop.xlane.xlu0 %3617
    %v3619 = vsel %vm284, %v3601, 0.0
    %3620 = vadd.xlane.f32.xlu0 %v3619
    %v3621 = vpop.xlane.xlu0 %3620
    %v3622 = vsel %vm284, %v3602, 0.0
    %3623 = vadd.xlane.f32.xlu0 %v3622
    %v3624 = vpop.xlane.xlu0 %3623
    %v3625 = vsel %vm284, %v3603, 0.0
    %3626 = vadd.xlane.f32.xlu0 %v3625
    %v3627 = vpop.xlane.xlu0 %3626
    %v3628 = vsel %vm284, %v3604, 0.0
    %3629 = vadd.xlane.f32.xlu0 %v3628
    %v3630 = vpop.xlane.xlu0 %3629
    %v3631 = vmul.f32 %v3609, %v309
    %v3632 = vmul.f32 %v3612, %v309
    %v3633 = vmul.f32 %v3615, %v309
    %v3634 = vmul.f32 %v3618, %v309
    %v3635 = vmul.f32 %v3621, %v309
    %v3636 = vmul.f32 %v3624, %v309
    %v3637 = vmul.f32 %v3627, %v309
    %v3638 = vmul.f32 %v3630, %v309
    %v3639 = vsub.f32 %v3597, %v3631
    %v3640 = vsub.f32 %v3598, %v3632
    %v3641 = vsub.f32 %v3599, %v3633
    %v3642 = vsub.f32 %v3600, %v3634
    %v3643 = vsub.f32 %v3601, %v3635
    %v3644 = vsub.f32 %v3602, %v3636
    %v3645 = vsub.f32 %v3603, %v3637
    %v3646 = vsub.f32 %v3604, %v3638
    %v3647 = vmul.f32 %v3639, %v3639
    %v3648 = vmul.f32 %v3640, %v3640
    %v3649 = vmul.f32 %v3641, %v3641
    %v3650 = vmul.f32 %v3642, %v3642
    %v3651 = vmul.f32 %v3643, %v3643
    %v3652 = vmul.f32 %v3644, %v3644
    %v3653 = vmul.f32 %v3645, %v3645
    %v3654 = vmul.f32 %v3646, %v3646
    %v3655 = vsel %vm284, %v3647, 0.0
    %3656 = vadd.xlane.f32.xlu0 %v3655
    %v3657 = vpop.xlane.xlu0 %3656
    %v3658 = vsel %vm284, %v3648, 0.0
    %3659 = vadd.xlane.f32.xlu0 %v3658
    %v3660 = vpop.xlane.xlu0 %3659
    %v3661 = vsel %vm284, %v3649, 0.0
    %3662 = vadd.xlane.f32.xlu0 %v3661
    %v3663 = vpop.xlane.xlu0 %3662
    %v3664 = vsel %vm284, %v3650, 0.0
    %3665 = vadd.xlane.f32.xlu0 %v3664
    %v3666 = vpop.xlane.xlu0 %3665
    %v3667 = vsel %vm284, %v3651, 0.0
    %3668 = vadd.xlane.f32.xlu0 %v3667
    %v3669 = vpop.xlane.xlu0 %3668
    %v3670 = vsel %vm284, %v3652, 0.0
    %3671 = vadd.xlane.f32.xlu0 %v3670
    %v3672 = vpop.xlane.xlu0 %3671
    %v3673 = vsel %vm284, %v3653, 0.0
    %3674 = vadd.xlane.f32.xlu0 %v3673
    %v3675 = vpop.xlane.xlu0 %3674
    %v3676 = vsel %vm284, %v3654, 0.0
    %3677 = vadd.xlane.f32.xlu0 %v3676
    %v3678 = vpop.xlane.xlu0 %3677
    %v3679 = vmul.f32 %v3657, %v309
    %v3680 = vmul.f32 %v3660, %v309
    %v3681 = vmul.f32 %v3663, %v309
    %v3682 = vmul.f32 %v3666, %v309
    %v3683 = vmul.f32 %v3669, %v309
    %v3684 = vmul.f32 %v3672, %v309
    %v3685 = vmul.f32 %v3675, %v309
    %v3686 = vmul.f32 %v3678, %v309
    %v3687 = vadd.f32 %v3679, 1e-05
    %v3688 = vadd.f32 %v3680, 1e-05
    %v3689 = vadd.f32 %v3681, 1e-05
    %v3690 = vadd.f32 %v3682, 1e-05
    %v3691 = vadd.f32 %v3683, 1e-05
    %v3692 = vadd.f32 %v3684, 1e-05
    %v3693 = vadd.f32 %v3685, 1e-05
    %v3694 = vadd.f32 %v3686, 1e-05
    %v3695 = vrsqrt.pop %v3687
    %v3696 = vrsqrt.pop %v3688
    %v3697 = vrsqrt.pop %v3689
    %v3698 = vrsqrt.pop %v3690
    %v3699 = vrsqrt.pop %v3691
    %v3700 = vrsqrt.pop %v3692
    %v3701 = vrsqrt.pop %v3693
    %v3702 = vrsqrt.pop %v3694
    %v3703 = vmul.f32 %v3639, %v3695
    %v3704 = vmul.f32 %v3640, %v3696
    %v3705 = vmul.f32 %v3641, %v3697
    %v3706 = vmul.f32 %v3642, %v3698
    %v3707 = vmul.f32 %v3643, %v3699
    %v3708 = vmul.f32 %v3644, %v3700
    %v3709 = vmul.f32 %v3645, %v3701
    %v3710 = vmul.f32 %v3646, %v3702
    %v3711 = vlaneseq
    %v3712 = vshrl.u32 %v3711, 7
    %v3713 = vsub.s32 0, %v3712
    %v3714 = vrot.slane %v3605, %v3713
    %v3715 = vmul.f32 %v3703, %v3714
    %v3716 = vmul.f32 %v3704, %v3714
    %v3717 = vmul.f32 %v3705, %v3714
    %v3718 = vmul.f32 %v3706, %v3714
    %v3719 = vmul.f32 %v3707, %v3714
    %v3720 = vmul.f32 %v3708, %v3714
    %v3721 = vmul.f32 %v3709, %v3714
    %v3722 = vmul.f32 %v3710, %v3714
    %v3723 = vlaneseq
    %v3724 = vshrl.u32 %v3723, 7
    %v3725 = vsub.s32 0, %v3724
    %v3726 = vrot.slane %v3606, %v3725
    %v3727 = vadd.f32 %v3715, %v3726
    %v3728 = vadd.f32 %v3716, %v3726
    %v3729 = vadd.f32 %v3717, %v3726
    %v3730 = vadd.f32 %v3718, %v3726
    %v3731 = vadd.f32 %v3719, %v3726
    %v3732 = vadd.f32 %v3720, %v3726
    %v3733 = vadd.f32 %v3721, %v3726
    %v3734 = vadd.f32 %v3722, %v3726
    %v3735 = vld [vmem:[%s6] sm:$0xff]
    %v3736 = vld [vmem:[%s6 + $0x8] sm:$0xff]
    %v3737 = vld [vmem:[%s6 + $0x10] sm:$0xff]
    %v3738 = vld [vmem:[%s6 + $0x18] sm:$0xff]
    %v3739 = vld [vmem:[%s2 + $0x4] sm:$0x1]
    %v3740 = vlaneseq
    %v3741 = vshrl.u32 %v3740, 7
    %v3742 = vsub.s32 0, %v3741
    %v3743 = vrot.slane %v3739, %v3742
    %v3745 = vsel %vm284, %v3727, 0
    %v3748 = vsel %vm284, %v3728, 0
    %v3751 = vsel %vm284, %v3729, 0
    %v3754 = vsel %vm284, %v3730, 0
    %v3757 = vsel %vm284, %v3731, 0
    %v3760 = vsel %vm284, %v3732, 0
    %v3763 = vsel %vm284, %v3733, 0
    %v3766 = vsel %vm284, %v3734, 0
    %3768 = vmatprep.subr.mxu0 0.0
    %3769 = vmatpush1.msra.mxu0 %v3735
    %3770 = vmatprep.subr.mxu0 0.0
    %3771 = vmatpush1.msra.mxu0 %v3736
    %3772 = vmatprep.subr.mxu0 0.0
    %3773 = vmatpush1.msra.mxu0 %v3737
    %3774 = vmatprep.subr.mxu0 0.0
    %3775 = vmatpush1.msra.mxu0 %v3738
    %3776 = vmatprep.subr.mxu0 0.0
    %3777 = vmatpush1.msra.mxu0 0.0
    %3778 = vmatprep.subr.mxu0 0.0
    %3779 = vmatpush1.msra.mxu0 0.0
    %3780 = vmatprep.subr.mxu0 0.0
    %3781 = vmatpush1.msra.mxu0 0.0
    %3782 = vmatprep.subr.mxu0 0.0
    %3783 = vmatpush1.msra.mxu0 0.0
    %3784 = vmatprep.subr.mxu0 0.0
    %3785 = vmatpush1.msra.mxu0 0.0
    %3786 = vmatprep.subr.mxu0 0.0
    %3787 = vmatpush1.msra.mxu0 0.0
    %3788 = vmatprep.subr.mxu0 0.0
    %3789 = vmatpush1.msra.mxu0 0.0
    %3790 = vmatprep.subr.mxu0 0.0
    %3791 = vmatpush1.msra.mxu0 0.0
    %3792 = vmatprep.subr.mxu0 0.0
    %3793 = vmatpush1.msra.mxu0 0.0
    %3794 = vmatprep.subr.mxu0 0.0
    %3795 = vmatpush1.msra.mxu0 0.0
    %3796 = vmatprep.subr.mxu0 0.0
    %3797 = vmatpush1.msra.mxu0 0.0
    %3798 = vmatprep.subr.mxu0 0.0
    %3799 = vmatpush1.msra.mxu0 0.0
    %3800 = vmatprep.subr.mxu0 0.0
    %3801 = vmatpush1.msra.mxu0 0.0
    %3802 = vmatprep.subr.mxu0 0.0
    %3803 = vmatpush1.msra.mxu0 0.0
    %3804 = vmatprep.subr.mxu0 0.0
    %3805 = vmatpush1.msra.mxu0 0.0
    %3806 = vmatprep.subr.mxu0 0.0
    %3807 = vmatpush1.msra.mxu0 0.0
    %3808 = vmatprep.subr.mxu0 0.0
    %3809 = vmatpush1.msra.mxu0 0.0
    %3810 = vmatprep.subr.mxu0 0.0
    %3811 = vmatpush1.msra.mxu0 0.0
    %3812 = vmatprep.subr.mxu0 0.0
    %3813 = vmatpush1.msra.mxu0 0.0
    %3814 = vmatprep.subr.mxu0 0.0
    %3815 = vmatpush1.msra.mxu0 0.0
    %3816 = vmatprep.subr.mxu0 0.0
    %3817 = vmatpush1.msra.mxu0 0.0
    %3818 = vmatprep.subr.mxu0 0.0
    %3819 = vmatpush1.msra.mxu0 0.0
    %3820 = vmatprep.subr.mxu0 0.0
    %3821 = vmatpush1.msra.mxu0 0.0
    %3822 = vmatprep.subr.mxu0 0.0
    %3823 = vmatpush1.msra.mxu0 0.0
    %3824 = vmatprep.subr.mxu0 0.0
    %3825 = vmatpush1.msra.mxu0 0.0
    %3826 = vmatprep.subr.mxu0 0.0
    %3827 = vmatpush1.msra.mxu0 0.0
    %3828 = vmatprep.subr.mxu0 0.0
    %3829 = vmatpush1.msra.mxu0 0.0
    %3830 = vmatprep.subr.mxu0 0.0
    %3831 = vmatpush1.msra.mxu0 0.0
    %3832 = vmatprep.mubr.f32.mxu0 0.0
    %3833 = vmatmul.mubr.f32.gmra.mrb[0].mxu0 %v3745
    %v3834 = vpop.f32.mrb[0].mxu0
    %v3835 = vadd.f32 %v3743, %v3834
    %v3836 = vpop.f32.mrb[0].mxu0
    %3837 = vmatprep.mubr.f32.mxu0 0.0
    %3838 = vmatmul.mubr.f32.gmra.mrb[0].mxu0 %v3748
    %v3839 = vpop.f32.mrb[0].mxu0
    %v3840 = vadd.f32 %v3743, %v3839
    %v3841 = vpop.f32.mrb[0].mxu0
    %3842 = vmatprep.mubr.f32.mxu0 0.0
    %3843 = vmatmul.mubr.f32.gmra.mrb[0].mxu0 %v3751
    %v3844 = vpop.f32.mrb[0].mxu0
    %v3845 = vadd.f32 %v3743, %v3844
    %v3846 = vpop.f32.mrb[0].mxu0
    %3847 = vmatprep.mubr.f32.mxu0 0.0
    %3848 = vmatmul.mubr.f32.gmra.mrb[0].mxu0 %v3754
    %v3849 = vpop.f32.mrb[0].mxu0
    %v3850 = vadd.f32 %v3743, %v3849
    %v3851 = vpop.f32.mrb[0].mxu0
    %3852 = vmatprep.mubr.f32.mxu0 0.0
    %3853 = vmatmul.mubr.f32.gmra.mrb[0].mxu0 %v3757
    %v3854 = vpop.f32.mrb[0].mxu0
    %v3855 = vadd.f32 %v3743, %v3854
    %v3856 = vpop.f32.mrb[0].mxu0
    %3857 = vmatprep.mubr.f32.mxu0 0.0
    %3858 = vmatmul.mubr.f32.gmra.mrb[0].mxu0 %v3760
    %v3859 = vpop.f32.mrb[0].mxu0
    %v3860 = vadd.f32 %v3743, %v3859
    %v3861 = vpop.f32.mrb[0].mxu0
    %3862 = vmatprep.mubr.f32.mxu0 0.0
    %3863 = vmatmul.mubr.f32.gmra.mrb[0].mxu0 %v3763
    %v3864 = vpop.f32.mrb[0].mxu0
    %v3865 = vadd.f32 %v3743, %v3864
    %v3866 = vpop.f32.mrb[0].mxu0
    %3867 = vmatprep.mubr.f32.mxu0 0.0
    %3868 = vmatmul.mubr.f32.gmra.mrb[0].mxu0 %v3766
    %v3869 = vpop.f32.mrb[0].mxu0
    %v3870 = vadd.f32 %v3743, %v3869
    %v3871 = vpop.f32.mrb[0].mxu0
    %3872 = vdwg.mxu0
    %v3873 = vmul.f32 %v3835, %v3835
    %v3874 = vmul.f32 %v3840, %v3840
    %v3875 = vmul.f32 %v3845, %v3845
    %v3876 = vmul.f32 %v3850, %v3850
    %v3877 = vmul.f32 %v3855, %v3855
    %v3878 = vmul.f32 %v3860, %v3860
    %v3879 = vmul.f32 %v3865, %v3865
    %v3880 = vmul.f32 %v3870, %v3870
    %v3881 = vmul.f32 %v3835, %v3873
    %v3882 = vmul.f32 %v3840, %v3874
    %v3883 = vmul.f32 %v3845, %v3875
    %v3884 = vmul.f32 %v3850, %v3876
    %v3885 = vmul.f32 %v3855, %v3877
    %v3886 = vmul.f32 %v3860, %v3878
    %v3887 = vmul.f32 %v3865, %v3879
    %v3888 = vmul.f32 %v3870, %v3880
    %v3889 = vmul.f32 %v3881, 0.044715
    %v3890 = vmul.f32 %v3882, 0.044715
    %v3891 = vmul.f32 %v3883, 0.044715
    %v3892 = vmul.f32 %v3884, 0.044715
    %v3893 = vmul.f32 %v3885, 0.044715
    %v3894 = vmul.f32 %v3886, 0.044715
    %v3895 = vmul.f32 %v3887, 0.044715
    %v3896 = vmul.f32 %v3888, 0.044715
    %v3897 = vadd.f32 %v3835, %v3889
    %v3898 = vadd.f32 %v3840, %v3890
    %v3899 = vadd.f32 %v3845, %v3891
    %v3900 = vadd.f32 %v3850, %v3892
    %v3901 = vadd.f32 %v3855, %v3893
    %v3902 = vadd.f32 %v3860, %v3894
    %v3903 = vadd.f32 %v3865, %v3895
    %v3904 = vadd.f32 %v3870, %v3896
    %v3905 = vmul.f32 %v3897, 0.7978846
    %v3906 = vmul.f32 %v3898, 0.7978846
    %v3907 = vmul.f32 %v3899, 0.7978846
    %v3908 = vmul.f32 %v3900, 0.7978846
    %v3909 = vmul.f32 %v3901, 0.7978846
    %v3910 = vmul.f32 %v3902, 0.7978846
    %v3911 = vmul.f32 %v3903, 0.7978846
    %v3912 = vmul.f32 %v3904, 0.7978846
    %v3913 = vtanh.pop %v3905
    %v3914 = vtanh.pop %v3906
    %v3915 = vtanh.pop %v3907
    %v3916 = vtanh.pop %v3908
    %v3917 = vtanh.pop %v3909
    %v3918 = vtanh.pop %v3910
    %v3919 = vtanh.pop %v3911
    %v3920 = vtanh.pop %v3912
    %v3921 = vadd.f32 %v3913, 1.0
    %v3922 = vadd.f32 %v3914, 1.0
    %v3923 = vadd.f32 %v3915, 1.0
    %v3924 = vadd.f32 %v3916, 1.0
    %v3925 = vadd.f32 %v3917, 1.0
    %v3926 = vadd.f32 %v3918, 1.0
    %v3927 = vadd.f32 %v3919, 1.0
    %v3928 = vadd.f32 %v3920, 1.0
    %v3929 = vmul.f32 %v3921, 0.5
    %v3930 = vmul.f32 %v3922, 0.5
    %v3931 = vmul.f32 %v3923, 0.5
    %v3932 = vmul.f32 %v3924, 0.5
    %v3933 = vmul.f32 %v3925, 0.5
    %v3934 = vmul.f32 %v3926, 0.5
    %v3935 = vmul.f32 %v3927, 0.5
    %v3936 = vmul.f32 %v3928, 0.5
    %v3937 = vmul.f32 %v3835, %v3929
    %v3938 = vmul.f32 %v3840, %v3930
    %v3939 = vmul.f32 %v3845, %v3931
    %v3940 = vmul.f32 %v3850, %v3932
    %v3941 = vmul.f32 %v3855, %v3933
    %v3942 = vmul.f32 %v3860, %v3934
    %v3943 = vmul.f32 %v3865, %v3935
    %v3944 = vmul.f32 %v3870, %v3936
    %v3945 = vld [vmem:[%s7] sm:$0xff]
    %v3946 = vld [vmem:[%s7 + $0x8] sm:$0xff]
    %v3947 = vld [vmem:[%s7 + $0x10] sm:$0xff]
    %v3948 = vld [vmem:[%s7 + $0x18] sm:$0xff]
    %v3949 = vld [vmem:[%s7 + $0x20] sm:$0xff]
    %v3950 = vld [vmem:[%s7 + $0x28] sm:$0xff]
    %v3951 = vld [vmem:[%s7 + $0x30] sm:$0xff]
    %v3952 = vld [vmem:[%s7 + $0x38] sm:$0xff]
    %v3953 = vld [vmem:[%s2 + $0x5] sm:$0x1]
    %v3954 = vlaneseq
    %v3955 = vshrl.u32 %v3954, 7
    %v3956 = vsub.s32 0, %v3955
    %v3957 = vrot.slane %v3953, %v3956
    %vm3958 = vcmask 523264
    %v3960 = vsel %vm3958, %v3937, 0
    %v3963 = vsel %vm3958, %v3938, 0
    %v3966 = vsel %vm3958, %v3939, 0
    %v3969 = vsel %vm3958, %v3940, 0
    %v3972 = vsel %vm3958, %v3941, 0
    %v3975 = vsel %vm3958, %v3942, 0
    %v3978 = vsel %vm3958, %v3943, 0
    %v3981 = vsel %vm3958, %v3944, 0
    %3983 = vmatprep.subr.mxu0 0.0
    %3984 = vmatpush1.msra.mxu0 %v3945
    %3985 = vmatprep.subr.mxu0 0.0
    %3986 = vmatpush1.msra.mxu0 %v3946
    %3987 = vmatprep.subr.mxu0 0.0
    %3988 = vmatpush1.msra.mxu0 %v3947
    %3989 = vmatprep.subr.mxu0 0.0
    %3990 = vmatpush1.msra.mxu0 %v3948
    %3991 = vmatprep.subr.mxu0 0.0
    %3992 = vmatpush1.msra.mxu0 %v3949
    %3993 = vmatprep.subr.mxu0 0.0
    %3994 = vmatpush1.msra.mxu0 %v3950
    %3995 = vmatprep.subr.mxu0 0.0
    %3996 = vmatpush1.msra.mxu0 %v3951
    %3997 = vmatprep.subr.mxu0 0.0
    %3998 = vmatpush1.msra.mxu0 %v3952
    %3999 = vmatprep.subr.mxu0 0.0
    %4000 = vmatpush1.msra.mxu0 0.0
    %4001 = vmatprep.subr.mxu0 0.0
    %4002 = vmatpush1.msra.mxu0 0.0
    %4003 = vmatprep.subr.mxu0 0.0
    %4004 = vmatpush1.msra.mxu0 0.0
    %4005 = vmatprep.subr.mxu0 0.0
    %4006 = vmatpush1.msra.mxu0 0.0
    %4007 = vmatprep.subr.mxu0 0.0
    %4008 = vmatpush1.msra.mxu0 0.0
    %4009 = vmatprep.subr.mxu0 0.0
    %4010 = vmatpush1.msra.mxu0 0.0
    %4011 = vmatprep.subr.mxu0 0.0
    %4012 = vmatpush1.msra.mxu0 0.0
    %4013 = vmatprep.subr.mxu0 0.0
    %4014 = vmatpush1.msra.mxu0 0.0
    %4015 = vmatprep.subr.mxu0 0.0
    %4016 = vmatpush1.msra.mxu0 0.0
    %4017 = vmatprep.subr.mxu0 0.0
    %4018 = vmatpush1.msra.mxu0 0.0
    %4019 = vmatprep.subr.mxu0 0.0
    %4020 = vmatpush1.msra.mxu0 0.0
    %4021 = vmatprep.subr.mxu0 0.0
    %4022 = vmatpush1.msra.mxu0 0.0
    %4023 = vmatprep.subr.mxu0 0.0
    %4024 = vmatpush1.msra.mxu0 0.0
    %4025 = vmatprep.subr.mxu0 0.0
    %4026 = vmatpush1.msra.mxu0 0.0
    %4027 = vmatprep.subr.mxu0 0.0
    %4028 = vmatpush1.msra.mxu0 0.0
    %4029 = vmatprep.subr.mxu0 0.0
    %4030 = vmatpush1.msra.mxu0 0.0
    %4031 = vmatprep.subr.mxu0 0.0
    %4032 = vmatpush1.msra.mxu0 0.0
    %4033 = vmatprep.subr.mxu0 0.0
    %4034 = vmatpush1.msra.mxu0 0.0
    %4035 = vmatprep.subr.mxu0 0.0
    %4036 = vmatpush1.msra.mxu0 0.0
    %4037 = vmatprep.subr.mxu0 0.0
    %4038 = vmatpush1.msra.mxu0 0.0
    %4039 = vmatprep.subr.mxu0 0.0
    %4040 = vmatpush1.msra.mxu0 0.0
    %4041 = vmatprep.subr.mxu0 0.0
    %4042 = vmatpush1.msra.mxu0 0.0
    %4043 = vmatprep.subr.mxu0 0.0
    %4044 = vmatpush1.msra.mxu0 0.0
    %4045 = vmatprep.subr.mxu0 0.0
    %4046 = vmatpush1.msra.mxu0 0.0
    %4047 = vmatprep.mubr.f32.mxu0 0.0
    %4048 = vmatmul.mubr.f32.gmra.mrb[0].mxu0 %v3960
    %v4049 = vpop.f32.mrb[0].mxu0
    %v4050 = vadd.f32 %v3957, %v4049
    %v4051 = vpop.f32.mrb[0].mxu0
    %4052 = vmatprep.mubr.f32.mxu0 0.0
    %4053 = vmatmul.mubr.f32.gmra.mrb[0].mxu0 %v3963
    %v4054 = vpop.f32.mrb[0].mxu0
    %v4055 = vadd.f32 %v3957, %v4054
    %v4056 = vpop.f32.mrb[0].mxu0
    %4057 = vmatprep.mubr.f32.mxu0 0.0
    %4058 = vmatmul.mubr.f32.gmra.mrb[0].mxu0 %v3966
    %v4059 = vpop.f32.mrb[0].mxu0
    %v4060 = vadd.f32 %v3957, %v4059
    %v4061 = vpop.f32.mrb[0].mxu0
    %4062 = vmatprep.mubr.f32.mxu0 0.0
    %4063 = vmatmul.mubr.f32.gmra.mrb[0].mxu0 %v3969
    %v4064 = vpop.f32.mrb[0].mxu0
    %v4065 = vadd.f32 %v3957, %v4064
    %v4066 = vpop.f32.mrb[0].mxu0
    %4067 = vmatprep.mubr.f32.mxu0 0.0
    %4068 = vmatmul.mubr.f32.gmra.mrb[0].mxu0 %v3972
    %v4069 = vpop.f32.mrb[0].mxu0
    %v4070 = vadd.f32 %v3957, %v4069
    %v4071 = vpop.f32.mrb[0].mxu0
    %4072 = vmatprep.mubr.f32.mxu0 0.0
    %4073 = vmatmul.mubr.f32.gmra.mrb[0].mxu0 %v3975
    %v4074 = vpop.f32.mrb[0].mxu0
    %v4075 = vadd.f32 %v3957, %v4074
    %v4076 = vpop.f32.mrb[0].mxu0
    %4077 = vmatprep.mubr.f32.mxu0 0.0
    %4078 = vmatmul.mubr.f32.gmra.mrb[0].mxu0 %v3978
    %v4079 = vpop.f32.mrb[0].mxu0
    %v4080 = vadd.f32 %v3957, %v4079
    %v4081 = vpop.f32.mrb[0].mxu0
    %4082 = vmatprep.mubr.f32.mxu0 0.0
    %4083 = vmatmul.mubr.f32.gmra.mrb[0].mxu0 %v3981
    %v4084 = vpop.f32.mrb[0].mxu0
    %v4085 = vadd.f32 %v3957, %v4084
    %v4086 = vpop.f32.mrb[0].mxu0
    %4087 = vdwg.mxu0
    %v4088 = vadd.f32 %v4050, %v3727
    %v4089 = vadd.f32 %v4055, %v3728
    %v4090 = vadd.f32 %v4060, %v3729
    %v4091 = vadd.f32 %v4065, %v3730
    %v4092 = vadd.f32 %v4070, %v3731
    %v4093 = vadd.f32 %v4075, %v3732
    %v4094 = vadd.f32 %v4080, %v3733
    %v4095 = vadd.f32 %v4085, %v3734
    %v4096 = vld [vmem:[%s2 + $0x6] sm:$0x1]
    %v4097 = vld [vmem:[%s2 + $0x7] sm:$0x1]
    %v4098 = vsel %vm284, %v4088, 0.0
    %4099 = vadd.xlane.f32.xlu0 %v4098
    %v4100 = vpop.xlane.xlu0 %4099
    %v4101 = vsel %vm284, %v4089, 0.0
    %4102 = vadd.xlane.f32.xlu0 %v4101
    %v4103 = vpop.xlane.xlu0 %4102
    %v4104 = vsel %vm284, %v4090, 0.0
    %4105 = vadd.xlane.f32.xlu0 %v4104
    %v4106 = vpop.xlane.xlu0 %4105
    %v4107 = vsel %vm284, %v4091, 0.0
    %4108 = vadd.xlane.f32.xlu0 %v4107
    %v4109 = vpop.xlane.xlu0 %4108
    %v4110 = vsel %vm284, %v4092, 0.0
    %4111 = vadd.xlane.f32.xlu0 %v4110
    %v4112 = vpop.xlane.xlu0 %4111
    %v4113 = vsel %vm284, %v4093, 0.0
    %4114 = vadd.xlane.f32.xlu0 %v4113
    %v4115 = vpop.xlane.xlu0 %4114
    %v4116 = vsel %vm284, %v4094, 0.0
    %4117 = vadd.xlane.f32.xlu0 %v4116
    %v4118 = vpop.xlane.xlu0 %4117
    %v4119 = vsel %vm284, %v4095, 0.0
    %4120 = vadd.xlane.f32.xlu0 %v4119
    %v4121 = vpop.xlane.xlu0 %4120
    %v4122 = vmul.f32 %v4100, %v309
    %v4123 = vmul.f32 %v4103, %v309
    %v4124 = vmul.f32 %v4106, %v309
    %v4125 = vmul.f32 %v4109, %v309
    %v4126 = vmul.f32 %v4112, %v309
    %v4127 = vmul.f32 %v4115, %v309
    %v4128 = vmul.f32 %v4118, %v309
    %v4129 = vmul.f32 %v4121, %v309
    %v4130 = vsub.f32 %v4088, %v4122
    %v4131 = vsub.f32 %v4089, %v4123
    %v4132 = vsub.f32 %v4090, %v4124
    %v4133 = vsub.f32 %v4091, %v4125
    %v4134 = vsub.f32 %v4092, %v4126
    %v4135 = vsub.f32 %v4093, %v4127
    %v4136 = vsub.f32 %v4094, %v4128
    %v4137 = vsub.f32 %v4095, %v4129
    %v4138 = vmul.f32 %v4130, %v4130
    %v4139 = vmul.f32 %v4131, %v4131
    %v4140 = vmul.f32 %v4132, %v4132
    %v4141 = vmul.f32 %v4133, %v4133
    %v4142 = vmul.f32 %v4134, %v4134
    %v4143 = vmul.f32 %v4135, %v4135
    %v4144 = vmul.f32 %v4136, %v4136
    %v4145 = vmul.f32 %v4137, %v4137
    %v4146 = vsel %vm284, %v4138, 0.0
    %4147 = vadd.xlane.f32.xlu0 %v4146
    %v4148 = vpop.xlane.xlu0 %4147
    %v4149 = vsel %vm284, %v4139, 0.0
    %4150 = vadd.xlane.f32.xlu0 %v4149
    %v4151 = vpop.xlane.xlu0 %4150
    %v4152 = vsel %vm284, %v4140, 0.0
    %4153 = vadd.xlane.f32.xlu0 %v4152
    %v4154 = vpop.xlane.xlu0 %4153
    %v4155 = vsel %vm284, %v4141, 0.0
    %4156 = vadd.xlane.f32.xlu0 %v4155
    %v4157 = vpop.xlane.xlu0 %4156
    %v4158 = vsel %vm284, %v4142, 0.0
    %4159 = vadd.xlane.f32.xlu0 %v4158
    %v4160 = vpop.xlane.xlu0 %4159
    %v4161 = vsel %vm284, %v4143, 0.0
    %4162 = vadd.xlane.f32.xlu0 %v4161
    %v4163 = vpop.xlane.xlu0 %4162
    %v4164 = vsel %vm284, %v4144, 0.0
    %4165 = vadd.xlane.f32.xlu0 %v4164
    %v4166 = vpop.xlane.xlu0 %4165
    %v4167 = vsel %vm284, %v4145, 0.0
    %4168 = vadd.xlane.f32.xlu0 %v4167
    %v4169 = vpop.xlane.xlu0 %4168
    %v4170 = vmul.f32 %v4148, %v309
    %v4171 = vmul.f32 %v4151, %v309
    %v4172 = vmul.f32 %v4154, %v309
    %v4173 = vmul.f32 %v4157, %v309
    %v4174 = vmul.f32 %v4160, %v309
    %v4175 = vmul.f32 %v4163, %v309
    %v4176 = vmul.f32 %v4166, %v309
    %v4177 = vmul.f32 %v4169, %v309
    %v4178 = vadd.f32 %v4170, 1e-05
    %v4179 = vadd.f32 %v4171, 1e-05
    %v4180 = vadd.f32 %v4172, 1e-05
    %v4181 = vadd.f32 %v4173, 1e-05
    %v4182 = vadd.f32 %v4174, 1e-05
    %v4183 = vadd.f32 %v4175, 1e-05
    %v4184 = vadd.f32 %v4176, 1e-05
    %v4185 = vadd.f32 %v4177, 1e-05
    %v4186 = vrsqrt.pop %v4178
    %v4187 = vrsqrt.pop %v4179
    %v4188 = vrsqrt.pop %v4180
    %v4189 = vrsqrt.pop %v4181
    %v4190 = vrsqrt.pop %v4182
    %v4191 = vrsqrt.pop %v4183
    %v4192 = vrsqrt.pop %v4184
    %v4193 = vrsqrt.pop %v4185
    %v4194 = vmul.f32 %v4130, %v4186
    %v4195 = vmul.f32 %v4131, %v4187
    %v4196 = vmul.f32 %v4132, %v4188
    %v4197 = vmul.f32 %v4133, %v4189
    %v4198 = vmul.f32 %v4134, %v4190
    %v4199 = vmul.f32 %v4135, %v4191
    %v4200 = vmul.f32 %v4136, %v4192
    %v4201 = vmul.f32 %v4137, %v4193
    %v4202 = vlaneseq
    %v4203 = vshrl.u32 %v4202, 7
    %v4204 = vsub.s32 0, %v4203
    %v4205 = vrot.slane %v4096, %v4204
    %v4206 = vmul.f32 %v4194, %v4205
    %v4207 = vmul.f32 %v4195, %v4205
    %v4208 = vmul.f32 %v4196, %v4205
    %v4209 = vmul.f32 %v4197, %v4205
    %v4210 = vmul.f32 %v4198, %v4205
    %v4211 = vmul.f32 %v4199, %v4205
    %v4212 = vmul.f32 %v4200, %v4205
    %v4213 = vmul.f32 %v4201, %v4205
    %v4214 = vlaneseq
    %v4215 = vshrl.u32 %v4214, 7
    %v4216 = vsub.s32 0, %v4215
    %v4217 = vrot.slane %v4097, %v4216
    %v4218 = vadd.f32 %v4206, %v4217
    %v4219 = vadd.f32 %v4207, %v4217
    %v4220 = vadd.f32 %v4208, %v4217
    %v4221 = vadd.f32 %v4209, %v4217
    %v4222 = vadd.f32 %v4210, %v4217
    %v4223 = vadd.f32 %v4211, %v4217
    %v4224 = vadd.f32 %v4212, %v4217
    %v4225 = vadd.f32 %v4213, %v4217
    %s4226 = scalar_lea.vmem %s4, 32
    %v4227 = vld [vmem:[%s4226] sm:$0xff]
    %v4228 = vld [vmem:[%s4226 + $0x8] sm:$0xff]
    %v4229 = vld [vmem:[%s4226 + $0x10] sm:$0xff]
    %v4230 = vld [vmem:[%s4226 + $0x18] sm:$0xff]
    %v4231 = vld [vmem:[%s2 + $0x8] sm:$0x1]
    %v4232 = vlaneseq
    %v4233 = vshrl.u32 %v4232, 7
    %v4234 = vsub.s32 0, %v4233
    %v4235 = vrot.slane %v4231, %v4234
    %v4237 = vsel %vm284, %v4218, 0
    %v4240 = vsel %vm284, %v4219, 0
    %v4243 = vsel %vm284, %v4220, 0
    %v4246 = vsel %vm284, %v4221, 0
    %v4249 = vsel %vm284, %v4222, 0
    %v4252 = vsel %vm284, %v4223, 0
    %v4255 = vsel %vm284, %v4224, 0
    %v4258 = vsel %vm284, %v4225, 0
    %4260 = vmatprep.subr.mxu0 0.0
    %4261 = vmatpush1.msra.mxu0 %v4227
    %4262 = vmatprep.subr.mxu0 0.0
    %4263 = vmatpush1.msra.mxu0 %v4228
    %4264 = vmatprep.subr.mxu0 0.0
    %4265 = vmatpush1.msra.mxu0 %v4229
    %4266 = vmatprep.subr.mxu0 0.0
    %4267 = vmatpush1.msra.mxu0 %v4230
    %4268 = vmatprep.subr.mxu0 0.0
    %4269 = vmatpush1.msra.mxu0 0.0
    %4270 = vmatprep.subr.mxu0 0.0
    %4271 = vmatpush1.msra.mxu0 0.0
    %4272 = vmatprep.subr.mxu0 0.0
    %4273 = vmatpush1.msra.mxu0 0.0
    %4274 = vmatprep.subr.mxu0 0.0
    %4275 = vmatpush1.msra.mxu0 0.0
    %4276 = vmatprep.subr.mxu0 0.0
    %4277 = vmatpush1.msra.mxu0 0.0
    %4278 = vmatprep.subr.mxu0 0.0
    %4279 = vmatpush1.msra.mxu0 0.0
    %4280 = vmatprep.subr.mxu0 0.0
    %4281 = vmatpush1.msra.mxu0 0.0
    %4282 = vmatprep.subr.mxu0 0.0
    %4283 = vmatpush1.msra.mxu0 0.0
    %4284 = vmatprep.subr.mxu0 0.0
    %4285 = vmatpush1.msra.mxu0 0.0
    %4286 = vmatprep.subr.mxu0 0.0
    %4287 = vmatpush1.msra.mxu0 0.0
    %4288 = vmatprep.subr.mxu0 0.0
    %4289 = vmatpush1.msra.mxu0 0.0
    %4290 = vmatprep.subr.mxu0 0.0
    %4291 = vmatpush1.msra.mxu0 0.0
    %4292 = vmatprep.subr.mxu0 0.0
    %4293 = vmatpush1.msra.mxu0 0.0
    %4294 = vmatprep.subr.mxu0 0.0
    %4295 = vmatpush1.msra.mxu0 0.0
    %4296 = vmatprep.subr.mxu0 0.0
    %4297 = vmatpush1.msra.mxu0 0.0
    %4298 = vmatprep.subr.mxu0 0.0
    %4299 = vmatpush1.msra.mxu0 0.0
    %4300 = vmatprep.subr.mxu0 0.0
    %4301 = vmatpush1.msra.mxu0 0.0
    %4302 = vmatprep.subr.mxu0 0.0
    %4303 = vmatpush1.msra.mxu0 0.0
    %4304 = vmatprep.subr.mxu0 0.0
    %4305 = vmatpush1.msra.mxu0 0.0
    %4306 = vmatprep.subr.mxu0 0.0
    %4307 = vmatpush1.msra.mxu0 0.0
    %4308 = vmatprep.subr.mxu0 0.0
    %4309 = vmatpush1.msra.mxu0 0.0
    %4310 = vmatprep.subr.mxu0 0.0
    %4311 = vmatpush1.msra.mxu0 0.0
    %4312 = vmatprep.subr.mxu0 0.0
    %4313 = vmatpush1.msra.mxu0 0.0
    %4314 = vmatprep.subr.mxu0 0.0
    %4315 = vmatpush1.msra.mxu0 0.0
    %4316 = vmatprep.subr.mxu0 0.0
    %4317 = vmatpush1.msra.mxu0 0.0
    %4318 = vmatprep.subr.mxu0 0.0
    %4319 = vmatpush1.msra.mxu0 0.0
    %4320 = vmatprep.subr.mxu0 0.0
    %4321 = vmatpush1.msra.mxu0 0.0
    %4322 = vmatprep.subr.mxu0 0.0
    %4323 = vmatpush1.msra.mxu0 0.0
    %4324 = vmatprep.mubr.f32.mxu0 0.0
    %4325 = vmatmul.mubr.f32.gmra.mrb[0].mxu0 %v4237
    %v4326 = vpop.f32.mrb[0].mxu0
    %v4327 = vadd.f32 %v4235, %v4326
    %v4328 = vpop.f32.mrb[0].mxu0
    %4329 = vmatprep.mubr.f32.mxu0 0.0
    %4330 = vmatmul.mubr.f32.gmra.mrb[0].mxu0 %v4240
    %v4331 = vpop.f32.mrb[0].mxu0
    %v4332 = vadd.f32 %v4235, %v4331
    %v4333 = vpop.f32.mrb[0].mxu0
    %4334 = vmatprep.mubr.f32.mxu0 0.0
    %4335 = vmatmul.mubr.f32.gmra.mrb[0].mxu0 %v4243
    %v4336 = vpop.f32.mrb[0].mxu0
    %v4337 = vadd.f32 %v4235, %v4336
    %v4338 = vpop.f32.mrb[0].mxu0
    %4339 = vmatprep.mubr.f32.mxu0 0.0
    %4340 = vmatmul.mubr.f32.gmra.mrb[0].mxu0 %v4246
    %v4341 = vpop.f32.mrb[0].mxu0
    %v4342 = vadd.f32 %v4235, %v4341
    %v4343 = vpop.f32.mrb[0].mxu0
    %4344 = vmatprep.mubr.f32.mxu0 0.0
    %4345 = vmatmul.mubr.f32.gmra.mrb[0].mxu0 %v4249
    %v4346 = vpop.f32.mrb[0].mxu0
    %v4347 = vadd.f32 %v4235, %v4346
    %v4348 = vpop.f32.mrb[0].mxu0
    %4349 = vmatprep.mubr.f32.mxu0 0.0
    %4350 = vmatmul.mubr.f32.gmra.mrb[0].mxu0 %v4252
    %v4351 = vpop.f32.mrb[0].mxu0
    %v4352 = vadd.f32 %v4235, %v4351
    %v4353 = vpop.f32.mrb[0].mxu0
    %4354 = vmatprep.mubr.f32.mxu0 0.0
    %4355 = vmatmul.mubr.f32.gmra.mrb[0].mxu0 %v4255
    %v4356 = vpop.f32.mrb[0].mxu0
    %v4357 = vadd.f32 %v4235, %v4356
    %v4358 = vpop.f32.mrb[0].mxu0
    %4359 = vmatprep.mubr.f32.mxu0 0.0
    %4360 = vmatmul.mubr.f32.gmra.mrb[0].mxu0 %v4258
    %v4361 = vpop.f32.mrb[0].mxu0
    %v4362 = vadd.f32 %v4235, %v4361
    %v4363 = vpop.f32.mrb[0].mxu0
    %4364 = vdwg.mxu0
    %4373 = vrot.lane.b32.xlu0 %v4327, 112
    %v4374 = vpop.permute.xlu0 %4373
    %4375 = vrot.lane.b32.xlu0 %v4332, 112
    %v4376 = vpop.permute.xlu0 %4375
    %4377 = vrot.lane.b32.xlu0 %v4337, 112
    %v4378 = vpop.permute.xlu0 %4377
    %4379 = vrot.lane.b32.xlu0 %v4342, 112
    %v4380 = vpop.permute.xlu0 %4379
    %4381 = vrot.lane.b32.xlu0 %v4347, 112
    %v4382 = vpop.permute.xlu0 %4381
    %4383 = vrot.lane.b32.xlu0 %v4352, 112
    %v4384 = vpop.permute.xlu0 %4383
    %4385 = vrot.lane.b32.xlu0 %v4357, 112
    %v4386 = vpop.permute.xlu0 %4385
    %4387 = vrot.lane.b32.xlu0 %v4362, 112
    %v4388 = vpop.permute.xlu0 %4387
    %4389 = vrot.lane.b32.xlu0 %v4327, 96
    %v4390 = vpop.permute.xlu0 %4389
    %4391 = vrot.lane.b32.xlu0 %v4332, 96
    %v4392 = vpop.permute.xlu0 %4391
    %4393 = vrot.lane.b32.xlu0 %v4337, 96
    %v4394 = vpop.permute.xlu0 %4393
    %4395 = vrot.lane.b32.xlu0 %v4342, 96
    %v4396 = vpop.permute.xlu0 %4395
    %4397 = vrot.lane.b32.xlu0 %v4347, 96
    %v4398 = vpop.permute.xlu0 %4397
    %4399 = vrot.lane.b32.xlu0 %v4352, 96
    %v4400 = vpop.permute.xlu0 %4399
    %4401 = vrot.lane.b32.xlu0 %v4357, 96
    %v4402 = vpop.permute.xlu0 %4401
    %4403 = vrot.lane.b32.xlu0 %v4362, 96
    %v4404 = vpop.permute.xlu0 %4403
    %4405 = vrot.lane.b32.xlu0 %v4327, 80
    %v4406 = vpop.permute.xlu0 %4405
    %4407 = vrot.lane.b32.xlu0 %v4332, 80
    %v4408 = vpop.permute.xlu0 %4407
    %4409 = vrot.lane.b32.xlu0 %v4337, 80
    %v4410 = vpop.permute.xlu0 %4409
    %4411 = vrot.lane.b32.xlu0 %v4342, 80
    %v4412 = vpop.permute.xlu0 %4411
    %4413 = vrot.lane.b32.xlu0 %v4347, 80
    %v4414 = vpop.permute.xlu0 %4413
    %4415 = vrot.lane.b32.xlu0 %v4352, 80
    %v4416 = vpop.permute.xlu0 %4415
    %4417 = vrot.lane.b32.xlu0 %v4357, 80
    %v4418 = vpop.permute.xlu0 %4417
    %4419 = vrot.lane.b32.xlu0 %v4362, 80
    %v4420 = vpop.permute.xlu0 %4419
    %4421 = vrot.lane.b32.xlu0 %v4327, 64
    %v4422 = vpop.permute.xlu0 %4421
    %4423 = vrot.lane.b32.xlu0 %v4332, 64
    %v4424 = vpop.permute.xlu0 %4423
    %4425 = vrot.lane.b32.xlu0 %v4337, 64
    %v4426 = vpop.permute.xlu0 %4425
    %4427 = vrot.lane.b32.xlu0 %v4342, 64
    %v4428 = vpop.permute.xlu0 %4427
    %4429 = vrot.lane.b32.xlu0 %v4347, 64
    %v4430 = vpop.permute.xlu0 %4429
    %4431 = vrot.lane.b32.xlu0 %v4352, 64
    %v4432 = vpop.permute.xlu0 %4431
    %4433 = vrot.lane.b32.xlu0 %v4357, 64
    %v4434 = vpop.permute.xlu0 %4433
    %4435 = vrot.lane.b32.xlu0 %v4362, 64
    %v4436 = vpop.permute.xlu0 %4435
    %4445 = vrot.lane.b32.xlu0 %v4327, 48
    %v4446 = vpop.permute.xlu0 %4445
    %4447 = vrot.lane.b32.xlu0 %v4332, 48
    %v4448 = vpop.permute.xlu0 %4447
    %4449 = vrot.lane.b32.xlu0 %v4337, 48
    %v4450 = vpop.permute.xlu0 %4449
    %4451 = vrot.lane.b32.xlu0 %v4342, 48
    %v4452 = vpop.permute.xlu0 %4451
    %4453 = vrot.lane.b32.xlu0 %v4347, 48
    %v4454 = vpop.permute.xlu0 %4453
    %4455 = vrot.lane.b32.xlu0 %v4352, 48
    %v4456 = vpop.permute.xlu0 %4455
    %4457 = vrot.lane.b32.xlu0 %v4357, 48
    %v4458 = vpop.permute.xlu0 %4457
    %4459 = vrot.lane.b32.xlu0 %v4362, 48
    %v4460 = vpop.permute.xlu0 %4459
    %v4469 = vsel %vm768, %v4327, 0
    %v4471 = vsel %vm768, %v4390, 0
    %4473 = vmatprep.subr.mxu0 0.0
    %4474 = vmatpush1.xpose.msra.mxu0 %v4471
    %4475 = vmatprep.subr.mxu0 0.0
    %4476 = vmatpush1.xpose.msra.mxu0 0.0
    %4477 = vmatprep.subr.mxu0 0.0
    %4478 = vmatpush1.xpose.msra.mxu0 0.0
    %4479 = vmatprep.subr.mxu0 0.0
    %4480 = vmatpush1.xpose.msra.mxu0 0.0
    %4481 = vmatprep.subr.mxu0 0.0
    %4482 = vmatpush1.xpose.msra.mxu0 0.0
    %4483 = vmatprep.subr.mxu0 0.0
    %4484 = vmatpush1.xpose.msra.mxu0 0.0
    %4485 = vmatprep.subr.mxu0 0.0
    %4486 = vmatpush1.xpose.msra.mxu0 0.0
    %4487 = vmatprep.subr.mxu0 0.0
    %4488 = vmatpush1.xpose.msra.mxu0 0.0
    %4489 = vmatprep.subr.mxu0 0.0
    %4490 = vmatpush1.xpose.msra.mxu0 0.0
    %4491 = vmatprep.subr.mxu0 0.0
    %4492 = vmatpush1.xpose.msra.mxu0 0.0
    %4493 = vmatprep.subr.mxu0 0.0
    %4494 = vmatpush1.xpose.msra.mxu0 0.0
    %4495 = vmatprep.subr.mxu0 0.0
    %4496 = vmatpush1.xpose.msra.mxu0 0.0
    %4497 = vmatprep.subr.mxu0 0.0
    %4498 = vmatpush1.xpose.msra.mxu0 0.0
    %4499 = vmatprep.subr.mxu0 0.0
    %4500 = vmatpush1.xpose.msra.mxu0 0.0
    %4501 = vmatprep.subr.mxu0 0.0
    %4502 = vmatpush1.xpose.msra.mxu0 0.0
    %4503 = vmatprep.subr.mxu0 0.0
    %4504 = vmatpush1.xpose.msra.mxu0 0.0
    %4505 = vmatprep.subr.mxu0 0.0
    %4506 = vmatpush1.xpose.msra.mxu0 0.0
    %4507 = vmatprep.subr.mxu0 0.0
    %4508 = vmatpush1.xpose.msra.mxu0 0.0
    %4509 = vmatprep.subr.mxu0 0.0
    %4510 = vmatpush1.xpose.msra.mxu0 0.0
    %4511 = vmatprep.subr.mxu0 0.0
    %4512 = vmatpush1.xpose.msra.mxu0 0.0
    %4513 = vmatprep.subr.mxu0 0.0
    %4514 = vmatpush1.xpose.msra.mxu0 0.0
    %4515 = vmatprep.subr.mxu0 0.0
    %4516 = vmatpush1.xpose.msra.mxu0 0.0
    %4517 = vmatprep.subr.mxu0 0.0
    %4518 = vmatpush1.xpose.msra.mxu0 0.0
    %4519 = vmatprep.subr.mxu0 0.0
    %4520 = vmatpush1.xpose.msra.mxu0 0.0
    %4521 = vmatprep.subr.mxu0 0.0
    %4522 = vmatpush1.xpose.msra.mxu0 0.0
    %4523 = vmatprep.subr.mxu0 0.0
    %4524 = vmatpush1.xpose.msra.mxu0 0.0
    %4525 = vmatprep.subr.mxu0 0.0
    %4526 = vmatpush1.xpose.msra.mxu0 0.0
    %4527 = vmatprep.subr.mxu0 0.0
    %4528 = vmatpush1.xpose.msra.mxu0 0.0
    %4529 = vmatprep.subr.mxu0 0.0
    %4530 = vmatpush1.xpose.msra.mxu0 0.0
    %4531 = vmatprep.subr.mxu0 0.0
    %4532 = vmatpush1.xpose.msra.mxu0 0.0
    %4533 = vmatprep.subr.mxu0 0.0
    %4534 = vmatpush1.xpose.msra.mxu0 0.0
    %4535 = vmatprep.subr.mxu0 0.0
    %4536 = vmatpush1.xpose.msra.mxu0 0.0
    %4537 = vmatprep.mubr.f32.mxu0 0.0
    %4538 = vmatmul.mubr.f32.gmra.mrb[0].mxu0 %v4469
    %v4539 = vpop.f32.mrb[0].mxu0
    %v4540 = vadd.f32 %v691, %v4539
    %v4541 = vpop.f32.mrb[0].mxu0
    %4542 = vdwg.mxu0
    %v4543 = vsel %vm768, %v4332, 0
    %v4545 = vsel %vm768, %v4392, 0
    %4547 = vmatprep.subr.mxu0 0.0
    %4548 = vmatpush1.xpose.msra.mxu0 %v4545
    %4549 = vmatprep.subr.mxu0 0.0
    %4550 = vmatpush1.xpose.msra.mxu0 0.0
    %4551 = vmatprep.subr.mxu0 0.0
    %4552 = vmatpush1.xpose.msra.mxu0 0.0
    %4553 = vmatprep.subr.mxu0 0.0
    %4554 = vmatpush1.xpose.msra.mxu0 0.0
    %4555 = vmatprep.subr.mxu0 0.0
    %4556 = vmatpush1.xpose.msra.mxu0 0.0
    %4557 = vmatprep.subr.mxu0 0.0
    %4558 = vmatpush1.xpose.msra.mxu0 0.0
    %4559 = vmatprep.subr.mxu0 0.0
    %4560 = vmatpush1.xpose.msra.mxu0 0.0
    %4561 = vmatprep.subr.mxu0 0.0
    %4562 = vmatpush1.xpose.msra.mxu0 0.0
    %4563 = vmatprep.subr.mxu0 0.0
    %4564 = vmatpush1.xpose.msra.mxu0 0.0
    %4565 = vmatprep.subr.mxu0 0.0
    %4566 = vmatpush1.xpose.msra.mxu0 0.0
    %4567 = vmatprep.subr.mxu0 0.0
    %4568 = vmatpush1.xpose.msra.mxu0 0.0
    %4569 = vmatprep.subr.mxu0 0.0
    %4570 = vmatpush1.xpose.msra.mxu0 0.0
    %4571 = vmatprep.subr.mxu0 0.0
    %4572 = vmatpush1.xpose.msra.mxu0 0.0
    %4573 = vmatprep.subr.mxu0 0.0
    %4574 = vmatpush1.xpose.msra.mxu0 0.0
    %4575 = vmatprep.subr.mxu0 0.0
    %4576 = vmatpush1.xpose.msra.mxu0 0.0
    %4577 = vmatprep.subr.mxu0 0.0
    %4578 = vmatpush1.xpose.msra.mxu0 0.0
    %4579 = vmatprep.subr.mxu0 0.0
    %4580 = vmatpush1.xpose.msra.mxu0 0.0
    %4581 = vmatprep.subr.mxu0 0.0
    %4582 = vmatpush1.xpose.msra.mxu0 0.0
    %4583 = vmatprep.subr.mxu0 0.0
    %4584 = vmatpush1.xpose.msra.mxu0 0.0
    %4585 = vmatprep.subr.mxu0 0.0
    %4586 = vmatpush1.xpose.msra.mxu0 0.0
    %4587 = vmatprep.subr.mxu0 0.0
    %4588 = vmatpush1.xpose.msra.mxu0 0.0
    %4589 = vmatprep.subr.mxu0 0.0
    %4590 = vmatpush1.xpose.msra.mxu0 0.0
    %4591 = vmatprep.subr.mxu0 0.0
    %4592 = vmatpush1.xpose.msra.mxu0 0.0
    %4593 = vmatprep.subr.mxu0 0.0
    %4594 = vmatpush1.xpose.msra.mxu0 0.0
    %4595 = vmatprep.subr.mxu0 0.0
    %4596 = vmatpush1.xpose.msra.mxu0 0.0
    %4597 = vmatprep.subr.mxu0 0.0
    %4598 = vmatpush1.xpose.msra.mxu0 0.0
    %4599 = vmatprep.subr.mxu0 0.0
    %4600 = vmatpush1.xpose.msra.mxu0 0.0
    %4601 = vmatprep.subr.mxu0 0.0
    %4602 = vmatpush1.xpose.msra.mxu0 0.0
    %4603 = vmatprep.subr.mxu0 0.0
    %4604 = vmatpush1.xpose.msra.mxu0 0.0
    %4605 = vmatprep.subr.mxu0 0.0
    %4606 = vmatpush1.xpose.msra.mxu0 0.0
    %4607 = vmatprep.subr.mxu0 0.0
    %4608 = vmatpush1.xpose.msra.mxu0 0.0
    %4609 = vmatprep.subr.mxu0 0.0
    %4610 = vmatpush1.xpose.msra.mxu0 0.0
    %4611 = vmatprep.mubr.f32.mxu0 0.0
    %4612 = vmatmul.mubr.f32.gmra.mrb[0].mxu0 %v4543
    %v4613 = vpop.f32.mrb[0].mxu0
    %v4614 = vadd.f32 %v695, %v4613
    %v4615 = vpop.f32.mrb[0].mxu0
    %4616 = vdwg.mxu0
    %v4617 = vsel %vm768, %v4337, 0
    %v4619 = vsel %vm768, %v4394, 0
    %4621 = vmatprep.subr.mxu0 0.0
    %4622 = vmatpush1.xpose.msra.mxu0 %v4619
    %4623 = vmatprep.subr.mxu0 0.0
    %4624 = vmatpush1.xpose.msra.mxu0 0.0
    %4625 = vmatprep.subr.mxu0 0.0
    %4626 = vmatpush1.xpose.msra.mxu0 0.0
    %4627 = vmatprep.subr.mxu0 0.0
    %4628 = vmatpush1.xpose.msra.mxu0 0.0
    %4629 = vmatprep.subr.mxu0 0.0
    %4630 = vmatpush1.xpose.msra.mxu0 0.0
    %4631 = vmatprep.subr.mxu0 0.0
    %4632 = vmatpush1.xpose.msra.mxu0 0.0
    %4633 = vmatprep.subr.mxu0 0.0
    %4634 = vmatpush1.xpose.msra.mxu0 0.0
    %4635 = vmatprep.subr.mxu0 0.0
    %4636 = vmatpush1.xpose.msra.mxu0 0.0
    %4637 = vmatprep.subr.mxu0 0.0
    %4638 = vmatpush1.xpose.msra.mxu0 0.0
    %4639 = vmatprep.subr.mxu0 0.0
    %4640 = vmatpush1.xpose.msra.mxu0 0.0
    %4641 = vmatprep.subr.mxu0 0.0
    %4642 = vmatpush1.xpose.msra.mxu0 0.0
    %4643 = vmatprep.subr.mxu0 0.0
    %4644 = vmatpush1.xpose.msra.mxu0 0.0
    %4645 = vmatprep.subr.mxu0 0.0
    %4646 = vmatpush1.xpose.msra.mxu0 0.0
    %4647 = vmatprep.subr.mxu0 0.0
    %4648 = vmatpush1.xpose.msra.mxu0 0.0
    %4649 = vmatprep.subr.mxu0 0.0
    %4650 = vmatpush1.xpose.msra.mxu0 0.0
    %4651 = vmatprep.subr.mxu0 0.0
    %4652 = vmatpush1.xpose.msra.mxu0 0.0
    %4653 = vmatprep.subr.mxu0 0.0
    %4654 = vmatpush1.xpose.msra.mxu0 0.0
    %4655 = vmatprep.subr.mxu0 0.0
    %4656 = vmatpush1.xpose.msra.mxu0 0.0
    %4657 = vmatprep.subr.mxu0 0.0
    %4658 = vmatpush1.xpose.msra.mxu0 0.0
    %4659 = vmatprep.subr.mxu0 0.0
    %4660 = vmatpush1.xpose.msra.mxu0 0.0
    %4661 = vmatprep.subr.mxu0 0.0
    %4662 = vmatpush1.xpose.msra.mxu0 0.0
    %4663 = vmatprep.subr.mxu0 0.0
    %4664 = vmatpush1.xpose.msra.mxu0 0.0
    %4665 = vmatprep.subr.mxu0 0.0
    %4666 = vmatpush1.xpose.msra.mxu0 0.0
    %4667 = vmatprep.subr.mxu0 0.0
    %4668 = vmatpush1.xpose.msra.mxu0 0.0
    %4669 = vmatprep.subr.mxu0 0.0
    %4670 = vmatpush1.xpose.msra.mxu0 0.0
    %4671 = vmatprep.subr.mxu0 0.0
    %4672 = vmatpush1.xpose.msra.mxu0 0.0
    %4673 = vmatprep.subr.mxu0 0.0
    %4674 = vmatpush1.xpose.msra.mxu0 0.0
    %4675 = vmatprep.subr.mxu0 0.0
    %4676 = vmatpush1.xpose.msra.mxu0 0.0
    %4677 = vmatprep.subr.mxu0 0.0
    %4678 = vmatpush1.xpose.msra.mxu0 0.0
    %4679 = vmatprep.subr.mxu0 0.0
    %4680 = vmatpush1.xpose.msra.mxu0 0.0
    %4681 = vmatprep.subr.mxu0 0.0
    %4682 = vmatpush1.xpose.msra.mxu0 0.0
    %4683 = vmatprep.subr.mxu0 0.0
    %4684 = vmatpush1.xpose.msra.mxu0 0.0
    %4685 = vmatprep.mubr.f32.mxu0 0.0
    %4686 = vmatmul.mubr.f32.gmra.mrb[0].mxu0 %v4617
    %v4687 = vpop.f32.mrb[0].mxu0
    %v4688 = vadd.f32 %v699, %v4687
    %v4689 = vpop.f32.mrb[0].mxu0
    %4690 = vdwg.mxu0
    %v4691 = vsel %vm768, %v4342, 0
    %v4693 = vsel %vm768, %v4396, 0
    %4695 = vmatprep.subr.mxu0 0.0
    %4696 = vmatpush1.xpose.msra.mxu0 %v4693
    %4697 = vmatprep.subr.mxu0 0.0
    %4698 = vmatpush1.xpose.msra.mxu0 0.0
    %4699 = vmatprep.subr.mxu0 0.0
    %4700 = vmatpush1.xpose.msra.mxu0 0.0
    %4701 = vmatprep.subr.mxu0 0.0
    %4702 = vmatpush1.xpose.msra.mxu0 0.0
    %4703 = vmatprep.subr.mxu0 0.0
    %4704 = vmatpush1.xpose.msra.mxu0 0.0
    %4705 = vmatprep.subr.mxu0 0.0
    %4706 = vmatpush1.xpose.msra.mxu0 0.0
    %4707 = vmatprep.subr.mxu0 0.0
    %4708 = vmatpush1.xpose.msra.mxu0 0.0
    %4709 = vmatprep.subr.mxu0 0.0
    %4710 = vmatpush1.xpose.msra.mxu0 0.0
    %4711 = vmatprep.subr.mxu0 0.0
    %4712 = vmatpush1.xpose.msra.mxu0 0.0
    %4713 = vmatprep.subr.mxu0 0.0
    %4714 = vmatpush1.xpose.msra.mxu0 0.0
    %4715 = vmatprep.subr.mxu0 0.0
    %4716 = vmatpush1.xpose.msra.mxu0 0.0
    %4717 = vmatprep.subr.mxu0 0.0
    %4718 = vmatpush1.xpose.msra.mxu0 0.0
    %4719 = vmatprep.subr.mxu0 0.0
    %4720 = vmatpush1.xpose.msra.mxu0 0.0
    %4721 = vmatprep.subr.mxu0 0.0
    %4722 = vmatpush1.xpose.msra.mxu0 0.0
    %4723 = vmatprep.subr.mxu0 0.0
    %4724 = vmatpush1.xpose.msra.mxu0 0.0
    %4725 = vmatprep.subr.mxu0 0.0
    %4726 = vmatpush1.xpose.msra.mxu0 0.0
    %4727 = vmatprep.subr.mxu0 0.0
    %4728 = vmatpush1.xpose.msra.mxu0 0.0
    %4729 = vmatprep.subr.mxu0 0.0
    %4730 = vmatpush1.xpose.msra.mxu0 0.0
    %4731 = vmatprep.subr.mxu0 0.0
    %4732 = vmatpush1.xpose.msra.mxu0 0.0
    %4733 = vmatprep.subr.mxu0 0.0
    %4734 = vmatpush1.xpose.msra.mxu0 0.0
    %4735 = vmatprep.subr.mxu0 0.0
    %4736 = vmatpush1.xpose.msra.mxu0 0.0
    %4737 = vmatprep.subr.mxu0 0.0
    %4738 = vmatpush1.xpose.msra.mxu0 0.0
    %4739 = vmatprep.subr.mxu0 0.0
    %4740 = vmatpush1.xpose.msra.mxu0 0.0
    %4741 = vmatprep.subr.mxu0 0.0
    %4742 = vmatpush1.xpose.msra.mxu0 0.0
    %4743 = vmatprep.subr.mxu0 0.0
    %4744 = vmatpush1.xpose.msra.mxu0 0.0
    %4745 = vmatprep.subr.mxu0 0.0
    %4746 = vmatpush1.xpose.msra.mxu0 0.0
    %4747 = vmatprep.subr.mxu0 0.0
    %4748 = vmatpush1.xpose.msra.mxu0 0.0
    %4749 = vmatprep.subr.mxu0 0.0
    %4750 = vmatpush1.xpose.msra.mxu0 0.0
    %4751 = vmatprep.subr.mxu0 0.0
    %4752 = vmatpush1.xpose.msra.mxu0 0.0
    %4753 = vmatprep.subr.mxu0 0.0
    %4754 = vmatpush1.xpose.msra.mxu0 0.0
    %4755 = vmatprep.subr.mxu0 0.0
    %4756 = vmatpush1.xpose.msra.mxu0 0.0
    %4757 = vmatprep.subr.mxu0 0.0
    %4758 = vmatpush1.xpose.msra.mxu0 0.0
    %4759 = vmatprep.mubr.f32.mxu0 0.0
    %4760 = vmatmul.mubr.f32.gmra.mrb[0].mxu0 %v4691
    %v4761 = vpop.f32.mrb[0].mxu0
    %v4762 = vadd.f32 %v703, %v4761
    %v4763 = vpop.f32.mrb[0].mxu0
    %4764 = vdwg.mxu0
    %v4765 = vsel %vm768, %v4347, 0
    %v4767 = vsel %vm768, %v4398, 0
    %4769 = vmatprep.subr.mxu0 0.0
    %4770 = vmatpush1.xpose.msra.mxu0 %v4767
    %4771 = vmatprep.subr.mxu0 0.0
    %4772 = vmatpush1.xpose.msra.mxu0 0.0
    %4773 = vmatprep.subr.mxu0 0.0
    %4774 = vmatpush1.xpose.msra.mxu0 0.0
    %4775 = vmatprep.subr.mxu0 0.0
    %4776 = vmatpush1.xpose.msra.mxu0 0.0
    %4777 = vmatprep.subr.mxu0 0.0
    %4778 = vmatpush1.xpose.msra.mxu0 0.0
    %4779 = vmatprep.subr.mxu0 0.0
    %4780 = vmatpush1.xpose.msra.mxu0 0.0
    %4781 = vmatprep.subr.mxu0 0.0
    %4782 = vmatpush1.xpose.msra.mxu0 0.0
    %4783 = vmatprep.subr.mxu0 0.0
    %4784 = vmatpush1.xpose.msra.mxu0 0.0
    %4785 = vmatprep.subr.mxu0 0.0
    %4786 = vmatpush1.xpose.msra.mxu0 0.0
    %4787 = vmatprep.subr.mxu0 0.0
    %4788 = vmatpush1.xpose.msra.mxu0 0.0
    %4789 = vmatprep.subr.mxu0 0.0
    %4790 = vmatpush1.xpose.msra.mxu0 0.0
    %4791 = vmatprep.subr.mxu0 0.0
    %4792 = vmatpush1.xpose.msra.mxu0 0.0
    %4793 = vmatprep.subr.mxu0 0.0
    %4794 = vmatpush1.xpose.msra.mxu0 0.0
    %4795 = vmatprep.subr.mxu0 0.0
    %4796 = vmatpush1.xpose.msra.mxu0 0.0
    %4797 = vmatprep.subr.mxu0 0.0
    %4798 = vmatpush1.xpose.msra.mxu0 0.0
    %4799 = vmatprep.subr.mxu0 0.0
    %4800 = vmatpush1.xpose.msra.mxu0 0.0
    %4801 = vmatprep.subr.mxu0 0.0
    %4802 = vmatpush1.xpose.msra.mxu0 0.0
    %4803 = vmatprep.subr.mxu0 0.0
    %4804 = vmatpush1.xpose.msra.mxu0 0.0
    %4805 = vmatprep.subr.mxu0 0.0
    %4806 = vmatpush1.xpose.msra.mxu0 0.0
    %4807 = vmatprep.subr.mxu0 0.0
    %4808 = vmatpush1.xpose.msra.mxu0 0.0
    %4809 = vmatprep.subr.mxu0 0.0
    %4810 = vmatpush1.xpose.msra.mxu0 0.0
    %4811 = vmatprep.subr.mxu0 0.0
    %4812 = vmatpush1.xpose.msra.mxu0 0.0
    %4813 = vmatprep.subr.mxu0 0.0
    %4814 = vmatpush1.xpose.msra.mxu0 0.0
    %4815 = vmatprep.subr.mxu0 0.0
    %4816 = vmatpush1.xpose.msra.mxu0 0.0
    %4817 = vmatprep.subr.mxu0 0.0
    %4818 = vmatpush1.xpose.msra.mxu0 0.0
    %4819 = vmatprep.subr.mxu0 0.0
    %4820 = vmatpush1.xpose.msra.mxu0 0.0
    %4821 = vmatprep.subr.mxu0 0.0
    %4822 = vmatpush1.xpose.msra.mxu0 0.0
    %4823 = vmatprep.subr.mxu0 0.0
    %4824 = vmatpush1.xpose.msra.mxu0 0.0
    %4825 = vmatprep.subr.mxu0 0.0
    %4826 = vmatpush1.xpose.msra.mxu0 0.0
    %4827 = vmatprep.subr.mxu0 0.0
    %4828 = vmatpush1.xpose.msra.mxu0 0.0
    %4829 = vmatprep.subr.mxu0 0.0
    %4830 = vmatpush1.xpose.msra.mxu0 0.0
    %4831 = vmatprep.subr.mxu0 0.0
    %4832 = vmatpush1.xpose.msra.mxu0 0.0
    %4833 = vmatprep.mubr.f32.mxu0 0.0
    %4834 = vmatmul.mubr.f32.gmra.mrb[0].mxu0 %v4765
    %v4835 = vpop.f32.mrb[0].mxu0
    %v4836 = vadd.f32 %v707, %v4835
    %v4837 = vpop.f32.mrb[0].mxu0
    %4838 = vdwg.mxu0
    %v4839 = vsel %vm768, %v4352, 0
    %v4841 = vsel %vm768, %v4400, 0
    %4843 = vmatprep.subr.mxu0 0.0
    %4844 = vmatpush1.xpose.msra.mxu0 %v4841
    %4845 = vmatprep.subr.mxu0 0.0
    %4846 = vmatpush1.xpose.msra.mxu0 0.0
    %4847 = vmatprep.subr.mxu0 0.0
    %4848 = vmatpush1.xpose.msra.mxu0 0.0
    %4849 = vmatprep.subr.mxu0 0.0
    %4850 = vmatpush1.xpose.msra.mxu0 0.0
    %4851 = vmatprep.subr.mxu0 0.0
    %4852 = vmatpush1.xpose.msra.mxu0 0.0
    %4853 = vmatprep.subr.mxu0 0.0
    %4854 = vmatpush1.xpose.msra.mxu0 0.0
    %4855 = vmatprep.subr.mxu0 0.0
    %4856 = vmatpush1.xpose.msra.mxu0 0.0
    %4857 = vmatprep.subr.mxu0 0.0
    %4858 = vmatpush1.xpose.msra.mxu0 0.0
    %4859 = vmatprep.subr.mxu0 0.0
    %4860 = vmatpush1.xpose.msra.mxu0 0.0
    %4861 = vmatprep.subr.mxu0 0.0
    %4862 = vmatpush1.xpose.msra.mxu0 0.0
    %4863 = vmatprep.subr.mxu0 0.0
    %4864 = vmatpush1.xpose.msra.mxu0 0.0
    %4865 = vmatprep.subr.mxu0 0.0
    %4866 = vmatpush1.xpose.msra.mxu0 0.0
    %4867 = vmatprep.subr.mxu0 0.0
    %4868 = vmatpush1.xpose.msra.mxu0 0.0
    %4869 = vmatprep.subr.mxu0 0.0
    %4870 = vmatpush1.xpose.msra.mxu0 0.0
    %4871 = vmatprep.subr.mxu0 0.0
    %4872 = vmatpush1.xpose.msra.mxu0 0.0
    %4873 = vmatprep.subr.mxu0 0.0
    %4874 = vmatpush1.xpose.msra.mxu0 0.0
    %4875 = vmatprep.subr.mxu0 0.0
    %4876 = vmatpush1.xpose.msra.mxu0 0.0
    %4877 = vmatprep.subr.mxu0 0.0
    %4878 = vmatpush1.xpose.msra.mxu0 0.0
    %4879 = vmatprep.subr.mxu0 0.0
    %4880 = vmatpush1.xpose.msra.mxu0 0.0
    %4881 = vmatprep.subr.mxu0 0.0
    %4882 = vmatpush1.xpose.msra.mxu0 0.0
    %4883 = vmatprep.subr.mxu0 0.0
    %4884 = vmatpush1.xpose.msra.mxu0 0.0
    %4885 = vmatprep.subr.mxu0 0.0
    %4886 = vmatpush1.xpose.msra.mxu0 0.0
    %4887 = vmatprep.subr.mxu0 0.0
    %4888 = vmatpush1.xpose.msra.mxu0 0.0
    %4889 = vmatprep.subr.mxu0 0.0
    %4890 = vmatpush1.xpose.msra.mxu0 0.0
    %4891 = vmatprep.subr.mxu0 0.0
    %4892 = vmatpush1.xpose.msra.mxu0 0.0
    %4893 = vmatprep.subr.mxu0 0.0
    %4894 = vmatpush1.xpose.msra.mxu0 0.0
    %4895 = vmatprep.subr.mxu0 0.0
    %4896 = vmatpush1.xpose.msra.mxu0 0.0
    %4897 = vmatprep.subr.mxu0 0.0
    %4898 = vmatpush1.xpose.msra.mxu0 0.0
    %4899 = vmatprep.subr.mxu0 0.0
    %4900 = vmatpush1.xpose.msra.mxu0 0.0
    %4901 = vmatprep.subr.mxu0 0.0
    %4902 = vmatpush1.xpose.msra.mxu0 0.0
    %4903 = vmatprep.subr.mxu0 0.0
    %4904 = vmatpush1.xpose.msra.mxu0 0.0
    %4905 = vmatprep.subr.mxu0 0.0
    %4906 = vmatpush1.xpose.msra.mxu0 0.0
    %4907 = vmatprep.mubr.f32.mxu0 0.0
    %4908 = vmatmul.mubr.f32.gmra.mrb[0].mxu0 %v4839
    %v4909 = vpop.f32.mrb[0].mxu0
    %v4910 = vadd.f32 %v711, %v4909
    %v4911 = vpop.f32.mrb[0].mxu0
    %4912 = vdwg.mxu0
    %v4913 = vsel %vm768, %v4357, 0
    %v4915 = vsel %vm768, %v4402, 0
    %4917 = vmatprep.subr.mxu0 0.0
    %4918 = vmatpush1.xpose.msra.mxu0 %v4915
    %4919 = vmatprep.subr.mxu0 0.0
    %4920 = vmatpush1.xpose.msra.mxu0 0.0
    %4921 = vmatprep.subr.mxu0 0.0
    %4922 = vmatpush1.xpose.msra.mxu0 0.0
    %4923 = vmatprep.subr.mxu0 0.0
    %4924 = vmatpush1.xpose.msra.mxu0 0.0
    %4925 = vmatprep.subr.mxu0 0.0
    %4926 = vmatpush1.xpose.msra.mxu0 0.0
    %4927 = vmatprep.subr.mxu0 0.0
    %4928 = vmatpush1.xpose.msra.mxu0 0.0
    %4929 = vmatprep.subr.mxu0 0.0
    %4930 = vmatpush1.xpose.msra.mxu0 0.0
    %4931 = vmatprep.subr.mxu0 0.0
    %4932 = vmatpush1.xpose.msra.mxu0 0.0
    %4933 = vmatprep.subr.mxu0 0.0
    %4934 = vmatpush1.xpose.msra.mxu0 0.0
    %4935 = vmatprep.subr.mxu0 0.0
    %4936 = vmatpush1.xpose.msra.mxu0 0.0
    %4937 = vmatprep.subr.mxu0 0.0
    %4938 = vmatpush1.xpose.msra.mxu0 0.0
    %4939 = vmatprep.subr.mxu0 0.0
    %4940 = vmatpush1.xpose.msra.mxu0 0.0
    %4941 = vmatprep.subr.mxu0 0.0
    %4942 = vmatpush1.xpose.msra.mxu0 0.0
    %4943 = vmatprep.subr.mxu0 0.0
    %4944 = vmatpush1.xpose.msra.mxu0 0.0
    %4945 = vmatprep.subr.mxu0 0.0
    %4946 = vmatpush1.xpose.msra.mxu0 0.0
    %4947 = vmatprep.subr.mxu0 0.0
    %4948 = vmatpush1.xpose.msra.mxu0 0.0
    %4949 = vmatprep.subr.mxu0 0.0
    %4950 = vmatpush1.xpose.msra.mxu0 0.0
    %4951 = vmatprep.subr.mxu0 0.0
    %4952 = vmatpush1.xpose.msra.mxu0 0.0
    %4953 = vmatprep.subr.mxu0 0.0
    %4954 = vmatpush1.xpose.msra.mxu0 0.0
    %4955 = vmatprep.subr.mxu0 0.0
    %4956 = vmatpush1.xpose.msra.mxu0 0.0
    %4957 = vmatprep.subr.mxu0 0.0
    %4958 = vmatpush1.xpose.msra.mxu0 0.0
    %4959 = vmatprep.subr.mxu0 0.0
    %4960 = vmatpush1.xpose.msra.mxu0 0.0
    %4961 = vmatprep.subr.mxu0 0.0
    %4962 = vmatpush1.xpose.msra.mxu0 0.0
    %4963 = vmatprep.subr.mxu0 0.0
    %4964 = vmatpush1.xpose.msra.mxu0 0.0
    %4965 = vmatprep.subr.mxu0 0.0
    %4966 = vmatpush1.xpose.msra.mxu0 0.0
    %4967 = vmatprep.subr.mxu0 0.0
    %4968 = vmatpush1.xpose.msra.mxu0 0.0
    %4969 = vmatprep.subr.mxu0 0.0
    %4970 = vmatpush1.xpose.msra.mxu0 0.0
    %4971 = vmatprep.subr.mxu0 0.0
    %4972 = vmatpush1.xpose.msra.mxu0 0.0
    %4973 = vmatprep.subr.mxu0 0.0
    %4974 = vmatpush1.xpose.msra.mxu0 0.0
    %4975 = vmatprep.subr.mxu0 0.0
    %4976 = vmatpush1.xpose.msra.mxu0 0.0
    %4977 = vmatprep.subr.mxu0 0.0
    %4978 = vmatpush1.xpose.msra.mxu0 0.0
    %4979 = vmatprep.subr.mxu0 0.0
    %4980 = vmatpush1.xpose.msra.mxu0 0.0
    %4981 = vmatprep.mubr.f32.mxu0 0.0
    %4982 = vmatmul.mubr.f32.gmra.mrb[0].mxu0 %v4913
    %v4983 = vpop.f32.mrb[0].mxu0
    %v4984 = vadd.f32 %v715, %v4983
    %v4985 = vpop.f32.mrb[0].mxu0
    %4986 = vdwg.mxu0
    %v4987 = vsel %vm768, %v4362, 0
    %v4989 = vsel %vm768, %v4404, 0
    %4991 = vmatprep.subr.mxu0 0.0
    %4992 = vmatpush1.xpose.msra.mxu0 %v4989
    %4993 = vmatprep.subr.mxu0 0.0
    %4994 = vmatpush1.xpose.msra.mxu0 0.0
    %4995 = vmatprep.subr.mxu0 0.0
    %4996 = vmatpush1.xpose.msra.mxu0 0.0
    %4997 = vmatprep.subr.mxu0 0.0
    %4998 = vmatpush1.xpose.msra.mxu0 0.0
    %4999 = vmatprep.subr.mxu0 0.0
    %5000 = vmatpush1.xpose.msra.mxu0 0.0
    %5001 = vmatprep.subr.mxu0 0.0
    %5002 = vmatpush1.xpose.msra.mxu0 0.0
    %5003 = vmatprep.subr.mxu0 0.0
    %5004 = vmatpush1.xpose.msra.mxu0 0.0
    %5005 = vmatprep.subr.mxu0 0.0
    %5006 = vmatpush1.xpose.msra.mxu0 0.0
    %5007 = vmatprep.subr.mxu0 0.0
    %5008 = vmatpush1.xpose.msra.mxu0 0.0
    %5009 = vmatprep.subr.mxu0 0.0
    %5010 = vmatpush1.xpose.msra.mxu0 0.0
    %5011 = vmatprep.subr.mxu0 0.0
    %5012 = vmatpush1.xpose.msra.mxu0 0.0
    %5013 = vmatprep.subr.mxu0 0.0
    %5014 = vmatpush1.xpose.msra.mxu0 0.0
    %5015 = vmatprep.subr.mxu0 0.0
    %5016 = vmatpush1.xpose.msra.mxu0 0.0
    %5017 = vmatprep.subr.mxu0 0.0
    %5018 = vmatpush1.xpose.msra.mxu0 0.0
    %5019 = vmatprep.subr.mxu0 0.0
    %5020 = vmatpush1.xpose.msra.mxu0 0.0
    %5021 = vmatprep.subr.mxu0 0.0
    %5022 = vmatpush1.xpose.msra.mxu0 0.0
    %5023 = vmatprep.subr.mxu0 0.0
    %5024 = vmatpush1.xpose.msra.mxu0 0.0
    %5025 = vmatprep.subr.mxu0 0.0
    %5026 = vmatpush1.xpose.msra.mxu0 0.0
    %5027 = vmatprep.subr.mxu0 0.0
    %5028 = vmatpush1.xpose.msra.mxu0 0.0
    %5029 = vmatprep.subr.mxu0 0.0
    %5030 = vmatpush1.xpose.msra.mxu0 0.0
    %5031 = vmatprep.subr.mxu0 0.0
    %5032 = vmatpush1.xpose.msra.mxu0 0.0
    %5033 = vmatprep.subr.mxu0 0.0
    %5034 = vmatpush1.xpose.msra.mxu0 0.0
    %5035 = vmatprep.subr.mxu0 0.0
    %5036 = vmatpush1.xpose.msra.mxu0 0.0
    %5037 = vmatprep.subr.mxu0 0.0
    %5038 = vmatpush1.xpose.msra.mxu0 0.0
    %5039 = vmatprep.subr.mxu0 0.0
    %5040 = vmatpush1.xpose.msra.mxu0 0.0
    %5041 = vmatprep.subr.mxu0 0.0
    %5042 = vmatpush1.xpose.msra.mxu0 0.0
    %5043 = vmatprep.subr.mxu0 0.0
    %5044 = vmatpush1.xpose.msra.mxu0 0.0
    %5045 = vmatprep.subr.mxu0 0.0
    %5046 = vmatpush1.xpose.msra.mxu0 0.0
    %5047 = vmatprep.subr.mxu0 0.0
    %5048 = vmatpush1.xpose.msra.mxu0 0.0
    %5049 = vmatprep.subr.mxu0 0.0
    %5050 = vmatpush1.xpose.msra.mxu0 0.0
    %5051 = vmatprep.subr.mxu0 0.0
    %5052 = vmatpush1.xpose.msra.mxu0 0.0
    %5053 = vmatprep.subr.mxu0 0.0
    %5054 = vmatpush1.xpose.msra.mxu0 0.0
    %5055 = vmatprep.mubr.f32.mxu0 0.0
    %5056 = vmatmul.mubr.f32.gmra.mrb[0].mxu0 %v4987
    %v5057 = vpop.f32.mrb[0].mxu0
    %v5058 = vadd.f32 %v719, %v5057
    %v5059 = vpop.f32.mrb[0].mxu0
    %5060 = vdwg.mxu0
    %v5061 = vsel %vm768, %v4374, 0
    %v5063 = vsel %vm768, %v4406, 0
    %5065 = vmatprep.subr.mxu0 0.0
    %5066 = vmatpush1.xpose.msra.mxu0 %v5063
    %5067 = vmatprep.subr.mxu0 0.0
    %5068 = vmatpush1.xpose.msra.mxu0 0.0
    %5069 = vmatprep.subr.mxu0 0.0
    %5070 = vmatpush1.xpose.msra.mxu0 0.0
    %5071 = vmatprep.subr.mxu0 0.0
    %5072 = vmatpush1.xpose.msra.mxu0 0.0
    %5073 = vmatprep.subr.mxu0 0.0
    %5074 = vmatpush1.xpose.msra.mxu0 0.0
    %5075 = vmatprep.subr.mxu0 0.0
    %5076 = vmatpush1.xpose.msra.mxu0 0.0
    %5077 = vmatprep.subr.mxu0 0.0
    %5078 = vmatpush1.xpose.msra.mxu0 0.0
    %5079 = vmatprep.subr.mxu0 0.0
    %5080 = vmatpush1.xpose.msra.mxu0 0.0
    %5081 = vmatprep.subr.mxu0 0.0
    %5082 = vmatpush1.xpose.msra.mxu0 0.0
    %5083 = vmatprep.subr.mxu0 0.0
    %5084 = vmatpush1.xpose.msra.mxu0 0.0
    %5085 = vmatprep.subr.mxu0 0.0
    %5086 = vmatpush1.xpose.msra.mxu0 0.0
    %5087 = vmatprep.subr.mxu0 0.0
    %5088 = vmatpush1.xpose.msra.mxu0 0.0
    %5089 = vmatprep.subr.mxu0 0.0
    %5090 = vmatpush1.xpose.msra.mxu0 0.0
    %5091 = vmatprep.subr.mxu0 0.0
    %5092 = vmatpush1.xpose.msra.mxu0 0.0
    %5093 = vmatprep.subr.mxu0 0.0
    %5094 = vmatpush1.xpose.msra.mxu0 0.0
    %5095 = vmatprep.subr.mxu0 0.0
    %5096 = vmatpush1.xpose.msra.mxu0 0.0
    %5097 = vmatprep.subr.mxu0 0.0
    %5098 = vmatpush1.xpose.msra.mxu0 0.0
    %5099 = vmatprep.subr.mxu0 0.0
    %5100 = vmatpush1.xpose.msra.mxu0 0.0
    %5101 = vmatprep.subr.mxu0 0.0
    %5102 = vmatpush1.xpose.msra.mxu0 0.0
    %5103 = vmatprep.subr.mxu0 0.0
    %5104 = vmatpush1.xpose.msra.mxu0 0.0
    %5105 = vmatprep.subr.mxu0 0.0
    %5106 = vmatpush1.xpose.msra.mxu0 0.0
    %5107 = vmatprep.subr.mxu0 0.0
    %5108 = vmatpush1.xpose.msra.mxu0 0.0
    %5109 = vmatprep.subr.mxu0 0.0
    %5110 = vmatpush1.xpose.msra.mxu0 0.0
    %5111 = vmatprep.subr.mxu0 0.0
    %5112 = vmatpush1.xpose.msra.mxu0 0.0
    %5113 = vmatprep.subr.mxu0 0.0
    %5114 = vmatpush1.xpose.msra.mxu0 0.0
    %5115 = vmatprep.subr.mxu0 0.0
    %5116 = vmatpush1.xpose.msra.mxu0 0.0
    %5117 = vmatprep.subr.mxu0 0.0
    %5118 = vmatpush1.xpose.msra.mxu0 0.0
    %5119 = vmatprep.subr.mxu0 0.0
    %5120 = vmatpush1.xpose.msra.mxu0 0.0
    %5121 = vmatprep.subr.mxu0 0.0
    %5122 = vmatpush1.xpose.msra.mxu0 0.0
    %5123 = vmatprep.subr.mxu0 0.0
    %5124 = vmatpush1.xpose.msra.mxu0 0.0
    %5125 = vmatprep.subr.mxu0 0.0
    %5126 = vmatpush1.xpose.msra.mxu0 0.0
    %5127 = vmatprep.subr.mxu0 0.0
    %5128 = vmatpush1.xpose.msra.mxu0 0.0
    %5129 = vmatprep.mubr.f32.mxu0 0.0
    %5130 = vmatmul.mubr.f32.gmra.mrb[0].mxu0 %v5061
    %v5131 = vpop.f32.mrb[0].mxu0
    %v5132 = vadd.f32 %v723, %v5131
    %v5133 = vpop.f32.mrb[0].mxu0
    %5134 = vdwg.mxu0
    %v5135 = vsel %vm768, %v4376, 0
    %v5137 = vsel %vm768, %v4408, 0
    %5139 = vmatprep.subr.mxu0 0.0
    %5140 = vmatpush1.xpose.msra.mxu0 %v5137
    %5141 = vmatprep.subr.mxu0 0.0
    %5142 = vmatpush1.xpose.msra.mxu0 0.0
    %5143 = vmatprep.subr.mxu0 0.0
    %5144 = vmatpush1.xpose.msra.mxu0 0.0
    %5145 = vmatprep.subr.mxu0 0.0
    %5146 = vmatpush1.xpose.msra.mxu0 0.0
    %5147 = vmatprep.subr.mxu0 0.0
    %5148 = vmatpush1.xpose.msra.mxu0 0.0
    %5149 = vmatprep.subr.mxu0 0.0
    %5150 = vmatpush1.xpose.msra.mxu0 0.0
    %5151 = vmatprep.subr.mxu0 0.0
    %5152 = vmatpush1.xpose.msra.mxu0 0.0
    %5153 = vmatprep.subr.mxu0 0.0
    %5154 = vmatpush1.xpose.msra.mxu0 0.0
    %5155 = vmatprep.subr.mxu0 0.0
    %5156 = vmatpush1.xpose.msra.mxu0 0.0
    %5157 = vmatprep.subr.mxu0 0.0
    %5158 = vmatpush1.xpose.msra.mxu0 0.0
    %5159 = vmatprep.subr.mxu0 0.0
    %5160 = vmatpush1.xpose.msra.mxu0 0.0
    %5161 = vmatprep.subr.mxu0 0.0
    %5162 = vmatpush1.xpose.msra.mxu0 0.0
    %5163 = vmatprep.subr.mxu0 0.0
    %5164 = vmatpush1.xpose.msra.mxu0 0.0
    %5165 = vmatprep.subr.mxu0 0.0
    %5166 = vmatpush1.xpose.msra.mxu0 0.0
    %5167 = vmatprep.subr.mxu0 0.0
    %5168 = vmatpush1.xpose.msra.mxu0 0.0
    %5169 = vmatprep.subr.mxu0 0.0
    %5170 = vmatpush1.xpose.msra.mxu0 0.0
    %5171 = vmatprep.subr.mxu0 0.0
    %5172 = vmatpush1.xpose.msra.mxu0 0.0
    %5173 = vmatprep.subr.mxu0 0.0
    %5174 = vmatpush1.xpose.msra.mxu0 0.0
    %5175 = vmatprep.subr.mxu0 0.0
    %5176 = vmatpush1.xpose.msra.mxu0 0.0
    %5177 = vmatprep.subr.mxu0 0.0
    %5178 = vmatpush1.xpose.msra.mxu0 0.0
    %5179 = vmatprep.subr.mxu0 0.0
    %5180 = vmatpush1.xpose.msra.mxu0 0.0
    %5181 = vmatprep.subr.mxu0 0.0
    %5182 = vmatpush1.xpose.msra.mxu0 0.0
    %5183 = vmatprep.subr.mxu0 0.0
    %5184 = vmatpush1.xpose.msra.mxu0 0.0
    %5185 = vmatprep.subr.mxu0 0.0
    %5186 = vmatpush1.xpose.msra.mxu0 0.0
    %5187 = vmatprep.subr.mxu0 0.0
    %5188 = vmatpush1.xpose.msra.mxu0 0.0
    %5189 = vmatprep.subr.mxu0 0.0
    %5190 = vmatpush1.xpose.msra.mxu0 0.0
    %5191 = vmatprep.subr.mxu0 0.0
    %5192 = vmatpush1.xpose.msra.mxu0 0.0
    %5193 = vmatprep.subr.mxu0 0.0
    %5194 = vmatpush1.xpose.msra.mxu0 0.0
    %5195 = vmatprep.subr.mxu0 0.0
    %5196 = vmatpush1.xpose.msra.mxu0 0.0
    %5197 = vmatprep.subr.mxu0 0.0
    %5198 = vmatpush1.xpose.msra.mxu0 0.0
    %5199 = vmatprep.subr.mxu0 0.0
    %5200 = vmatpush1.xpose.msra.mxu0 0.0
    %5201 = vmatprep.subr.mxu0 0.0
    %5202 = vmatpush1.xpose.msra.mxu0 0.0
    %5203 = vmatprep.mubr.f32.mxu0 0.0
    %5204 = vmatmul.mubr.f32.gmra.mrb[0].mxu0 %v5135
    %v5205 = vpop.f32.mrb[0].mxu0
    %v5206 = vadd.f32 %v727, %v5205
    %v5207 = vpop.f32.mrb[0].mxu0
    %5208 = vdwg.mxu0
    %v5209 = vsel %vm768, %v4378, 0
    %v5211 = vsel %vm768, %v4410, 0
    %5213 = vmatprep.subr.mxu0 0.0
    %5214 = vmatpush1.xpose.msra.mxu0 %v5211
    %5215 = vmatprep.subr.mxu0 0.0
    %5216 = vmatpush1.xpose.msra.mxu0 0.0
    %5217 = vmatprep.subr.mxu0 0.0
    %5218 = vmatpush1.xpose.msra.mxu0 0.0
    %5219 = vmatprep.subr.mxu0 0.0
    %5220 = vmatpush1.xpose.msra.mxu0 0.0
    %5221 = vmatprep.subr.mxu0 0.0
    %5222 = vmatpush1.xpose.msra.mxu0 0.0
    %5223 = vmatprep.subr.mxu0 0.0
    %5224 = vmatpush1.xpose.msra.mxu0 0.0
    %5225 = vmatprep.subr.mxu0 0.0
    %5226 = vmatpush1.xpose.msra.mxu0 0.0
    %5227 = vmatprep.subr.mxu0 0.0
    %5228 = vmatpush1.xpose.msra.mxu0 0.0
    %5229 = vmatprep.subr.mxu0 0.0
    %5230 = vmatpush1.xpose.msra.mxu0 0.0
    %5231 = vmatprep.subr.mxu0 0.0
    %5232 = vmatpush1.xpose.msra.mxu0 0.0
    %5233 = vmatprep.subr.mxu0 0.0
    %5234 = vmatpush1.xpose.msra.mxu0 0.0
    %5235 = vmatprep.subr.mxu0 0.0
    %5236 = vmatpush1.xpose.msra.mxu0 0.0
    %5237 = vmatprep.subr.mxu0 0.0
    %5238 = vmatpush1.xpose.msra.mxu0 0.0
    %5239 = vmatprep.subr.mxu0 0.0
    %5240 = vmatpush1.xpose.msra.mxu0 0.0
    %5241 = vmatprep.subr.mxu0 0.0
    %5242 = vmatpush1.xpose.msra.mxu0 0.0
    %5243 = vmatprep.subr.mxu0 0.0
    %5244 = vmatpush1.xpose.msra.mxu0 0.0
    %5245 = vmatprep.subr.mxu0 0.0
    %5246 = vmatpush1.xpose.msra.mxu0 0.0
    %5247 = vmatprep.subr.mxu0 0.0
    %5248 = vmatpush1.xpose.msra.mxu0 0.0
    %5249 = vmatprep.subr.mxu0 0.0
    %5250 = vmatpush1.xpose.msra.mxu0 0.0
    %5251 = vmatprep.subr.mxu0 0.0
    %5252 = vmatpush1.xpose.msra.mxu0 0.0
    %5253 = vmatprep.subr.mxu0 0.0
    %5254 = vmatpush1.xpose.msra.mxu0 0.0
    %5255 = vmatprep.subr.mxu0 0.0
    %5256 = vmatpush1.xpose.msra.mxu0 0.0
    %5257 = vmatprep.subr.mxu0 0.0
    %5258 = vmatpush1.xpose.msra.mxu0 0.0
    %5259 = vmatprep.subr.mxu0 0.0
    %5260 = vmatpush1.xpose.msra.mxu0 0.0
    %5261 = vmatprep.subr.mxu0 0.0
    %5262 = vmatpush1.xpose.msra.mxu0 0.0
    %5263 = vmatprep.subr.mxu0 0.0
    %5264 = vmatpush1.xpose.msra.mxu0 0.0
    %5265 = vmatprep.subr.mxu0 0.0
    %5266 = vmatpush1.xpose.msra.mxu0 0.0
    %5267 = vmatprep.subr.mxu0 0.0
    %5268 = vmatpush1.xpose.msra.mxu0 0.0
    %5269 = vmatprep.subr.mxu0 0.0
    %5270 = vmatpush1.xpose.msra.mxu0 0.0
    %5271 = vmatprep.subr.mxu0 0.0
    %5272 = vmatpush1.xpose.msra.mxu0 0.0
    %5273 = vmatprep.subr.mxu0 0.0
    %5274 = vmatpush1.xpose.msra.mxu0 0.0
    %5275 = vmatprep.subr.mxu0 0.0
    %5276 = vmatpush1.xpose.msra.mxu0 0.0
    %5277 = vmatprep.mubr.f32.mxu0 0.0
    %5278 = vmatmul.mubr.f32.gmra.mrb[0].mxu0 %v5209
    %v5279 = vpop.f32.mrb[0].mxu0
    %v5280 = vadd.f32 %v731, %v5279
    %v5281 = vpop.f32.mrb[0].mxu0
    %5282 = vdwg.mxu0
    %v5283 = vsel %vm768, %v4380, 0
    %v5285 = vsel %vm768, %v4412, 0
    %5287 = vmatprep.subr.mxu0 0.0
    %5288 = vmatpush1.xpose.msra.mxu0 %v5285
    %5289 = vmatprep.subr.mxu0 0.0
    %5290 = vmatpush1.xpose.msra.mxu0 0.0
    %5291 = vmatprep.subr.mxu0 0.0
    %5292 = vmatpush1.xpose.msra.mxu0 0.0
    %5293 = vmatprep.subr.mxu0 0.0
    %5294 = vmatpush1.xpose.msra.mxu0 0.0
    %5295 = vmatprep.subr.mxu0 0.0
    %5296 = vmatpush1.xpose.msra.mxu0 0.0
    %5297 = vmatprep.subr.mxu0 0.0
    %5298 = vmatpush1.xpose.msra.mxu0 0.0
    %5299 = vmatprep.subr.mxu0 0.0
    %5300 = vmatpush1.xpose.msra.mxu0 0.0
    %5301 = vmatprep.subr.mxu0 0.0
    %5302 = vmatpush1.xpose.msra.mxu0 0.0
    %5303 = vmatprep.subr.mxu0 0.0
    %5304 = vmatpush1.xpose.msra.mxu0 0.0
    %5305 = vmatprep.subr.mxu0 0.0
    %5306 = vmatpush1.xpose.msra.mxu0 0.0
    %5307 = vmatprep.subr.mxu0 0.0
    %5308 = vmatpush1.xpose.msra.mxu0 0.0
    %5309 = vmatprep.subr.mxu0 0.0
    %5310 = vmatpush1.xpose.msra.mxu0 0.0
    %5311 = vmatprep.subr.mxu0 0.0
    %5312 = vmatpush1.xpose.msra.mxu0 0.0
    %5313 = vmatprep.subr.mxu0 0.0
    %5314 = vmatpush1.xpose.msra.mxu0 0.0
    %5315 = vmatprep.subr.mxu0 0.0
    %5316 = vmatpush1.xpose.msra.mxu0 0.0
    %5317 = vmatprep.subr.mxu0 0.0
    %5318 = vmatpush1.xpose.msra.mxu0 0.0
    %5319 = vmatprep.subr.mxu0 0.0
    %5320 = vmatpush1.xpose.msra.mxu0 0.0
    %5321 = vmatprep.subr.mxu0 0.0
    %5322 = vmatpush1.xpose.msra.mxu0 0.0
    %5323 = vmatprep.subr.mxu0 0.0
    %5324 = vmatpush1.xpose.msra.mxu0 0.0
    %5325 = vmatprep.subr.mxu0 0.0
    %5326 = vmatpush1.xpose.msra.mxu0 0.0
    %5327 = vmatprep.subr.mxu0 0.0
    %5328 = vmatpush1.xpose.msra.mxu0 0.0
    %5329 = vmatprep.subr.mxu0 0.0
    %5330 = vmatpush1.xpose.msra.mxu0 0.0
    %5331 = vmatprep.subr.mxu0 0.0
    %5332 = vmatpush1.xpose.msra.mxu0 0.0
    %5333 = vmatprep.subr.mxu0 0.0
    %5334 = vmatpush1.xpose.msra.mxu0 0.0
    %5335 = vmatprep.subr.mxu0 0.0
    %5336 = vmatpush1.xpose.msra.mxu0 0.0
    %5337 = vmatprep.subr.mxu0 0.0
    %5338 = vmatpush1.xpose.msra.mxu0 0.0
    %5339 = vmatprep.subr.mxu0 0.0
    %5340 = vmatpush1.xpose.msra.mxu0 0.0
    %5341 = vmatprep.subr.mxu0 0.0
    %5342 = vmatpush1.xpose.msra.mxu0 0.0
    %5343 = vmatprep.subr.mxu0 0.0
    %5344 = vmatpush1.xpose.msra.mxu0 0.0
    %5345 = vmatprep.subr.mxu0 0.0
    %5346 = vmatpush1.xpose.msra.mxu0 0.0
    %5347 = vmatprep.subr.mxu0 0.0
    %5348 = vmatpush1.xpose.msra.mxu0 0.0
    %5349 = vmatprep.subr.mxu0 0.0
    %5350 = vmatpush1.xpose.msra.mxu0 0.0
    %5351 = vmatprep.mubr.f32.mxu0 0.0
    %5352 = vmatmul.mubr.f32.gmra.mrb[0].mxu0 %v5283
    %v5353 = vpop.f32.mrb[0].mxu0
    %v5354 = vadd.f32 %v735, %v5353
    %v5355 = vpop.f32.mrb[0].mxu0
    %5356 = vdwg.mxu0
    %v5357 = vsel %vm768, %v4382, 0
    %v5359 = vsel %vm768, %v4414, 0
    %5361 = vmatprep.subr.mxu0 0.0
    %5362 = vmatpush1.xpose.msra.mxu0 %v5359
    %5363 = vmatprep.subr.mxu0 0.0
    %5364 = vmatpush1.xpose.msra.mxu0 0.0
    %5365 = vmatprep.subr.mxu0 0.0
    %5366 = vmatpush1.xpose.msra.mxu0 0.0
    %5367 = vmatprep.subr.mxu0 0.0
    %5368 = vmatpush1.xpose.msra.mxu0 0.0
    %5369 = vmatprep.subr.mxu0 0.0
    %5370 = vmatpush1.xpose.msra.mxu0 0.0
    %5371 = vmatprep.subr.mxu0 0.0
    %5372 = vmatpush1.xpose.msra.mxu0 0.0
    %5373 = vmatprep.subr.mxu0 0.0
    %5374 = vmatpush1.xpose.msra.mxu0 0.0
    %5375 = vmatprep.subr.mxu0 0.0
    %5376 = vmatpush1.xpose.msra.mxu0 0.0
    %5377 = vmatprep.subr.mxu0 0.0
    %5378 = vmatpush1.xpose.msra.mxu0 0.0
    %5379 = vmatprep.subr.mxu0 0.0
    %5380 = vmatpush1.xpose.msra.mxu0 0.0
    %5381 = vmatprep.subr.mxu0 0.0
    %5382 = vmatpush1.xpose.msra.mxu0 0.0
    %5383 = vmatprep.subr.mxu0 0.0
    %5384 = vmatpush1.xpose.msra.mxu0 0.0
    %5385 = vmatprep.subr.mxu0 0.0
    %5386 = vmatpush1.xpose.msra.mxu0 0.0
    %5387 = vmatprep.subr.mxu0 0.0
    %5388 = vmatpush1.xpose.msra.mxu0 0.0
    %5389 = vmatprep.subr.mxu0 0.0
    %5390 = vmatpush1.xpose.msra.mxu0 0.0
    %5391 = vmatprep.subr.mxu0 0.0
    %5392 = vmatpush1.xpose.msra.mxu0 0.0
    %5393 = vmatprep.subr.mxu0 0.0
    %5394 = vmatpush1.xpose.msra.mxu0 0.0
    %5395 = vmatprep.subr.mxu0 0.0
    %5396 = vmatpush1.xpose.msra.mxu0 0.0
    %5397 = vmatprep.subr.mxu0 0.0
    %5398 = vmatpush1.xpose.msra.mxu0 0.0
    %5399 = vmatprep.subr.mxu0 0.0
    %5400 = vmatpush1.xpose.msra.mxu0 0.0
    %5401 = vmatprep.subr.mxu0 0.0
    %5402 = vmatpush1.xpose.msra.mxu0 0.0
    %5403 = vmatprep.subr.mxu0 0.0
    %5404 = vmatpush1.xpose.msra.mxu0 0.0
    %5405 = vmatprep.subr.mxu0 0.0
    %5406 = vmatpush1.xpose.msra.mxu0 0.0
    %5407 = vmatprep.subr.mxu0 0.0
    %5408 = vmatpush1.xpose.msra.mxu0 0.0
    %5409 = vmatprep.subr.mxu0 0.0
    %5410 = vmatpush1.xpose.msra.mxu0 0.0
    %5411 = vmatprep.subr.mxu0 0.0
    %5412 = vmatpush1.xpose.msra.mxu0 0.0
    %5413 = vmatprep.subr.mxu0 0.0
    %5414 = vmatpush1.xpose.msra.mxu0 0.0
    %5415 = vmatprep.subr.mxu0 0.0
    %5416 = vmatpush1.xpose.msra.mxu0 0.0
    %5417 = vmatprep.subr.mxu0 0.0
    %5418 = vmatpush1.xpose.msra.mxu0 0.0
    %5419 = vmatprep.subr.mxu0 0.0
    %5420 = vmatpush1.xpose.msra.mxu0 0.0
    %5421 = vmatprep.subr.mxu0 0.0
    %5422 = vmatpush1.xpose.msra.mxu0 0.0
    %5423 = vmatprep.subr.mxu0 0.0
    %5424 = vmatpush1.xpose.msra.mxu0 0.0
    %5425 = vmatprep.mubr.f32.mxu0 0.0
    %5426 = vmatmul.mubr.f32.gmra.mrb[0].mxu0 %v5357
    %v5427 = vpop.f32.mrb[0].mxu0
    %v5428 = vadd.f32 %v739, %v5427
    %v5429 = vpop.f32.mrb[0].mxu0
    %5430 = vdwg.mxu0
    %v5431 = vsel %vm768, %v4384, 0
    %v5433 = vsel %vm768, %v4416, 0
    %5435 = vmatprep.subr.mxu0 0.0
    %5436 = vmatpush1.xpose.msra.mxu0 %v5433
    %5437 = vmatprep.subr.mxu0 0.0
    %5438 = vmatpush1.xpose.msra.mxu0 0.0
    %5439 = vmatprep.subr.mxu0 0.0
    %5440 = vmatpush1.xpose.msra.mxu0 0.0
    %5441 = vmatprep.subr.mxu0 0.0
    %5442 = vmatpush1.xpose.msra.mxu0 0.0
    %5443 = vmatprep.subr.mxu0 0.0
    %5444 = vmatpush1.xpose.msra.mxu0 0.0
    %5445 = vmatprep.subr.mxu0 0.0
    %5446 = vmatpush1.xpose.msra.mxu0 0.0
    %5447 = vmatprep.subr.mxu0 0.0
    %5448 = vmatpush1.xpose.msra.mxu0 0.0
    %5449 = vmatprep.subr.mxu0 0.0
    %5450 = vmatpush1.xpose.msra.mxu0 0.0
    %5451 = vmatprep.subr.mxu0 0.0
    %5452 = vmatpush1.xpose.msra.mxu0 0.0
    %5453 = vmatprep.subr.mxu0 0.0
    %5454 = vmatpush1.xpose.msra.mxu0 0.0
    %5455 = vmatprep.subr.mxu0 0.0
    %5456 = vmatpush1.xpose.msra.mxu0 0.0
    %5457 = vmatprep.subr.mxu0 0.0
    %5458 = vmatpush1.xpose.msra.mxu0 0.0
    %5459 = vmatprep.subr.mxu0 0.0
    %5460 = vmatpush1.xpose.msra.mxu0 0.0
    %5461 = vmatprep.subr.mxu0 0.0
    %5462 = vmatpush1.xpose.msra.mxu0 0.0
    %5463 = vmatprep.subr.mxu0 0.0
    %5464 = vmatpush1.xpose.msra.mxu0 0.0
    %5465 = vmatprep.subr.mxu0 0.0
    %5466 = vmatpush1.xpose.msra.mxu0 0.0
    %5467 = vmatprep.subr.mxu0 0.0
    %5468 = vmatpush1.xpose.msra.mxu0 0.0
    %5469 = vmatprep.subr.mxu0 0.0
    %5470 = vmatpush1.xpose.msra.mxu0 0.0
    %5471 = vmatprep.subr.mxu0 0.0
    %5472 = vmatpush1.xpose.msra.mxu0 0.0
    %5473 = vmatprep.subr.mxu0 0.0
    %5474 = vmatpush1.xpose.msra.mxu0 0.0
    %5475 = vmatprep.subr.mxu0 0.0
    %5476 = vmatpush1.xpose.msra.mxu0 0.0
    %5477 = vmatprep.subr.mxu0 0.0
    %5478 = vmatpush1.xpose.msra.mxu0 0.0
    %5479 = vmatprep.subr.mxu0 0.0
    %5480 = vmatpush1.xpose.msra.mxu0 0.0
    %5481 = vmatprep.subr.mxu0 0.0
    %5482 = vmatpush1.xpose.msra.mxu0 0.0
    %5483 = vmatprep.subr.mxu0 0.0
    %5484 = vmatpush1.xpose.msra.mxu0 0.0
    %5485 = vmatprep.subr.mxu0 0.0
    %5486 = vmatpush1.xpose.msra.mxu0 0.0
    %5487 = vmatprep.subr.mxu0 0.0
    %5488 = vmatpush1.xpose.msra.mxu0 0.0
    %5489 = vmatprep.subr.mxu0 0.0
    %5490 = vmatpush1.xpose.msra.mxu0 0.0
    %5491 = vmatprep.subr.mxu0 0.0
    %5492 = vmatpush1.xpose.msra.mxu0 0.0
    %5493 = vmatprep.subr.mxu0 0.0
    %5494 = vmatpush1.xpose.msra.mxu0 0.0
    %5495 = vmatprep.subr.mxu0 0.0
    %5496 = vmatpush1.xpose.msra.mxu0 0.0
    %5497 = vmatprep.subr.mxu0 0.0
    %5498 = vmatpush1.xpose.msra.mxu0 0.0
    %5499 = vmatprep.mubr.f32.mxu0 0.0
    %5500 = vmatmul.mubr.f32.gmra.mrb[0].mxu0 %v5431
    %v5501 = vpop.f32.mrb[0].mxu0
    %v5502 = vadd.f32 %v743, %v5501
    %v5503 = vpop.f32.mrb[0].mxu0
    %5504 = vdwg.mxu0
    %v5505 = vsel %vm768, %v4386, 0
    %v5507 = vsel %vm768, %v4418, 0
    %5509 = vmatprep.subr.mxu0 0.0
    %5510 = vmatpush1.xpose.msra.mxu0 %v5507
    %5511 = vmatprep.subr.mxu0 0.0
    %5512 = vmatpush1.xpose.msra.mxu0 0.0
    %5513 = vmatprep.subr.mxu0 0.0
    %5514 = vmatpush1.xpose.msra.mxu0 0.0
    %5515 = vmatprep.subr.mxu0 0.0
    %5516 = vmatpush1.xpose.msra.mxu0 0.0
    %5517 = vmatprep.subr.mxu0 0.0
    %5518 = vmatpush1.xpose.msra.mxu0 0.0
    %5519 = vmatprep.subr.mxu0 0.0
    %5520 = vmatpush1.xpose.msra.mxu0 0.0
    %5521 = vmatprep.subr.mxu0 0.0
    %5522 = vmatpush1.xpose.msra.mxu0 0.0
    %5523 = vmatprep.subr.mxu0 0.0
    %5524 = vmatpush1.xpose.msra.mxu0 0.0
    %5525 = vmatprep.subr.mxu0 0.0
    %5526 = vmatpush1.xpose.msra.mxu0 0.0
    %5527 = vmatprep.subr.mxu0 0.0
    %5528 = vmatpush1.xpose.msra.mxu0 0.0
    %5529 = vmatprep.subr.mxu0 0.0
    %5530 = vmatpush1.xpose.msra.mxu0 0.0
    %5531 = vmatprep.subr.mxu0 0.0
    %5532 = vmatpush1.xpose.msra.mxu0 0.0
    %5533 = vmatprep.subr.mxu0 0.0
    %5534 = vmatpush1.xpose.msra.mxu0 0.0
    %5535 = vmatprep.subr.mxu0 0.0
    %5536 = vmatpush1.xpose.msra.mxu0 0.0
    %5537 = vmatprep.subr.mxu0 0.0
    %5538 = vmatpush1.xpose.msra.mxu0 0.0
    %5539 = vmatprep.subr.mxu0 0.0
    %5540 = vmatpush1.xpose.msra.mxu0 0.0
    %5541 = vmatprep.subr.mxu0 0.0
    %5542 = vmatpush1.xpose.msra.mxu0 0.0
    %5543 = vmatprep.subr.mxu0 0.0
    %5544 = vmatpush1.xpose.msra.mxu0 0.0
    %5545 = vmatprep.subr.mxu0 0.0
    %5546 = vmatpush1.xpose.msra.mxu0 0.0
    %5547 = vmatprep.subr.mxu0 0.0
    %5548 = vmatpush1.xpose.msra.mxu0 0.0
    %5549 = vmatprep.subr.mxu0 0.0
    %5550 = vmatpush1.xpose.msra.mxu0 0.0
    %5551 = vmatprep.subr.mxu0 0.0
    %5552 = vmatpush1.xpose.msra.mxu0 0.0
    %5553 = vmatprep.subr.mxu0 0.0
    %5554 = vmatpush1.xpose.msra.mxu0 0.0
    %5555 = vmatprep.subr.mxu0 0.0
    %5556 = vmatpush1.xpose.msra.mxu0 0.0
    %5557 = vmatprep.subr.mxu0 0.0
    %5558 = vmatpush1.xpose.msra.mxu0 0.0
    %5559 = vmatprep.subr.mxu0 0.0
    %5560 = vmatpush1.xpose.msra.mxu0 0.0
    %5561 = vmatprep.subr.mxu0 0.0
    %5562 = vmatpush1.xpose.msra.mxu0 0.0
    %5563 = vmatprep.subr.mxu0 0.0
    %5564 = vmatpush1.xpose.msra.mxu0 0.0
    %5565 = vmatprep.subr.mxu0 0.0
    %5566 = vmatpush1.xpose.msra.mxu0 0.0
    %5567 = vmatprep.subr.mxu0 0.0
    %5568 = vmatpush1.xpose.msra.mxu0 0.0
    %5569 = vmatprep.subr.mxu0 0.0
    %5570 = vmatpush1.xpose.msra.mxu0 0.0
    %5571 = vmatprep.subr.mxu0 0.0
    %5572 = vmatpush1.xpose.msra.mxu0 0.0
    %5573 = vmatprep.mubr.f32.mxu0 0.0
    %5574 = vmatmul.mubr.f32.gmra.mrb[0].mxu0 %v5505
    %v5575 = vpop.f32.mrb[0].mxu0
    %v5576 = vadd.f32 %v747, %v5575
    %v5577 = vpop.f32.mrb[0].mxu0
    %5578 = vdwg.mxu0
    %v5579 = vsel %vm768, %v4388, 0
    %v5581 = vsel %vm768, %v4420, 0
    %5583 = vmatprep.subr.mxu0 0.0
    %5584 = vmatpush1.xpose.msra.mxu0 %v5581
    %5585 = vmatprep.subr.mxu0 0.0
    %5586 = vmatpush1.xpose.msra.mxu0 0.0
    %5587 = vmatprep.subr.mxu0 0.0
    %5588 = vmatpush1.xpose.msra.mxu0 0.0
    %5589 = vmatprep.subr.mxu0 0.0
    %5590 = vmatpush1.xpose.msra.mxu0 0.0
    %5591 = vmatprep.subr.mxu0 0.0
    %5592 = vmatpush1.xpose.msra.mxu0 0.0
    %5593 = vmatprep.subr.mxu0 0.0
    %5594 = vmatpush1.xpose.msra.mxu0 0.0
    %5595 = vmatprep.subr.mxu0 0.0
    %5596 = vmatpush1.xpose.msra.mxu0 0.0
    %5597 = vmatprep.subr.mxu0 0.0
    %5598 = vmatpush1.xpose.msra.mxu0 0.0
    %5599 = vmatprep.subr.mxu0 0.0
    %5600 = vmatpush1.xpose.msra.mxu0 0.0
    %5601 = vmatprep.subr.mxu0 0.0
    %5602 = vmatpush1.xpose.msra.mxu0 0.0
    %5603 = vmatprep.subr.mxu0 0.0
    %5604 = vmatpush1.xpose.msra.mxu0 0.0
    %5605 = vmatprep.subr.mxu0 0.0
    %5606 = vmatpush1.xpose.msra.mxu0 0.0
    %5607 = vmatprep.subr.mxu0 0.0
    %5608 = vmatpush1.xpose.msra.mxu0 0.0
    %5609 = vmatprep.subr.mxu0 0.0
    %5610 = vmatpush1.xpose.msra.mxu0 0.0
    %5611 = vmatprep.subr.mxu0 0.0
    %5612 = vmatpush1.xpose.msra.mxu0 0.0
    %5613 = vmatprep.subr.mxu0 0.0
    %5614 = vmatpush1.xpose.msra.mxu0 0.0
    %5615 = vmatprep.subr.mxu0 0.0
    %5616 = vmatpush1.xpose.msra.mxu0 0.0
    %5617 = vmatprep.subr.mxu0 0.0
    %5618 = vmatpush1.xpose.msra.mxu0 0.0
    %5619 = vmatprep.subr.mxu0 0.0
    %5620 = vmatpush1.xpose.msra.mxu0 0.0
    %5621 = vmatprep.subr.mxu0 0.0
    %5622 = vmatpush1.xpose.msra.mxu0 0.0
    %5623 = vmatprep.subr.mxu0 0.0
    %5624 = vmatpush1.xpose.msra.mxu0 0.0
    %5625 = vmatprep.subr.mxu0 0.0
    %5626 = vmatpush1.xpose.msra.mxu0 0.0
    %5627 = vmatprep.subr.mxu0 0.0
    %5628 = vmatpush1.xpose.msra.mxu0 0.0
    %5629 = vmatprep.subr.mxu0 0.0
    %5630 = vmatpush1.xpose.msra.mxu0 0.0
    %5631 = vmatprep.subr.mxu0 0.0
    %5632 = vmatpush1.xpose.msra.mxu0 0.0
    %5633 = vmatprep.subr.mxu0 0.0
    %5634 = vmatpush1.xpose.msra.mxu0 0.0
    %5635 = vmatprep.subr.mxu0 0.0
    %5636 = vmatpush1.xpose.msra.mxu0 0.0
    %5637 = vmatprep.subr.mxu0 0.0
    %5638 = vmatpush1.xpose.msra.mxu0 0.0
    %5639 = vmatprep.subr.mxu0 0.0
    %5640 = vmatpush1.xpose.msra.mxu0 0.0
    %5641 = vmatprep.subr.mxu0 0.0
    %5642 = vmatpush1.xpose.msra.mxu0 0.0
    %5643 = vmatprep.subr.mxu0 0.0
    %5644 = vmatpush1.xpose.msra.mxu0 0.0
    %5645 = vmatprep.subr.mxu0 0.0
    %5646 = vmatpush1.xpose.msra.mxu0 0.0
    %5647 = vmatprep.mubr.f32.mxu0 0.0
    %5648 = vmatmul.mubr.f32.gmra.mrb[0].mxu0 %v5579
    %v5649 = vpop.f32.mrb[0].mxu0
    %v5650 = vadd.f32 %v751, %v5649
    %v5651 = vpop.f32.mrb[0].mxu0
    %5652 = vdwg.mxu0
    %v5653 = vsel %vm1953, %v4540, -inf
    %5654 = vmax.xlane.f32.xlu0 %v5653
    %v5655 = vpop.xlane.xlu0 %5654
    %v5656 = vsel %vm1953, %v4614, -inf
    %5657 = vmax.xlane.f32.xlu0 %v5656
    %v5658 = vpop.xlane.xlu0 %5657
    %v5659 = vsel %vm1953, %v4688, -inf
    %5660 = vmax.xlane.f32.xlu0 %v5659
    %v5661 = vpop.xlane.xlu0 %5660
    %v5662 = vsel %vm1953, %v4762, -inf
    %5663 = vmax.xlane.f32.xlu0 %v5662
    %v5664 = vpop.xlane.xlu0 %5663
    %v5665 = vsel %vm1953, %v4836, -inf
    %5666 = vmax.xlane.f32.xlu0 %v5665
    %v5667 = vpop.xlane.xlu0 %5666
    %v5668 = vsel %vm1953, %v4910, -inf
    %5669 = vmax.xlane.f32.xlu0 %v5668
    %v5670 = vpop.xlane.xlu0 %5669
    %v5671 = vsel %vm1953, %v4984, -inf
    %5672 = vmax.xlane.f32.xlu0 %v5671
    %v5673 = vpop.xlane.xlu0 %5672
    %v5674 = vsel %vm1953, %v5058, -inf
    %5675 = vmax.xlane.f32.xlu0 %v5674
    %v5676 = vpop.xlane.xlu0 %5675
    %v5677 = vsel %vm1953, %v5132, -inf
    %5678 = vmax.xlane.f32.xlu0 %v5677
    %v5679 = vpop.xlane.xlu0 %5678
    %v5680 = vsel %vm1953, %v5206, -inf
    %5681 = vmax.xlane.f32.xlu0 %v5680
    %v5682 = vpop.xlane.xlu0 %5681
    %v5683 = vsel %vm1953, %v5280, -inf
    %5684 = vmax.xlane.f32.xlu0 %v5683
    %v5685 = vpop.xlane.xlu0 %5684
    %v5686 = vsel %vm1953, %v5354, -inf
    %5687 = vmax.xlane.f32.xlu0 %v5686
    %v5688 = vpop.xlane.xlu0 %5687
    %v5689 = vsel %vm1953, %v5428, -inf
    %5690 = vmax.xlane.f32.xlu0 %v5689
    %v5691 = vpop.xlane.xlu0 %5690
    %v5692 = vsel %vm1953, %v5502, -inf
    %5693 = vmax.xlane.f32.xlu0 %v5692
    %v5694 = vpop.xlane.xlu0 %5693
    %v5695 = vsel %vm1953, %v5576, -inf
    %5696 = vmax.xlane.f32.xlu0 %v5695
    %v5697 = vpop.xlane.xlu0 %5696
    %v5698 = vsel %vm1953, %v5650, -inf
    %5699 = vmax.xlane.f32.xlu0 %v5698
    %v5700 = vpop.xlane.xlu0 %5699
    %v5701 = vsub.f32 %v4540, %v5655
    %v5702 = vsub.f32 %v4614, %v5658
    %v5703 = vsub.f32 %v4688, %v5661
    %v5704 = vsub.f32 %v4762, %v5664
    %v5705 = vsub.f32 %v4836, %v5667
    %v5706 = vsub.f32 %v4910, %v5670
    %v5707 = vsub.f32 %v4984, %v5673
    %v5708 = vsub.f32 %v5058, %v5676
    %v5709 = vsub.f32 %v5132, %v5679
    %v5710 = vsub.f32 %v5206, %v5682
    %v5711 = vsub.f32 %v5280, %v5685
    %v5712 = vsub.f32 %v5354, %v5688
    %v5713 = vsub.f32 %v5428, %v5691
    %v5714 = vsub.f32 %v5502, %v5694
    %v5715 = vsub.f32 %v5576, %v5697
    %v5716 = vsub.f32 %v5650, %v5700
    %v5717 = vmul.f32 %v5701, 1.442695
    %v5718 = vpow.pop %v5717
    %v5719 = vmul.f32 %v5702, 1.442695
    %v5720 = vpow.pop %v5719
    %v5721 = vmul.f32 %v5703, 1.442695
    %v5722 = vpow.pop %v5721
    %v5723 = vmul.f32 %v5704, 1.442695
    %v5724 = vpow.pop %v5723
    %v5725 = vmul.f32 %v5705, 1.442695
    %v5726 = vpow.pop %v5725
    %v5727 = vmul.f32 %v5706, 1.442695
    %v5728 = vpow.pop %v5727
    %v5729 = vmul.f32 %v5707, 1.442695
    %v5730 = vpow.pop %v5729
    %v5731 = vmul.f32 %v5708, 1.442695
    %v5732 = vpow.pop %v5731
    %v5733 = vmul.f32 %v5709, 1.442695
    %v5734 = vpow.pop %v5733
    %v5735 = vmul.f32 %v5710, 1.442695
    %v5736 = vpow.pop %v5735
    %v5737 = vmul.f32 %v5711, 1.442695
    %v5738 = vpow.pop %v5737
    %v5739 = vmul.f32 %v5712, 1.442695
    %v5740 = vpow.pop %v5739
    %v5741 = vmul.f32 %v5713, 1.442695
    %v5742 = vpow.pop %v5741
    %v5743 = vmul.f32 %v5714, 1.442695
    %v5744 = vpow.pop %v5743
    %v5745 = vmul.f32 %v5715, 1.442695
    %v5746 = vpow.pop %v5745
    %v5747 = vmul.f32 %v5716, 1.442695
    %v5748 = vpow.pop %v5747
    %v5749 = vsel %vm1953, %v5718, 0.0
    %5750 = vadd.xlane.f32.xlu0 %v5749
    %v5751 = vpop.xlane.xlu0 %5750
    %v5752 = vsel %vm1953, %v5720, 0.0
    %5753 = vadd.xlane.f32.xlu0 %v5752
    %v5754 = vpop.xlane.xlu0 %5753
    %v5755 = vsel %vm1953, %v5722, 0.0
    %5756 = vadd.xlane.f32.xlu0 %v5755
    %v5757 = vpop.xlane.xlu0 %5756
    %v5758 = vsel %vm1953, %v5724, 0.0
    %5759 = vadd.xlane.f32.xlu0 %v5758
    %v5760 = vpop.xlane.xlu0 %5759
    %v5761 = vsel %vm1953, %v5726, 0.0
    %5762 = vadd.xlane.f32.xlu0 %v5761
    %v5763 = vpop.xlane.xlu0 %5762
    %v5764 = vsel %vm1953, %v5728, 0.0
    %5765 = vadd.xlane.f32.xlu0 %v5764
    %v5766 = vpop.xlane.xlu0 %5765
    %v5767 = vsel %vm1953, %v5730, 0.0
    %5768 = vadd.xlane.f32.xlu0 %v5767
    %v5769 = vpop.xlane.xlu0 %5768
    %v5770 = vsel %vm1953, %v5732, 0.0
    %5771 = vadd.xlane.f32.xlu0 %v5770
    %v5772 = vpop.xlane.xlu0 %5771
    %v5773 = vsel %vm1953, %v5734, 0.0
    %5774 = vadd.xlane.f32.xlu0 %v5773
    %v5775 = vpop.xlane.xlu0 %5774
    %v5776 = vsel %vm1953, %v5736, 0.0
    %5777 = vadd.xlane.f32.xlu0 %v5776
    %v5778 = vpop.xlane.xlu0 %5777
    %v5779 = vsel %vm1953, %v5738, 0.0
    %5780 = vadd.xlane.f32.xlu0 %v5779
    %v5781 = vpop.xlane.xlu0 %5780
    %v5782 = vsel %vm1953, %v5740, 0.0
    %5783 = vadd.xlane.f32.xlu0 %v5782
    %v5784 = vpop.xlane.xlu0 %5783
    %v5785 = vsel %vm1953, %v5742, 0.0
    %5786 = vadd.xlane.f32.xlu0 %v5785
    %v5787 = vpop.xlane.xlu0 %5786
    %v5788 = vsel %vm1953, %v5744, 0.0
    %5789 = vadd.xlane.f32.xlu0 %v5788
    %v5790 = vpop.xlane.xlu0 %5789
    %v5791 = vsel %vm1953, %v5746, 0.0
    %5792 = vadd.xlane.f32.xlu0 %v5791
    %v5793 = vpop.xlane.xlu0 %5792
    %v5794 = vsel %vm1953, %v5748, 0.0
    %5795 = vadd.xlane.f32.xlu0 %v5794
    %v5796 = vpop.xlane.xlu0 %5795
    %v5797 = vrcp.pop %v5751
    %v5798 = vmul.f32 %v5718, %v5797
    %v5799 = vrcp.pop %v5754
    %v5800 = vmul.f32 %v5720, %v5799
    %v5801 = vrcp.pop %v5757
    %v5802 = vmul.f32 %v5722, %v5801
    %v5803 = vrcp.pop %v5760
    %v5804 = vmul.f32 %v5724, %v5803
    %v5805 = vrcp.pop %v5763
    %v5806 = vmul.f32 %v5726, %v5805
    %v5807 = vrcp.pop %v5766
    %v5808 = vmul.f32 %v5728, %v5807
    %v5809 = vrcp.pop %v5769
    %v5810 = vmul.f32 %v5730, %v5809
    %v5811 = vrcp.pop %v5772
    %v5812 = vmul.f32 %v5732, %v5811
    %v5813 = vrcp.pop %v5775
    %v5814 = vmul.f32 %v5734, %v5813
    %v5815 = vrcp.pop %v5778
    %v5816 = vmul.f32 %v5736, %v5815
    %v5817 = vrcp.pop %v5781
    %v5818 = vmul.f32 %v5738, %v5817
    %v5819 = vrcp.pop %v5784
    %v5820 = vmul.f32 %v5740, %v5819
    %v5821 = vrcp.pop %v5787
    %v5822 = vmul.f32 %v5742, %v5821
    %v5823 = vrcp.pop %v5790
    %v5824 = vmul.f32 %v5744, %v5823
    %v5825 = vrcp.pop %v5793
    %v5826 = vmul.f32 %v5746, %v5825
    %v5827 = vrcp.pop %v5796
    %v5828 = vmul.f32 %v5748, %v5827
    %v5830 = vsel %vm1953, %v5798, 0
    %5832 = vmatprep.subr.mxu0 0.0
    %5833 = vmatpush1.msra.mxu0 %v4422
    %5834 = vmatprep.subr.mxu0 0.0
    %5835 = vmatpush1.msra.mxu0 0.0
    %5836 = vmatprep.subr.mxu0 0.0
    %5837 = vmatpush1.msra.mxu0 0.0
    %5838 = vmatprep.subr.mxu0 0.0
    %5839 = vmatpush1.msra.mxu0 0.0
    %5840 = vmatprep.subr.mxu0 0.0
    %5841 = vmatpush1.msra.mxu0 0.0
    %5842 = vmatprep.subr.mxu0 0.0
    %5843 = vmatpush1.msra.mxu0 0.0
    %5844 = vmatprep.subr.mxu0 0.0
    %5845 = vmatpush1.msra.mxu0 0.0
    %5846 = vmatprep.subr.mxu0 0.0
    %5847 = vmatpush1.msra.mxu0 0.0
    %5848 = vmatprep.subr.mxu0 0.0
    %5849 = vmatpush1.msra.mxu0 0.0
    %5850 = vmatprep.subr.mxu0 0.0
    %5851 = vmatpush1.msra.mxu0 0.0
    %5852 = vmatprep.subr.mxu0 0.0
    %5853 = vmatpush1.msra.mxu0 0.0
    %5854 = vmatprep.subr.mxu0 0.0
    %5855 = vmatpush1.msra.mxu0 0.0
    %5856 = vmatprep.subr.mxu0 0.0
    %5857 = vmatpush1.msra.mxu0 0.0
    %5858 = vmatprep.subr.mxu0 0.0
    %5859 = vmatpush1.msra.mxu0 0.0
    %5860 = vmatprep.subr.mxu0 0.0
    %5861 = vmatpush1.msra.mxu0 0.0
    %5862 = vmatprep.subr.mxu0 0.0
    %5863 = vmatpush1.msra.mxu0 0.0
    %5864 = vmatprep.subr.mxu0 0.0
    %5865 = vmatpush1.msra.mxu0 0.0
    %5866 = vmatprep.subr.mxu0 0.0
    %5867 = vmatpush1.msra.mxu0 0.0
    %5868 = vmatprep.subr.mxu0 0.0
    %5869 = vmatpush1.msra.mxu0 0.0
    %5870 = vmatprep.subr.mxu0 0.0
    %5871 = vmatpush1.msra.mxu0 0.0
    %5872 = vmatprep.subr.mxu0 0.0
    %5873 = vmatpush1.msra.mxu0 0.0
    %5874 = vmatprep.subr.mxu0 0.0
    %5875 = vmatpush1.msra.mxu0 0.0
    %5876 = vmatprep.subr.mxu0 0.0
    %5877 = vmatpush1.msra.mxu0 0.0
    %5878 = vmatprep.subr.mxu0 0.0
    %5879 = vmatpush1.msra.mxu0 0.0
    %5880 = vmatprep.subr.mxu0 0.0
    %5881 = vmatpush1.msra.mxu0 0.0
    %5882 = vmatprep.subr.mxu0 0.0
    %5883 = vmatpush1.msra.mxu0 0.0
    %5884 = vmatprep.subr.mxu0 0.0
    %5885 = vmatpush1.msra.mxu0 0.0
    %5886 = vmatprep.subr.mxu0 0.0
    %5887 = vmatpush1.msra.mxu0 0.0
    %5888 = vmatprep.subr.mxu0 0.0
    %5889 = vmatpush1.msra.mxu0 0.0
    %5890 = vmatprep.subr.mxu0 0.0
    %5891 = vmatpush1.msra.mxu0 0.0
    %5892 = vmatprep.subr.mxu0 0.0
    %5893 = vmatpush1.msra.mxu0 0.0
    %5894 = vmatprep.subr.mxu0 0.0
    %5895 = vmatpush1.msra.mxu0 0.0
    %5896 = vmatprep.mubr.f32.mxu0 0.0
    %5897 = vmatmul.mubr.f32.gmra.mrb[0].mxu0 %v5830
    %v5898 = vpop.f32.mrb[0].mxu0
    %v5899 = vadd.f32 0.0, %v5898
    %v5900 = vpop.f32.mrb[0].mxu0
    %5901 = vdwg.mxu0
    %v5903 = vsel %vm1953, %v5800, 0
    %5905 = vmatprep.subr.mxu0 0.0
    %5906 = vmatpush1.msra.mxu0 %v4424
    %5907 = vmatprep.subr.mxu0 0.0
    %5908 = vmatpush1.msra.mxu0 0.0
    %5909 = vmatprep.subr.mxu0 0.0
    %5910 = vmatpush1.msra.mxu0 0.0
    %5911 = vmatprep.subr.mxu0 0.0
    %5912 = vmatpush1.msra.mxu0 0.0
    %5913 = vmatprep.subr.mxu0 0.0
    %5914 = vmatpush1.msra.mxu0 0.0
    %5915 = vmatprep.subr.mxu0 0.0
    %5916 = vmatpush1.msra.mxu0 0.0
    %5917 = vmatprep.subr.mxu0 0.0
    %5918 = vmatpush1.msra.mxu0 0.0
    %5919 = vmatprep.subr.mxu0 0.0
    %5920 = vmatpush1.msra.mxu0 0.0
    %5921 = vmatprep.subr.mxu0 0.0
    %5922 = vmatpush1.msra.mxu0 0.0
    %5923 = vmatprep.subr.mxu0 0.0
    %5924 = vmatpush1.msra.mxu0 0.0
    %5925 = vmatprep.subr.mxu0 0.0
    %5926 = vmatpush1.msra.mxu0 0.0
    %5927 = vmatprep.subr.mxu0 0.0
    %5928 = vmatpush1.msra.mxu0 0.0
    %5929 = vmatprep.subr.mxu0 0.0
    %5930 = vmatpush1.msra.mxu0 0.0
    %5931 = vmatprep.subr.mxu0 0.0
    %5932 = vmatpush1.msra.mxu0 0.0
    %5933 = vmatprep.subr.mxu0 0.0
    %5934 = vmatpush1.msra.mxu0 0.0
    %5935 = vmatprep.subr.mxu0 0.0
    %5936 = vmatpush1.msra.mxu0 0.0
    %5937 = vmatprep.subr.mxu0 0.0
    %5938 = vmatpush1.msra.mxu0 0.0
    %5939 = vmatprep.subr.mxu0 0.0
    %5940 = vmatpush1.msra.mxu0 0.0
    %5941 = vmatprep.subr.mxu0 0.0
    %5942 = vmatpush1.msra.mxu0 0.0
    %5943 = vmatprep.subr.mxu0 0.0
    %5944 = vmatpush1.msra.mxu0 0.0
    %5945 = vmatprep.subr.mxu0 0.0
    %5946 = vmatpush1.msra.mxu0 0.0
    %5947 = vmatprep.subr.mxu0 0.0
    %5948 = vmatpush1.msra.mxu0 0.0
    %5949 = vmatprep.subr.mxu0 0.0
    %5950 = vmatpush1.msra.mxu0 0.0
    %5951 = vmatprep.subr.mxu0 0.0
    %5952 = vmatpush1.msra.mxu0 0.0
    %5953 = vmatprep.subr.mxu0 0.0
    %5954 = vmatpush1.msra.mxu0 0.0
    %5955 = vmatprep.subr.mxu0 0.0
    %5956 = vmatpush1.msra.mxu0 0.0
    %5957 = vmatprep.subr.mxu0 0.0
    %5958 = vmatpush1.msra.mxu0 0.0
    %5959 = vmatprep.subr.mxu0 0.0
    %5960 = vmatpush1.msra.mxu0 0.0
    %5961 = vmatprep.subr.mxu0 0.0
    %5962 = vmatpush1.msra.mxu0 0.0
    %5963 = vmatprep.subr.mxu0 0.0
    %5964 = vmatpush1.msra.mxu0 0.0
    %5965 = vmatprep.subr.mxu0 0.0
    %5966 = vmatpush1.msra.mxu0 0.0
    %5967 = vmatprep.subr.mxu0 0.0
    %5968 = vmatpush1.msra.mxu0 0.0
    %5969 = vmatprep.mubr.f32.mxu0 0.0
    %5970 = vmatmul.mubr.f32.gmra.mrb[0].mxu0 %v5903
    %v5971 = vpop.f32.mrb[0].mxu0
    %v5972 = vadd.f32 0.0, %v5971
    %v5973 = vpop.f32.mrb[0].mxu0
    %5974 = vdwg.mxu0
    %v5976 = vsel %vm1953, %v5802, 0
    %5978 = vmatprep.subr.mxu0 0.0
    %5979 = vmatpush1.msra.mxu0 %v4426
    %5980 = vmatprep.subr.mxu0 0.0
    %5981 = vmatpush1.msra.mxu0 0.0
    %5982 = vmatprep.subr.mxu0 0.0
    %5983 = vmatpush1.msra.mxu0 0.0
    %5984 = vmatprep.subr.mxu0 0.0
    %5985 = vmatpush1.msra.mxu0 0.0
    %5986 = vmatprep.subr.mxu0 0.0
    %5987 = vmatpush1.msra.mxu0 0.0
    %5988 = vmatprep.subr.mxu0 0.0
    %5989 = vmatpush1.msra.mxu0 0.0
    %5990 = vmatprep.subr.mxu0 0.0
    %5991 = vmatpush1.msra.mxu0 0.0
    %5992 = vmatprep.subr.mxu0 0.0
    %5993 = vmatpush1.msra.mxu0 0.0
    %5994 = vmatprep.subr.mxu0 0.0
    %5995 = vmatpush1.msra.mxu0 0.0
    %5996 = vmatprep.subr.mxu0 0.0
    %5997 = vmatpush1.msra.mxu0 0.0
    %5998 = vmatprep.subr.mxu0 0.0
    %5999 = vmatpush1.msra.mxu0 0.0
    %6000 = vmatprep.subr.mxu0 0.0
    %6001 = vmatpush1.msra.mxu0 0.0
    %6002 = vmatprep.subr.mxu0 0.0
    %6003 = vmatpush1.msra.mxu0 0.0
    %6004 = vmatprep.subr.mxu0 0.0
    %6005 = vmatpush1.msra.mxu0 0.0
    %6006 = vmatprep.subr.mxu0 0.0
    %6007 = vmatpush1.msra.mxu0 0.0
    %6008 = vmatprep.subr.mxu0 0.0
    %6009 = vmatpush1.msra.mxu0 0.0
    %6010 = vmatprep.subr.mxu0 0.0
    %6011 = vmatpush1.msra.mxu0 0.0
    %6012 = vmatprep.subr.mxu0 0.0
    %6013 = vmatpush1.msra.mxu0 0.0
    %6014 = vmatprep.subr.mxu0 0.0
    %6015 = vmatpush1.msra.mxu0 0.0
    %6016 = vmatprep.subr.mxu0 0.0
    %6017 = vmatpush1.msra.mxu0 0.0
    %6018 = vmatprep.subr.mxu0 0.0
    %6019 = vmatpush1.msra.mxu0 0.0
    %6020 = vmatprep.subr.mxu0 0.0
    %6021 = vmatpush1.msra.mxu0 0.0
    %6022 = vmatprep.subr.mxu0 0.0
    %6023 = vmatpush1.msra.mxu0 0.0
    %6024 = vmatprep.subr.mxu0 0.0
    %6025 = vmatpush1.msra.mxu0 0.0
    %6026 = vmatprep.subr.mxu0 0.0
    %6027 = vmatpush1.msra.mxu0 0.0
    %6028 = vmatprep.subr.mxu0 0.0
    %6029 = vmatpush1.msra.mxu0 0.0
    %6030 = vmatprep.subr.mxu0 0.0
    %6031 = vmatpush1.msra.mxu0 0.0
    %6032 = vmatprep.subr.mxu0 0.0
    %6033 = vmatpush1.msra.mxu0 0.0
    %6034 = vmatprep.subr.mxu0 0.0
    %6035 = vmatpush1.msra.mxu0 0.0
    %6036 = vmatprep.subr.mxu0 0.0
    %6037 = vmatpush1.msra.mxu0 0.0
    %6038 = vmatprep.subr.mxu0 0.0
    %6039 = vmatpush1.msra.mxu0 0.0
    %6040 = vmatprep.subr.mxu0 0.0
    %6041 = vmatpush1.msra.mxu0 0.0
    %6042 = vmatprep.mubr.f32.mxu0 0.0
    %6043 = vmatmul.mubr.f32.gmra.mrb[0].mxu0 %v5976
    %v6044 = vpop.f32.mrb[0].mxu0
    %v6045 = vadd.f32 0.0, %v6044
    %v6046 = vpop.f32.mrb[0].mxu0
    %6047 = vdwg.mxu0
    %v6049 = vsel %vm1953, %v5804, 0
    %6051 = vmatprep.subr.mxu0 0.0
    %6052 = vmatpush1.msra.mxu0 %v4428
    %6053 = vmatprep.subr.mxu0 0.0
    %6054 = vmatpush1.msra.mxu0 0.0
    %6055 = vmatprep.subr.mxu0 0.0
    %6056 = vmatpush1.msra.mxu0 0.0
    %6057 = vmatprep.subr.mxu0 0.0
    %6058 = vmatpush1.msra.mxu0 0.0
    %6059 = vmatprep.subr.mxu0 0.0
    %6060 = vmatpush1.msra.mxu0 0.0
    %6061 = vmatprep.subr.mxu0 0.0
    %6062 = vmatpush1.msra.mxu0 0.0
    %6063 = vmatprep.subr.mxu0 0.0
    %6064 = vmatpush1.msra.mxu0 0.0
    %6065 = vmatprep.subr.mxu0 0.0
    %6066 = vmatpush1.msra.mxu0 0.0
    %6067 = vmatprep.subr.mxu0 0.0
    %6068 = vmatpush1.msra.mxu0 0.0
    %6069 = vmatprep.subr.mxu0 0.0
    %6070 = vmatpush1.msra.mxu0 0.0
    %6071 = vmatprep.subr.mxu0 0.0
    %6072 = vmatpush1.msra.mxu0 0.0
    %6073 = vmatprep.subr.mxu0 0.0
    %6074 = vmatpush1.msra.mxu0 0.0
    %6075 = vmatprep.subr.mxu0 0.0
    %6076 = vmatpush1.msra.mxu0 0.0
    %6077 = vmatprep.subr.mxu0 0.0
    %6078 = vmatpush1.msra.mxu0 0.0
    %6079 = vmatprep.subr.mxu0 0.0
    %6080 = vmatpush1.msra.mxu0 0.0
    %6081 = vmatprep.subr.mxu0 0.0
    %6082 = vmatpush1.msra.mxu0 0.0
    %6083 = vmatprep.subr.mxu0 0.0
    %6084 = vmatpush1.msra.mxu0 0.0
    %6085 = vmatprep.subr.mxu0 0.0
    %6086 = vmatpush1.msra.mxu0 0.0
    %6087 = vmatprep.subr.mxu0 0.0
    %6088 = vmatpush1.msra.mxu0 0.0
    %6089 = vmatprep.subr.mxu0 0.0
    %6090 = vmatpush1.msra.mxu0 0.0
    %6091 = vmatprep.subr.mxu0 0.0
    %6092 = vmatpush1.msra.mxu0 0.0
    %6093 = vmatprep.subr.mxu0 0.0
    %6094 = vmatpush1.msra.mxu0 0.0
    %6095 = vmatprep.subr.mxu0 0.0
    %6096 = vmatpush1.msra.mxu0 0.0
    %6097 = vmatprep.subr.mxu0 0.0
    %6098 = vmatpush1.msra.mxu0 0.0
    %6099 = vmatprep.subr.mxu0 0.0
    %6100 = vmatpush1.msra.mxu0 0.0
    %6101 = vmatprep.subr.mxu0 0.0
    %6102 = vmatpush1.msra.mxu0 0.0
    %6103 = vmatprep.subr.mxu0 0.0
    %6104 = vmatpush1.msra.mxu0 0.0
    %6105 = vmatprep.subr.mxu0 0.0
    %6106 = vmatpush1.msra.mxu0 0.0
    %6107 = vmatprep.subr.mxu0 0.0
    %6108 = vmatpush1.msra.mxu0 0.0
    %6109 = vmatprep.subr.mxu0 0.0
    %6110 = vmatpush1.msra.mxu0 0.0
    %6111 = vmatprep.subr.mxu0 0.0
    %6112 = vmatpush1.msra.mxu0 0.0
    %6113 = vmatprep.subr.mxu0 0.0
    %6114 = vmatpush1.msra.mxu0 0.0
    %6115 = vmatprep.mubr.f32.mxu0 0.0
    %6116 = vmatmul.mubr.f32.gmra.mrb[0].mxu0 %v6049
    %v6117 = vpop.f32.mrb[0].mxu0
    %v6118 = vadd.f32 0.0, %v6117
    %v6119 = vpop.f32.mrb[0].mxu0
    %6120 = vdwg.mxu0
    %v6122 = vsel %vm1953, %v5806, 0
    %6124 = vmatprep.subr.mxu0 0.0
    %6125 = vmatpush1.msra.mxu0 %v4430
    %6126 = vmatprep.subr.mxu0 0.0
    %6127 = vmatpush1.msra.mxu0 0.0
    %6128 = vmatprep.subr.mxu0 0.0
    %6129 = vmatpush1.msra.mxu0 0.0
    %6130 = vmatprep.subr.mxu0 0.0
    %6131 = vmatpush1.msra.mxu0 0.0
    %6132 = vmatprep.subr.mxu0 0.0
    %6133 = vmatpush1.msra.mxu0 0.0
    %6134 = vmatprep.subr.mxu0 0.0
    %6135 = vmatpush1.msra.mxu0 0.0
    %6136 = vmatprep.subr.mxu0 0.0
    %6137 = vmatpush1.msra.mxu0 0.0
    %6138 = vmatprep.subr.mxu0 0.0
    %6139 = vmatpush1.msra.mxu0 0.0
    %6140 = vmatprep.subr.mxu0 0.0
    %6141 = vmatpush1.msra.mxu0 0.0
    %6142 = vmatprep.subr.mxu0 0.0
    %6143 = vmatpush1.msra.mxu0 0.0
    %6144 = vmatprep.subr.mxu0 0.0
    %6145 = vmatpush1.msra.mxu0 0.0
    %6146 = vmatprep.subr.mxu0 0.0
    %6147 = vmatpush1.msra.mxu0 0.0
    %6148 = vmatprep.subr.mxu0 0.0
    %6149 = vmatpush1.msra.mxu0 0.0
    %6150 = vmatprep.subr.mxu0 0.0
    %6151 = vmatpush1.msra.mxu0 0.0
    %6152 = vmatprep.subr.mxu0 0.0
    %6153 = vmatpush1.msra.mxu0 0.0
    %6154 = vmatprep.subr.mxu0 0.0
    %6155 = vmatpush1.msra.mxu0 0.0
    %6156 = vmatprep.subr.mxu0 0.0
    %6157 = vmatpush1.msra.mxu0 0.0
    %6158 = vmatprep.subr.mxu0 0.0
    %6159 = vmatpush1.msra.mxu0 0.0
    %6160 = vmatprep.subr.mxu0 0.0
    %6161 = vmatpush1.msra.mxu0 0.0
    %6162 = vmatprep.subr.mxu0 0.0
    %6163 = vmatpush1.msra.mxu0 0.0
    %6164 = vmatprep.subr.mxu0 0.0
    %6165 = vmatpush1.msra.mxu0 0.0
    %6166 = vmatprep.subr.mxu0 0.0
    %6167 = vmatpush1.msra.mxu0 0.0
    %6168 = vmatprep.subr.mxu0 0.0
    %6169 = vmatpush1.msra.mxu0 0.0
    %6170 = vmatprep.subr.mxu0 0.0
    %6171 = vmatpush1.msra.mxu0 0.0
    %6172 = vmatprep.subr.mxu0 0.0
    %6173 = vmatpush1.msra.mxu0 0.0
    %6174 = vmatprep.subr.mxu0 0.0
    %6175 = vmatpush1.msra.mxu0 0.0
    %6176 = vmatprep.subr.mxu0 0.0
    %6177 = vmatpush1.msra.mxu0 0.0
    %6178 = vmatprep.subr.mxu0 0.0
    %6179 = vmatpush1.msra.mxu0 0.0
    %6180 = vmatprep.subr.mxu0 0.0
    %6181 = vmatpush1.msra.mxu0 0.0
    %6182 = vmatprep.subr.mxu0 0.0
    %6183 = vmatpush1.msra.mxu0 0.0
    %6184 = vmatprep.subr.mxu0 0.0
    %6185 = vmatpush1.msra.mxu0 0.0
    %6186 = vmatprep.subr.mxu0 0.0
    %6187 = vmatpush1.msra.mxu0 0.0
    %6188 = vmatprep.mubr.f32.mxu0 0.0
    %6189 = vmatmul.mubr.f32.gmra.mrb[0].mxu0 %v6122
    %v6190 = vpop.f32.mrb[0].mxu0
    %v6191 = vadd.f32 0.0, %v6190
    %v6192 = vpop.f32.mrb[0].mxu0
    %6193 = vdwg.mxu0
    %v6195 = vsel %vm1953, %v5808, 0
    %6197 = vmatprep.subr.mxu0 0.0
    %6198 = vmatpush1.msra.mxu0 %v4432
    %6199 = vmatprep.subr.mxu0 0.0
    %6200 = vmatpush1.msra.mxu0 0.0
    %6201 = vmatprep.subr.mxu0 0.0
    %6202 = vmatpush1.msra.mxu0 0.0
    %6203 = vmatprep.subr.mxu0 0.0
    %6204 = vmatpush1.msra.mxu0 0.0
    %6205 = vmatprep.subr.mxu0 0.0
    %6206 = vmatpush1.msra.mxu0 0.0
    %6207 = vmatprep.subr.mxu0 0.0
    %6208 = vmatpush1.msra.mxu0 0.0
    %6209 = vmatprep.subr.mxu0 0.0
    %6210 = vmatpush1.msra.mxu0 0.0
    %6211 = vmatprep.subr.mxu0 0.0
    %6212 = vmatpush1.msra.mxu0 0.0
    %6213 = vmatprep.subr.mxu0 0.0
    %6214 = vmatpush1.msra.mxu0 0.0
    %6215 = vmatprep.subr.mxu0 0.0
    %6216 = vmatpush1.msra.mxu0 0.0
    %6217 = vmatprep.subr.mxu0 0.0
    %6218 = vmatpush1.msra.mxu0 0.0
    %6219 = vmatprep.subr.mxu0 0.0
    %6220 = vmatpush1.msra.mxu0 0.0
    %6221 = vmatprep.subr.mxu0 0.0
    %6222 = vmatpush1.msra.mxu0 0.0
    %6223 = vmatprep.subr.mxu0 0.0
    %6224 = vmatpush1.msra.mxu0 0.0
    %6225 = vmatprep.subr.mxu0 0.0
    %6226 = vmatpush1.msra.mxu0 0.0
    %6227 = vmatprep.subr.mxu0 0.0
    %6228 = vmatpush1.msra.mxu0 0.0
    %6229 = vmatprep.subr.mxu0 0.0
    %6230 = vmatpush1.msra.mxu0 0.0
    %6231 = vmatprep.subr.mxu0 0.0
    %6232 = vmatpush1.msra.mxu0 0.0
    %6233 = vmatprep.subr.mxu0 0.0
    %6234 = vmatpush1.msra.mxu0 0.0
    %6235 = vmatprep.subr.mxu0 0.0
    %6236 = vmatpush1.msra.mxu0 0.0
    %6237 = vmatprep.subr.mxu0 0.0
    %6238 = vmatpush1.msra.mxu0 0.0
    %6239 = vmatprep.subr.mxu0 0.0
    %6240 = vmatpush1.msra.mxu0 0.0
    %6241 = vmatprep.subr.mxu0 0.0
    %6242 = vmatpush1.msra.mxu0 0.0
    %6243 = vmatprep.subr.mxu0 0.0
    %6244 = vmatpush1.msra.mxu0 0.0
    %6245 = vmatprep.subr.mxu0 0.0
    %6246 = vmatpush1.msra.mxu0 0.0
    %6247 = vmatprep.subr.mxu0 0.0
    %6248 = vmatpush1.msra.mxu0 0.0
    %6249 = vmatprep.subr.mxu0 0.0
    %6250 = vmatpush1.msra.mxu0 0.0
    %6251 = vmatprep.subr.mxu0 0.0
    %6252 = vmatpush1.msra.mxu0 0.0
    %6253 = vmatprep.subr.mxu0 0.0
    %6254 = vmatpush1.msra.mxu0 0.0
    %6255 = vmatprep.subr.mxu0 0.0
    %6256 = vmatpush1.msra.mxu0 0.0
    %6257 = vmatprep.subr.mxu0 0.0
    %6258 = vmatpush1.msra.mxu0 0.0
    %6259 = vmatprep.subr.mxu0 0.0
    %6260 = vmatpush1.msra.mxu0 0.0
    %6261 = vmatprep.mubr.f32.mxu0 0.0
    %6262 = vmatmul.mubr.f32.gmra.mrb[0].mxu0 %v6195
    %v6263 = vpop.f32.mrb[0].mxu0
    %v6264 = vadd.f32 0.0, %v6263
    %v6265 = vpop.f32.mrb[0].mxu0
    %6266 = vdwg.mxu0
    %v6268 = vsel %vm1953, %v5810, 0
    %6270 = vmatprep.subr.mxu0 0.0
    %6271 = vmatpush1.msra.mxu0 %v4434
    %6272 = vmatprep.subr.mxu0 0.0
    %6273 = vmatpush1.msra.mxu0 0.0
    %6274 = vmatprep.subr.mxu0 0.0
    %6275 = vmatpush1.msra.mxu0 0.0
    %6276 = vmatprep.subr.mxu0 0.0
    %6277 = vmatpush1.msra.mxu0 0.0
    %6278 = vmatprep.subr.mxu0 0.0
    %6279 = vmatpush1.msra.mxu0 0.0
    %6280 = vmatprep.subr.mxu0 0.0
    %6281 = vmatpush1.msra.mxu0 0.0
    %6282 = vmatprep.subr.mxu0 0.0
    %6283 = vmatpush1.msra.mxu0 0.0
    %6284 = vmatprep.subr.mxu0 0.0
    %6285 = vmatpush1.msra.mxu0 0.0
    %6286 = vmatprep.subr.mxu0 0.0
    %6287 = vmatpush1.msra.mxu0 0.0
    %6288 = vmatprep.subr.mxu0 0.0
    %6289 = vmatpush1.msra.mxu0 0.0
    %6290 = vmatprep.subr.mxu0 0.0
    %6291 = vmatpush1.msra.mxu0 0.0
    %6292 = vmatprep.subr.mxu0 0.0
    %6293 = vmatpush1.msra.mxu0 0.0
    %6294 = vmatprep.subr.mxu0 0.0
    %6295 = vmatpush1.msra.mxu0 0.0
    %6296 = vmatprep.subr.mxu0 0.0
    %6297 = vmatpush1.msra.mxu0 0.0
    %6298 = vmatprep.subr.mxu0 0.0
    %6299 = vmatpush1.msra.mxu0 0.0
    %6300 = vmatprep.subr.mxu0 0.0
    %6301 = vmatpush1.msra.mxu0 0.0
    %6302 = vmatprep.subr.mxu0 0.0
    %6303 = vmatpush1.msra.mxu0 0.0
    %6304 = vmatprep.subr.mxu0 0.0
    %6305 = vmatpush1.msra.mxu0 0.0
    %6306 = vmatprep.subr.mxu0 0.0
    %6307 = vmatpush1.msra.mxu0 0.0
    %6308 = vmatprep.subr.mxu0 0.0
    %6309 = vmatpush1.msra.mxu0 0.0
    %6310 = vmatprep.subr.mxu0 0.0
    %6311 = vmatpush1.msra.mxu0 0.0
    %6312 = vmatprep.subr.mxu0 0.0
    %6313 = vmatpush1.msra.mxu0 0.0
    %6314 = vmatprep.subr.mxu0 0.0
    %6315 = vmatpush1.msra.mxu0 0.0
    %6316 = vmatprep.subr.mxu0 0.0
    %6317 = vmatpush1.msra.mxu0 0.0
    %6318 = vmatprep.subr.mxu0 0.0
    %6319 = vmatpush1.msra.mxu0 0.0
    %6320 = vmatprep.subr.mxu0 0.0
    %6321 = vmatpush1.msra.mxu0 0.0
    %6322 = vmatprep.subr.mxu0 0.0
    %6323 = vmatpush1.msra.mxu0 0.0
    %6324 = vmatprep.subr.mxu0 0.0
    %6325 = vmatpush1.msra.mxu0 0.0
    %6326 = vmatprep.subr.mxu0 0.0
    %6327 = vmatpush1.msra.mxu0 0.0
    %6328 = vmatprep.subr.mxu0 0.0
    %6329 = vmatpush1.msra.mxu0 0.0
    %6330 = vmatprep.subr.mxu0 0.0
    %6331 = vmatpush1.msra.mxu0 0.0
    %6332 = vmatprep.subr.mxu0 0.0
    %6333 = vmatpush1.msra.mxu0 0.0
    %6334 = vmatprep.mubr.f32.mxu0 0.0
    %6335 = vmatmul.mubr.f32.gmra.mrb[0].mxu0 %v6268
    %v6336 = vpop.f32.mrb[0].mxu0
    %v6337 = vadd.f32 0.0, %v6336
    %v6338 = vpop.f32.mrb[0].mxu0
    %6339 = vdwg.mxu0
    %v6341 = vsel %vm1953, %v5812, 0
    %6343 = vmatprep.subr.mxu0 0.0
    %6344 = vmatpush1.msra.mxu0 %v4436
    %6345 = vmatprep.subr.mxu0 0.0
    %6346 = vmatpush1.msra.mxu0 0.0
    %6347 = vmatprep.subr.mxu0 0.0
    %6348 = vmatpush1.msra.mxu0 0.0
    %6349 = vmatprep.subr.mxu0 0.0
    %6350 = vmatpush1.msra.mxu0 0.0
    %6351 = vmatprep.subr.mxu0 0.0
    %6352 = vmatpush1.msra.mxu0 0.0
    %6353 = vmatprep.subr.mxu0 0.0
    %6354 = vmatpush1.msra.mxu0 0.0
    %6355 = vmatprep.subr.mxu0 0.0
    %6356 = vmatpush1.msra.mxu0 0.0
    %6357 = vmatprep.subr.mxu0 0.0
    %6358 = vmatpush1.msra.mxu0 0.0
    %6359 = vmatprep.subr.mxu0 0.0
    %6360 = vmatpush1.msra.mxu0 0.0
    %6361 = vmatprep.subr.mxu0 0.0
    %6362 = vmatpush1.msra.mxu0 0.0
    %6363 = vmatprep.subr.mxu0 0.0
    %6364 = vmatpush1.msra.mxu0 0.0
    %6365 = vmatprep.subr.mxu0 0.0
    %6366 = vmatpush1.msra.mxu0 0.0
    %6367 = vmatprep.subr.mxu0 0.0
    %6368 = vmatpush1.msra.mxu0 0.0
    %6369 = vmatprep.subr.mxu0 0.0
    %6370 = vmatpush1.msra.mxu0 0.0
    %6371 = vmatprep.subr.mxu0 0.0
    %6372 = vmatpush1.msra.mxu0 0.0
    %6373 = vmatprep.subr.mxu0 0.0
    %6374 = vmatpush1.msra.mxu0 0.0
    %6375 = vmatprep.subr.mxu0 0.0
    %6376 = vmatpush1.msra.mxu0 0.0
    %6377 = vmatprep.subr.mxu0 0.0
    %6378 = vmatpush1.msra.mxu0 0.0
    %6379 = vmatprep.subr.mxu0 0.0
    %6380 = vmatpush1.msra.mxu0 0.0
    %6381 = vmatprep.subr.mxu0 0.0
    %6382 = vmatpush1.msra.mxu0 0.0
    %6383 = vmatprep.subr.mxu0 0.0
    %6384 = vmatpush1.msra.mxu0 0.0
    %6385 = vmatprep.subr.mxu0 0.0
    %6386 = vmatpush1.msra.mxu0 0.0
    %6387 = vmatprep.subr.mxu0 0.0
    %6388 = vmatpush1.msra.mxu0 0.0
    %6389 = vmatprep.subr.mxu0 0.0
    %6390 = vmatpush1.msra.mxu0 0.0
    %6391 = vmatprep.subr.mxu0 0.0
    %6392 = vmatpush1.msra.mxu0 0.0
    %6393 = vmatprep.subr.mxu0 0.0
    %6394 = vmatpush1.msra.mxu0 0.0
    %6395 = vmatprep.subr.mxu0 0.0
    %6396 = vmatpush1.msra.mxu0 0.0
    %6397 = vmatprep.subr.mxu0 0.0
    %6398 = vmatpush1.msra.mxu0 0.0
    %6399 = vmatprep.subr.mxu0 0.0
    %6400 = vmatpush1.msra.mxu0 0.0
    %6401 = vmatprep.subr.mxu0 0.0
    %6402 = vmatpush1.msra.mxu0 0.0
    %6403 = vmatprep.subr.mxu0 0.0
    %6404 = vmatpush1.msra.mxu0 0.0
    %6405 = vmatprep.subr.mxu0 0.0
    %6406 = vmatpush1.msra.mxu0 0.0
    %6407 = vmatprep.mubr.f32.mxu0 0.0
    %6408 = vmatmul.mubr.f32.gmra.mrb[0].mxu0 %v6341
    %v6409 = vpop.f32.mrb[0].mxu0
    %v6410 = vadd.f32 0.0, %v6409
    %v6411 = vpop.f32.mrb[0].mxu0
    %6412 = vdwg.mxu0
    %v6414 = vsel %vm1953, %v5814, 0
    %6416 = vmatprep.subr.mxu0 0.0
    %6417 = vmatpush1.msra.mxu0 %v4446
    %6418 = vmatprep.subr.mxu0 0.0
    %6419 = vmatpush1.msra.mxu0 0.0
    %6420 = vmatprep.subr.mxu0 0.0
    %6421 = vmatpush1.msra.mxu0 0.0
    %6422 = vmatprep.subr.mxu0 0.0
    %6423 = vmatpush1.msra.mxu0 0.0
    %6424 = vmatprep.subr.mxu0 0.0
    %6425 = vmatpush1.msra.mxu0 0.0
    %6426 = vmatprep.subr.mxu0 0.0
    %6427 = vmatpush1.msra.mxu0 0.0
    %6428 = vmatprep.subr.mxu0 0.0
    %6429 = vmatpush1.msra.mxu0 0.0
    %6430 = vmatprep.subr.mxu0 0.0
    %6431 = vmatpush1.msra.mxu0 0.0
    %6432 = vmatprep.subr.mxu0 0.0
    %6433 = vmatpush1.msra.mxu0 0.0
    %6434 = vmatprep.subr.mxu0 0.0
    %6435 = vmatpush1.msra.mxu0 0.0
    %6436 = vmatprep.subr.mxu0 0.0
    %6437 = vmatpush1.msra.mxu0 0.0
    %6438 = vmatprep.subr.mxu0 0.0
    %6439 = vmatpush1.msra.mxu0 0.0
    %6440 = vmatprep.subr.mxu0 0.0
    %6441 = vmatpush1.msra.mxu0 0.0
    %6442 = vmatprep.subr.mxu0 0.0
    %6443 = vmatpush1.msra.mxu0 0.0
    %6444 = vmatprep.subr.mxu0 0.0
    %6445 = vmatpush1.msra.mxu0 0.0
    %6446 = vmatprep.subr.mxu0 0.0
    %6447 = vmatpush1.msra.mxu0 0.0
    %6448 = vmatprep.subr.mxu0 0.0
    %6449 = vmatpush1.msra.mxu0 0.0
    %6450 = vmatprep.subr.mxu0 0.0
    %6451 = vmatpush1.msra.mxu0 0.0
    %6452 = vmatprep.subr.mxu0 0.0
    %6453 = vmatpush1.msra.mxu0 0.0
    %6454 = vmatprep.subr.mxu0 0.0
    %6455 = vmatpush1.msra.mxu0 0.0
    %6456 = vmatprep.subr.mxu0 0.0
    %6457 = vmatpush1.msra.mxu0 0.0
    %6458 = vmatprep.subr.mxu0 0.0
    %6459 = vmatpush1.msra.mxu0 0.0
    %6460 = vmatprep.subr.mxu0 0.0
    %6461 = vmatpush1.msra.mxu0 0.0
    %6462 = vmatprep.subr.mxu0 0.0
    %6463 = vmatpush1.msra.mxu0 0.0
    %6464 = vmatprep.subr.mxu0 0.0
    %6465 = vmatpush1.msra.mxu0 0.0
    %6466 = vmatprep.subr.mxu0 0.0
    %6467 = vmatpush1.msra.mxu0 0.0
    %6468 = vmatprep.subr.mxu0 0.0
    %6469 = vmatpush1.msra.mxu0 0.0
    %6470 = vmatprep.subr.mxu0 0.0
    %6471 = vmatpush1.msra.mxu0 0.0
    %6472 = vmatprep.subr.mxu0 0.0
    %6473 = vmatpush1.msra.mxu0 0.0
    %6474 = vmatprep.subr.mxu0 0.0
    %6475 = vmatpush1.msra.mxu0 0.0
    %6476 = vmatprep.subr.mxu0 0.0
    %6477 = vmatpush1.msra.mxu0 0.0
    %6478 = vmatprep.subr.mxu0 0.0
    %6479 = vmatpush1.msra.mxu0 0.0
    %6480 = vmatprep.mubr.f32.mxu0 0.0
    %6481 = vmatmul.mubr.f32.gmra.mrb[0].mxu0 %v6414
    %v6482 = vpop.f32.mrb[0].mxu0
    %v6483 = vadd.f32 0.0, %v6482
    %v6484 = vpop.f32.mrb[0].mxu0
    %6485 = vdwg.mxu0
    %v6487 = vsel %vm1953, %v5816, 0
    %6489 = vmatprep.subr.mxu0 0.0
    %6490 = vmatpush1.msra.mxu0 %v4448
    %6491 = vmatprep.subr.mxu0 0.0
    %6492 = vmatpush1.msra.mxu0 0.0
    %6493 = vmatprep.subr.mxu0 0.0
    %6494 = vmatpush1.msra.mxu0 0.0
    %6495 = vmatprep.subr.mxu0 0.0
    %6496 = vmatpush1.msra.mxu0 0.0
    %6497 = vmatprep.subr.mxu0 0.0
    %6498 = vmatpush1.msra.mxu0 0.0
    %6499 = vmatprep.subr.mxu0 0.0
    %6500 = vmatpush1.msra.mxu0 0.0
    %6501 = vmatprep.subr.mxu0 0.0
    %6502 = vmatpush1.msra.mxu0 0.0
    %6503 = vmatprep.subr.mxu0 0.0
    %6504 = vmatpush1.msra.mxu0 0.0
    %6505 = vmatprep.subr.mxu0 0.0
    %6506 = vmatpush1.msra.mxu0 0.0
    %6507 = vmatprep.subr.mxu0 0.0
    %6508 = vmatpush1.msra.mxu0 0.0
    %6509 = vmatprep.subr.mxu0 0.0
    %6510 = vmatpush1.msra.mxu0 0.0
    %6511 = vmatprep.subr.mxu0 0.0
    %6512 = vmatpush1.msra.mxu0 0.0
    %6513 = vmatprep.subr.mxu0 0.0
    %6514 = vmatpush1.msra.mxu0 0.0
    %6515 = vmatprep.subr.mxu0 0.0
    %6516 = vmatpush1.msra.mxu0 0.0
    %6517 = vmatprep.subr.mxu0 0.0
    %6518 = vmatpush1.msra.mxu0 0.0
    %6519 = vmatprep.subr.mxu0 0.0
    %6520 = vmatpush1.msra.mxu0 0.0
    %6521 = vmatprep.subr.mxu0 0.0
    %6522 = vmatpush1.msra.mxu0 0.0
    %6523 = vmatprep.subr.mxu0 0.0
    %6524 = vmatpush1.msra.mxu0 0.0
    %6525 = vmatprep.subr.mxu0 0.0
    %6526 = vmatpush1.msra.mxu0 0.0
    %6527 = vmatprep.subr.mxu0 0.0
    %6528 = vmatpush1.msra.mxu0 0.0
    %6529 = vmatprep.subr.mxu0 0.0
    %6530 = vmatpush1.msra.mxu0 0.0
    %6531 = vmatprep.subr.mxu0 0.0
    %6532 = vmatpush1.msra.mxu0 0.0
    %6533 = vmatprep.subr.mxu0 0.0
    %6534 = vmatpush1.msra.mxu0 0.0
    %6535 = vmatprep.subr.mxu0 0.0
    %6536 = vmatpush1.msra.mxu0 0.0
    %6537 = vmatprep.subr.mxu0 0.0
    %6538 = vmatpush1.msra.mxu0 0.0
    %6539 = vmatprep.subr.mxu0 0.0
    %6540 = vmatpush1.msra.mxu0 0.0
    %6541 = vmatprep.subr.mxu0 0.0
    %6542 = vmatpush1.msra.mxu0 0.0
    %6543 = vmatprep.subr.mxu0 0.0
    %6544 = vmatpush1.msra.mxu0 0.0
    %6545 = vmatprep.subr.mxu0 0.0
    %6546 = vmatpush1.msra.mxu0 0.0
    %6547 = vmatprep.subr.mxu0 0.0
    %6548 = vmatpush1.msra.mxu0 0.0
    %6549 = vmatprep.subr.mxu0 0.0
    %6550 = vmatpush1.msra.mxu0 0.0
    %6551 = vmatprep.subr.mxu0 0.0
    %6552 = vmatpush1.msra.mxu0 0.0
    %6553 = vmatprep.mubr.f32.mxu0 0.0
    %6554 = vmatmul.mubr.f32.gmra.mrb[0].mxu0 %v6487
    %v6555 = vpop.f32.mrb[0].mxu0
    %v6556 = vadd.f32 0.0, %v6555
    %v6557 = vpop.f32.mrb[0].mxu0
    %6558 = vdwg.mxu0
    %v6560 = vsel %vm1953, %v5818, 0
    %6562 = vmatprep.subr.mxu0 0.0
    %6563 = vmatpush1.msra.mxu0 %v4450
    %6564 = vmatprep.subr.mxu0 0.0
    %6565 = vmatpush1.msra.mxu0 0.0
    %6566 = vmatprep.subr.mxu0 0.0
    %6567 = vmatpush1.msra.mxu0 0.0
    %6568 = vmatprep.subr.mxu0 0.0
    %6569 = vmatpush1.msra.mxu0 0.0
    %6570 = vmatprep.subr.mxu0 0.0
    %6571 = vmatpush1.msra.mxu0 0.0
    %6572 = vmatprep.subr.mxu0 0.0
    %6573 = vmatpush1.msra.mxu0 0.0
    %6574 = vmatprep.subr.mxu0 0.0
    %6575 = vmatpush1.msra.mxu0 0.0
    %6576 = vmatprep.subr.mxu0 0.0
    %6577 = vmatpush1.msra.mxu0 0.0
    %6578 = vmatprep.subr.mxu0 0.0
    %6579 = vmatpush1.msra.mxu0 0.0
    %6580 = vmatprep.subr.mxu0 0.0
    %6581 = vmatpush1.msra.mxu0 0.0
    %6582 = vmatprep.subr.mxu0 0.0
    %6583 = vmatpush1.msra.mxu0 0.0
    %6584 = vmatprep.subr.mxu0 0.0
    %6585 = vmatpush1.msra.mxu0 0.0
    %6586 = vmatprep.subr.mxu0 0.0
    %6587 = vmatpush1.msra.mxu0 0.0
    %6588 = vmatprep.subr.mxu0 0.0
    %6589 = vmatpush1.msra.mxu0 0.0
    %6590 = vmatprep.subr.mxu0 0.0
    %6591 = vmatpush1.msra.mxu0 0.0
    %6592 = vmatprep.subr.mxu0 0.0
    %6593 = vmatpush1.msra.mxu0 0.0
    %6594 = vmatprep.subr.mxu0 0.0
    %6595 = vmatpush1.msra.mxu0 0.0
    %6596 = vmatprep.subr.mxu0 0.0
    %6597 = vmatpush1.msra.mxu0 0.0
    %6598 = vmatprep.subr.mxu0 0.0
    %6599 = vmatpush1.msra.mxu0 0.0
    %6600 = vmatprep.subr.mxu0 0.0
    %6601 = vmatpush1.msra.mxu0 0.0
    %6602 = vmatprep.subr.mxu0 0.0
    %6603 = vmatpush1.msra.mxu0 0.0
    %6604 = vmatprep.subr.mxu0 0.0
    %6605 = vmatpush1.msra.mxu0 0.0
    %6606 = vmatprep.subr.mxu0 0.0
    %6607 = vmatpush1.msra.mxu0 0.0
    %6608 = vmatprep.subr.mxu0 0.0
    %6609 = vmatpush1.msra.mxu0 0.0
    %6610 = vmatprep.subr.mxu0 0.0
    %6611 = vmatpush1.msra.mxu0 0.0
    %6612 = vmatprep.subr.mxu0 0.0
    %6613 = vmatpush1.msra.mxu0 0.0
    %6614 = vmatprep.subr.mxu0 0.0
    %6615 = vmatpush1.msra.mxu0 0.0
    %6616 = vmatprep.subr.mxu0 0.0
    %6617 = vmatpush1.msra.mxu0 0.0
    %6618 = vmatprep.subr.mxu0 0.0
    %6619 = vmatpush1.msra.mxu0 0.0
    %6620 = vmatprep.subr.mxu0 0.0
    %6621 = vmatpush1.msra.mxu0 0.0
    %6622 = vmatprep.subr.mxu0 0.0
    %6623 = vmatpush1.msra.mxu0 0.0
    %6624 = vmatprep.subr.mxu0 0.0
    %6625 = vmatpush1.msra.mxu0 0.0
    %6626 = vmatprep.mubr.f32.mxu0 0.0
    %6627 = vmatmul.mubr.f32.gmra.mrb[0].mxu0 %v6560
    %v6628 = vpop.f32.mrb[0].mxu0
    %v6629 = vadd.f32 0.0, %v6628
    %v6630 = vpop.f32.mrb[0].mxu0
    %6631 = vdwg.mxu0
    %v6633 = vsel %vm1953, %v5820, 0
    %6635 = vmatprep.subr.mxu0 0.0
    %6636 = vmatpush1.msra.mxu0 %v4452
    %6637 = vmatprep.subr.mxu0 0.0
    %6638 = vmatpush1.msra.mxu0 0.0
    %6639 = vmatprep.subr.mxu0 0.0
    %6640 = vmatpush1.msra.mxu0 0.0
    %6641 = vmatprep.subr.mxu0 0.0
    %6642 = vmatpush1.msra.mxu0 0.0
    %6643 = vmatprep.subr.mxu0 0.0
    %6644 = vmatpush1.msra.mxu0 0.0
    %6645 = vmatprep.subr.mxu0 0.0
    %6646 = vmatpush1.msra.mxu0 0.0
    %6647 = vmatprep.subr.mxu0 0.0
    %6648 = vmatpush1.msra.mxu0 0.0
    %6649 = vmatprep.subr.mxu0 0.0
    %6650 = vmatpush1.msra.mxu0 0.0
    %6651 = vmatprep.subr.mxu0 0.0
    %6652 = vmatpush1.msra.mxu0 0.0
    %6653 = vmatprep.subr.mxu0 0.0
    %6654 = vmatpush1.msra.mxu0 0.0
    %6655 = vmatprep.subr.mxu0 0.0
    %6656 = vmatpush1.msra.mxu0 0.0
    %6657 = vmatprep.subr.mxu0 0.0
    %6658 = vmatpush1.msra.mxu0 0.0
    %6659 = vmatprep.subr.mxu0 0.0
    %6660 = vmatpush1.msra.mxu0 0.0
    %6661 = vmatprep.subr.mxu0 0.0
    %6662 = vmatpush1.msra.mxu0 0.0
    %6663 = vmatprep.subr.mxu0 0.0
    %6664 = vmatpush1.msra.mxu0 0.0
    %6665 = vmatprep.subr.mxu0 0.0
    %6666 = vmatpush1.msra.mxu0 0.0
    %6667 = vmatprep.subr.mxu0 0.0
    %6668 = vmatpush1.msra.mxu0 0.0
    %6669 = vmatprep.subr.mxu0 0.0
    %6670 = vmatpush1.msra.mxu0 0.0
    %6671 = vmatprep.subr.mxu0 0.0
    %6672 = vmatpush1.msra.mxu0 0.0
    %6673 = vmatprep.subr.mxu0 0.0
    %6674 = vmatpush1.msra.mxu0 0.0
    %6675 = vmatprep.subr.mxu0 0.0
    %6676 = vmatpush1.msra.mxu0 0.0
    %6677 = vmatprep.subr.mxu0 0.0
    %6678 = vmatpush1.msra.mxu0 0.0
    %6679 = vmatprep.subr.mxu0 0.0
    %6680 = vmatpush1.msra.mxu0 0.0
    %6681 = vmatprep.subr.mxu0 0.0
    %6682 = vmatpush1.msra.mxu0 0.0
    %6683 = vmatprep.subr.mxu0 0.0
    %6684 = vmatpush1.msra.mxu0 0.0
    %6685 = vmatprep.subr.mxu0 0.0
    %6686 = vmatpush1.msra.mxu0 0.0
    %6687 = vmatprep.subr.mxu0 0.0
    %6688 = vmatpush1.msra.mxu0 0.0
    %6689 = vmatprep.subr.mxu0 0.0
    %6690 = vmatpush1.msra.mxu0 0.0
    %6691 = vmatprep.subr.mxu0 0.0
    %6692 = vmatpush1.msra.mxu0 0.0
    %6693 = vmatprep.subr.mxu0 0.0
    %6694 = vmatpush1.msra.mxu0 0.0
    %6695 = vmatprep.subr.mxu0 0.0
    %6696 = vmatpush1.msra.mxu0 0.0
    %6697 = vmatprep.subr.mxu0 0.0
    %6698 = vmatpush1.msra.mxu0 0.0
    %6699 = vmatprep.mubr.f32.mxu0 0.0
    %6700 = vmatmul.mubr.f32.gmra.mrb[0].mxu0 %v6633
    %v6701 = vpop.f32.mrb[0].mxu0
    %v6702 = vadd.f32 0.0, %v6701
    %v6703 = vpop.f32.mrb[0].mxu0
    %6704 = vdwg.mxu0
    %v6706 = vsel %vm1953, %v5822, 0
    %6708 = vmatprep.subr.mxu0 0.0
    %6709 = vmatpush1.msra.mxu0 %v4454
    %6710 = vmatprep.subr.mxu0 0.0
    %6711 = vmatpush1.msra.mxu0 0.0
    %6712 = vmatprep.subr.mxu0 0.0
    %6713 = vmatpush1.msra.mxu0 0.0
    %6714 = vmatprep.subr.mxu0 0.0
    %6715 = vmatpush1.msra.mxu0 0.0
    %6716 = vmatprep.subr.mxu0 0.0
    %6717 = vmatpush1.msra.mxu0 0.0
    %6718 = vmatprep.subr.mxu0 0.0
    %6719 = vmatpush1.msra.mxu0 0.0
    %6720 = vmatprep.subr.mxu0 0.0
    %6721 = vmatpush1.msra.mxu0 0.0
    %6722 = vmatprep.subr.mxu0 0.0
    %6723 = vmatpush1.msra.mxu0 0.0
    %6724 = vmatprep.subr.mxu0 0.0
    %6725 = vmatpush1.msra.mxu0 0.0
    %6726 = vmatprep.subr.mxu0 0.0
    %6727 = vmatpush1.msra.mxu0 0.0
    %6728 = vmatprep.subr.mxu0 0.0
    %6729 = vmatpush1.msra.mxu0 0.0
    %6730 = vmatprep.subr.mxu0 0.0
    %6731 = vmatpush1.msra.mxu0 0.0
    %6732 = vmatprep.subr.mxu0 0.0
    %6733 = vmatpush1.msra.mxu0 0.0
    %6734 = vmatprep.subr.mxu0 0.0
    %6735 = vmatpush1.msra.mxu0 0.0
    %6736 = vmatprep.subr.mxu0 0.0
    %6737 = vmatpush1.msra.mxu0 0.0
    %6738 = vmatprep.subr.mxu0 0.0
    %6739 = vmatpush1.msra.mxu0 0.0
    %6740 = vmatprep.subr.mxu0 0.0
    %6741 = vmatpush1.msra.mxu0 0.0
    %6742 = vmatprep.subr.mxu0 0.0
    %6743 = vmatpush1.msra.mxu0 0.0
    %6744 = vmatprep.subr.mxu0 0.0
    %6745 = vmatpush1.msra.mxu0 0.0
    %6746 = vmatprep.subr.mxu0 0.0
    %6747 = vmatpush1.msra.mxu0 0.0
    %6748 = vmatprep.subr.mxu0 0.0
    %6749 = vmatpush1.msra.mxu0 0.0
    %6750 = vmatprep.subr.mxu0 0.0
    %6751 = vmatpush1.msra.mxu0 0.0
    %6752 = vmatprep.subr.mxu0 0.0
    %6753 = vmatpush1.msra.mxu0 0.0
    %6754 = vmatprep.subr.mxu0 0.0
    %6755 = vmatpush1.msra.mxu0 0.0
    %6756 = vmatprep.subr.mxu0 0.0
    %6757 = vmatpush1.msra.mxu0 0.0
    %6758 = vmatprep.subr.mxu0 0.0
    %6759 = vmatpush1.msra.mxu0 0.0
    %6760 = vmatprep.subr.mxu0 0.0
    %6761 = vmatpush1.msra.mxu0 0.0
    %6762 = vmatprep.subr.mxu0 0.0
    %6763 = vmatpush1.msra.mxu0 0.0
    %6764 = vmatprep.subr.mxu0 0.0
    %6765 = vmatpush1.msra.mxu0 0.0
    %6766 = vmatprep.subr.mxu0 0.0
    %6767 = vmatpush1.msra.mxu0 0.0
    %6768 = vmatprep.subr.mxu0 0.0
    %6769 = vmatpush1.msra.mxu0 0.0
    %6770 = vmatprep.subr.mxu0 0.0
    %6771 = vmatpush1.msra.mxu0 0.0
    %6772 = vmatprep.mubr.f32.mxu0 0.0
    %6773 = vmatmul.mubr.f32.gmra.mrb[0].mxu0 %v6706
    %v6774 = vpop.f32.mrb[0].mxu0
    %v6775 = vadd.f32 0.0, %v6774
    %v6776 = vpop.f32.mrb[0].mxu0
    %6777 = vdwg.mxu0
    %v6779 = vsel %vm1953, %v5824, 0
    %6781 = vmatprep.subr.mxu0 0.0
    %6782 = vmatpush1.msra.mxu0 %v4456
    %6783 = vmatprep.subr.mxu0 0.0
    %6784 = vmatpush1.msra.mxu0 0.0
    %6785 = vmatprep.subr.mxu0 0.0
    %6786 = vmatpush1.msra.mxu0 0.0
    %6787 = vmatprep.subr.mxu0 0.0
    %6788 = vmatpush1.msra.mxu0 0.0
    %6789 = vmatprep.subr.mxu0 0.0
    %6790 = vmatpush1.msra.mxu0 0.0
    %6791 = vmatprep.subr.mxu0 0.0
    %6792 = vmatpush1.msra.mxu0 0.0
    %6793 = vmatprep.subr.mxu0 0.0
    %6794 = vmatpush1.msra.mxu0 0.0
    %6795 = vmatprep.subr.mxu0 0.0
    %6796 = vmatpush1.msra.mxu0 0.0
    %6797 = vmatprep.subr.mxu0 0.0
    %6798 = vmatpush1.msra.mxu0 0.0
    %6799 = vmatprep.subr.mxu0 0.0
    %6800 = vmatpush1.msra.mxu0 0.0
    %6801 = vmatprep.subr.mxu0 0.0
    %6802 = vmatpush1.msra.mxu0 0.0
    %6803 = vmatprep.subr.mxu0 0.0
    %6804 = vmatpush1.msra.mxu0 0.0
    %6805 = vmatprep.subr.mxu0 0.0
    %6806 = vmatpush1.msra.mxu0 0.0
    %6807 = vmatprep.subr.mxu0 0.0
    %6808 = vmatpush1.msra.mxu0 0.0
    %6809 = vmatprep.subr.mxu0 0.0
    %6810 = vmatpush1.msra.mxu0 0.0
    %6811 = vmatprep.subr.mxu0 0.0
    %6812 = vmatpush1.msra.mxu0 0.0
    %6813 = vmatprep.subr.mxu0 0.0
    %6814 = vmatpush1.msra.mxu0 0.0
    %6815 = vmatprep.subr.mxu0 0.0
    %6816 = vmatpush1.msra.mxu0 0.0
    %6817 = vmatprep.subr.mxu0 0.0
    %6818 = vmatpush1.msra.mxu0 0.0
    %6819 = vmatprep.subr.mxu0 0.0
    %6820 = vmatpush1.msra.mxu0 0.0
    %6821 = vmatprep.subr.mxu0 0.0
    %6822 = vmatpush1.msra.mxu0 0.0
    %6823 = vmatprep.subr.mxu0 0.0
    %6824 = vmatpush1.msra.mxu0 0.0
    %6825 = vmatprep.subr.mxu0 0.0
    %6826 = vmatpush1.msra.mxu0 0.0
    %6827 = vmatprep.subr.mxu0 0.0
    %6828 = vmatpush1.msra.mxu0 0.0
    %6829 = vmatprep.subr.mxu0 0.0
    %6830 = vmatpush1.msra.mxu0 0.0
    %6831 = vmatprep.subr.mxu0 0.0
    %6832 = vmatpush1.msra.mxu0 0.0
    %6833 = vmatprep.subr.mxu0 0.0
    %6834 = vmatpush1.msra.mxu0 0.0
    %6835 = vmatprep.subr.mxu0 0.0
    %6836 = vmatpush1.msra.mxu0 0.0
    %6837 = vmatprep.subr.mxu0 0.0
    %6838 = vmatpush1.msra.mxu0 0.0
    %6839 = vmatprep.subr.mxu0 0.0
    %6840 = vmatpush1.msra.mxu0 0.0
    %6841 = vmatprep.subr.mxu0 0.0
    %6842 = vmatpush1.msra.mxu0 0.0
    %6843 = vmatprep.subr.mxu0 0.0
    %6844 = vmatpush1.msra.mxu0 0.0
    %6845 = vmatprep.mubr.f32.mxu0 0.0
    %6846 = vmatmul.mubr.f32.gmra.mrb[0].mxu0 %v6779
    %v6847 = vpop.f32.mrb[0].mxu0
    %v6848 = vadd.f32 0.0, %v6847
    %v6849 = vpop.f32.mrb[0].mxu0
    %6850 = vdwg.mxu0
    %v6852 = vsel %vm1953, %v5826, 0
    %6854 = vmatprep.subr.mxu0 0.0
    %6855 = vmatpush1.msra.mxu0 %v4458
    %6856 = vmatprep.subr.mxu0 0.0
    %6857 = vmatpush1.msra.mxu0 0.0
    %6858 = vmatprep.subr.mxu0 0.0
    %6859 = vmatpush1.msra.mxu0 0.0
    %6860 = vmatprep.subr.mxu0 0.0
    %6861 = vmatpush1.msra.mxu0 0.0
    %6862 = vmatprep.subr.mxu0 0.0
    %6863 = vmatpush1.msra.mxu0 0.0
    %6864 = vmatprep.subr.mxu0 0.0
    %6865 = vmatpush1.msra.mxu0 0.0
    %6866 = vmatprep.subr.mxu0 0.0
    %6867 = vmatpush1.msra.mxu0 0.0
    %6868 = vmatprep.subr.mxu0 0.0
    %6869 = vmatpush1.msra.mxu0 0.0
    %6870 = vmatprep.subr.mxu0 0.0
    %6871 = vmatpush1.msra.mxu0 0.0
    %6872 = vmatprep.subr.mxu0 0.0
    %6873 = vmatpush1.msra.mxu0 0.0
    %6874 = vmatprep.subr.mxu0 0.0
    %6875 = vmatpush1.msra.mxu0 0.0
    %6876 = vmatprep.subr.mxu0 0.0
    %6877 = vmatpush1.msra.mxu0 0.0
    %6878 = vmatprep.subr.mxu0 0.0
    %6879 = vmatpush1.msra.mxu0 0.0
    %6880 = vmatprep.subr.mxu0 0.0
    %6881 = vmatpush1.msra.mxu0 0.0
    %6882 = vmatprep.subr.mxu0 0.0
    %6883 = vmatpush1.msra.mxu0 0.0
    %6884 = vmatprep.subr.mxu0 0.0
    %6885 = vmatpush1.msra.mxu0 0.0
    %6886 = vmatprep.subr.mxu0 0.0
    %6887 = vmatpush1.msra.mxu0 0.0
    %6888 = vmatprep.subr.mxu0 0.0
    %6889 = vmatpush1.msra.mxu0 0.0
    %6890 = vmatprep.subr.mxu0 0.0
    %6891 = vmatpush1.msra.mxu0 0.0
    %6892 = vmatprep.subr.mxu0 0.0
    %6893 = vmatpush1.msra.mxu0 0.0
    %6894 = vmatprep.subr.mxu0 0.0
    %6895 = vmatpush1.msra.mxu0 0.0
    %6896 = vmatprep.subr.mxu0 0.0
    %6897 = vmatpush1.msra.mxu0 0.0
    %6898 = vmatprep.subr.mxu0 0.0
    %6899 = vmatpush1.msra.mxu0 0.0
    %6900 = vmatprep.subr.mxu0 0.0
    %6901 = vmatpush1.msra.mxu0 0.0
    %6902 = vmatprep.subr.mxu0 0.0
    %6903 = vmatpush1.msra.mxu0 0.0
    %6904 = vmatprep.subr.mxu0 0.0
    %6905 = vmatpush1.msra.mxu0 0.0
    %6906 = vmatprep.subr.mxu0 0.0
    %6907 = vmatpush1.msra.mxu0 0.0
    %6908 = vmatprep.subr.mxu0 0.0
    %6909 = vmatpush1.msra.mxu0 0.0
    %6910 = vmatprep.subr.mxu0 0.0
    %6911 = vmatpush1.msra.mxu0 0.0
    %6912 = vmatprep.subr.mxu0 0.0
    %6913 = vmatpush1.msra.mxu0 0.0
    %6914 = vmatprep.subr.mxu0 0.0
    %6915 = vmatpush1.msra.mxu0 0.0
    %6916 = vmatprep.subr.mxu0 0.0
    %6917 = vmatpush1.msra.mxu0 0.0
    %6918 = vmatprep.mubr.f32.mxu0 0.0
    %6919 = vmatmul.mubr.f32.gmra.mrb[0].mxu0 %v6852
    %v6920 = vpop.f32.mrb[0].mxu0
    %v6921 = vadd.f32 0.0, %v6920
    %v6922 = vpop.f32.mrb[0].mxu0
    %6923 = vdwg.mxu0
    %v6925 = vsel %vm1953, %v5828, 0
    %6927 = vmatprep.subr.mxu0 0.0
    %6928 = vmatpush1.msra.mxu0 %v4460
    %6929 = vmatprep.subr.mxu0 0.0
    %6930 = vmatpush1.msra.mxu0 0.0
    %6931 = vmatprep.subr.mxu0 0.0
    %6932 = vmatpush1.msra.mxu0 0.0
    %6933 = vmatprep.subr.mxu0 0.0
    %6934 = vmatpush1.msra.mxu0 0.0
    %6935 = vmatprep.subr.mxu0 0.0
    %6936 = vmatpush1.msra.mxu0 0.0
    %6937 = vmatprep.subr.mxu0 0.0
    %6938 = vmatpush1.msra.mxu0 0.0
    %6939 = vmatprep.subr.mxu0 0.0
    %6940 = vmatpush1.msra.mxu0 0.0
    %6941 = vmatprep.subr.mxu0 0.0
    %6942 = vmatpush1.msra.mxu0 0.0
    %6943 = vmatprep.subr.mxu0 0.0
    %6944 = vmatpush1.msra.mxu0 0.0
    %6945 = vmatprep.subr.mxu0 0.0
    %6946 = vmatpush1.msra.mxu0 0.0
    %6947 = vmatprep.subr.mxu0 0.0
    %6948 = vmatpush1.msra.mxu0 0.0
    %6949 = vmatprep.subr.mxu0 0.0
    %6950 = vmatpush1.msra.mxu0 0.0
    %6951 = vmatprep.subr.mxu0 0.0
    %6952 = vmatpush1.msra.mxu0 0.0
    %6953 = vmatprep.subr.mxu0 0.0
    %6954 = vmatpush1.msra.mxu0 0.0
    %6955 = vmatprep.subr.mxu0 0.0
    %6956 = vmatpush1.msra.mxu0 0.0
    %6957 = vmatprep.subr.mxu0 0.0
    %6958 = vmatpush1.msra.mxu0 0.0
    %6959 = vmatprep.subr.mxu0 0.0
    %6960 = vmatpush1.msra.mxu0 0.0
    %6961 = vmatprep.subr.mxu0 0.0
    %6962 = vmatpush1.msra.mxu0 0.0
    %6963 = vmatprep.subr.mxu0 0.0
    %6964 = vmatpush1.msra.mxu0 0.0
    %6965 = vmatprep.subr.mxu0 0.0
    %6966 = vmatpush1.msra.mxu0 0.0
    %6967 = vmatprep.subr.mxu0 0.0
    %6968 = vmatpush1.msra.mxu0 0.0
    %6969 = vmatprep.subr.mxu0 0.0
    %6970 = vmatpush1.msra.mxu0 0.0
    %6971 = vmatprep.subr.mxu0 0.0
    %6972 = vmatpush1.msra.mxu0 0.0
    %6973 = vmatprep.subr.mxu0 0.0
    %6974 = vmatpush1.msra.mxu0 0.0
    %6975 = vmatprep.subr.mxu0 0.0
    %6976 = vmatpush1.msra.mxu0 0.0
    %6977 = vmatprep.subr.mxu0 0.0
    %6978 = vmatpush1.msra.mxu0 0.0
    %6979 = vmatprep.subr.mxu0 0.0
    %6980 = vmatpush1.msra.mxu0 0.0
    %6981 = vmatprep.subr.mxu0 0.0
    %6982 = vmatpush1.msra.mxu0 0.0
    %6983 = vmatprep.subr.mxu0 0.0
    %6984 = vmatpush1.msra.mxu0 0.0
    %6985 = vmatprep.subr.mxu0 0.0
    %6986 = vmatpush1.msra.mxu0 0.0
    %6987 = vmatprep.subr.mxu0 0.0
    %6988 = vmatpush1.msra.mxu0 0.0
    %6989 = vmatprep.subr.mxu0 0.0
    %6990 = vmatpush1.msra.mxu0 0.0
    %6991 = vmatprep.mubr.f32.mxu0 0.0
    %6992 = vmatmul.mubr.f32.gmra.mrb[0].mxu0 %v6925
    %v6993 = vpop.f32.mrb[0].mxu0
    %v6994 = vadd.f32 0.0, %v6993
    %v6995 = vpop.f32.mrb[0].mxu0
    %6996 = vdwg.mxu0
    %s6997 = scalar_lea.vmem %s5, 32
    %v6998 = vld [vmem:[%s6997] sm:$0xff]
    %v6999 = vld [vmem:[%s6997 + $0x8] sm:$0xff]
    %v7000 = vld [vmem:[%s6997 + $0x10] sm:$0xff]
    %v7001 = vld [vmem:[%s6997 + $0x18] sm:$0xff]
    %v7003 = vsel %vm768, %v5899, 0
    %v7006 = vsel %vm768, %v5972, 0
    %v7009 = vsel %vm768, %v6045, 0
    %v7012 = vsel %vm768, %v6118, 0
    %v7015 = vsel %vm768, %v6191, 0
    %v7018 = vsel %vm768, %v6264, 0
    %v7021 = vsel %vm768, %v6337, 0
    %v7024 = vsel %vm768, %v6410, 0
    %7026 = vmatprep.subr.mxu0 0.0
    %7027 = vmatpush1.msra.mxu0 %v6998
    %7028 = vmatprep.subr.mxu0 0.0
    %7029 = vmatpush1.msra.mxu0 %v6999
    %7030 = vmatprep.subr.mxu0 0.0
    %7031 = vmatpush1.msra.mxu0 0.0
    %7032 = vmatprep.subr.mxu0 0.0
    %7033 = vmatpush1.msra.mxu0 0.0
    %7034 = vmatprep.subr.mxu0 0.0
    %7035 = vmatpush1.msra.mxu0 0.0
    %7036 = vmatprep.subr.mxu0 0.0
    %7037 = vmatpush1.msra.mxu0 0.0
    %7038 = vmatprep.subr.mxu0 0.0
    %7039 = vmatpush1.msra.mxu0 0.0
    %7040 = vmatprep.subr.mxu0 0.0
    %7041 = vmatpush1.msra.mxu0 0.0
    %7042 = vmatprep.subr.mxu0 0.0
    %7043 = vmatpush1.msra.mxu0 0.0
    %7044 = vmatprep.subr.mxu0 0.0
    %7045 = vmatpush1.msra.mxu0 0.0
    %7046 = vmatprep.subr.mxu0 0.0
    %7047 = vmatpush1.msra.mxu0 0.0
    %7048 = vmatprep.subr.mxu0 0.0
    %7049 = vmatpush1.msra.mxu0 0.0
    %7050 = vmatprep.subr.mxu0 0.0
    %7051 = vmatpush1.msra.mxu0 0.0
    %7052 = vmatprep.subr.mxu0 0.0
    %7053 = vmatpush1.msra.mxu0 0.0
    %7054 = vmatprep.subr.mxu0 0.0
    %7055 = vmatpush1.msra.mxu0 0.0
    %7056 = vmatprep.subr.mxu0 0.0
    %7057 = vmatpush1.msra.mxu0 0.0
    %7058 = vmatprep.subr.mxu0 0.0
    %7059 = vmatpush1.msra.mxu0 0.0
    %7060 = vmatprep.subr.mxu0 0.0
    %7061 = vmatpush1.msra.mxu0 0.0
    %7062 = vmatprep.subr.mxu0 0.0
    %7063 = vmatpush1.msra.mxu0 0.0
    %7064 = vmatprep.subr.mxu0 0.0
    %7065 = vmatpush1.msra.mxu0 0.0
    %7066 = vmatprep.subr.mxu0 0.0
    %7067 = vmatpush1.msra.mxu0 0.0
    %7068 = vmatprep.subr.mxu0 0.0
    %7069 = vmatpush1.msra.mxu0 0.0
    %7070 = vmatprep.subr.mxu0 0.0
    %7071 = vmatpush1.msra.mxu0 0.0
    %7072 = vmatprep.subr.mxu0 0.0
    %7073 = vmatpush1.msra.mxu0 0.0
    %7074 = vmatprep.subr.mxu0 0.0
    %7075 = vmatpush1.msra.mxu0 0.0
    %7076 = vmatprep.subr.mxu0 0.0
    %7077 = vmatpush1.msra.mxu0 0.0
    %7078 = vmatprep.subr.mxu0 0.0
    %7079 = vmatpush1.msra.mxu0 0.0
    %7080 = vmatprep.subr.mxu0 0.0
    %7081 = vmatpush1.msra.mxu0 0.0
    %7082 = vmatprep.subr.mxu0 0.0
    %7083 = vmatpush1.msra.mxu0 0.0
    %7084 = vmatprep.subr.mxu0 0.0
    %7085 = vmatpush1.msra.mxu0 0.0
    %7086 = vmatprep.subr.mxu0 0.0
    %7087 = vmatpush1.msra.mxu0 0.0
    %7088 = vmatprep.subr.mxu0 0.0
    %7089 = vmatpush1.msra.mxu0 0.0
    %7090 = vmatprep.mubr.f32.mxu0 0.0
    %7091 = vmatmul.mubr.f32.gmra.mrb[0].mxu0 %v7003
    %v7092 = vpop.f32.mrb[0].mxu0
    %v7093 = vadd.f32 0.0, %v7092
    %v7094 = vpop.f32.mrb[0].mxu0
    %7095 = vmatprep.mubr.f32.mxu0 0.0
    %7096 = vmatmul.mubr.f32.gmra.mrb[0].mxu0 %v7006
    %v7097 = vpop.f32.mrb[0].mxu0
    %v7098 = vadd.f32 0.0, %v7097
    %v7099 = vpop.f32.mrb[0].mxu0
    %7100 = vmatprep.mubr.f32.mxu0 0.0
    %7101 = vmatmul.mubr.f32.gmra.mrb[0].mxu0 %v7009
    %v7102 = vpop.f32.mrb[0].mxu0
    %v7103 = vadd.f32 0.0, %v7102
    %v7104 = vpop.f32.mrb[0].mxu0
    %7105 = vmatprep.mubr.f32.mxu0 0.0
    %7106 = vmatmul.mubr.f32.gmra.mrb[0].mxu0 %v7012
    %v7107 = vpop.f32.mrb[0].mxu0
    %v7108 = vadd.f32 0.0, %v7107
    %v7109 = vpop.f32.mrb[0].mxu0
    %7110 = vmatprep.mubr.f32.mxu0 0.0
    %7111 = vmatmul.mubr.f32.gmra.mrb[0].mxu0 %v7015
    %v7112 = vpop.f32.mrb[0].mxu0
    %v7113 = vadd.f32 0.0, %v7112
    %v7114 = vpop.f32.mrb[0].mxu0
    %7115 = vmatprep.mubr.f32.mxu0 0.0
    %7116 = vmatmul.mubr.f32.gmra.mrb[0].mxu0 %v7018
    %v7117 = vpop.f32.mrb[0].mxu0
    %v7118 = vadd.f32 0.0, %v7117
    %v7119 = vpop.f32.mrb[0].mxu0
    %7120 = vmatprep.mubr.f32.mxu0 0.0
    %7121 = vmatmul.mubr.f32.gmra.mrb[0].mxu0 %v7021
    %v7122 = vpop.f32.mrb[0].mxu0
    %v7123 = vadd.f32 0.0, %v7122
    %v7124 = vpop.f32.mrb[0].mxu0
    %7125 = vmatprep.mubr.f32.mxu0 0.0
    %7126 = vmatmul.mubr.f32.gmra.mrb[0].mxu0 %v7024
    %v7127 = vpop.f32.mrb[0].mxu0
    %v7128 = vadd.f32 0.0, %v7127
    %v7129 = vpop.f32.mrb[0].mxu0
    %7130 = vdwg.mxu0
    %v7132 = vsel %vm768, %v6483, 0
    %v7135 = vsel %vm768, %v6556, 0
    %v7138 = vsel %vm768, %v6629, 0
    %v7141 = vsel %vm768, %v6702, 0
    %v7144 = vsel %vm768, %v6775, 0
    %v7147 = vsel %vm768, %v6848, 0
    %v7150 = vsel %vm768, %v6921, 0
    %v7153 = vsel %vm768, %v6994, 0
    %7155 = vmatprep.subr.mxu0 0.0
    %7156 = vmatpush1.msra.mxu0 %v7000
    %7157 = vmatprep.subr.mxu0 0.0
    %7158 = vmatpush1.msra.mxu0 %v7001
    %7159 = vmatprep.subr.mxu0 0.0
    %7160 = vmatpush1.msra.mxu0 0.0
    %7161 = vmatprep.subr.mxu0 0.0
    %7162 = vmatpush1.msra.mxu0 0.0
    %7163 = vmatprep.subr.mxu0 0.0
    %7164 = vmatpush1.msra.mxu0 0.0
    %7165 = vmatprep.subr.mxu0 0.0
    %7166 = vmatpush1.msra.mxu0 0.0
    %7167 = vmatprep.subr.mxu0 0.0
    %7168 = vmatpush1.msra.mxu0 0.0
    %7169 = vmatprep.subr.mxu0 0.0
    %7170 = vmatpush1.msra.mxu0 0.0
    %7171 = vmatprep.subr.mxu0 0.0
    %7172 = vmatpush1.msra.mxu0 0.0
    %7173 = vmatprep.subr.mxu0 0.0
    %7174 = vmatpush1.msra.mxu0 0.0
    %7175 = vmatprep.subr.mxu0 0.0
    %7176 = vmatpush1.msra.mxu0 0.0
    %7177 = vmatprep.subr.mxu0 0.0
    %7178 = vmatpush1.msra.mxu0 0.0
    %7179 = vmatprep.subr.mxu0 0.0
    %7180 = vmatpush1.msra.mxu0 0.0
    %7181 = vmatprep.subr.mxu0 0.0
    %7182 = vmatpush1.msra.mxu0 0.0
    %7183 = vmatprep.subr.mxu0 0.0
    %7184 = vmatpush1.msra.mxu0 0.0
    %7185 = vmatprep.subr.mxu0 0.0
    %7186 = vmatpush1.msra.mxu0 0.0
    %7187 = vmatprep.subr.mxu0 0.0
    %7188 = vmatpush1.msra.mxu0 0.0
    %7189 = vmatprep.subr.mxu0 0.0
    %7190 = vmatpush1.msra.mxu0 0.0
    %7191 = vmatprep.subr.mxu0 0.0
    %7192 = vmatpush1.msra.mxu0 0.0
    %7193 = vmatprep.subr.mxu0 0.0
    %7194 = vmatpush1.msra.mxu0 0.0
    %7195 = vmatprep.subr.mxu0 0.0
    %7196 = vmatpush1.msra.mxu0 0.0
    %7197 = vmatprep.subr.mxu0 0.0
    %7198 = vmatpush1.msra.mxu0 0.0
    %7199 = vmatprep.subr.mxu0 0.0
    %7200 = vmatpush1.msra.mxu0 0.0
    %7201 = vmatprep.subr.mxu0 0.0
    %7202 = vmatpush1.msra.mxu0 0.0
    %7203 = vmatprep.subr.mxu0 0.0
    %7204 = vmatpush1.msra.mxu0 0.0
    %7205 = vmatprep.subr.mxu0 0.0
    %7206 = vmatpush1.msra.mxu0 0.0
    %7207 = vmatprep.subr.mxu0 0.0
    %7208 = vmatpush1.msra.mxu0 0.0
    %7209 = vmatprep.subr.mxu0 0.0
    %7210 = vmatpush1.msra.mxu0 0.0
    %7211 = vmatprep.subr.mxu0 0.0
    %7212 = vmatpush1.msra.mxu0 0.0
    %7213 = vmatprep.subr.mxu0 0.0
    %7214 = vmatpush1.msra.mxu0 0.0
    %7215 = vmatprep.subr.mxu0 0.0
    %7216 = vmatpush1.msra.mxu0 0.0
    %7217 = vmatprep.subr.mxu0 0.0
    %7218 = vmatpush1.msra.mxu0 0.0
    %7219 = vmatprep.mubr.f32.mxu0 0.0
    %7220 = vmatmul.mubr.f32.gmra.mrb[0].mxu0 %v7132
    %v7221 = vpop.f32.mrb[0].mxu0
    %v7222 = vadd.f32 0.0, %v7221
    %v7223 = vpop.f32.mrb[0].mxu0
    %7224 = vmatprep.mubr.f32.mxu0 0.0
    %7225 = vmatmul.mubr.f32.gmra.mrb[0].mxu0 %v7135
    %v7226 = vpop.f32.mrb[0].mxu0
    %v7227 = vadd.f32 0.0, %v7226
    %v7228 = vpop.f32.mrb[0].mxu0
    %7229 = vmatprep.mubr.f32.mxu0 0.0
    %7230 = vmatmul.mubr.f32.gmra.mrb[0].mxu0 %v7138
    %v7231 = vpop.f32.mrb[0].mxu0
    %v7232 = vadd.f32 0.0, %v7231
    %v7233 = vpop.f32.mrb[0].mxu0
    %7234 = vmatprep.mubr.f32.mxu0 0.0
    %7235 = vmatmul.mubr.f32.gmra.mrb[0].mxu0 %v7141
    %v7236 = vpop.f32.mrb[0].mxu0
    %v7237 = vadd.f32 0.0, %v7236
    %v7238 = vpop.f32.mrb[0].mxu0
    %7239 = vmatprep.mubr.f32.mxu0 0.0
    %7240 = vmatmul.mubr.f32.gmra.mrb[0].mxu0 %v7144
    %v7241 = vpop.f32.mrb[0].mxu0
    %v7242 = vadd.f32 0.0, %v7241
    %v7243 = vpop.f32.mrb[0].mxu0
    %7244 = vmatprep.mubr.f32.mxu0 0.0
    %7245 = vmatmul.mubr.f32.gmra.mrb[0].mxu0 %v7147
    %v7246 = vpop.f32.mrb[0].mxu0
    %v7247 = vadd.f32 0.0, %v7246
    %v7248 = vpop.f32.mrb[0].mxu0
    %7249 = vmatprep.mubr.f32.mxu0 0.0
    %7250 = vmatmul.mubr.f32.gmra.mrb[0].mxu0 %v7150
    %v7251 = vpop.f32.mrb[0].mxu0
    %v7252 = vadd.f32 0.0, %v7251
    %v7253 = vpop.f32.mrb[0].mxu0
    %7254 = vmatprep.mubr.f32.mxu0 0.0
    %7255 = vmatmul.mubr.f32.gmra.mrb[0].mxu0 %v7153
    %v7256 = vpop.f32.mrb[0].mxu0
    %v7257 = vadd.f32 0.0, %v7256
    %v7258 = vpop.f32.mrb[0].mxu0
    %7259 = vdwg.mxu0
    %v7260 = vsel %vm284, %v7093, 0.0
    %v7261 = vsel %vm284, %v7222, 0.0
    %v7262 = vadd.f32 %v7260, %v7261
    %v7263 = vsel %vm284, %v7098, 0.0
    %v7264 = vsel %vm284, %v7227, 0.0
    %v7265 = vadd.f32 %v7263, %v7264
    %v7266 = vsel %vm284, %v7103, 0.0
    %v7267 = vsel %vm284, %v7232, 0.0
    %v7268 = vadd.f32 %v7266, %v7267
    %v7269 = vsel %vm284, %v7108, 0.0
    %v7270 = vsel %vm284, %v7237, 0.0
    %v7271 = vadd.f32 %v7269, %v7270
    %v7272 = vsel %vm284, %v7113, 0.0
    %v7273 = vsel %vm284, %v7242, 0.0
    %v7274 = vadd.f32 %v7272, %v7273
    %v7275 = vsel %vm284, %v7118, 0.0
    %v7276 = vsel %vm284, %v7247, 0.0
    %v7277 = vadd.f32 %v7275, %v7276
    %v7278 = vsel %vm284, %v7123, 0.0
    %v7279 = vsel %vm284, %v7252, 0.0
    %v7280 = vadd.f32 %v7278, %v7279
    %v7281 = vsel %vm284, %v7128, 0.0
    %v7282 = vsel %vm284, %v7257, 0.0
    %v7283 = vadd.f32 %v7281, %v7282
    %v7284 = vld [vmem:[%s2 + $0x9] sm:$0x1]
    %v7285 = vlaneseq
    %v7286 = vshrl.u32 %v7285, 7
    %v7287 = vsub.s32 0, %v7286
    %v7288 = vrot.slane %v7284, %v7287
    %v7289 = vadd.f32 %v7262, %v7288
    %v7290 = vadd.f32 %v7265, %v7288
    %v7291 = vadd.f32 %v7268, %v7288
    %v7292 = vadd.f32 %v7271, %v7288
    %v7293 = vadd.f32 %v7274, %v7288
    %v7294 = vadd.f32 %v7277, %v7288
    %v7295 = vadd.f32 %v7280, %v7288
    %v7296 = vadd.f32 %v7283, %v7288
    %v7297 = vadd.f32 %v7289, %v4218
    %v7298 = vadd.f32 %v7290, %v4219
    %v7299 = vadd.f32 %v7291, %v4220
    %v7300 = vadd.f32 %v7292, %v4221
    %v7301 = vadd.f32 %v7293, %v4222
    %v7302 = vadd.f32 %v7294, %v4223
    %v7303 = vadd.f32 %v7295, %v4224
    %v7304 = vadd.f32 %v7296, %v4225
    %v7305 = vld [vmem:[%s2 + $0xa] sm:$0x1]
    %v7306 = vld [vmem:[%s2 + $0xb] sm:$0x1]
    %v7307 = vsel %vm284, %v7297, 0.0
    %7308 = vadd.xlane.f32.xlu0 %v7307
    %v7309 = vpop.xlane.xlu0 %7308
    %v7310 = vsel %vm284, %v7298, 0.0
    %7311 = vadd.xlane.f32.xlu0 %v7310
    %v7312 = vpop.xlane.xlu0 %7311
    %v7313 = vsel %vm284, %v7299, 0.0
    %7314 = vadd.xlane.f32.xlu0 %v7313
    %v7315 = vpop.xlane.xlu0 %7314
    %v7316 = vsel %vm284, %v7300, 0.0
    %7317 = vadd.xlane.f32.xlu0 %v7316
    %v7318 = vpop.xlane.xlu0 %7317
    %v7319 = vsel %vm284, %v7301, 0.0
    %7320 = vadd.xlane.f32.xlu0 %v7319
    %v7321 = vpop.xlane.xlu0 %7320
    %v7322 = vsel %vm284, %v7302, 0.0
    %7323 = vadd.xlane.f32.xlu0 %v7322
    %v7324 = vpop.xlane.xlu0 %7323
    %v7325 = vsel %vm284, %v7303, 0.0
    %7326 = vadd.xlane.f32.xlu0 %v7325
    %v7327 = vpop.xlane.xlu0 %7326
    %v7328 = vsel %vm284, %v7304, 0.0
    %7329 = vadd.xlane.f32.xlu0 %v7328
    %v7330 = vpop.xlane.xlu0 %7329
    %v7331 = vmul.f32 %v7309, %v309
    %v7332 = vmul.f32 %v7312, %v309
    %v7333 = vmul.f32 %v7315, %v309
    %v7334 = vmul.f32 %v7318, %v309
    %v7335 = vmul.f32 %v7321, %v309
    %v7336 = vmul.f32 %v7324, %v309
    %v7337 = vmul.f32 %v7327, %v309
    %v7338 = vmul.f32 %v7330, %v309
    %v7339 = vsub.f32 %v7297, %v7331
    %v7340 = vsub.f32 %v7298, %v7332
    %v7341 = vsub.f32 %v7299, %v7333
    %v7342 = vsub.f32 %v7300, %v7334
    %v7343 = vsub.f32 %v7301, %v7335
    %v7344 = vsub.f32 %v7302, %v7336
    %v7345 = vsub.f32 %v7303, %v7337
    %v7346 = vsub.f32 %v7304, %v7338
    %v7347 = vmul.f32 %v7339, %v7339
    %v7348 = vmul.f32 %v7340, %v7340
    %v7349 = vmul.f32 %v7341, %v7341
    %v7350 = vmul.f32 %v7342, %v7342
    %v7351 = vmul.f32 %v7343, %v7343
    %v7352 = vmul.f32 %v7344, %v7344
    %v7353 = vmul.f32 %v7345, %v7345
    %v7354 = vmul.f32 %v7346, %v7346
    %v7355 = vsel %vm284, %v7347, 0.0
    %7356 = vadd.xlane.f32.xlu0 %v7355
    %v7357 = vpop.xlane.xlu0 %7356
    %v7358 = vsel %vm284, %v7348, 0.0
    %7359 = vadd.xlane.f32.xlu0 %v7358
    %v7360 = vpop.xlane.xlu0 %7359
    %v7361 = vsel %vm284, %v7349, 0.0
    %7362 = vadd.xlane.f32.xlu0 %v7361
    %v7363 = vpop.xlane.xlu0 %7362
    %v7364 = vsel %vm284, %v7350, 0.0
    %7365 = vadd.xlane.f32.xlu0 %v7364
    %v7366 = vpop.xlane.xlu0 %7365
    %v7367 = vsel %vm284, %v7351, 0.0
    %7368 = vadd.xlane.f32.xlu0 %v7367
    %v7369 = vpop.xlane.xlu0 %7368
    %v7370 = vsel %vm284, %v7352, 0.0
    %7371 = vadd.xlane.f32.xlu0 %v7370
    %v7372 = vpop.xlane.xlu0 %7371
    %v7373 = vsel %vm284, %v7353, 0.0
    %7374 = vadd.xlane.f32.xlu0 %v7373
    %v7375 = vpop.xlane.xlu0 %7374
    %v7376 = vsel %vm284, %v7354, 0.0
    %7377 = vadd.xlane.f32.xlu0 %v7376
    %v7378 = vpop.xlane.xlu0 %7377
    %v7379 = vmul.f32 %v7357, %v309
    %v7380 = vmul.f32 %v7360, %v309
    %v7381 = vmul.f32 %v7363, %v309
    %v7382 = vmul.f32 %v7366, %v309
    %v7383 = vmul.f32 %v7369, %v309
    %v7384 = vmul.f32 %v7372, %v309
    %v7385 = vmul.f32 %v7375, %v309
    %v7386 = vmul.f32 %v7378, %v309
    %v7387 = vadd.f32 %v7379, 1e-05
    %v7388 = vadd.f32 %v7380, 1e-05
    %v7389 = vadd.f32 %v7381, 1e-05
    %v7390 = vadd.f32 %v7382, 1e-05
    %v7391 = vadd.f32 %v7383, 1e-05
    %v7392 = vadd.f32 %v7384, 1e-05
    %v7393 = vadd.f32 %v7385, 1e-05
    %v7394 = vadd.f32 %v7386, 1e-05
    %v7395 = vrsqrt.pop %v7387
    %v7396 = vrsqrt.pop %v7388
    %v7397 = vrsqrt.pop %v7389
    %v7398 = vrsqrt.pop %v7390
    %v7399 = vrsqrt.pop %v7391
    %v7400 = vrsqrt.pop %v7392
    %v7401 = vrsqrt.pop %v7393
    %v7402 = vrsqrt.pop %v7394
    %v7403 = vmul.f32 %v7339, %v7395
    %v7404 = vmul.f32 %v7340, %v7396
    %v7405 = vmul.f32 %v7341, %v7397
    %v7406 = vmul.f32 %v7342, %v7398
    %v7407 = vmul.f32 %v7343, %v7399
    %v7408 = vmul.f32 %v7344, %v7400
    %v7409 = vmul.f32 %v7345, %v7401
    %v7410 = vmul.f32 %v7346, %v7402
    %v7411 = vlaneseq
    %v7412 = vshrl.u32 %v7411, 7
    %v7413 = vsub.s32 0, %v7412
    %v7414 = vrot.slane %v7305, %v7413
    %v7415 = vmul.f32 %v7403, %v7414
    %v7416 = vmul.f32 %v7404, %v7414
    %v7417 = vmul.f32 %v7405, %v7414
    %v7418 = vmul.f32 %v7406, %v7414
    %v7419 = vmul.f32 %v7407, %v7414
    %v7420 = vmul.f32 %v7408, %v7414
    %v7421 = vmul.f32 %v7409, %v7414
    %v7422 = vmul.f32 %v7410, %v7414
    %v7423 = vlaneseq
    %v7424 = vshrl.u32 %v7423, 7
    %v7425 = vsub.s32 0, %v7424
    %v7426 = vrot.slane %v7306, %v7425
    %v7427 = vadd.f32 %v7415, %v7426
    %v7428 = vadd.f32 %v7416, %v7426
    %v7429 = vadd.f32 %v7417, %v7426
    %v7430 = vadd.f32 %v7418, %v7426
    %v7431 = vadd.f32 %v7419, %v7426
    %v7432 = vadd.f32 %v7420, %v7426
    %v7433 = vadd.f32 %v7421, %v7426
    %v7434 = vadd.f32 %v7422, %v7426
    %s7435 = scalar_lea.vmem %s6, 32
    %v7436 = vld [vmem:[%s7435] sm:$0xff]
    %v7437 = vld [vmem:[%s7435 + $0x8] sm:$0xff]
    %v7438 = vld [vmem:[%s7435 + $0x10] sm:$0xff]
    %v7439 = vld [vmem:[%s7435 + $0x18] sm:$0xff]
    %v7440 = vld [vmem:[%s2 + $0xc] sm:$0x1]
    %v7441 = vlaneseq
    %v7442 = vshrl.u32 %v7441, 7
    %v7443 = vsub.s32 0, %v7442
    %v7444 = vrot.slane %v7440, %v7443
    %v7446 = vsel %vm284, %v7427, 0
    %v7449 = vsel %vm284, %v7428, 0
    %v7452 = vsel %vm284, %v7429, 0
    %v7455 = vsel %vm284, %v7430, 0
    %v7458 = vsel %vm284, %v7431, 0
    %v7461 = vsel %vm284, %v7432, 0
    %v7464 = vsel %vm284, %v7433, 0
    %v7467 = vsel %vm284, %v7434, 0
    %7469 = vmatprep.subr.mxu0 0.0
    %7470 = vmatpush1.msra.mxu0 %v7436
    %7471 = vmatprep.subr.mxu0 0.0
    %7472 = vmatpush1.msra.mxu0 %v7437
    %7473 = vmatprep.subr.mxu0 0.0
    %7474 = vmatpush1.msra.mxu0 %v7438
    %7475 = vmatprep.subr.mxu0 0.0
    %7476 = vmatpush1.msra.mxu0 %v7439
    %7477 = vmatprep.subr.mxu0 0.0
    %7478 = vmatpush1.msra.mxu0 0.0
    %7479 = vmatprep.subr.mxu0 0.0
    %7480 = vmatpush1.msra.mxu0 0.0
    %7481 = vmatprep.subr.mxu0 0.0
    %7482 = vmatpush1.msra.mxu0 0.0
    %7483 = vmatprep.subr.mxu0 0.0
    %7484 = vmatpush1.msra.mxu0 0.0
    %7485 = vmatprep.subr.mxu0 0.0
    %7486 = vmatpush1.msra.mxu0 0.0
    %7487 = vmatprep.subr.mxu0 0.0
    %7488 = vmatpush1.msra.mxu0 0.0
    %7489 = vmatprep.subr.mxu0 0.0
    %7490 = vmatpush1.msra.mxu0 0.0
    %7491 = vmatprep.subr.mxu0 0.0
    %7492 = vmatpush1.msra.mxu0 0.0
    %7493 = vmatprep.subr.mxu0 0.0
    %7494 = vmatpush1.msra.mxu0 0.0
    %7495 = vmatprep.subr.mxu0 0.0
    %7496 = vmatpush1.msra.mxu0 0.0
    %7497 = vmatprep.subr.mxu0 0.0
    %7498 = vmatpush1.msra.mxu0 0.0
    %7499 = vmatprep.subr.mxu0 0.0
    %7500 = vmatpush1.msra.mxu0 0.0
    %7501 = vmatprep.subr.mxu0 0.0
    %7502 = vmatpush1.msra.mxu0 0.0
    %7503 = vmatprep.subr.mxu0 0.0
    %7504 = vmatpush1.msra.mxu0 0.0
    %7505 = vmatprep.subr.mxu0 0.0
    %7506 = vmatpush1.msra.mxu0 0.0
    %7507 = vmatprep.subr.mxu0 0.0
    %7508 = vmatpush1.msra.mxu0 0.0
    %7509 = vmatprep.subr.mxu0 0.0
    %7510 = vmatpush1.msra.mxu0 0.0
    %7511 = vmatprep.subr.mxu0 0.0
    %7512 = vmatpush1.msra.mxu0 0.0
    %7513 = vmatprep.subr.mxu0 0.0
    %7514 = vmatpush1.msra.mxu0 0.0
    %7515 = vmatprep.subr.mxu0 0.0
    %7516 = vmatpush1.msra.mxu0 0.0
    %7517 = vmatprep.subr.mxu0 0.0
    %7518 = vmatpush1.msra.mxu0 0.0
    %7519 = vmatprep.subr.mxu0 0.0
    %7520 = vmatpush1.msra.mxu0 0.0
    %7521 = vmatprep.subr.mxu0 0.0
    %7522 = vmatpush1.msra.mxu0 0.0
    %7523 = vmatprep.subr.mxu0 0.0
    %7524 = vmatpush1.msra.mxu0 0.0
    %7525 = vmatprep.subr.mxu0 0.0
    %7526 = vmatpush1.msra.mxu0 0.0
    %7527 = vmatprep.subr.mxu0 0.0
    %7528 = vmatpush1.msra.mxu0 0.0
    %7529 = vmatprep.subr.mxu0 0.0
    %7530 = vmatpush1.msra.mxu0 0.0
    %7531 = vmatprep.subr.mxu0 0.0
    %7532 = vmatpush1.msra.mxu0 0.0
    %7533 = vmatprep.mubr.f32.mxu0 0.0
    %7534 = vmatmul.mubr.f32.gmra.mrb[0].mxu0 %v7446
    %v7535 = vpop.f32.mrb[0].mxu0
    %v7536 = vadd.f32 %v7444, %v7535
    %v7537 = vpop.f32.mrb[0].mxu0
    %7538 = vmatprep.mubr.f32.mxu0 0.0
    %7539 = vmatmul.mubr.f32.gmra.mrb[0].mxu0 %v7449
    %v7540 = vpop.f32.mrb[0].mxu0
    %v7541 = vadd.f32 %v7444, %v7540
    %v7542 = vpop.f32.mrb[0].mxu0
    %7543 = vmatprep.mubr.f32.mxu0 0.0
    %7544 = vmatmul.mubr.f32.gmra.mrb[0].mxu0 %v7452
    %v7545 = vpop.f32.mrb[0].mxu0
    %v7546 = vadd.f32 %v7444, %v7545
    %v7547 = vpop.f32.mrb[0].mxu0
    %7548 = vmatprep.mubr.f32.mxu0 0.0
    %7549 = vmatmul.mubr.f32.gmra.mrb[0].mxu0 %v7455
    %v7550 = vpop.f32.mrb[0].mxu0
    %v7551 = vadd.f32 %v7444, %v7550
    %v7552 = vpop.f32.mrb[0].mxu0
    %7553 = vmatprep.mubr.f32.mxu0 0.0
    %7554 = vmatmul.mubr.f32.gmra.mrb[0].mxu0 %v7458
    %v7555 = vpop.f32.mrb[0].mxu0
    %v7556 = vadd.f32 %v7444, %v7555
    %v7557 = vpop.f32.mrb[0].mxu0
    %7558 = vmatprep.mubr.f32.mxu0 0.0
    %7559 = vmatmul.mubr.f32.gmra.mrb[0].mxu0 %v7461
    %v7560 = vpop.f32.mrb[0].mxu0
    %v7561 = vadd.f32 %v7444, %v7560
    %v7562 = vpop.f32.mrb[0].mxu0
    %7563 = vmatprep.mubr.f32.mxu0 0.0
    %7564 = vmatmul.mubr.f32.gmra.mrb[0].mxu0 %v7464
    %v7565 = vpop.f32.mrb[0].mxu0
    %v7566 = vadd.f32 %v7444, %v7565
    %v7567 = vpop.f32.mrb[0].mxu0
    %7568 = vmatprep.mubr.f32.mxu0 0.0
    %7569 = vmatmul.mubr.f32.gmra.mrb[0].mxu0 %v7467
    %v7570 = vpop.f32.mrb[0].mxu0
    %v7571 = vadd.f32 %v7444, %v7570
    %v7572 = vpop.f32.mrb[0].mxu0
    %7573 = vdwg.mxu0
    %v7574 = vmul.f32 %v7536, %v7536
    %v7575 = vmul.f32 %v7541, %v7541
    %v7576 = vmul.f32 %v7546, %v7546
    %v7577 = vmul.f32 %v7551, %v7551
    %v7578 = vmul.f32 %v7556, %v7556
    %v7579 = vmul.f32 %v7561, %v7561
    %v7580 = vmul.f32 %v7566, %v7566
    %v7581 = vmul.f32 %v7571, %v7571
    %v7582 = vmul.f32 %v7536, %v7574
    %v7583 = vmul.f32 %v7541, %v7575
    %v7584 = vmul.f32 %v7546, %v7576
    %v7585 = vmul.f32 %v7551, %v7577
    %v7586 = vmul.f32 %v7556, %v7578
    %v7587 = vmul.f32 %v7561, %v7579
    %v7588 = vmul.f32 %v7566, %v7580
    %v7589 = vmul.f32 %v7571, %v7581
    %v7590 = vmul.f32 %v7582, 0.044715
    %v7591 = vmul.f32 %v7583, 0.044715
    %v7592 = vmul.f32 %v7584, 0.044715
    %v7593 = vmul.f32 %v7585, 0.044715
    %v7594 = vmul.f32 %v7586, 0.044715
    %v7595 = vmul.f32 %v7587, 0.044715
    %v7596 = vmul.f32 %v7588, 0.044715
    %v7597 = vmul.f32 %v7589, 0.044715
    %v7598 = vadd.f32 %v7536, %v7590
    %v7599 = vadd.f32 %v7541, %v7591
    %v7600 = vadd.f32 %v7546, %v7592
    %v7601 = vadd.f32 %v7551, %v7593
    %v7602 = vadd.f32 %v7556, %v7594
    %v7603 = vadd.f32 %v7561, %v7595
    %v7604 = vadd.f32 %v7566, %v7596
    %v7605 = vadd.f32 %v7571, %v7597
    %v7606 = vmul.f32 %v7598, 0.7978846
    %v7607 = vmul.f32 %v7599, 0.7978846
    %v7608 = vmul.f32 %v7600, 0.7978846
    %v7609 = vmul.f32 %v7601, 0.7978846
    %v7610 = vmul.f32 %v7602, 0.7978846
    %v7611 = vmul.f32 %v7603, 0.7978846
    %v7612 = vmul.f32 %v7604, 0.7978846
    %v7613 = vmul.f32 %v7605, 0.7978846
    %v7614 = vtanh.pop %v7606
    %v7615 = vtanh.pop %v7607
    %v7616 = vtanh.pop %v7608
    %v7617 = vtanh.pop %v7609
    %v7618 = vtanh.pop %v7610
    %v7619 = vtanh.pop %v7611
    %v7620 = vtanh.pop %v7612
    %v7621 = vtanh.pop %v7613
    %v7622 = vadd.f32 %v7614, 1.0
    %v7623 = vadd.f32 %v7615, 1.0
    %v7624 = vadd.f32 %v7616, 1.0
    %v7625 = vadd.f32 %v7617, 1.0
    %v7626 = vadd.f32 %v7618, 1.0
    %v7627 = vadd.f32 %v7619, 1.0
    %v7628 = vadd.f32 %v7620, 1.0
    %v7629 = vadd.f32 %v7621, 1.0
    %v7630 = vmul.f32 %v7622, 0.5
    %v7631 = vmul.f32 %v7623, 0.5
    %v7632 = vmul.f32 %v7624, 0.5
    %v7633 = vmul.f32 %v7625, 0.5
    %v7634 = vmul.f32 %v7626, 0.5
    %v7635 = vmul.f32 %v7627, 0.5
    %v7636 = vmul.f32 %v7628, 0.5
    %v7637 = vmul.f32 %v7629, 0.5
    %v7638 = vmul.f32 %v7536, %v7630
    %v7639 = vmul.f32 %v7541, %v7631
    %v7640 = vmul.f32 %v7546, %v7632
    %v7641 = vmul.f32 %v7551, %v7633
    %v7642 = vmul.f32 %v7556, %v7634
    %v7643 = vmul.f32 %v7561, %v7635
    %v7644 = vmul.f32 %v7566, %v7636
    %v7645 = vmul.f32 %v7571, %v7637
    %s7646 = scalar_lea.vmem %s7, 64
    %v7647 = vld [vmem:[%s7646] sm:$0xff]
    %v7648 = vld [vmem:[%s7646 + $0x8] sm:$0xff]
    %v7649 = vld [vmem:[%s7646 + $0x10] sm:$0xff]
    %v7650 = vld [vmem:[%s7646 + $0x18] sm:$0xff]
    %v7651 = vld [vmem:[%s7646 + $0x20] sm:$0xff]
    %v7652 = vld [vmem:[%s7646 + $0x28] sm:$0xff]
    %v7653 = vld [vmem:[%s7646 + $0x30] sm:$0xff]
    %v7654 = vld [vmem:[%s7646 + $0x38] sm:$0xff]
    %v7655 = vld [vmem:[%s2 + $0xd] sm:$0x1]
    %v7656 = vlaneseq
    %v7657 = vshrl.u32 %v7656, 7
    %v7658 = vsub.s32 0, %v7657
    %v7659 = vrot.slane %v7655, %v7658
    %v7661 = vsel %vm3958, %v7638, 0
    %v7664 = vsel %vm3958, %v7639, 0
    %v7667 = vsel %vm3958, %v7640, 0
    %v7670 = vsel %vm3958, %v7641, 0
    %v7673 = vsel %vm3958, %v7642, 0
    %v7676 = vsel %vm3958, %v7643, 0
    %v7679 = vsel %vm3958, %v7644, 0
    %v7682 = vsel %vm3958, %v7645, 0
    %7684 = vmatprep.subr.mxu0 0.0
    %7685 = vmatpush1.msra.mxu0 %v7647
    %7686 = vmatprep.subr.mxu0 0.0
    %7687 = vmatpush1.msra.mxu0 %v7648
    %7688 = vmatprep.subr.mxu0 0.0
    %7689 = vmatpush1.msra.mxu0 %v7649
    %7690 = vmatprep.subr.mxu0 0.0
    %7691 = vmatpush1.msra.mxu0 %v7650
    %7692 = vmatprep.subr.mxu0 0.0
    %7693 = vmatpush1.msra.mxu0 %v7651
    %7694 = vmatprep.subr.mxu0 0.0
    %7695 = vmatpush1.msra.mxu0 %v7652
    %7696 = vmatprep.subr.mxu0 0.0
    %7697 = vmatpush1.msra.mxu0 %v7653
    %7698 = vmatprep.subr.mxu0 0.0
    %7699 = vmatpush1.msra.mxu0 %v7654
    %7700 = vmatprep.subr.mxu0 0.0
    %7701 = vmatpush1.msra.mxu0 0.0
    %7702 = vmatprep.subr.mxu0 0.0
    %7703 = vmatpush1.msra.mxu0 0.0
    %7704 = vmatprep.subr.mxu0 0.0
    %7705 = vmatpush1.msra.mxu0 0.0
    %7706 = vmatprep.subr.mxu0 0.0
    %7707 = vmatpush1.msra.mxu0 0.0
    %7708 = vmatprep.subr.mxu0 0.0
    %7709 = vmatpush1.msra.mxu0 0.0
    %7710 = vmatprep.subr.mxu0 0.0
    %7711 = vmatpush1.msra.mxu0 0.0
    %7712 = vmatprep.subr.mxu0 0.0
    %7713 = vmatpush1.msra.mxu0 0.0
    %7714 = vmatprep.subr.mxu0 0.0
    %7715 = vmatpush1.msra.mxu0 0.0
    %7716 = vmatprep.subr.mxu0 0.0
    %7717 = vmatpush1.msra.mxu0 0.0
    %7718 = vmatprep.subr.mxu0 0.0
    %7719 = vmatpush1.msra.mxu0 0.0
    %7720 = vmatprep.subr.mxu0 0.0
    %7721 = vmatpush1.msra.mxu0 0.0
    %7722 = vmatprep.subr.mxu0 0.0
    %7723 = vmatpush1.msra.mxu0 0.0
    %7724 = vmatprep.subr.mxu0 0.0
    %7725 = vmatpush1.msra.mxu0 0.0
    %7726 = vmatprep.subr.mxu0 0.0
    %7727 = vmatpush1.msra.mxu0 0.0
    %7728 = vmatprep.subr.mxu0 0.0
    %7729 = vmatpush1.msra.mxu0 0.0
    %7730 = vmatprep.subr.mxu0 0.0
    %7731 = vmatpush1.msra.mxu0 0.0
    %7732 = vmatprep.subr.mxu0 0.0
    %7733 = vmatpush1.msra.mxu0 0.0
    %7734 = vmatprep.subr.mxu0 0.0
    %7735 = vmatpush1.msra.mxu0 0.0
    %7736 = vmatprep.subr.mxu0 0.0
    %7737 = vmatpush1.msra.mxu0 0.0
    %7738 = vmatprep.subr.mxu0 0.0
    %7739 = vmatpush1.msra.mxu0 0.0
    %7740 = vmatprep.subr.mxu0 0.0
    %7741 = vmatpush1.msra.mxu0 0.0
    %7742 = vmatprep.subr.mxu0 0.0
    %7743 = vmatpush1.msra.mxu0 0.0
    %7744 = vmatprep.subr.mxu0 0.0
    %7745 = vmatpush1.msra.mxu0 0.0
    %7746 = vmatprep.subr.mxu0 0.0
    %7747 = vmatpush1.msra.mxu0 0.0
    %7748 = vmatprep.mubr.f32.mxu0 0.0
    %7749 = vmatmul.mubr.f32.gmra.mrb[0].mxu0 %v7661
    %v7750 = vpop.f32.mrb[0].mxu0
    %v7751 = vadd.f32 %v7659, %v7750
    %v7752 = vpop.f32.mrb[0].mxu0
    %7753 = vmatprep.mubr.f32.mxu0 0.0
    %7754 = vmatmul.mubr.f32.gmra.mrb[0].mxu0 %v7664
    %v7755 = vpop.f32.mrb[0].mxu0
    %v7756 = vadd.f32 %v7659, %v7755
    %v7757 = vpop.f32.mrb[0].mxu0
    %7758 = vmatprep.mubr.f32.mxu0 0.0
    %7759 = vmatmul.mubr.f32.gmra.mrb[0].mxu0 %v7667
    %v7760 = vpop.f32.mrb[0].mxu0
    %v7761 = vadd.f32 %v7659, %v7760
    %v7762 = vpop.f32.mrb[0].mxu0
    %7763 = vmatprep.mubr.f32.mxu0 0.0
    %7764 = vmatmul.mubr.f32.gmra.mrb[0].mxu0 %v7670
    %v7765 = vpop.f32.mrb[0].mxu0
    %v7766 = vadd.f32 %v7659, %v7765
    %v7767 = vpop.f32.mrb[0].mxu0
    %7768 = vmatprep.mubr.f32.mxu0 0.0
    %7769 = vmatmul.mubr.f32.gmra.mrb[0].mxu0 %v7673
    %v7770 = vpop.f32.mrb[0].mxu0
    %v7771 = vadd.f32 %v7659, %v7770
    %v7772 = vpop.f32.mrb[0].mxu0
    %7773 = vmatprep.mubr.f32.mxu0 0.0
    %7774 = vmatmul.mubr.f32.gmra.mrb[0].mxu0 %v7676
    %v7775 = vpop.f32.mrb[0].mxu0
    %v7776 = vadd.f32 %v7659, %v7775
    %v7777 = vpop.f32.mrb[0].mxu0
    %7778 = vmatprep.mubr.f32.mxu0 0.0
    %7779 = vmatmul.mubr.f32.gmra.mrb[0].mxu0 %v7679
    %v7780 = vpop.f32.mrb[0].mxu0
    %v7781 = vadd.f32 %v7659, %v7780
    %v7782 = vpop.f32.mrb[0].mxu0
    %7783 = vmatprep.mubr.f32.mxu0 0.0
    %7784 = vmatmul.mubr.f32.gmra.mrb[0].mxu0 %v7682
    %v7785 = vpop.f32.mrb[0].mxu0
    %v7786 = vadd.f32 %v7659, %v7785
    %v7787 = vpop.f32.mrb[0].mxu0
    %7788 = vdwg.mxu0
    %v7789 = vadd.f32 %v7751, %v7427
    %v7790 = vadd.f32 %v7756, %v7428
    %v7791 = vadd.f32 %v7761, %v7429
    %v7792 = vadd.f32 %v7766, %v7430
    %v7793 = vadd.f32 %v7771, %v7431
    %v7794 = vadd.f32 %v7776, %v7432
    %v7795 = vadd.f32 %v7781, %v7433
    %v7796 = vadd.f32 %v7786, %v7434
    %v7797 = vld [vmem:[%s2 + $0xe] sm:$0x1]
    %v7798 = vld [vmem:[%s2 + $0xf] sm:$0x1]
    %v7799 = vsel %vm284, %v7789, 0.0
    %7800 = vadd.xlane.f32.xlu0 %v7799
    %v7801 = vpop.xlane.xlu0 %7800
    %v7802 = vsel %vm284, %v7790, 0.0
    %7803 = vadd.xlane.f32.xlu0 %v7802
    %v7804 = vpop.xlane.xlu0 %7803
    %v7805 = vsel %vm284, %v7791, 0.0
    %7806 = vadd.xlane.f32.xlu0 %v7805
    %v7807 = vpop.xlane.xlu0 %7806
    %v7808 = vsel %vm284, %v7792, 0.0
    %7809 = vadd.xlane.f32.xlu0 %v7808
    %v7810 = vpop.xlane.xlu0 %7809
    %v7811 = vsel %vm284, %v7793, 0.0
    %7812 = vadd.xlane.f32.xlu0 %v7811
    %v7813 = vpop.xlane.xlu0 %7812
    %v7814 = vsel %vm284, %v7794, 0.0
    %7815 = vadd.xlane.f32.xlu0 %v7814
    %v7816 = vpop.xlane.xlu0 %7815
    %v7817 = vsel %vm284, %v7795, 0.0
    %7818 = vadd.xlane.f32.xlu0 %v7817
    %v7819 = vpop.xlane.xlu0 %7818
    %v7820 = vsel %vm284, %v7796, 0.0
    %7821 = vadd.xlane.f32.xlu0 %v7820
    %v7822 = vpop.xlane.xlu0 %7821
    %v7823 = vmul.f32 %v7801, %v309
    %v7824 = vmul.f32 %v7804, %v309
    %v7825 = vmul.f32 %v7807, %v309
    %v7826 = vmul.f32 %v7810, %v309
    %v7827 = vmul.f32 %v7813, %v309
    %v7828 = vmul.f32 %v7816, %v309
    %v7829 = vmul.f32 %v7819, %v309
    %v7830 = vmul.f32 %v7822, %v309
    %v7831 = vsub.f32 %v7789, %v7823
    %v7832 = vsub.f32 %v7790, %v7824
    %v7833 = vsub.f32 %v7791, %v7825
    %v7834 = vsub.f32 %v7792, %v7826
    %v7835 = vsub.f32 %v7793, %v7827
    %v7836 = vsub.f32 %v7794, %v7828
    %v7837 = vsub.f32 %v7795, %v7829
    %v7838 = vsub.f32 %v7796, %v7830
    %v7839 = vmul.f32 %v7831, %v7831
    %v7840 = vmul.f32 %v7832, %v7832
    %v7841 = vmul.f32 %v7833, %v7833
    %v7842 = vmul.f32 %v7834, %v7834
    %v7843 = vmul.f32 %v7835, %v7835
    %v7844 = vmul.f32 %v7836, %v7836
    %v7845 = vmul.f32 %v7837, %v7837
    %v7846 = vmul.f32 %v7838, %v7838
    %v7847 = vsel %vm284, %v7839, 0.0
    %7848 = vadd.xlane.f32.xlu0 %v7847
    %v7849 = vpop.xlane.xlu0 %7848
    %v7850 = vsel %vm284, %v7840, 0.0
    %7851 = vadd.xlane.f32.xlu0 %v7850
    %v7852 = vpop.xlane.xlu0 %7851
    %v7853 = vsel %vm284, %v7841, 0.0
    %7854 = vadd.xlane.f32.xlu0 %v7853
    %v7855 = vpop.xlane.xlu0 %7854
    %v7856 = vsel %vm284, %v7842, 0.0
    %7857 = vadd.xlane.f32.xlu0 %v7856
    %v7858 = vpop.xlane.xlu0 %7857
    %v7859 = vsel %vm284, %v7843, 0.0
    %7860 = vadd.xlane.f32.xlu0 %v7859
    %v7861 = vpop.xlane.xlu0 %7860
    %v7862 = vsel %vm284, %v7844, 0.0
    %7863 = vadd.xlane.f32.xlu0 %v7862
    %v7864 = vpop.xlane.xlu0 %7863
    %v7865 = vsel %vm284, %v7845, 0.0
    %7866 = vadd.xlane.f32.xlu0 %v7865
    %v7867 = vpop.xlane.xlu0 %7866
    %v7868 = vsel %vm284, %v7846, 0.0
    %7869 = vadd.xlane.f32.xlu0 %v7868
    %v7870 = vpop.xlane.xlu0 %7869
    %v7871 = vmul.f32 %v7849, %v309
    %v7872 = vmul.f32 %v7852, %v309
    %v7873 = vmul.f32 %v7855, %v309
    %v7874 = vmul.f32 %v7858, %v309
    %v7875 = vmul.f32 %v7861, %v309
    %v7876 = vmul.f32 %v7864, %v309
    %v7877 = vmul.f32 %v7867, %v309
    %v7878 = vmul.f32 %v7870, %v309
    %v7879 = vadd.f32 %v7871, 1e-05
    %v7880 = vadd.f32 %v7872, 1e-05
    %v7881 = vadd.f32 %v7873, 1e-05
    %v7882 = vadd.f32 %v7874, 1e-05
    %v7883 = vadd.f32 %v7875, 1e-05
    %v7884 = vadd.f32 %v7876, 1e-05
    %v7885 = vadd.f32 %v7877, 1e-05
    %v7886 = vadd.f32 %v7878, 1e-05
    %v7887 = vrsqrt.pop %v7879
    %v7888 = vrsqrt.pop %v7880
    %v7889 = vrsqrt.pop %v7881
    %v7890 = vrsqrt.pop %v7882
    %v7891 = vrsqrt.pop %v7883
    %v7892 = vrsqrt.pop %v7884
    %v7893 = vrsqrt.pop %v7885
    %v7894 = vrsqrt.pop %v7886
    %v7895 = vmul.f32 %v7831, %v7887
    %v7896 = vmul.f32 %v7832, %v7888
    %v7897 = vmul.f32 %v7833, %v7889
    %v7898 = vmul.f32 %v7834, %v7890
    %v7899 = vmul.f32 %v7835, %v7891
    %v7900 = vmul.f32 %v7836, %v7892
    %v7901 = vmul.f32 %v7837, %v7893
    %v7902 = vmul.f32 %v7838, %v7894
    %v7903 = vlaneseq
    %v7904 = vshrl.u32 %v7903, 7
    %v7905 = vsub.s32 0, %v7904
    %v7906 = vrot.slane %v7797, %v7905
    %v7907 = vmul.f32 %v7895, %v7906
    %v7908 = vmul.f32 %v7896, %v7906
    %v7909 = vmul.f32 %v7897, %v7906
    %v7910 = vmul.f32 %v7898, %v7906
    %v7911 = vmul.f32 %v7899, %v7906
    %v7912 = vmul.f32 %v7900, %v7906
    %v7913 = vmul.f32 %v7901, %v7906
    %v7914 = vmul.f32 %v7902, %v7906
    %v7915 = vlaneseq
    %v7916 = vshrl.u32 %v7915, 7
    %v7917 = vsub.s32 0, %v7916
    %v7918 = vrot.slane %v7798, %v7917
    %v7919 = vadd.f32 %v7907, %v7918
    %v7920 = vadd.f32 %v7908, %v7918
    %v7921 = vadd.f32 %v7909, %v7918
    %v7922 = vadd.f32 %v7910, %v7918
    %v7923 = vadd.f32 %v7911, %v7918
    %v7924 = vadd.f32 %v7912, %v7918
    %v7925 = vadd.f32 %v7913, %v7918
    %v7926 = vadd.f32 %v7914, %v7918
    %v7927 = vlaneseq
    %v7928 = vshrl.u32 %v7927, 7
    %v7929 = vmul.u32 %v7928, 8
    %vm7930 = vcmp.eq.s32.totalorder %v45, %v7929
    %v7931 = vsel %vm7930, 1, 0
    %v7932 = vcvt.s32.f32 %v7931
    %v7934 = vsel %vm3958, %v7932, 0
    %7936 = vmatprep.subr.mxu0 0.0
    %7937 = vmatpush1.msra.mxu0 %v7919
    %7938 = vmatprep.subr.mxu0 0.0
    %7939 = vmatpush1.msra.mxu0 %v7920
    %7940 = vmatprep.subr.mxu0 0.0
    %7941 = vmatpush1.msra.mxu0 %v7921
    %7942 = vmatprep.subr.mxu0 0.0
    %7943 = vmatpush1.msra.mxu0 %v7922
    %7944 = vmatprep.subr.mxu0 0.0
    %7945 = vmatpush1.msra.mxu0 %v7923
    %7946 = vmatprep.subr.mxu0 0.0
    %7947 = vmatpush1.msra.mxu0 %v7924
    %7948 = vmatprep.subr.mxu0 0.0
    %7949 = vmatpush1.msra.mxu0 %v7925
    %7950 = vmatprep.subr.mxu0 0.0
    %7951 = vmatpush1.msra.mxu0 %v7926
    %7952 = vmatprep.subr.mxu0 0.0
    %7953 = vmatpush1.msra.mxu0 0.0
    %7954 = vmatprep.subr.mxu0 0.0
    %7955 = vmatpush1.msra.mxu0 0.0
    %7956 = vmatprep.subr.mxu0 0.0
    %7957 = vmatpush1.msra.mxu0 0.0
    %7958 = vmatprep.subr.mxu0 0.0
    %7959 = vmatpush1.msra.mxu0 0.0
    %7960 = vmatprep.subr.mxu0 0.0
    %7961 = vmatpush1.msra.mxu0 0.0
    %7962 = vmatprep.subr.mxu0 0.0
    %7963 = vmatpush1.msra.mxu0 0.0
    %7964 = vmatprep.subr.mxu0 0.0
    %7965 = vmatpush1.msra.mxu0 0.0
    %7966 = vmatprep.subr.mxu0 0.0
    %7967 = vmatpush1.msra.mxu0 0.0
    %7968 = vmatprep.subr.mxu0 0.0
    %7969 = vmatpush1.msra.mxu0 0.0
    %7970 = vmatprep.subr.mxu0 0.0
    %7971 = vmatpush1.msra.mxu0 0.0
    %7972 = vmatprep.subr.mxu0 0.0
    %7973 = vmatpush1.msra.mxu0 0.0
    %7974 = vmatprep.subr.mxu0 0.0
    %7975 = vmatpush1.msra.mxu0 0.0
    %7976 = vmatprep.subr.mxu0 0.0
    %7977 = vmatpush1.msra.mxu0 0.0
    %7978 = vmatprep.subr.mxu0 0.0
    %7979 = vmatpush1.msra.mxu0 0.0
    %7980 = vmatprep.subr.mxu0 0.0
    %7981 = vmatpush1.msra.mxu0 0.0
    %7982 = vmatprep.subr.mxu0 0.0
    %7983 = vmatpush1.msra.mxu0 0.0
    %7984 = vmatprep.subr.mxu0 0.0
    %7985 = vmatpush1.msra.mxu0 0.0
    %7986 = vmatprep.subr.mxu0 0.0
    %7987 = vmatpush1.msra.mxu0 0.0
    %7988 = vmatprep.subr.mxu0 0.0
    %7989 = vmatpush1.msra.mxu0 0.0
    %7990 = vmatprep.subr.mxu0 0.0
    %7991 = vmatpush1.msra.mxu0 0.0
    %7992 = vmatprep.subr.mxu0 0.0
    %7993 = vmatpush1.msra.mxu0 0.0
    %7994 = vmatprep.subr.mxu0 0.0
    %7995 = vmatpush1.msra.mxu0 0.0
    %7996 = vmatprep.subr.mxu0 0.0
    %7997 = vmatpush1.msra.mxu0 0.0
    %7998 = vmatprep.subr.mxu0 0.0
    %7999 = vmatpush1.msra.mxu0 0.0
    %8000 = vmatprep.mubr.f32.mxu0 0.0
    %8001 = vmatmul.mubr.f32.gmra.mrb[0].mxu0 %v7934
    %v8002 = vpop.f32.mrb[0].mxu0
    %v8003 = vadd.f32 0.0, %v8002
    %v8004 = vpop.f32.mrb[0].mxu0
    %8005 = vdwg.mxu0
    %v8006 = vld [vmem:[%s8] sm:$0xff]
    %v8007 = vld [vmem:[%s8 + $0x8] sm:$0xff]
    %v8008 = vld [vmem:[%s8 + $0x10] sm:$0xff]
    %v8009 = vld [vmem:[%s8 + $0x18] sm:$0xff]
    %v8010 = vld [vmem:[%s2 + $0x12] sm:$0x1]
    %v8011 = vlaneseq
    %v8012 = vshrl.u32 %v8011, 7
    %v8013 = vsub.s32 0, %v8012
    %v8014 = vrot.slane %v8010, %v8013
    %v8016 = vsel %vm284, %v8003, 0
    %8018 = vmatprep.subr.mxu0 0.0
    %8019 = vmatpush1.msra.mxu0 %v8006
    %8020 = vmatprep.subr.mxu0 0.0
    %8021 = vmatpush1.msra.mxu0 %v8007
    %8022 = vmatprep.subr.mxu0 0.0
    %8023 = vmatpush1.msra.mxu0 %v8008
    %8024 = vmatprep.subr.mxu0 0.0
    %8025 = vmatpush1.msra.mxu0 %v8009
    %8026 = vmatprep.subr.mxu0 0.0
    %8027 = vmatpush1.msra.mxu0 0.0
    %8028 = vmatprep.subr.mxu0 0.0
    %8029 = vmatpush1.msra.mxu0 0.0
    %8030 = vmatprep.subr.mxu0 0.0
    %8031 = vmatpush1.msra.mxu0 0.0
    %8032 = vmatprep.subr.mxu0 0.0
    %8033 = vmatpush1.msra.mxu0 0.0
    %8034 = vmatprep.subr.mxu0 0.0
    %8035 = vmatpush1.msra.mxu0 0.0
    %8036 = vmatprep.subr.mxu0 0.0
    %8037 = vmatpush1.msra.mxu0 0.0
    %8038 = vmatprep.subr.mxu0 0.0
    %8039 = vmatpush1.msra.mxu0 0.0
    %8040 = vmatprep.subr.mxu0 0.0
    %8041 = vmatpush1.msra.mxu0 0.0
    %8042 = vmatprep.subr.mxu0 0.0
    %8043 = vmatpush1.msra.mxu0 0.0
    %8044 = vmatprep.subr.mxu0 0.0
    %8045 = vmatpush1.msra.mxu0 0.0
    %8046 = vmatprep.subr.mxu0 0.0
    %8047 = vmatpush1.msra.mxu0 0.0
    %8048 = vmatprep.subr.mxu0 0.0
    %8049 = vmatpush1.msra.mxu0 0.0
    %8050 = vmatprep.subr.mxu0 0.0
    %8051 = vmatpush1.msra.mxu0 0.0
    %8052 = vmatprep.subr.mxu0 0.0
    %8053 = vmatpush1.msra.mxu0 0.0
    %8054 = vmatprep.subr.mxu0 0.0
    %8055 = vmatpush1.msra.mxu0 0.0
    %8056 = vmatprep.subr.mxu0 0.0
    %8057 = vmatpush1.msra.mxu0 0.0
    %8058 = vmatprep.subr.mxu0 0.0
    %8059 = vmatpush1.msra.mxu0 0.0
    %8060 = vmatprep.subr.mxu0 0.0
    %8061 = vmatpush1.msra.mxu0 0.0
    %8062 = vmatprep.subr.mxu0 0.0
    %8063 = vmatpush1.msra.mxu0 0.0
    %8064 = vmatprep.subr.mxu0 0.0
    %8065 = vmatpush1.msra.mxu0 0.0
    %8066 = vmatprep.subr.mxu0 0.0
    %8067 = vmatpush1.msra.mxu0 0.0
    %8068 = vmatprep.subr.mxu0 0.0
    %8069 = vmatpush1.msra.mxu0 0.0
    %8070 = vmatprep.subr.mxu0 0.0
    %8071 = vmatpush1.msra.mxu0 0.0
    %8072 = vmatprep.subr.mxu0 0.0
    %8073 = vmatpush1.msra.mxu0 0.0
    %8074 = vmatprep.subr.mxu0 0.0
    %8075 = vmatpush1.msra.mxu0 0.0
    %8076 = vmatprep.subr.mxu0 0.0
    %8077 = vmatpush1.msra.mxu0 0.0
    %8078 = vmatprep.subr.mxu0 0.0
    %8079 = vmatpush1.msra.mxu0 0.0
    %8080 = vmatprep.subr.mxu0 0.0
    %8081 = vmatpush1.msra.mxu0 0.0
    %8082 = vmatprep.mubr.f32.mxu0 0.0
    %8083 = vmatmul.mubr.f32.gmra.mrb[0].mxu0 %v8016
    %v8084 = vpop.f32.mrb[0].mxu0
    %v8085 = vadd.f32 %v8014, %v8084
    %v8086 = vpop.f32.mrb[0].mxu0
    %8087 = vdwg.mxu0
    %v8088 = vtanh.pop %v8085
    %v8089 = vld [vmem:[%s9] sm:$0xff]
    %v8090 = vld [vmem:[%s9 + $0x8] sm:$0xff]
    %v8091 = vld [vmem:[%s9 + $0x10] sm:$0xff]
    %v8092 = vld [vmem:[%s9 + $0x18] sm:$0xff]
    %v8093 = vld [vmem:[%s2 + $0x13] sm:$0x1]
    %v8094 = vlaneseq
    %v8095 = vshrl.u32 %v8094, 7
    %v8096 = vsub.s32 0, %v8095
    %v8097 = vrot.slane %v8093, %v8096
    %v8099 = vsel %vm284, %v8088, 0
    %8101 = vmatprep.subr.mxu0 0.0
    %8102 = vmatpush1.msra.mxu0 %v8089
    %8103 = vmatprep.subr.mxu0 0.0
    %8104 = vmatpush1.msra.mxu0 %v8090
    %8105 = vmatprep.subr.mxu0 0.0
    %8106 = vmatpush1.msra.mxu0 %v8091
    %8107 = vmatprep.subr.mxu0 0.0
    %8108 = vmatpush1.msra.mxu0 %v8092
    %8109 = vmatprep.subr.mxu0 0.0
    %8110 = vmatpush1.msra.mxu0 0.0
    %8111 = vmatprep.subr.mxu0 0.0
    %8112 = vmatpush1.msra.mxu0 0.0
    %8113 = vmatprep.subr.mxu0 0.0
    %8114 = vmatpush1.msra.mxu0 0.0
    %8115 = vmatprep.subr.mxu0 0.0
    %8116 = vmatpush1.msra.mxu0 0.0
    %8117 = vmatprep.subr.mxu0 0.0
    %8118 = vmatpush1.msra.mxu0 0.0
    %8119 = vmatprep.subr.mxu0 0.0
    %8120 = vmatpush1.msra.mxu0 0.0
    %8121 = vmatprep.subr.mxu0 0.0
    %8122 = vmatpush1.msra.mxu0 0.0
    %8123 = vmatprep.subr.mxu0 0.0
    %8124 = vmatpush1.msra.mxu0 0.0
    %8125 = vmatprep.subr.mxu0 0.0
    %8126 = vmatpush1.msra.mxu0 0.0
    %8127 = vmatprep.subr.mxu0 0.0
    %8128 = vmatpush1.msra.mxu0 0.0
    %8129 = vmatprep.subr.mxu0 0.0
    %8130 = vmatpush1.msra.mxu0 0.0
    %8131 = vmatprep.subr.mxu0 0.0
    %8132 = vmatpush1.msra.mxu0 0.0
    %8133 = vmatprep.subr.mxu0 0.0
    %8134 = vmatpush1.msra.mxu0 0.0
    %8135 = vmatprep.subr.mxu0 0.0
    %8136 = vmatpush1.msra.mxu0 0.0
    %8137 = vmatprep.subr.mxu0 0.0
    %8138 = vmatpush1.msra.mxu0 0.0
    %8139 = vmatprep.subr.mxu0 0.0
    %8140 = vmatpush1.msra.mxu0 0.0
    %8141 = vmatprep.subr.mxu0 0.0
    %8142 = vmatpush1.msra.mxu0 0.0
    %8143 = vmatprep.subr.mxu0 0.0
    %8144 = vmatpush1.msra.mxu0 0.0
    %8145 = vmatprep.subr.mxu0 0.0
    %8146 = vmatpush1.msra.mxu0 0.0
    %8147 = vmatprep.subr.mxu0 0.0
    %8148 = vmatpush1.msra.mxu0 0.0
    %8149 = vmatprep.subr.mxu0 0.0
    %8150 = vmatpush1.msra.mxu0 0.0
    %8151 = vmatprep.subr.mxu0 0.0
    %8152 = vmatpush1.msra.mxu0 0.0
    %8153 = vmatprep.subr.mxu0 0.0
    %8154 = vmatpush1.msra.mxu0 0.0
    %8155 = vmatprep.subr.mxu0 0.0
    %8156 = vmatpush1.msra.mxu0 0.0
    %8157 = vmatprep.subr.mxu0 0.0
    %8158 = vmatpush1.msra.mxu0 0.0
    %8159 = vmatprep.subr.mxu0 0.0
    %8160 = vmatpush1.msra.mxu0 0.0
    %8161 = vmatprep.subr.mxu0 0.0
    %8162 = vmatpush1.msra.mxu0 0.0
    %8163 = vmatprep.subr.mxu0 0.0
    %8164 = vmatpush1.msra.mxu0 0.0
    %8165 = vmatprep.mubr.f32.mxu0 0.0
    %8166 = vmatmul.mubr.f32.gmra.mrb[0].mxu0 %v8099
    %v8167 = vpop.f32.mrb[0].mxu0
    %v8168 = vadd.f32 %v8097, %v8167
    %v8169 = vpop.f32.mrb[0].mxu0
    %8170 = vdwg.mxu0
    %8171 = vst [vmem:[#allocation2] sm:$0xff] %v8168
    // Predicated region
    $region42: #{tpu_custom_call.1} parent=1 // pred_check
      _
    $region43: #{tpu_custom_call.1} parent=1 // pred_check_branch
      %8173 = sbr.rel (0) target = $region45
    $region44: #{tpu_custom_call.1} parent=1 // pred_region
      %s8175 = ssub.s32 128, 128
      %8176 = vsyncadd [#allocation3], %s8175
      %s8178 = sshll.u32 [#allocation2], 4
      %s8179 = int_to_ptr.vmem [resolvable:$true] %s8178
      %8181 = dma.vmem_to_hbm [thread:$0]  %s8179, 128, %s10, [#allocation3]
    $region45: #{tpu_custom_call.1} parent=1 // pred_fallthru
      _
    // Predicated region
    $region46: #{tpu_custom_call.1} parent=1 // pred_check
      _
    $region47: #{tpu_custom_call.1} parent=1 // pred_check_branch
      %8183 = sbr.rel (0) target = $region49
    $region48: #{tpu_custom_call.1} parent=1 // pred_region
      %8184 = dma.done [#allocation3], 128
    $region49: #{tpu_custom_call.1} parent=1 // pred_fallthru
      _
    %8185 = vsyncpa [#allocation3], 1

</llo_original>
